<compile_context>
chip_gen: v6e
topology: v6e:2x2x1
jax: 0.10.0
libtpu: 0.0.40
codegen_flags: <defaults>
</compile_context>

<pallas_src>
import functools

import jax
import jax.numpy as jnp
from jax import lax
from jax.experimental import pallas as pl
from jax.experimental.pallas import tpu as pltpu


def _round_up(x, m):
    return ((x + m - 1) // m) * m


def _resblock_kernel(x_ref, w1_ref, sb1_ref, w2_ref, sb2_ref, out_ref,
                     pad_ref, patch_ref, *, H, W, PAD):
    """One batch element per grid step (stride=1, identity shortcut).

    x_ref    : (1, H*W, C)       input, NHWC flattened over (H, W), f32
    w1_ref   : (9*C, C)          conv1 weights, tap-major rows (kh, kw, cin), bf16
    sb1_ref  : (2, C)            row0 = BN1 scale, row1 = folded BN1 bias, f32
    w2_ref   : (9*C, C)          conv2 weights, bf16
    sb2_ref  : (2, C)            BN2 scale / folded bias, f32
    out_ref  : (1, H*W, C)       block output, f32
    pad_ref  : (H*W + 2*PAD, C)  f32 scratch: zero halo rows + staged activation
    patch_ref: (H*W, 9*C)        bf16 scratch: im2col operand
    """
    P = H * W
    C = out_ref.shape[-1]
    f32 = jnp.float32
    bf16 = jnp.bfloat16

    # Zero only the halo rows, every grid step.  Required for correctness when
    # the "parallel" grid axis is sharded across TensorCores (per-core scratch
    # is not zero-initialised).  Cost is tiny.
    pad_ref[pl.ds(0, PAD), :] = jnp.zeros((PAD, C), f32)
    pad_ref[pl.ds(PAD + P, PAD), :] = jnp.zeros((PAD, C), f32)

    # Width-boundary masks built in-kernel (a few VPU ops hidden under MXU
    # slack).  Hoisted once so the broadcast is not replicated per tap.
    col = lax.broadcasted_iota(jnp.int32, (P, 1), 0) % W
    mlo = jnp.broadcast_to(col > 0, (P, C))        # valid rows for dw = -1
    mhi = jnp.broadcast_to(col < W - 1, (P, C))    # valid rows for dw = +1

    def conv3x3(w_ref, sb_ref):
        # im2col: fill the (P, 9C) bf16 operand once, then a single MXU dot.
        for kh in range(3):
            for kw in range(3):
                dh, dw = kh - 1, kw - 1
                start = PAD + dh * W + dw            # static Python int
                s = pad_ref[pl.ds(start, P), :]      # shifted (P, C) view, f32
                if dw == -1:                         # mask width wrap-around
                    s = jnp.where(mlo, s, 0.0)
                elif dw == 1:
                    s = jnp.where(mhi, s, 0.0)
                t = kh * 3 + kw
                patch_ref[:, t * C:(t + 1) * C] = s.astype(bf16)
        acc = jnp.dot(patch_ref[...], w_ref[...], preferred_element_type=f32)
        # BN (inference mode): per-channel scale + bias in f32 after the dot.
        return acc * sb_ref[0:1, :] + sb_ref[1:2, :]

    # ---- conv1 (3x3, pad 1) + BN1 + ReLU ----
    pad_ref[pl.ds(PAD, P), :] = x_ref[0]             # stage input inside halo
    y1 = jnp.maximum(conv3x3(w1_ref, sb1_ref), 0.0)

    # ---- conv2 (3x3, pad 1) + BN2 + residual add + ReLU ----
    pad_ref[pl.ds(PAD, P), :] = y1                   # reuse the same scratch
    out_ref[0] = jnp.maximum(conv3x3(w2_ref, sb2_ref) + x_ref[0], 0.0)


def residual_block_pallas(x_nchw, params):
    """Forward pass of ResidualBlock (stride=1, downsample=None)."""
    w1, g1, be1, m1, v1, w2, g2, be2, m2, v2 = params
    eps = 1e-5

    N, Cin, H, W = x_nchw.shape
    C = w1.shape[-1]
    assert Cin == C, "identity residual requires in_planes == planes"
    # TODO(synk): stride>1 / downsample shortcut path not implemented.

    P = H * W
    PAD = _round_up(W + 1, 8)     # f32 halo scratch -> 8-row sublane alignment

    # BN (inference) as post-dot f32 scale + bias; weights stay raw bf16.
    s1 = g1 / jnp.sqrt(v1 + eps)
    s2 = g2 / jnp.sqrt(v2 + eps)
    sb1 = jnp.stack([s1, be1 - m1 * s1]).astype(jnp.float32)   # (2, C)
    sb2 = jnp.stack([s2, be2 - m2 * s2]).astype(jnp.float32)   # (2, C)
    w1f = w1.reshape(9 * Cin, C).astype(jnp.bfloat16)          # tap-major rows
    w2f = w2.reshape(9 * C, C).astype(jnp.bfloat16)

    # NCHW -> (N, H*W, C): channels on lanes, pixels on sublanes; no host pad.
    xf = jnp.transpose(x_nchw, (0, 2, 3, 1)).reshape(N, P, Cin)
    xf = xf.astype(jnp.float32)

    kernel = functools.partial(_resblock_kernel, H=H, W=W, PAD=PAD)

    out = pl.pallas_call(
        kernel,
        out_shape=jax.ShapeDtypeStruct((N, P, C), jnp.float32),
        grid_spec=pltpu.PrefetchScalarGridSpec(
            num_scalar_prefetch=0,
            grid=(N,),
            in_specs=[
                pl.BlockSpec((1, P, Cin), lambda n: (n, 0, 0)),
                pl.BlockSpec((9 * Cin, C), lambda n: (0, 0)),
                pl.BlockSpec((2, C), lambda n: (0, 0)),
                pl.BlockSpec((9 * C, C), lambda n: (0, 0)),
                pl.BlockSpec((2, C), lambda n: (0, 0)),
            ],
            out_specs=pl.BlockSpec((1, P, C), lambda n: (n, 0, 0)),
            scratch_shapes=[
                pltpu.VMEM((P + 2 * PAD, C), jnp.float32),    # halo rows
                pltpu.VMEM((P, 9 * Cin), jnp.bfloat16),       # im2col patch
            ],
        ),
        compiler_params=pltpu.CompilerParams(
            dimension_semantics=("parallel",)),
    )(xf, w1f, sb1, w2f, sb2)

    out = out.reshape(N, H, W, C)
    return jnp.transpose(out, (0, 3, 1, 2))  # back to NCHW


def _reference(x_nchw, params):
    """Pure-JAX reference (f32 throughout) for the correctness check."""
    w1, g1, be1, m1, v1, w2, g2, be2, m2, v2 = params
    eps = 1e-5

    def conv(x, w):  # x NCHW, w HWIO
        return lax.conv_general_dilated(
            x, w, window_strides=(1, 1), padding=((1, 1), (1, 1)),
            dimension_numbers=("NCHW", "HWIO", "NCHW"))

    def bn(x, g, b, m, v):
        g, b, m, v = (t.reshape(1, -1, 1, 1) for t in (g, b, m, v))
        return (x - m) / jnp.sqrt(v + eps) * g + b

    out = jnp.maximum(bn(conv(x_nchw, w1), g1, be1, m1, v1), 0.0)
    out = bn(conv(out, w2), g2, be2, m2, v2)
    return jnp.maximum(out + x_nchw, 0.0)


def _init_params(key, in_planes, planes):
    ks = jax.random.split(key, 10)
    w1 = 0.1 * jax.random.normal(ks[0], (3, 3, in_planes, planes), jnp.float32)
    g1 = 1.0 + 0.1 * jax.random.normal(ks[1], (planes,), jnp.float32)
    b1 = 0.1 * jax.random.normal(ks[2], (planes,), jnp.float32)
    m1 = 0.1 * jax.random.normal(ks[3], (planes,), jnp.float32)
    v1 = 1.0 + 0.1 * jax.random.uniform(ks[4], (planes,), jnp.float32)
    w2 = 0.1 * jax.random.normal(ks[5], (3, 3, planes, planes), jnp.float32)
    g2 = 1.0 + 0.1 * jax.random.normal(ks[6], (planes,), jnp.float32)
    b2 = 0.1 * jax.random.normal(ks[7], (planes,), jnp.float32)
    m2 = 0.1 * jax.random.normal(ks[8], (planes,), jnp.float32)
    v2 = 1.0 + 0.1 * jax.random.uniform(ks[9], (planes,), jnp.float32)
    return (w1, g1, b1, m1, v1, w2, g2, b2, m2, v2)


if __name__ == "__main__":
    key = jax.random.PRNGKey(0)
    kx, kp = jax.random.split(key)

    N, C, H, W = 2, 4, 16, 16          # batch=2, in_planes=planes=4, 16x16
    x = jax.random.normal(kx, (N, C, H, W), jnp.float32)
    params = _init_params(kp, C, C)

    out = residual_block_pallas(x, params)
    out = jax.block_until_ready(out)

    ref = _reference(x, params)
    assert out.shape == ref.shape == (N, C, H, W)
    # bf16 matmul inputs -> slightly loosened tolerance vs. pure-f32 reference
    max_err = float(jnp.max(jnp.abs(out - ref)))
    assert jnp.allclose(out, ref, atol=5e-2, rtol=5e-2), max_err

    print("KERNEL_OK")
</pallas_src>

<mosaic_0001>
module attributes {stable_mosaic.version = 11 : i64} {
  func.func @_resblock_kernel(%arg0: i32, %arg1: memref<1x256x4xf32, #tpu.memory_space<vmem>>, %arg2: memref<36x4xbf16, #tpu.memory_space<vmem>>, %arg3: memref<2x4xf32, #tpu.memory_space<vmem>>, %arg4: memref<36x4xbf16, #tpu.memory_space<vmem>>, %arg5: memref<2x4xf32, #tpu.memory_space<vmem>>, %arg6: memref<1x256x4xf32, #tpu.memory_space<vmem>>, %arg7: memref<304x4xf32, #tpu.memory_space<vmem>>, %arg8: memref<256x36xbf16, #tpu.memory_space<vmem>>) attributes {dimension_semantics = [#tpu.dimension_semantics<parallel>], iteration_bounds = array<i64: 2>, scalar_prefetch = 0 : i64, scratch_operands = 2 : i64, tpu.core_type = #tpu.core_type<tc>, window_params = [{transform_indices = @transform_0, window_bounds = array<i64: 1, 256, 4>}, {pipeline_mode = #tpu.pipeline_mode<synchronous>, transform_indices = @transform_1, window_bounds = array<i64: 36, 4>}, {pipeline_mode = #tpu.pipeline_mode<synchronous>, transform_indices = @transform_2, window_bounds = array<i64: 2, 4>}, {pipeline_mode = #tpu.pipeline_mode<synchronous>, transform_indices = @transform_3, window_bounds = array<i64: 36, 4>}, {pipeline_mode = #tpu.pipeline_mode<synchronous>, transform_indices = @transform_4, window_bounds = array<i64: 2, 4>}, {transform_indices = @transform_5, window_bounds = array<i64: 1, 256, 4>}]} {
    %cst = arith.constant 0.000000e+00 : f32
    %0 = vector.broadcast %cst : f32 to vector<24x4xf32>
    %c0 = arith.constant 0 : index
    %c0_0 = arith.constant 0 : index
    %1 = vector.load %arg7[%c0, %c0_0] : memref<304x4xf32, #tpu.memory_space<vmem>>, vector<24x4xf32>
    tpu.vector_store %arg7[%c0, %c0_0], %0 {strides = array<i32>} : memref<304x4xf32, #tpu.memory_space<vmem>>, vector<24x4xf32>,
    %cst_1 = arith.constant 0.000000e+00 : f32
    %2 = vector.broadcast %cst_1 : f32 to vector<24x4xf32>
    %c280 = arith.constant 280 : index
    %c0_2 = arith.constant 0 : index
    %3 = vector.load %arg7[%c280, %c0_2] : memref<304x4xf32, #tpu.memory_space<vmem>>, vector<24x4xf32>
    tpu.vector_store %arg7[%c280, %c0_2], %2 {strides = array<i32>} : memref<304x4xf32, #tpu.memory_space<vmem>>, vector<24x4xf32>,
    %4 = tpu.iota {dimensions = array<i32: 0>} : vector<256x1xi32>
    %c16_i32 = arith.constant 16 : i32
    %c0_i32 = arith.constant 0 : i32
    %5 = arith.cmpi eq, %c16_i32, %c0_i32 : i32
    %c1_i32 = arith.constant 1 : i32
    %6 = arith.select %5, %c1_i32, %c16_i32 : i32
    %7 = vector.broadcast %6 : i32 to vector<256x1xi32>
    %8 = arith.remsi %4, %7 : vector<256x1xi32>
    %c0_i32_3 = arith.constant 0 : i32
    %9 = vector.broadcast %c0_i32_3 : i32 to vector<256x1xi32>
    %10 = arith.cmpi ne, %8, %9 : vector<256x1xi32>
    %c0_i32_4 = arith.constant 0 : i32
    %11 = vector.broadcast %c0_i32_4 : i32 to vector<256x1xi32>
    %12 = arith.cmpi slt, %8, %11 : vector<256x1xi32>
    %c0_i32_5 = arith.constant 0 : i32
    %13 = arith.cmpi slt, %6, %c0_i32_5 : i32
    %14 = vector.broadcast %13 : i1 to vector<256x1xi1>
    %15 = vector.broadcast %14 : vector<256x1xi1> to vector<256x1xi1>
    %16 = arith.xori %12, %15 : vector<256x1xi1>
    %17 = arith.andi %16, %10 : vector<256x1xi1>
    %18 = vector.broadcast %6 : i32 to vector<256x1xi32>
    %19 = arith.addi %8, %18 : vector<256x1xi32>
    %20 = arith.select %17, %19, %8 : vector<256x1xi1>, vector<256x1xi32>
    %c0_i32_6 = arith.constant 0 : i32
    %21 = vector.broadcast %c0_i32_6 : i32 to vector<256x1xi32>
    %22 = arith.cmpi sgt, %20, %21 : vector<256x1xi32>
    %23 = vector.shape_cast %22 : vector<256x1xi1> to vector<256x1xi1>
    %24 = vector.broadcast %23 : vector<256x1xi1> to vector<256x4xi1>
    %c15_i32 = arith.constant 15 : i32
    %25 = vector.broadcast %c15_i32 : i32 to vector<256x1xi32>
    %26 = arith.cmpi slt, %20, %25 : vector<256x1xi32>
    %27 = vector.shape_cast %26 : vector<256x1xi1> to vector<256x1xi1>
    %28 = vector.broadcast %27 : vector<256x1xi1> to vector<256x4xi1>
    %c0_7 = arith.constant 0 : index
    %c0_8 = arith.constant 0 : index
    %c0_9 = arith.constant 0 : index
    %29 = vector.load %arg1[%c0_7, %c0_8, %c0_9] : memref<1x256x4xf32, #tpu.memory_space<vmem>>, vector<1x256x4xf32>
    %30 = vector.shape_cast %29 : vector<1x256x4xf32> to vector<256x4xf32>
    %c24 = arith.constant 24 : index
    %c0_10 = arith.constant 0 : index
    %31 = vector.load %arg7[%c24, %c0_10] : memref<304x4xf32, #tpu.memory_space<vmem>>, vector<256x4xf32>
    tpu.vector_store %arg7[%c24, %c0_10], %30 {strides = array<i32>} : memref<304x4xf32, #tpu.memory_space<vmem>>, vector<256x4xf32>,
    %c7 = arith.constant 7 : index
    %c0_11 = arith.constant 0 : index
    %32 = vector.load %arg7[%c7, %c0_11] : memref<304x4xf32, #tpu.memory_space<vmem>>, vector<256x4xf32>
    %cst_12 = arith.constant 0.000000e+00 : f32
    %33 = vector.broadcast %cst_12 : f32 to vector<256x4xf32>
    %34 = arith.select %24, %32, %33 : vector<256x4xi1>, vector<256x4xf32>
    %35 = arith.truncf %34 : vector<256x4xf32> to vector<256x4xbf16>
    %c0_13 = arith.constant 0 : index
    %c0_14 = arith.constant 0 : index
    %36 = vector.load %arg8[%c0_13, %c0_14] : memref<256x36xbf16, #tpu.memory_space<vmem>>, vector<256x4xbf16>
    tpu.vector_store %arg8[%c0_13, %c0_14], %35 {strides = array<i32>} : memref<256x36xbf16, #tpu.memory_space<vmem>>, vector<256x4xbf16>,
    %c8 = arith.constant 8 : index
    %c0_15 = arith.constant 0 : index
    %37 = vector.load %arg7[%c8, %c0_15] : memref<304x4xf32, #tpu.memory_space<vmem>>, vector<256x4xf32>
    %38 = arith.truncf %37 : vector<256x4xf32> to vector<256x4xbf16>
    %c0_16 = arith.constant 0 : index
    %c4 = arith.constant 4 : index
    %39 = vector.load %arg8[%c0_16, %c4] : memref<256x36xbf16, #tpu.memory_space<vmem>>, vector<256x4xbf16>
    tpu.vector_store %arg8[%c0_16, %c4], %38 {strides = array<i32>} : memref<256x36xbf16, #tpu.memory_space<vmem>>, vector<256x4xbf16>,
    %c9 = arith.constant 9 : index
    %c0_17 = arith.constant 0 : index
    %40 = vector.load %arg7[%c9, %c0_17] : memref<304x4xf32, #tpu.memory_space<vmem>>, vector<256x4xf32>
    %cst_18 = arith.constant 0.000000e+00 : f32
    %41 = vector.broadcast %cst_18 : f32 to vector<256x4xf32>
    %42 = arith.select %28, %40, %41 : vector<256x4xi1>, vector<256x4xf32>
    %43 = arith.truncf %42 : vector<256x4xf32> to vector<256x4xbf16>
    %c0_19 = arith.constant 0 : index
    %c8_20 = arith.constant 8 : index
    %44 = vector.load %arg8[%c0_19, %c8_20] : memref<256x36xbf16, #tpu.memory_space<vmem>>, vector<256x4xbf16>
    tpu.vector_store %arg8[%c0_19, %c8_20], %43 {strides = array<i32>} : memref<256x36xbf16, #tpu.memory_space<vmem>>, vector<256x4xbf16>,
    %c23 = arith.constant 23 : index
    %c0_21 = arith.constant 0 : index
    %45 = vector.load %arg7[%c23, %c0_21] : memref<304x4xf32, #tpu.memory_space<vmem>>, vector<256x4xf32>
    %cst_22 = arith.constant 0.000000e+00 : f32
    %46 = vector.broadcast %cst_22 : f32 to vector<256x4xf32>
    %47 = arith.select %24, %45, %46 : vector<256x4xi1>, vector<256x4xf32>
    %48 = arith.truncf %47 : vector<256x4xf32> to vector<256x4xbf16>
    %c0_23 = arith.constant 0 : index
    %c12 = arith.constant 12 : index
    %49 = vector.load %arg8[%c0_23, %c12] : memref<256x36xbf16, #tpu.memory_space<vmem>>, vector<256x4xbf16>
    tpu.vector_store %arg8[%c0_23, %c12], %48 {strides = array<i32>} : memref<256x36xbf16, #tpu.memory_space<vmem>>, vector<256x4xbf16>,
    %c24_24 = arith.constant 24 : index
    %c0_25 = arith.constant 0 : index
    %50 = vector.load %arg7[%c24_24, %c0_25] : memref<304x4xf32, #tpu.memory_space<vmem>>, vector<256x4xf32>
    %51 = arith.truncf %50 : vector<256x4xf32> to vector<256x4xbf16>
    %c0_26 = arith.constant 0 : index
    %c16 = arith.constant 16 : index
    %52 = vector.load %arg8[%c0_26, %c16] : memref<256x36xbf16, #tpu.memory_space<vmem>>, vector<256x4xbf16>
    tpu.vector_store %arg8[%c0_26, %c16], %51 {strides = array<i32>} : memref<256x36xbf16, #tpu.memory_space<vmem>>, vector<256x4xbf16>,
    %c25 = arith.constant 25 : index
    %c0_27 = arith.constant 0 : index
    %53 = vector.load %arg7[%c25, %c0_27] : memref<304x4xf32, #tpu.memory_space<vmem>>, vector<256x4xf32>
    %cst_28 = arith.constant 0.000000e+00 : f32
    %54 = vector.broadcast %cst_28 : f32 to vector<256x4xf32>
    %55 = arith.select %28, %53, %54 : vector<256x4xi1>, vector<256x4xf32>
    %56 = arith.truncf %55 : vector<256x4xf32> to vector<256x4xbf16>
    %c0_29 = arith.constant 0 : index
    %c20 = arith.constant 20 : index
    %57 = vector.load %arg8[%c0_29, %c20] : memref<256x36xbf16, #tpu.memory_space<vmem>>, vector<256x4xbf16>
    tpu.vector_store %arg8[%c0_29, %c20], %56 {strides = array<i32>} : memref<256x36xbf16, #tpu.memory_space<vmem>>, vector<256x4xbf16>,
    %c39 = arith.constant 39 : index
    %c0_30 = arith.constant 0 : index
    %58 = vector.load %arg7[%c39, %c0_30] : memref<304x4xf32, #tpu.memory_space<vmem>>, vector<256x4xf32>
    %cst_31 = arith.constant 0.000000e+00 : f32
    %59 = vector.broadcast %cst_31 : f32 to vector<256x4xf32>
    %60 = arith.select %24, %58, %59 : vector<256x4xi1>, vector<256x4xf32>
    %61 = arith.truncf %60 : vector<256x4xf32> to vector<256x4xbf16>
    %c0_32 = arith.constant 0 : index
    %c24_33 = arith.constant 24 : index
    %62 = vector.load %arg8[%c0_32, %c24_33] : memref<256x36xbf16, #tpu.memory_space<vmem>>, vector<256x4xbf16>
    tpu.vector_store %arg8[%c0_32, %c24_33], %61 {strides = array<i32>} : memref<256x36xbf16, #tpu.memory_space<vmem>>, vector<256x4xbf16>,
    %c40 = arith.constant 40 : index
    %c0_34 = arith.constant 0 : index
    %63 = vector.load %arg7[%c40, %c0_34] : memref<304x4xf32, #tpu.memory_space<vmem>>, vector<256x4xf32>
    %64 = arith.truncf %63 : vector<256x4xf32> to vector<256x4xbf16>
    %c0_35 = arith.constant 0 : index
    %c28 = arith.constant 28 : index
    %65 = vector.load %arg8[%c0_35, %c28] : memref<256x36xbf16, #tpu.memory_space<vmem>>, vector<256x4xbf16>
    tpu.vector_store %arg8[%c0_35, %c28], %64 {strides = array<i32>} : memref<256x36xbf16, #tpu.memory_space<vmem>>, vector<256x4xbf16>,
    %c41 = arith.constant 41 : index
    %c0_36 = arith.constant 0 : index
    %66 = vector.load %arg7[%c41, %c0_36] : memref<304x4xf32, #tpu.memory_space<vmem>>, vector<256x4xf32>
    %cst_37 = arith.constant 0.000000e+00 : f32
    %67 = vector.broadcast %cst_37 : f32 to vector<256x4xf32>
    %68 = arith.select %28, %66, %67 : vector<256x4xi1>, vector<256x4xf32>
    %69 = arith.truncf %68 : vector<256x4xf32> to vector<256x4xbf16>
    %c0_38 = arith.constant 0 : index
    %c32 = arith.constant 32 : index
    %70 = vector.load %arg8[%c0_38, %c32] : memref<256x36xbf16, #tpu.memory_space<vmem>>, vector<256x4xbf16>
    tpu.vector_store %arg8[%c0_38, %c32], %69 {strides = array<i32>} : memref<256x36xbf16, #tpu.memory_space<vmem>>, vector<256x4xbf16>,
    %c0_39 = arith.constant 0 : index
    %c0_40 = arith.constant 0 : index
    %71 = vector.load %arg8[%c0_39, %c0_40] : memref<256x36xbf16, #tpu.memory_space<vmem>>, vector<256x36xbf16>
    %c0_41 = arith.constant 0 : index
    %c0_42 = arith.constant 0 : index
    %72 = vector.load %arg2[%c0_41, %c0_42] : memref<36x4xbf16, #tpu.memory_space<vmem>>, vector<36x4xbf16>
    %cst_43 = arith.constant dense<0.000000e+00> : vector<256x4xf32>
    %73 = tpu.matmul %71, %72, %cst_43 {dimension_numbers = #tpu.dot_dimension_numbers<[1], [0], [0], [1], [0, 0, 1, 1], [], []>} : vector<256x36xbf16>, vector<36x4xbf16>, vector<256x4xf32> -> vector<256x4xf32>
    %c0_44 = arith.constant 0 : index
    %c0_45 = arith.constant 0 : index
    %74 = vector.load %arg3[%c0_44, %c0_45] : memref<2x4xf32, #tpu.memory_space<vmem>>, vector<1x4xf32>
    %75 = vector.broadcast %74 : vector<1x4xf32> to vector<256x4xf32>
    %76 = arith.mulf %73, %75 : vector<256x4xf32>
    %c1 = arith.constant 1 : index
    %c0_46 = arith.constant 0 : index
    %77 = vector.load %arg3[%c1, %c0_46] : memref<2x4xf32, #tpu.memory_space<vmem>>, vector<1x4xf32>
    %78 = vector.broadcast %77 : vector<1x4xf32> to vector<256x4xf32>
    %79 = arith.addf %76, %78 : vector<256x4xf32>
    %cst_47 = arith.constant 0.000000e+00 : f32
    %80 = vector.broadcast %cst_47 : f32 to vector<256x4xf32>
    %81 = arith.maximumf %79, %80 : vector<256x4xf32>
    %c24_48 = arith.constant 24 : index
    %c0_49 = arith.constant 0 : index
    %82 = vector.load %arg7[%c24_48, %c0_49] : memref<304x4xf32, #tpu.memory_space<vmem>>, vector<256x4xf32>
    tpu.vector_store %arg7[%c24_48, %c0_49], %81 {strides = array<i32>} : memref<304x4xf32, #tpu.memory_space<vmem>>, vector<256x4xf32>,
    %c7_50 = arith.constant 7 : index
    %c0_51 = arith.constant 0 : index
    %83 = vector.load %arg7[%c7_50, %c0_51] : memref<304x4xf32, #tpu.memory_space<vmem>>, vector<256x4xf32>
    %cst_52 = arith.constant 0.000000e+00 : f32
    %84 = vector.broadcast %cst_52 : f32 to vector<256x4xf32>
    %85 = arith.select %24, %83, %84 : vector<256x4xi1>, vector<256x4xf32>
    %86 = arith.truncf %85 : vector<256x4xf32> to vector<256x4xbf16>
    %c0_53 = arith.constant 0 : index
    %c0_54 = arith.constant 0 : index
    %87 = vector.load %arg8[%c0_53, %c0_54] : memref<256x36xbf16, #tpu.memory_space<vmem>>, vector<256x4xbf16>
    tpu.vector_store %arg8[%c0_53, %c0_54], %86 {strides = array<i32>} : memref<256x36xbf16, #tpu.memory_space<vmem>>, vector<256x4xbf16>,
    %c8_55 = arith.constant 8 : index
    %c0_56 = arith.constant 0 : index
    %88 = vector.load %arg7[%c8_55, %c0_56] : memref<304x4xf32, #tpu.memory_space<vmem>>, vector<256x4xf32>
    %89 = arith.truncf %88 : vector<256x4xf32> to vector<256x4xbf16>
    %c0_57 = arith.constant 0 : index
    %c4_58 = arith.constant 4 : index
    %90 = vector.load %arg8[%c0_57, %c4_58] : memref<256x36xbf16, #tpu.memory_space<vmem>>, vector<256x4xbf16>
    tpu.vector_store %arg8[%c0_57, %c4_58], %89 {strides = array<i32>} : memref<256x36xbf16, #tpu.memory_space<vmem>>, vector<256x4xbf16>,
    %c9_59 = arith.constant 9 : index
    %c0_60 = arith.constant 0 : index
    %91 = vector.load %arg7[%c9_59, %c0_60] : memref<304x4xf32, #tpu.memory_space<vmem>>, vector<256x4xf32>
    %cst_61 = arith.constant 0.000000e+00 : f32
    %92 = vector.broadcast %cst_61 : f32 to vector<256x4xf32>
    %93 = arith.select %28, %91, %92 : vector<256x4xi1>, vector<256x4xf32>
    %94 = arith.truncf %93 : vector<256x4xf32> to vector<256x4xbf16>
    %c0_62 = arith.constant 0 : index
    %c8_63 = arith.constant 8 : index
    %95 = vector.load %arg8[%c0_62, %c8_63] : memref<256x36xbf16, #tpu.memory_space<vmem>>, vector<256x4xbf16>
    tpu.vector_store %arg8[%c0_62, %c8_63], %94 {strides = array<i32>} : memref<256x36xbf16, #tpu.memory_space<vmem>>, vector<256x4xbf16>,
    %c23_64 = arith.constant 23 : index
    %c0_65 = arith.constant 0 : index
    %96 = vector.load %arg7[%c23_64, %c0_65] : memref<304x4xf32, #tpu.memory_space<vmem>>, vector<256x4xf32>
    %cst_66 = arith.constant 0.000000e+00 : f32
    %97 = vector.broadcast %cst_66 : f32 to vector<256x4xf32>
    %98 = arith.select %24, %96, %97 : vector<256x4xi1>, vector<256x4xf32>
    %99 = arith.truncf %98 : vector<256x4xf32> to vector<256x4xbf16>
    %c0_67 = arith.constant 0 : index
    %c12_68 = arith.constant 12 : index
    %100 = vector.load %arg8[%c0_67, %c12_68] : memref<256x36xbf16, #tpu.memory_space<vmem>>, vector<256x4xbf16>
    tpu.vector_store %arg8[%c0_67, %c12_68], %99 {strides = array<i32>} : memref<256x36xbf16, #tpu.memory_space<vmem>>, vector<256x4xbf16>,
    %c24_69 = arith.constant 24 : index
    %c0_70 = arith.constant 0 : index
    %101 = vector.load %arg7[%c24_69, %c0_70] : memref<304x4xf32, #tpu.memory_space<vmem>>, vector<256x4xf32>
    %102 = arith.truncf %101 : vector<256x4xf32> to vector<256x4xbf16>
    %c0_71 = arith.constant 0 : index
    %c16_72 = arith.constant 16 : index
    %103 = vector.load %arg8[%c0_71, %c16_72] : memref<256x36xbf16, #tpu.memory_space<vmem>>, vector<256x4xbf16>
    tpu.vector_store %arg8[%c0_71, %c16_72], %102 {strides = array<i32>} : memref<256x36xbf16, #tpu.memory_space<vmem>>, vector<256x4xbf16>,
    %c25_73 = arith.constant 25 : index
    %c0_74 = arith.constant 0 : index
    %104 = vector.load %arg7[%c25_73, %c0_74] : memref<304x4xf32, #tpu.memory_space<vmem>>, vector<256x4xf32>
    %cst_75 = arith.constant 0.000000e+00 : f32
    %105 = vector.broadcast %cst_75 : f32 to vector<256x4xf32>
    %106 = arith.select %28, %104, %105 : vector<256x4xi1>, vector<256x4xf32>
    %107 = arith.truncf %106 : vector<256x4xf32> to vector<256x4xbf16>
    %c0_76 = arith.constant 0 : index
    %c20_77 = arith.constant 20 : index
    %108 = vector.load %arg8[%c0_76, %c20_77] : memref<256x36xbf16, #tpu.memory_space<vmem>>, vector<256x4xbf16>
    tpu.vector_store %arg8[%c0_76, %c20_77], %107 {strides = array<i32>} : memref<256x36xbf16, #tpu.memory_space<vmem>>, vector<256x4xbf16>,
    %c39_78 = arith.constant 39 : index
    %c0_79 = arith.constant 0 : index
    %109 = vector.load %arg7[%c39_78, %c0_79] : memref<304x4xf32, #tpu.memory_space<vmem>>, vector<256x4xf32>
    %cst_80 = arith.constant 0.000000e+00 : f32
    %110 = vector.broadcast %cst_80 : f32 to vector<256x4xf32>
    %111 = arith.select %24, %109, %110 : vector<256x4xi1>, vector<256x4xf32>
    %112 = arith.truncf %111 : vector<256x4xf32> to vector<256x4xbf16>
    %c0_81 = arith.constant 0 : index
    %c24_82 = arith.constant 24 : index
    %113 = vector.load %arg8[%c0_81, %c24_82] : memref<256x36xbf16, #tpu.memory_space<vmem>>, vector<256x4xbf16>
    tpu.vector_store %arg8[%c0_81, %c24_82], %112 {strides = array<i32>} : memref<256x36xbf16, #tpu.memory_space<vmem>>, vector<256x4xbf16>,
    %c40_83 = arith.constant 40 : index
    %c0_84 = arith.constant 0 : index
    %114 = vector.load %arg7[%c40_83, %c0_84] : memref<304x4xf32, #tpu.memory_space<vmem>>, vector<256x4xf32>
    %115 = arith.truncf %114 : vector<256x4xf32> to vector<256x4xbf16>
    %c0_85 = arith.constant 0 : index
    %c28_86 = arith.constant 28 : index
    %116 = vector.load %arg8[%c0_85, %c28_86] : memref<256x36xbf16, #tpu.memory_space<vmem>>, vector<256x4xbf16>
    tpu.vector_store %arg8[%c0_85, %c28_86], %115 {strides = array<i32>} : memref<256x36xbf16, #tpu.memory_space<vmem>>, vector<256x4xbf16>,
    %c41_87 = arith.constant 41 : index
    %c0_88 = arith.constant 0 : index
    %117 = vector.load %arg7[%c41_87, %c0_88] : memref<304x4xf32, #tpu.memory_space<vmem>>, vector<256x4xf32>
    %cst_89 = arith.constant 0.000000e+00 : f32
    %118 = vector.broadcast %cst_89 : f32 to vector<256x4xf32>
    %119 = arith.select %28, %117, %118 : vector<256x4xi1>, vector<256x4xf32>
    %120 = arith.truncf %119 : vector<256x4xf32> to vector<256x4xbf16>
    %c0_90 = arith.constant 0 : index
    %c32_91 = arith.constant 32 : index
    %121 = vector.load %arg8[%c0_90, %c32_91] : memref<256x36xbf16, #tpu.memory_space<vmem>>, vector<256x4xbf16>
    tpu.vector_store %arg8[%c0_90, %c32_91], %120 {strides = array<i32>} : memref<256x36xbf16, #tpu.memory_space<vmem>>, vector<256x4xbf16>,
    %c0_92 = arith.constant 0 : index
    %c0_93 = arith.constant 0 : index
    %122 = vector.load %arg8[%c0_92, %c0_93] : memref<256x36xbf16, #tpu.memory_space<vmem>>, vector<256x36xbf16>
    %c0_94 = arith.constant 0 : index
    %c0_95 = arith.constant 0 : index
    %123 = vector.load %arg4[%c0_94, %c0_95] : memref<36x4xbf16, #tpu.memory_space<vmem>>, vector<36x4xbf16>
    %cst_96 = arith.constant dense<0.000000e+00> : vector<256x4xf32>
    %124 = tpu.matmul %122, %123, %cst_96 {dimension_numbers = #tpu.dot_dimension_numbers<[1], [0], [0], [1], [0, 0, 1, 1], [], []>} : vector<256x36xbf16>, vector<36x4xbf16>, vector<256x4xf32> -> vector<256x4xf32>
    %c0_97 = arith.constant 0 : index
    %c0_98 = arith.constant 0 : index
    %125 = vector.load %arg5[%c0_97, %c0_98] : memref<2x4xf32, #tpu.memory_space<vmem>>, vector<1x4xf32>
    %126 = vector.broadcast %125 : vector<1x4xf32> to vector<256x4xf32>
    %127 = arith.mulf %124, %126 : vector<256x4xf32>
    %c1_99 = arith.constant 1 : index
    %c0_100 = arith.constant 0 : index
    %128 = vector.load %arg5[%c1_99, %c0_100] : memref<2x4xf32, #tpu.memory_space<vmem>>, vector<1x4xf32>
    %129 = vector.broadcast %128 : vector<1x4xf32> to vector<256x4xf32>
    %130 = arith.addf %127, %129 : vector<256x4xf32>
    %c0_101 = arith.constant 0 : index
    %c0_102 = arith.constant 0 : index
    %c0_103 = arith.constant 0 : index
    %131 = vector.load %arg1[%c0_101, %c0_102, %c0_103] : memref<1x256x4xf32, #tpu.memory_space<vmem>>, vector<1x256x4xf32>
    %132 = vector.shape_cast %131 : vector<1x256x4xf32> to vector<256x4xf32>
    %133 = arith.addf %130, %132 : vector<256x4xf32>
    %cst_104 = arith.constant 0.000000e+00 : f32
    %134 = vector.broadcast %cst_104 : f32 to vector<256x4xf32>
    %135 = arith.maximumf %133, %134 : vector<256x4xf32>
    %c0_105 = arith.constant 0 : index
    %c0_106 = arith.constant 0 : index
    %c0_107 = arith.constant 0 : index
    %136 = vector.load %arg6[%c0_105, %c0_106, %c0_107] : memref<1x256x4xf32, #tpu.memory_space<vmem>>, vector<1x256x4xf32>
    %137 = vector.shape_cast %136 : vector<1x256x4xf32> to vector<256x4xf32>
    %138 = vector.shape_cast %135 : vector<256x4xf32> to vector<1x256x4xf32>
    tpu.vector_store %arg6[%c0_105, %c0_106, %c0_107], %138 {strides = array<i32>} : memref<1x256x4xf32, #tpu.memory_space<vmem>>, vector<1x256x4xf32>,
    return
  }
  func.func @transform_0(%arg0: i32) -> (i32, i32, i32) {
    %c0_i32 = arith.constant 0 : i32
    %c0_i32_0 = arith.constant 0 : i32
    %c0_i32_1 = arith.constant 0 : i32
    return %arg0, %c0_i32, %c0_i32_0 : i32, i32, i32
  }
  func.func @transform_1(%arg0: i32) -> (i32, i32) {
    %c0_i32 = arith.constant 0 : i32
    %c0_i32_0 = arith.constant 0 : i32
    %c0_i32_1 = arith.constant 0 : i32
    return %c0_i32, %c0_i32_0 : i32, i32
  }
  func.func @transform_2(%arg0: i32) -> (i32, i32) {
    %c0_i32 = arith.constant 0 : i32
    %c0_i32_0 = arith.constant 0 : i32
    %c0_i32_1 = arith.constant 0 : i32
    return %c0_i32, %c0_i32_0 : i32, i32
  }
  func.func @transform_3(%arg0: i32) -> (i32, i32) {
    %c0_i32 = arith.constant 0 : i32
    %c0_i32_0 = arith.constant 0 : i32
    %c0_i32_1 = arith.constant 0 : i32
    return %c0_i32, %c0_i32_0 : i32, i32
  }
  func.func @transform_4(%arg0: i32) -> (i32, i32) {
    %c0_i32 = arith.constant 0 : i32
    %c0_i32_0 = arith.constant 0 : i32
    %c0_i32_1 = arith.constant 0 : i32
    return %c0_i32, %c0_i32_0 : i32, i32
  }
  func.func @transform_5(%arg0: i32) -> (i32, i32, i32) {
    %c0_i32 = arith.constant 0 : i32
    %c0_i32_0 = arith.constant 0 : i32
    %c0_i32_1 = arith.constant 0 : i32
    return %arg0, %c0_i32, %c0_i32_0 : i32, i32, i32
  }
}

</mosaic_0001>

<llo_original>
// kernel: tpu_custom_call.1
$region0: #{tpu_custom_call.1}
  #allocation0 [shape = 'u32[]', space=smem, size = 0x4, offset = 0x4, fixed_abs, tag = 'smem constant byte address 0x4 - core index']
  #allocation1 [shape = 'u32[144,128]{1,0:T(1,128)}', space=vmem, size = 0x12000, scoped, tag = 'internal scratch']
  #allocation2 [shape = 'f32[304,4]{1,0:T(8,128)}', space=vmem, size = 0x26000, scoped, tag = 'scratch operand']
  #allocation3 [shape = 'bf16[256,36]{1,0:T(8,128)(2,1)}', space=vmem, size = 0x10000, scoped, tag = 'scratch operand']
  %s0 = inlined_call_operand.vmem [shape: f32[2,256,4], index: 0, kind: input, shape index: {}]
  %s1 = inlined_call_operand.vmem [shape: bf16[36,4], index: 1, kind: input, shape index: {}]
  %s2 = inlined_call_operand.vmem [shape: f32[2,4], index: 2, kind: input, shape index: {}]
  %s3 = inlined_call_operand.vmem [shape: bf16[36,4], index: 3, kind: input, shape index: {}]
  %s4 = inlined_call_operand.vmem [shape: f32[2,4], index: 4, kind: input, shape index: {}]
  %s5 = inlined_call_operand.vmem [shape: f32[2,256,4], index: 5, kind: output, shape index: {}]
  %s6 = sld [smem:[#allocation0]]
  $region53: #{tpu_custom_call.1} parent=0
    _
  %s8 = ssub.s32 1, %s6
  %s9 = scalar_select 0, %s8, %s6
  loop: start=0, step=1, limit=4
  $region2: #{tpu_custom_call.1} parent=0 // loop_pre_header
    _
  $region3: #{tpu_custom_call.1} parent=0 // loop_header
    %s11 = sphi 0, %s15
    %p12 = scmp.ge.s32.totalorder %s11, 4
    %s21 = sphi 0, %s23
    %s24 = sphi 0, %s21
    %s25 = sphi 0, %s24
    %s41 = sphi 0, %s25
    %s45 = sphi 0, %s45
    %s47 = sphi 0, %s45
    %s48 = sphi 0, %s47
    %s62 = sphi 0, %s48
    %s66 = sphi 0, %s66
    %s68 = sphi 0, %s66
    %s69 = sphi 0, %s68
    %s83 = sphi 0, %s69
    %s87 = sphi 0, %s87
    %s89 = sphi 0, %s87
    %s90 = sphi 0, %s89
    %s104 = sphi 0, %s90
    %s108 = sphi 0, %s108
    %s110 = sphi 0, %s108
    %s111 = sphi 0, %s110
    %s125 = sphi 0, %s111
    %s131 = sphi 0, %s133
    %s134 = sphi 0, %s131
    %s135 = sphi 0, %s134
    %s151 = sphi 0, %s135
  $region4: #{tpu_custom_call.1} parent=0 // loop_header_branch
    %14 = sbr.rel (%p12) target = $region8
  $region5: #{tpu_custom_call.1} parent=0 // loop_body
    %s16 = ssub.s32 %s11, 1
    %s17 = ssub.s32 %s11, 2
    %s18 = sadd.s32 %s11, 1
    %s19 = ssub.s32 %s11, %s18
    %p20 = scmp.eq.s32.totalorder %s19, 0
    %s22 = sadd.s32 %s21, 1
    %s23 = scalar_select %p20, %s21, %s22
    %p26 = pneg %p20
    %p27 = scmp.eq.s32.totalorder %s11, 1
    %p28 = por %p26, %p27
    %p29 = scmp.ne.s32.totalorder %s21, %s24
    %p30 = scmp.eq.s32.totalorder %s11, 0
    %p31 = por %p29, %p30
    %p32 = scmp.ne.s32.totalorder %s21, %s24
    %p33 = scmp.eq.s32.totalorder %s16, 1
    %p34 = por %p32, %p33
    %p35 = scmp.ne.s32.totalorder %s24, %s25
    %p36 = scmp.eq.s32.totalorder %s16, 0
    %p37 = por %p35, %p36
    %p38 = scmp.ne.s32.totalorder %s24, %s25
    %p39 = scmp.eq.s32.totalorder %s17, 1
    %p40 = por %p38, %p39
    %p42 = scmp.ne.s32.totalorder %s25, %s41
    %p43 = scmp.eq.s32.totalorder %s17, 0
    %p44 = por %p42, %p43
    %s46 = sadd.s32 %s45, 1
    %p49 = scmp.eq.s32.totalorder %s11, 1
    %p50 = scmp.ne.s32.totalorder %s45, %s47
    %p51 = scmp.eq.s32.totalorder %s11, 0
    %p52 = por %p50, %p51
    %p53 = scmp.ne.s32.totalorder %s45, %s47
    %p54 = scmp.eq.s32.totalorder %s16, 1
    %p55 = por %p53, %p54
    %p56 = scmp.ne.s32.totalorder %s47, %s48
    %p57 = scmp.eq.s32.totalorder %s16, 0
    %p58 = por %p56, %p57
    %p59 = scmp.ne.s32.totalorder %s47, %s48
    %p60 = scmp.eq.s32.totalorder %s17, 1
    %p61 = por %p59, %p60
    %p63 = scmp.ne.s32.totalorder %s48, %s62
    %p64 = scmp.eq.s32.totalorder %s17, 0
    %p65 = por %p63, %p64
    %s67 = sadd.s32 %s66, 1
    %p70 = scmp.eq.s32.totalorder %s11, 1
    %p71 = scmp.ne.s32.totalorder %s66, %s68
    %p72 = scmp.eq.s32.totalorder %s11, 0
    %p73 = por %p71, %p72
    %p74 = scmp.ne.s32.totalorder %s66, %s68
    %p75 = scmp.eq.s32.totalorder %s16, 1
    %p76 = por %p74, %p75
    %p77 = scmp.ne.s32.totalorder %s68, %s69
    %p78 = scmp.eq.s32.totalorder %s16, 0
    %p79 = por %p77, %p78
    %p80 = scmp.ne.s32.totalorder %s68, %s69
    %p81 = scmp.eq.s32.totalorder %s17, 1
    %p82 = por %p80, %p81
    %p84 = scmp.ne.s32.totalorder %s69, %s83
    %p85 = scmp.eq.s32.totalorder %s17, 0
    %p86 = por %p84, %p85
    %s88 = sadd.s32 %s87, 1
    %p91 = scmp.eq.s32.totalorder %s11, 1
    %p92 = scmp.ne.s32.totalorder %s87, %s89
    %p93 = scmp.eq.s32.totalorder %s11, 0
    %p94 = por %p92, %p93
    %p95 = scmp.ne.s32.totalorder %s87, %s89
    %p96 = scmp.eq.s32.totalorder %s16, 1
    %p97 = por %p95, %p96
    %p98 = scmp.ne.s32.totalorder %s89, %s90
    %p99 = scmp.eq.s32.totalorder %s16, 0
    %p100 = por %p98, %p99
    %p101 = scmp.ne.s32.totalorder %s89, %s90
    %p102 = scmp.eq.s32.totalorder %s17, 1
    %p103 = por %p101, %p102
    %p105 = scmp.ne.s32.totalorder %s90, %s104
    %p106 = scmp.eq.s32.totalorder %s17, 0
    %p107 = por %p105, %p106
    %s109 = sadd.s32 %s108, 1
    %p112 = scmp.eq.s32.totalorder %s11, 1
    %p113 = scmp.ne.s32.totalorder %s108, %s110
    %p114 = scmp.eq.s32.totalorder %s11, 0
    %p115 = por %p113, %p114
    %p116 = scmp.ne.s32.totalorder %s108, %s110
    %p117 = scmp.eq.s32.totalorder %s16, 1
    %p118 = por %p116, %p117
    %p119 = scmp.ne.s32.totalorder %s110, %s111
    %p120 = scmp.eq.s32.totalorder %s16, 0
    %p121 = por %p119, %p120
    %p122 = scmp.ne.s32.totalorder %s110, %s111
    %p123 = scmp.eq.s32.totalorder %s17, 1
    %p124 = por %p122, %p123
    %p126 = scmp.ne.s32.totalorder %s111, %s125
    %p127 = scmp.eq.s32.totalorder %s17, 0
    %p128 = por %p126, %p127
    %s129 = ssub.s32 %s11, %s18
    %p130 = scmp.eq.s32.totalorder %s129, 0
    %s132 = sadd.s32 %s131, 1
    %s133 = scalar_select %p130, %s131, %s132
    %p136 = pneg %p130
    %p137 = scmp.eq.s32.totalorder %s11, 1
    %p138 = por %p136, %p137
    %p139 = scmp.ne.s32.totalorder %s131, %s134
    %p140 = scmp.eq.s32.totalorder %s11, 0
    %p141 = por %p139, %p140
    %p142 = scmp.ne.s32.totalorder %s131, %s134
    %p143 = scmp.eq.s32.totalorder %s16, 1
    %p144 = por %p142, %p143
    %p145 = scmp.ne.s32.totalorder %s134, %s135
    %p146 = scmp.eq.s32.totalorder %s16, 0
    %p147 = por %p145, %p146
    %p148 = scmp.ne.s32.totalorder %s134, %s135
    %p149 = scmp.eq.s32.totalorder %s17, 1
    %p150 = por %p148, %p149
    %p152 = scmp.ne.s32.totalorder %s135, %s151
    %p153 = scmp.eq.s32.totalorder %s17, 0
    %p154 = por %p152, %p153
    %p155 = scmp.le.s32.totalorder 1, %s11
    %p156 = scmp.lt.s32.totalorder %s11, 3
    %p157 = pnand %p155, %p156
    %p158 = pneg %p157
    // Predicated region
    $region9: #{tpu_custom_call.1} parent=5 // pred_check
      _
    $region10: #{tpu_custom_call.1} parent=5 // pred_check_branch
      %160 = sbr.rel (%p157) target = $region12
    $region11: #{tpu_custom_call.1} parent=5 // pred_region
      %s161 = ssub.s32 %s11, 1
      // Predicated region
      $region13: #{tpu_custom_call.1} parent=11 // pred_check
        %p162 = pneg %p58
      $region14: #{tpu_custom_call.1} parent=11 // pred_check_branch
        %164 = sbr.rel (%p162) target = $region16
      $region15: #{tpu_custom_call.1} parent=11 // pred_region
        _
      $region16: #{tpu_custom_call.1} parent=11 // pred_fallthru
        _
      // Predicated region
      $region17: #{tpu_custom_call.1} parent=11 // pred_check
        %p165 = pneg %p79
      $region18: #{tpu_custom_call.1} parent=11 // pred_check_branch
        %167 = sbr.rel (%p165) target = $region20
      $region19: #{tpu_custom_call.1} parent=11 // pred_region
        _
      $region20: #{tpu_custom_call.1} parent=11 // pred_fallthru
        _
      // Predicated region
      $region21: #{tpu_custom_call.1} parent=11 // pred_check
        %p168 = pneg %p100
      $region22: #{tpu_custom_call.1} parent=11 // pred_check_branch
        %170 = sbr.rel (%p168) target = $region24
      $region23: #{tpu_custom_call.1} parent=11 // pred_region
        _
      $region24: #{tpu_custom_call.1} parent=11 // pred_fallthru
        _
      // Predicated region
      $region25: #{tpu_custom_call.1} parent=11 // pred_check
        %p171 = pneg %p121
      $region26: #{tpu_custom_call.1} parent=11 // pred_check_branch
        %173 = sbr.rel (%p171) target = $region28
      $region27: #{tpu_custom_call.1} parent=11 // pred_region
        _
      $region28: #{tpu_custom_call.1} parent=11 // pred_fallthru
        _
    $region12: #{tpu_custom_call.1} parent=5 // pred_fallthru
      _
    %p174 = scmp.lt.s32.totalorder %s11, 2
    // Predicated region
    $region29: #{tpu_custom_call.1} parent=5 // pred_check
      %p175 = pneg %p174
    $region30: #{tpu_custom_call.1} parent=5 // pred_check_branch
      %177 = sbr.rel (%p175) target = $region32
    $region31: #{tpu_custom_call.1} parent=5 // pred_region
      // Predicated region
      $region33: #{tpu_custom_call.1} parent=31 // pred_check
        %p178 = pneg %p31
      $region34: #{tpu_custom_call.1} parent=31 // pred_check_branch
        %180 = sbr.rel (%p178) target = $region36
      $region35: #{tpu_custom_call.1} parent=31 // pred_region
        %p181 = scmp.lt.s32.totalorder %s11, 1
        %s182 = scalar_select %p181, %s11, 1
        %s183 = smul.addr %s182, 32
        %s184 = smul.addr %s183, 8
        %s185 = scalar_lea.vmem %s0, %s184
      $region36: #{tpu_custom_call.1} parent=31 // pred_fallthru
        _
    $region32: #{tpu_custom_call.1} parent=5 // pred_fallthru
      _
    %p186 = scmp.le.s32.totalorder 1, %s11
    %p187 = scmp.lt.s32.totalorder %s11, 3
    %p188 = pnand %p186, %p187
    %p189 = pneg %p188
    // Predicated region
    $region37: #{tpu_custom_call.1} parent=5 // pred_check
      _
    $region38: #{tpu_custom_call.1} parent=5 // pred_check_branch
      %191 = sbr.rel (%p188) target = $region40
    $region39: #{tpu_custom_call.1} parent=5 // pred_region
      %s192 = ssub.s32 %s11, 1
      %p193 = scmp.lt.s32.totalorder %s16, 1
      %s194 = scalar_select %p193, %s16, 1
      %s195 = smul.addr %s194, 32
      %s196 = smul.addr %s195, 8
      %s197 = scalar_lea.vmem %s0, %s196
      %p198 = pneg %p37
      %p199 = pneg %p34
      %p200 = pneg %p58
      %p201 = pneg %p55
      %p202 = pneg %p79
      %p203 = pneg %p76
      %p204 = pneg %p100
      %p205 = pneg %p97
      %p206 = pneg %p121
      %p207 = pneg %p118
      %p208 = pneg %p147
      %p209 = pneg %p144
      %p210 = scmp.lt.s32.totalorder %s16, 1
      %s211 = scalar_select %p210, %s16, 1
      %s212 = smul.addr %s211, 32
      %s213 = smul.addr %s212, 8
      %s214 = scalar_lea.vmem %s5, %s213
      %p215 = scmp.lt.s32.totalorder %s16, 1
      %s216 = scalar_select %p215, %s16, 1
      %s217 = smul.addr %s216, 32
      %s218 = smul.addr %s217, 8
      %s219 = scalar_lea.vmem %s0, %s218
      %p220 = scmp.lt.s32.totalorder %s16, 1
      %s221 = scalar_select %p220, %s16, 1
      %s222 = smul.addr %s221, 32
      %s223 = smul.addr %s222, 8
      %s224 = scalar_lea.vmem %s5, %s223
      %vm226 = vcmask 31744
      %227 = vst.msk [vmem:[#allocation2] sm:$0xff] %vm226, 0.0
      %228 = vst.msk [vmem:[#allocation2 + $0x8] sm:$0xff] %vm226, 0.0
      %229 = vst.msk [vmem:[#allocation2 + $0x10] sm:$0xff] %vm226, 0.0
      %230 = vst.msk [vmem:[#allocation2 + $0x118] sm:$0xff] %vm226, 0.0
      %231 = vst.msk [vmem:[#allocation2 + $0x120] sm:$0xff] %vm226, 0.0
      %232 = vst.msk [vmem:[#allocation2 + $0x128] sm:$0xff] %vm226, 0.0
      %v233 = vlaneseq
      %v234 = vshrl.u32 %v233, 7
      %v235 = vadd.s32 %v234, 8
      %v236 = vadd.s32 %v234, 16
      %v237 = vadd.s32 %v234, 24
      %v238 = vadd.s32 %v234, 32
      %v239 = vadd.s32 %v234, 40
      %v240 = vadd.s32 %v234, 48
      %v241 = vadd.s32 %v234, 56
      %v242 = vadd.s32 %v234, 64
      %v243 = vadd.s32 %v234, 72
      %v244 = vadd.s32 %v234, 80
      %v245 = vadd.s32 %v234, 88
      %v246 = vadd.s32 %v234, 96
      %v247 = vadd.s32 %v234, 104
      %v248 = vadd.s32 %v234, 112
      %v249 = vadd.s32 %v234, 120
      %v250 = vadd.s32 %v234, 128
      %v251 = vadd.s32 %v234, 136
      %v252 = vadd.s32 %v234, 144
      %v253 = vadd.s32 %v234, 152
      %v254 = vadd.s32 %v234, 160
      %v255 = vadd.s32 %v234, 168
      %v256 = vadd.s32 %v234, 176
      %v257 = vadd.s32 %v234, 184
      %v258 = vadd.s32 %v234, 192
      %v259 = vadd.s32 %v234, 200
      %v260 = vadd.s32 %v234, 208
      %v261 = vadd.s32 %v234, 216
      %v262 = vadd.s32 %v234, 224
      %v263 = vadd.s32 %v234, 232
      %v264 = vadd.s32 %v234, 240
      %v265 = vadd.s32 %v234, 248
      %vm266 = vcmp.lt.s32.totalorder %v234, 0
      %v267 = vsub.s32 0, %v234
      %v268 = vsel %vm266, %v267, %v234
      %v269 = vshrl.u32 %v268, 4
      %v270 = vand.u32 %v268, 15
      %v271 = vsub.s32 0, %v270
      %v272 = vsel %vm266, %v271, %v270
      %vm273 = vcmp.lt.s32.totalorder %v235, 0
      %v274 = vsub.s32 0, %v235
      %v275 = vsel %vm273, %v274, %v235
      %v276 = vshrl.u32 %v275, 4
      %v277 = vand.u32 %v275, 15
      %v278 = vsub.s32 0, %v277
      %v279 = vsel %vm273, %v278, %v277
      %vm280 = vcmp.lt.s32.totalorder %v236, 0
      %v281 = vsub.s32 0, %v236
      %v282 = vsel %vm280, %v281, %v236
      %v283 = vshrl.u32 %v282, 4
      %v284 = vand.u32 %v282, 15
      %v285 = vsub.s32 0, %v284
      %v286 = vsel %vm280, %v285, %v284
      %vm287 = vcmp.lt.s32.totalorder %v237, 0
      %v288 = vsub.s32 0, %v237
      %v289 = vsel %vm287, %v288, %v237
      %v290 = vshrl.u32 %v289, 4
      %v291 = vand.u32 %v289, 15
      %v292 = vsub.s32 0, %v291
      %v293 = vsel %vm287, %v292, %v291
      %vm294 = vcmp.lt.s32.totalorder %v238, 0
      %v295 = vsub.s32 0, %v238
      %v296 = vsel %vm294, %v295, %v238
      %v297 = vshrl.u32 %v296, 4
      %v298 = vand.u32 %v296, 15
      %v299 = vsub.s32 0, %v298
      %v300 = vsel %vm294, %v299, %v298
      %vm301 = vcmp.lt.s32.totalorder %v239, 0
      %v302 = vsub.s32 0, %v239
      %v303 = vsel %vm301, %v302, %v239
      %v304 = vshrl.u32 %v303, 4
      %v305 = vand.u32 %v303, 15
      %v306 = vsub.s32 0, %v305
      %v307 = vsel %vm301, %v306, %v305
      %vm308 = vcmp.lt.s32.totalorder %v240, 0
      %v309 = vsub.s32 0, %v240
      %v310 = vsel %vm308, %v309, %v240
      %v311 = vshrl.u32 %v310, 4
      %v312 = vand.u32 %v310, 15
      %v313 = vsub.s32 0, %v312
      %v314 = vsel %vm308, %v313, %v312
      %vm315 = vcmp.lt.s32.totalorder %v241, 0
      %v316 = vsub.s32 0, %v241
      %v317 = vsel %vm315, %v316, %v241
      %v318 = vshrl.u32 %v317, 4
      %v319 = vand.u32 %v317, 15
      %v320 = vsub.s32 0, %v319
      %v321 = vsel %vm315, %v320, %v319
      %vm322 = vcmp.lt.s32.totalorder %v242, 0
      %v323 = vsub.s32 0, %v242
      %v324 = vsel %vm322, %v323, %v242
      %v325 = vshrl.u32 %v324, 4
      %v326 = vand.u32 %v324, 15
      %v327 = vsub.s32 0, %v326
      %v328 = vsel %vm322, %v327, %v326
      %vm329 = vcmp.lt.s32.totalorder %v243, 0
      %v330 = vsub.s32 0, %v243
      %v331 = vsel %vm329, %v330, %v243
      %v332 = vshrl.u32 %v331, 4
      %v333 = vand.u32 %v331, 15
      %v334 = vsub.s32 0, %v333
      %v335 = vsel %vm329, %v334, %v333
      %vm336 = vcmp.lt.s32.totalorder %v244, 0
      %v337 = vsub.s32 0, %v244
      %v338 = vsel %vm336, %v337, %v244
      %v339 = vshrl.u32 %v338, 4
      %v340 = vand.u32 %v338, 15
      %v341 = vsub.s32 0, %v340
      %v342 = vsel %vm336, %v341, %v340
      %vm343 = vcmp.lt.s32.totalorder %v245, 0
      %v344 = vsub.s32 0, %v245
      %v345 = vsel %vm343, %v344, %v245
      %v346 = vshrl.u32 %v345, 4
      %v347 = vand.u32 %v345, 15
      %v348 = vsub.s32 0, %v347
      %v349 = vsel %vm343, %v348, %v347
      %vm350 = vcmp.lt.s32.totalorder %v246, 0
      %v351 = vsub.s32 0, %v246
      %v352 = vsel %vm350, %v351, %v246
      %v353 = vshrl.u32 %v352, 4
      %v354 = vand.u32 %v352, 15
      %v355 = vsub.s32 0, %v354
      %v356 = vsel %vm350, %v355, %v354
      %vm357 = vcmp.lt.s32.totalorder %v247, 0
      %v358 = vsub.s32 0, %v247
      %v359 = vsel %vm357, %v358, %v247
      %v360 = vshrl.u32 %v359, 4
      %v361 = vand.u32 %v359, 15
      %v362 = vsub.s32 0, %v361
      %v363 = vsel %vm357, %v362, %v361
      %vm364 = vcmp.lt.s32.totalorder %v248, 0
      %v365 = vsub.s32 0, %v248
      %v366 = vsel %vm364, %v365, %v248
      %v367 = vshrl.u32 %v366, 4
      %v368 = vand.u32 %v366, 15
      %v369 = vsub.s32 0, %v368
      %v370 = vsel %vm364, %v369, %v368
      %vm371 = vcmp.lt.s32.totalorder %v249, 0
      %v372 = vsub.s32 0, %v249
      %v373 = vsel %vm371, %v372, %v249
      %v374 = vshrl.u32 %v373, 4
      %v375 = vand.u32 %v373, 15
      %v376 = vsub.s32 0, %v375
      %v377 = vsel %vm371, %v376, %v375
      %vm378 = vcmp.lt.s32.totalorder %v250, 0
      %v379 = vsub.s32 0, %v250
      %v380 = vsel %vm378, %v379, %v250
      %v381 = vshrl.u32 %v380, 4
      %v382 = vand.u32 %v380, 15
      %v383 = vsub.s32 0, %v382
      %v384 = vsel %vm378, %v383, %v382
      %vm385 = vcmp.lt.s32.totalorder %v251, 0
      %v386 = vsub.s32 0, %v251
      %v387 = vsel %vm385, %v386, %v251
      %v388 = vshrl.u32 %v387, 4
      %v389 = vand.u32 %v387, 15
      %v390 = vsub.s32 0, %v389
      %v391 = vsel %vm385, %v390, %v389
      %vm392 = vcmp.lt.s32.totalorder %v252, 0
      %v393 = vsub.s32 0, %v252
      %v394 = vsel %vm392, %v393, %v252
      %v395 = vshrl.u32 %v394, 4
      %v396 = vand.u32 %v394, 15
      %v397 = vsub.s32 0, %v396
      %v398 = vsel %vm392, %v397, %v396
      %vm399 = vcmp.lt.s32.totalorder %v253, 0
      %v400 = vsub.s32 0, %v253
      %v401 = vsel %vm399, %v400, %v253
      %v402 = vshrl.u32 %v401, 4
      %v403 = vand.u32 %v401, 15
      %v404 = vsub.s32 0, %v403
      %v405 = vsel %vm399, %v404, %v403
      %vm406 = vcmp.lt.s32.totalorder %v254, 0
      %v407 = vsub.s32 0, %v254
      %v408 = vsel %vm406, %v407, %v254
      %v409 = vshrl.u32 %v408, 4
      %v410 = vand.u32 %v408, 15
      %v411 = vsub.s32 0, %v410
      %v412 = vsel %vm406, %v411, %v410
      %vm413 = vcmp.lt.s32.totalorder %v255, 0
      %v414 = vsub.s32 0, %v255
      %v415 = vsel %vm413, %v414, %v255
      %v416 = vshrl.u32 %v415, 4
      %v417 = vand.u32 %v415, 15
      %v418 = vsub.s32 0, %v417
      %v419 = vsel %vm413, %v418, %v417
      %vm420 = vcmp.lt.s32.totalorder %v256, 0
      %v421 = vsub.s32 0, %v256
      %v422 = vsel %vm420, %v421, %v256
      %v423 = vshrl.u32 %v422, 4
      %v424 = vand.u32 %v422, 15
      %v425 = vsub.s32 0, %v424
      %v426 = vsel %vm420, %v425, %v424
      %vm427 = vcmp.lt.s32.totalorder %v257, 0
      %v428 = vsub.s32 0, %v257
      %v429 = vsel %vm427, %v428, %v257
      %v430 = vshrl.u32 %v429, 4
      %v431 = vand.u32 %v429, 15
      %v432 = vsub.s32 0, %v431
      %v433 = vsel %vm427, %v432, %v431
      %vm434 = vcmp.lt.s32.totalorder %v258, 0
      %v435 = vsub.s32 0, %v258
      %v436 = vsel %vm434, %v435, %v258
      %v437 = vshrl.u32 %v436, 4
      %v438 = vand.u32 %v436, 15
      %v439 = vsub.s32 0, %v438
      %v440 = vsel %vm434, %v439, %v438
      %vm441 = vcmp.lt.s32.totalorder %v259, 0
      %v442 = vsub.s32 0, %v259
      %v443 = vsel %vm441, %v442, %v259
      %v444 = vshrl.u32 %v443, 4
      %v445 = vand.u32 %v443, 15
      %v446 = vsub.s32 0, %v445
      %v447 = vsel %vm441, %v446, %v445
      %vm448 = vcmp.lt.s32.totalorder %v260, 0
      %v449 = vsub.s32 0, %v260
      %v450 = vsel %vm448, %v449, %v260
      %v451 = vshrl.u32 %v450, 4
      %v452 = vand.u32 %v450, 15
      %v453 = vsub.s32 0, %v452
      %v454 = vsel %vm448, %v453, %v452
      %vm455 = vcmp.lt.s32.totalorder %v261, 0
      %v456 = vsub.s32 0, %v261
      %v457 = vsel %vm455, %v456, %v261
      %v458 = vshrl.u32 %v457, 4
      %v459 = vand.u32 %v457, 15
      %v460 = vsub.s32 0, %v459
      %v461 = vsel %vm455, %v460, %v459
      %vm462 = vcmp.lt.s32.totalorder %v262, 0
      %v463 = vsub.s32 0, %v262
      %v464 = vsel %vm462, %v463, %v262
      %v465 = vshrl.u32 %v464, 4
      %v466 = vand.u32 %v464, 15
      %v467 = vsub.s32 0, %v466
      %v468 = vsel %vm462, %v467, %v466
      %vm469 = vcmp.lt.s32.totalorder %v263, 0
      %v470 = vsub.s32 0, %v263
      %v471 = vsel %vm469, %v470, %v263
      %v472 = vshrl.u32 %v471, 4
      %v473 = vand.u32 %v471, 15
      %v474 = vsub.s32 0, %v473
      %v475 = vsel %vm469, %v474, %v473
      %vm476 = vcmp.lt.s32.totalorder %v264, 0
      %v477 = vsub.s32 0, %v264
      %v478 = vsel %vm476, %v477, %v264
      %v479 = vshrl.u32 %v478, 4
      %v480 = vand.u32 %v478, 15
      %v481 = vsub.s32 0, %v480
      %v482 = vsel %vm476, %v481, %v480
      %vm483 = vcmp.lt.s32.totalorder %v265, 0
      %v484 = vsub.s32 0, %v265
      %v485 = vsel %vm483, %v484, %v265
      %v486 = vshrl.u32 %v485, 4
      %v487 = vand.u32 %v485, 15
      %v488 = vsub.s32 0, %v487
      %v489 = vsel %vm483, %v488, %v487
      %vm490 = vcmp.ne.s32.totalorder %v272, 0
      %vm491 = vcmp.ne.s32.totalorder %v279, 0
      %vm492 = vcmp.ne.s32.totalorder %v286, 0
      %vm493 = vcmp.ne.s32.totalorder %v293, 0
      %vm494 = vcmp.ne.s32.totalorder %v300, 0
      %vm495 = vcmp.ne.s32.totalorder %v307, 0
      %vm496 = vcmp.ne.s32.totalorder %v314, 0
      %vm497 = vcmp.ne.s32.totalorder %v321, 0
      %vm498 = vcmp.ne.s32.totalorder %v328, 0
      %vm499 = vcmp.ne.s32.totalorder %v335, 0
      %vm500 = vcmp.ne.s32.totalorder %v342, 0
      %vm501 = vcmp.ne.s32.totalorder %v349, 0
      %vm502 = vcmp.ne.s32.totalorder %v356, 0
      %vm503 = vcmp.ne.s32.totalorder %v363, 0
      %vm504 = vcmp.ne.s32.totalorder %v370, 0
      %vm505 = vcmp.ne.s32.totalorder %v377, 0
      %vm506 = vcmp.ne.s32.totalorder %v384, 0
      %vm507 = vcmp.ne.s32.totalorder %v391, 0
      %vm508 = vcmp.ne.s32.totalorder %v398, 0
      %vm509 = vcmp.ne.s32.totalorder %v405, 0
      %vm510 = vcmp.ne.s32.totalorder %v412, 0
      %vm511 = vcmp.ne.s32.totalorder %v419, 0
      %vm512 = vcmp.ne.s32.totalorder %v426, 0
      %vm513 = vcmp.ne.s32.totalorder %v433, 0
      %vm514 = vcmp.ne.s32.totalorder %v440, 0
      %vm515 = vcmp.ne.s32.totalorder %v447, 0
      %vm516 = vcmp.ne.s32.totalorder %v454, 0
      %vm517 = vcmp.ne.s32.totalorder %v461, 0
      %vm518 = vcmp.ne.s32.totalorder %v468, 0
      %vm519 = vcmp.ne.s32.totalorder %v475, 0
      %vm520 = vcmp.ne.s32.totalorder %v482, 0
      %vm521 = vcmp.ne.s32.totalorder %v489, 0
      %vm522 = vcmp.lt.s32.totalorder %v272, 0
      %vm523 = vcmp.lt.s32.totalorder %v279, 0
      %vm524 = vcmp.lt.s32.totalorder %v286, 0
      %vm525 = vcmp.lt.s32.totalorder %v293, 0
      %vm526 = vcmp.lt.s32.totalorder %v300, 0
      %vm527 = vcmp.lt.s32.totalorder %v307, 0
      %vm528 = vcmp.lt.s32.totalorder %v314, 0
      %vm529 = vcmp.lt.s32.totalorder %v321, 0
      %vm530 = vcmp.lt.s32.totalorder %v328, 0
      %vm531 = vcmp.lt.s32.totalorder %v335, 0
      %vm532 = vcmp.lt.s32.totalorder %v342, 0
      %vm533 = vcmp.lt.s32.totalorder %v349, 0
      %vm534 = vcmp.lt.s32.totalorder %v356, 0
      %vm535 = vcmp.lt.s32.totalorder %v363, 0
      %vm536 = vcmp.lt.s32.totalorder %v370, 0
      %vm537 = vcmp.lt.s32.totalorder %v377, 0
      %vm538 = vcmp.lt.s32.totalorder %v384, 0
      %vm539 = vcmp.lt.s32.totalorder %v391, 0
      %vm540 = vcmp.lt.s32.totalorder %v398, 0
      %vm541 = vcmp.lt.s32.totalorder %v405, 0
      %vm542 = vcmp.lt.s32.totalorder %v412, 0
      %vm543 = vcmp.lt.s32.totalorder %v419, 0
      %vm544 = vcmp.lt.s32.totalorder %v426, 0
      %vm545 = vcmp.lt.s32.totalorder %v433, 0
      %vm546 = vcmp.lt.s32.totalorder %v440, 0
      %vm547 = vcmp.lt.s32.totalorder %v447, 0
      %vm548 = vcmp.lt.s32.totalorder %v454, 0
      %vm549 = vcmp.lt.s32.totalorder %v461, 0
      %vm550 = vcmp.lt.s32.totalorder %v468, 0
      %vm551 = vcmp.lt.s32.totalorder %v475, 0
      %vm552 = vcmp.lt.s32.totalorder %v482, 0
      %vm553 = vcmp.lt.s32.totalorder %v489, 0
      %vm554 = vmand %vm522, %vm490
      %vm555 = vmand %vm523, %vm491
      %vm556 = vmand %vm524, %vm492
      %vm557 = vmand %vm525, %vm493
      %vm558 = vmand %vm526, %vm494
      %vm559 = vmand %vm527, %vm495
      %vm560 = vmand %vm528, %vm496
      %vm561 = vmand %vm529, %vm497
      %vm562 = vmand %vm530, %vm498
      %vm563 = vmand %vm531, %vm499
      %vm564 = vmand %vm532, %vm500
      %vm565 = vmand %vm533, %vm501
      %vm566 = vmand %vm534, %vm502
      %vm567 = vmand %vm535, %vm503
      %vm568 = vmand %vm536, %vm504
      %vm569 = vmand %vm537, %vm505
      %vm570 = vmand %vm538, %vm506
      %vm571 = vmand %vm539, %vm507
      %vm572 = vmand %vm540, %vm508
      %vm573 = vmand %vm541, %vm509
      %vm574 = vmand %vm542, %vm510
      %vm575 = vmand %vm543, %vm511
      %vm576 = vmand %vm544, %vm512
      %vm577 = vmand %vm545, %vm513
      %vm578 = vmand %vm546, %vm514
      %vm579 = vmand %vm547, %vm515
      %vm580 = vmand %vm548, %vm516
      %vm581 = vmand %vm549, %vm517
      %vm582 = vmand %vm550, %vm518
      %vm583 = vmand %vm551, %vm519
      %vm584 = vmand %vm552, %vm520
      %vm585 = vmand %vm553, %vm521
      %v586 = vadd.s32 %v272, 16
      %v587 = vadd.s32 %v279, 16
      %v588 = vadd.s32 %v286, 16
      %v589 = vadd.s32 %v293, 16
      %v590 = vadd.s32 %v300, 16
      %v591 = vadd.s32 %v307, 16
      %v592 = vadd.s32 %v314, 16
      %v593 = vadd.s32 %v321, 16
      %v594 = vadd.s32 %v328, 16
      %v595 = vadd.s32 %v335, 16
      %v596 = vadd.s32 %v342, 16
      %v597 = vadd.s32 %v349, 16
      %v598 = vadd.s32 %v356, 16
      %v599 = vadd.s32 %v363, 16
      %v600 = vadd.s32 %v370, 16
      %v601 = vadd.s32 %v377, 16
      %v602 = vadd.s32 %v384, 16
      %v603 = vadd.s32 %v391, 16
      %v604 = vadd.s32 %v398, 16
      %v605 = vadd.s32 %v405, 16
      %v606 = vadd.s32 %v412, 16
      %v607 = vadd.s32 %v419, 16
      %v608 = vadd.s32 %v426, 16
      %v609 = vadd.s32 %v433, 16
      %v610 = vadd.s32 %v440, 16
      %v611 = vadd.s32 %v447, 16
      %v612 = vadd.s32 %v454, 16
      %v613 = vadd.s32 %v461, 16
      %v614 = vadd.s32 %v468, 16
      %v615 = vadd.s32 %v475, 16
      %v616 = vadd.s32 %v482, 16
      %v617 = vadd.s32 %v489, 16
      %v618 = vsel %vm554, %v586, %v272
      %v619 = vsel %vm555, %v587, %v279
      %v620 = vsel %vm556, %v588, %v286
      %v621 = vsel %vm557, %v589, %v293
      %v622 = vsel %vm558, %v590, %v300
      %v623 = vsel %vm559, %v591, %v307
      %v624 = vsel %vm560, %v592, %v314
      %v625 = vsel %vm561, %v593, %v321
      %v626 = vsel %vm562, %v594, %v328
      %v627 = vsel %vm563, %v595, %v335
      %v628 = vsel %vm564, %v596, %v342
      %v629 = vsel %vm565, %v597, %v349
      %v630 = vsel %vm566, %v598, %v356
      %v631 = vsel %vm567, %v599, %v363
      %v632 = vsel %vm568, %v600, %v370
      %v633 = vsel %vm569, %v601, %v377
      %v634 = vsel %vm570, %v602, %v384
      %v635 = vsel %vm571, %v603, %v391
      %v636 = vsel %vm572, %v604, %v398
      %v637 = vsel %vm573, %v605, %v405
      %v638 = vsel %vm574, %v606, %v412
      %v639 = vsel %vm575, %v607, %v419
      %v640 = vsel %vm576, %v608, %v426
      %v641 = vsel %vm577, %v609, %v433
      %v642 = vsel %vm578, %v610, %v440
      %v643 = vsel %vm579, %v611, %v447
      %v644 = vsel %vm580, %v612, %v454
      %v645 = vsel %vm581, %v613, %v461
      %v646 = vsel %vm582, %v614, %v468
      %v647 = vsel %vm583, %v615, %v475
      %v648 = vsel %vm584, %v616, %v482
      %v649 = vsel %vm585, %v617, %v489
      %vm650 = vcmp.gt.s32.totalorder %v618, 0
      %vm651 = vcmp.gt.s32.totalorder %v619, 0
      %vm652 = vcmp.gt.s32.totalorder %v620, 0
      %vm653 = vcmp.gt.s32.totalorder %v621, 0
      %vm654 = vcmp.gt.s32.totalorder %v622, 0
      %vm655 = vcmp.gt.s32.totalorder %v623, 0
      %vm656 = vcmp.gt.s32.totalorder %v624, 0
      %vm657 = vcmp.gt.s32.totalorder %v625, 0
      %vm658 = vcmp.gt.s32.totalorder %v626, 0
      %vm659 = vcmp.gt.s32.totalorder %v627, 0
      %vm660 = vcmp.gt.s32.totalorder %v628, 0
      %vm661 = vcmp.gt.s32.totalorder %v629, 0
      %vm662 = vcmp.gt.s32.totalorder %v630, 0
      %vm663 = vcmp.gt.s32.totalorder %v631, 0
      %vm664 = vcmp.gt.s32.totalorder %v632, 0
      %vm665 = vcmp.gt.s32.totalorder %v633, 0
      %vm666 = vcmp.gt.s32.totalorder %v634, 0
      %vm667 = vcmp.gt.s32.totalorder %v635, 0
      %vm668 = vcmp.gt.s32.totalorder %v636, 0
      %vm669 = vcmp.gt.s32.totalorder %v637, 0
      %vm670 = vcmp.gt.s32.totalorder %v638, 0
      %vm671 = vcmp.gt.s32.totalorder %v639, 0
      %vm672 = vcmp.gt.s32.totalorder %v640, 0
      %vm673 = vcmp.gt.s32.totalorder %v641, 0
      %vm674 = vcmp.gt.s32.totalorder %v642, 0
      %vm675 = vcmp.gt.s32.totalorder %v643, 0
      %vm676 = vcmp.gt.s32.totalorder %v644, 0
      %vm677 = vcmp.gt.s32.totalorder %v645, 0
      %vm678 = vcmp.gt.s32.totalorder %v646, 0
      %vm679 = vcmp.gt.s32.totalorder %v647, 0
      %vm680 = vcmp.gt.s32.totalorder %v648, 0
      %vm681 = vcmp.gt.s32.totalorder %v649, 0
      %v682 = vsel %vm650, 1, 0
      %v683 = vsel %vm651, 1, 0
      %v684 = vsel %vm652, 1, 0
      %v685 = vsel %vm653, 1, 0
      %v686 = vsel %vm654, 1, 0
      %v687 = vsel %vm655, 1, 0
      %v688 = vsel %vm656, 1, 0
      %v689 = vsel %vm657, 1, 0
      %v690 = vsel %vm658, 1, 0
      %v691 = vsel %vm659, 1, 0
      %v692 = vsel %vm660, 1, 0
      %v693 = vsel %vm661, 1, 0
      %v694 = vsel %vm662, 1, 0
      %v695 = vsel %vm663, 1, 0
      %v696 = vsel %vm664, 1, 0
      %v697 = vsel %vm665, 1, 0
      %v698 = vsel %vm666, 1, 0
      %v699 = vsel %vm667, 1, 0
      %v700 = vsel %vm668, 1, 0
      %v701 = vsel %vm669, 1, 0
      %v702 = vsel %vm670, 1, 0
      %v703 = vsel %vm671, 1, 0
      %v704 = vsel %vm672, 1, 0
      %v705 = vsel %vm673, 1, 0
      %v706 = vsel %vm674, 1, 0
      %v707 = vsel %vm675, 1, 0
      %v708 = vsel %vm676, 1, 0
      %v709 = vsel %vm677, 1, 0
      %v710 = vsel %vm678, 1, 0
      %v711 = vsel %vm679, 1, 0
      %v712 = vsel %vm680, 1, 0
      %v713 = vsel %vm681, 1, 0
      %vm714 = vcmp.eq.s32.totalorder %v682, 1
      %vm715 = vcmp.eq.s32.totalorder %v683, 1
      %vm716 = vcmp.eq.s32.totalorder %v684, 1
      %vm717 = vcmp.eq.s32.totalorder %v685, 1
      %vm718 = vcmp.eq.s32.totalorder %v686, 1
      %vm719 = vcmp.eq.s32.totalorder %v687, 1
      %vm720 = vcmp.eq.s32.totalorder %v688, 1
      %vm721 = vcmp.eq.s32.totalorder %v689, 1
      %vm722 = vcmp.eq.s32.totalorder %v690, 1
      %vm723 = vcmp.eq.s32.totalorder %v691, 1
      %vm724 = vcmp.eq.s32.totalorder %v692, 1
      %vm725 = vcmp.eq.s32.totalorder %v693, 1
      %vm726 = vcmp.eq.s32.totalorder %v694, 1
      %vm727 = vcmp.eq.s32.totalorder %v695, 1
      %vm728 = vcmp.eq.s32.totalorder %v696, 1
      %vm729 = vcmp.eq.s32.totalorder %v697, 1
      %vm730 = vcmp.eq.s32.totalorder %v698, 1
      %vm731 = vcmp.eq.s32.totalorder %v699, 1
      %vm732 = vcmp.eq.s32.totalorder %v700, 1
      %vm733 = vcmp.eq.s32.totalorder %v701, 1
      %vm734 = vcmp.eq.s32.totalorder %v702, 1
      %vm735 = vcmp.eq.s32.totalorder %v703, 1
      %vm736 = vcmp.eq.s32.totalorder %v704, 1
      %vm737 = vcmp.eq.s32.totalorder %v705, 1
      %vm738 = vcmp.eq.s32.totalorder %v706, 1
      %vm739 = vcmp.eq.s32.totalorder %v707, 1
      %vm740 = vcmp.eq.s32.totalorder %v708, 1
      %vm741 = vcmp.eq.s32.totalorder %v709, 1
      %vm742 = vcmp.eq.s32.totalorder %v710, 1
      %vm743 = vcmp.eq.s32.totalorder %v711, 1
      %vm744 = vcmp.eq.s32.totalorder %v712, 1
      %vm745 = vcmp.eq.s32.totalorder %v713, 1
      %vm746 = vcmp.lt.s32.totalorder %v618, 15
      %vm747 = vcmp.lt.s32.totalorder %v619, 15
      %vm748 = vcmp.lt.s32.totalorder %v620, 15
      %vm749 = vcmp.lt.s32.totalorder %v621, 15
      %vm750 = vcmp.lt.s32.totalorder %v622, 15
      %vm751 = vcmp.lt.s32.totalorder %v623, 15
      %vm752 = vcmp.lt.s32.totalorder %v624, 15
      %vm753 = vcmp.lt.s32.totalorder %v625, 15
      %vm754 = vcmp.lt.s32.totalorder %v626, 15
      %vm755 = vcmp.lt.s32.totalorder %v627, 15
      %vm756 = vcmp.lt.s32.totalorder %v628, 15
      %vm757 = vcmp.lt.s32.totalorder %v629, 15
      %vm758 = vcmp.lt.s32.totalorder %v630, 15
      %vm759 = vcmp.lt.s32.totalorder %v631, 15
      %vm760 = vcmp.lt.s32.totalorder %v632, 15
      %vm761 = vcmp.lt.s32.totalorder %v633, 15
      %vm762 = vcmp.lt.s32.totalorder %v634, 15
      %vm763 = vcmp.lt.s32.totalorder %v635, 15
      %vm764 = vcmp.lt.s32.totalorder %v636, 15
      %vm765 = vcmp.lt.s32.totalorder %v637, 15
      %vm766 = vcmp.lt.s32.totalorder %v638, 15
      %vm767 = vcmp.lt.s32.totalorder %v639, 15
      %vm768 = vcmp.lt.s32.totalorder %v640, 15
      %vm769 = vcmp.lt.s32.totalorder %v641, 15
      %vm770 = vcmp.lt.s32.totalorder %v642, 15
      %vm771 = vcmp.lt.s32.totalorder %v643, 15
      %vm772 = vcmp.lt.s32.totalorder %v644, 15
      %vm773 = vcmp.lt.s32.totalorder %v645, 15
      %vm774 = vcmp.lt.s32.totalorder %v646, 15
      %vm775 = vcmp.lt.s32.totalorder %v647, 15
      %vm776 = vcmp.lt.s32.totalorder %v648, 15
      %vm777 = vcmp.lt.s32.totalorder %v649, 15
      %v778 = vsel %vm746, 1, 0
      %v779 = vsel %vm747, 1, 0
      %v780 = vsel %vm748, 1, 0
      %v781 = vsel %vm749, 1, 0
      %v782 = vsel %vm750, 1, 0
      %v783 = vsel %vm751, 1, 0
      %v784 = vsel %vm752, 1, 0
      %v785 = vsel %vm753, 1, 0
      %v786 = vsel %vm754, 1, 0
      %v787 = vsel %vm755, 1, 0
      %v788 = vsel %vm756, 1, 0
      %v789 = vsel %vm757, 1, 0
      %v790 = vsel %vm758, 1, 0
      %v791 = vsel %vm759, 1, 0
      %v792 = vsel %vm760, 1, 0
      %v793 = vsel %vm761, 1, 0
      %v794 = vsel %vm762, 1, 0
      %v795 = vsel %vm763, 1, 0
      %v796 = vsel %vm764, 1, 0
      %v797 = vsel %vm765, 1, 0
      %v798 = vsel %vm766, 1, 0
      %v799 = vsel %vm767, 1, 0
      %v800 = vsel %vm768, 1, 0
      %v801 = vsel %vm769, 1, 0
      %v802 = vsel %vm770, 1, 0
      %v803 = vsel %vm771, 1, 0
      %v804 = vsel %vm772, 1, 0
      %v805 = vsel %vm773, 1, 0
      %v806 = vsel %vm774, 1, 0
      %v807 = vsel %vm775, 1, 0
      %v808 = vsel %vm776, 1, 0
      %v809 = vsel %vm777, 1, 0
      %vm810 = vcmp.eq.s32.totalorder %v778, 1
      %vm811 = vcmp.eq.s32.totalorder %v779, 1
      %vm812 = vcmp.eq.s32.totalorder %v780, 1
      %vm813 = vcmp.eq.s32.totalorder %v781, 1
      %vm814 = vcmp.eq.s32.totalorder %v782, 1
      %vm815 = vcmp.eq.s32.totalorder %v783, 1
      %vm816 = vcmp.eq.s32.totalorder %v784, 1
      %vm817 = vcmp.eq.s32.totalorder %v785, 1
      %vm818 = vcmp.eq.s32.totalorder %v786, 1
      %vm819 = vcmp.eq.s32.totalorder %v787, 1
      %vm820 = vcmp.eq.s32.totalorder %v788, 1
      %vm821 = vcmp.eq.s32.totalorder %v789, 1
      %vm822 = vcmp.eq.s32.totalorder %v790, 1
      %vm823 = vcmp.eq.s32.totalorder %v791, 1
      %vm824 = vcmp.eq.s32.totalorder %v792, 1
      %vm825 = vcmp.eq.s32.totalorder %v793, 1
      %vm826 = vcmp.eq.s32.totalorder %v794, 1
      %vm827 = vcmp.eq.s32.totalorder %v795, 1
      %vm828 = vcmp.eq.s32.totalorder %v796, 1
      %vm829 = vcmp.eq.s32.totalorder %v797, 1
      %vm830 = vcmp.eq.s32.totalorder %v798, 1
      %vm831 = vcmp.eq.s32.totalorder %v799, 1
      %vm832 = vcmp.eq.s32.totalorder %v800, 1
      %vm833 = vcmp.eq.s32.totalorder %v801, 1
      %vm834 = vcmp.eq.s32.totalorder %v802, 1
      %vm835 = vcmp.eq.s32.totalorder %v803, 1
      %vm836 = vcmp.eq.s32.totalorder %v804, 1
      %vm837 = vcmp.eq.s32.totalorder %v805, 1
      %vm838 = vcmp.eq.s32.totalorder %v806, 1
      %vm839 = vcmp.eq.s32.totalorder %v807, 1
      %vm840 = vcmp.eq.s32.totalorder %v808, 1
      %vm841 = vcmp.eq.s32.totalorder %v809, 1
      %v842 = vld [vmem:[%s219] sm:$0xff]
      %v843 = vld [vmem:[%s219 + $0x8] sm:$0xff]
      %v844 = vld [vmem:[%s219 + $0x10] sm:$0xff]
      %v845 = vld [vmem:[%s219 + $0x18] sm:$0xff]
      %v846 = vld [vmem:[%s219 + $0x20] sm:$0xff]
      %v847 = vld [vmem:[%s219 + $0x28] sm:$0xff]
      %v848 = vld [vmem:[%s219 + $0x30] sm:$0xff]
      %v849 = vld [vmem:[%s219 + $0x38] sm:$0xff]
      %v850 = vld [vmem:[%s219 + $0x40] sm:$0xff]
      %v851 = vld [vmem:[%s219 + $0x48] sm:$0xff]
      %v852 = vld [vmem:[%s219 + $0x50] sm:$0xff]
      %v853 = vld [vmem:[%s219 + $0x58] sm:$0xff]
      %v854 = vld [vmem:[%s219 + $0x60] sm:$0xff]
      %v855 = vld [vmem:[%s219 + $0x68] sm:$0xff]
      %v856 = vld [vmem:[%s219 + $0x70] sm:$0xff]
      %v857 = vld [vmem:[%s219 + $0x78] sm:$0xff]
      %v858 = vld [vmem:[%s219 + $0x80] sm:$0xff]
      %v859 = vld [vmem:[%s219 + $0x88] sm:$0xff]
      %v860 = vld [vmem:[%s219 + $0x90] sm:$0xff]
      %v861 = vld [vmem:[%s219 + $0x98] sm:$0xff]
      %v862 = vld [vmem:[%s219 + $0xa0] sm:$0xff]
      %v863 = vld [vmem:[%s219 + $0xa8] sm:$0xff]
      %v864 = vld [vmem:[%s219 + $0xb0] sm:$0xff]
      %v865 = vld [vmem:[%s219 + $0xb8] sm:$0xff]
      %v866 = vld [vmem:[%s219 + $0xc0] sm:$0xff]
      %v867 = vld [vmem:[%s219 + $0xc8] sm:$0xff]
      %v868 = vld [vmem:[%s219 + $0xd0] sm:$0xff]
      %v869 = vld [vmem:[%s219 + $0xd8] sm:$0xff]
      %v870 = vld [vmem:[%s219 + $0xe0] sm:$0xff]
      %v871 = vld [vmem:[%s219 + $0xe8] sm:$0xff]
      %v872 = vld [vmem:[%s219 + $0xf0] sm:$0xff]
      %v873 = vld [vmem:[%s219 + $0xf8] sm:$0xff]
      %874 = vst.msk [vmem:[#allocation2 + $0x18] sm:$0xff] %vm226, %v842
      %875 = vst.msk [vmem:[#allocation2 + $0x20] sm:$0xff] %vm226, %v843
      %876 = vst.msk [vmem:[#allocation2 + $0x28] sm:$0xff] %vm226, %v844
      %877 = vst.msk [vmem:[#allocation2 + $0x30] sm:$0xff] %vm226, %v845
      %878 = vst.msk [vmem:[#allocation2 + $0x38] sm:$0xff] %vm226, %v846
      %879 = vst.msk [vmem:[#allocation2 + $0x40] sm:$0xff] %vm226, %v847
      %880 = vst.msk [vmem:[#allocation2 + $0x48] sm:$0xff] %vm226, %v848
      %881 = vst.msk [vmem:[#allocation2 + $0x50] sm:$0xff] %vm226, %v849
      %882 = vst.msk [vmem:[#allocation2 + $0x58] sm:$0xff] %vm226, %v850
      %883 = vst.msk [vmem:[#allocation2 + $0x60] sm:$0xff] %vm226, %v851
      %884 = vst.msk [vmem:[#allocation2 + $0x68] sm:$0xff] %vm226, %v852
      %885 = vst.msk [vmem:[#allocation2 + $0x70] sm:$0xff] %vm226, %v853
      %886 = vst.msk [vmem:[#allocation2 + $0x78] sm:$0xff] %vm226, %v854
      %887 = vst.msk [vmem:[#allocation2 + $0x80] sm:$0xff] %vm226, %v855
      %888 = vst.msk [vmem:[#allocation2 + $0x88] sm:$0xff] %vm226, %v856
      %889 = vst.msk [vmem:[#allocation2 + $0x90] sm:$0xff] %vm226, %v857
      %890 = vst.msk [vmem:[#allocation2 + $0x98] sm:$0xff] %vm226, %v858
      %891 = vst.msk [vmem:[#allocation2 + $0xa0] sm:$0xff] %vm226, %v859
      %892 = vst.msk [vmem:[#allocation2 + $0xa8] sm:$0xff] %vm226, %v860
      %893 = vst.msk [vmem:[#allocation2 + $0xb0] sm:$0xff] %vm226, %v861
      %894 = vst.msk [vmem:[#allocation2 + $0xb8] sm:$0xff] %vm226, %v862
      %895 = vst.msk [vmem:[#allocation2 + $0xc0] sm:$0xff] %vm226, %v863
      %896 = vst.msk [vmem:[#allocation2 + $0xc8] sm:$0xff] %vm226, %v864
      %897 = vst.msk [vmem:[#allocation2 + $0xd0] sm:$0xff] %vm226, %v865
      %898 = vst.msk [vmem:[#allocation2 + $0xd8] sm:$0xff] %vm226, %v866
      %899 = vst.msk [vmem:[#allocation2 + $0xe0] sm:$0xff] %vm226, %v867
      %900 = vst.msk [vmem:[#allocation2 + $0xe8] sm:$0xff] %vm226, %v868
      %901 = vst.msk [vmem:[#allocation2 + $0xf0] sm:$0xff] %vm226, %v869
      %902 = vst.msk [vmem:[#allocation2 + $0xf8] sm:$0xff] %vm226, %v870
      %903 = vst.msk [vmem:[#allocation2 + $0x100] sm:$0xff] %vm226, %v871
      %904 = vst.msk [vmem:[#allocation2 + $0x108] sm:$0xff] %vm226, %v872
      %905 = vst.msk [vmem:[#allocation2 + $0x110] sm:$0xff] %vm226, %v873
      %v906 = vld [vmem:[#allocation2 + $0x7] sm:$0xff]
      %v907 = vld [vmem:[#allocation2 + $0xf] sm:$0xff]
      %v908 = vld [vmem:[#allocation2 + $0x17] sm:$0xff]
      %v909 = vld [vmem:[#allocation2 + $0x1f] sm:$0xff]
      %v910 = vld [vmem:[#allocation2 + $0x27] sm:$0xff]
      %v911 = vld [vmem:[#allocation2 + $0x2f] sm:$0xff]
      %v912 = vld [vmem:[#allocation2 + $0x37] sm:$0xff]
      %v913 = vld [vmem:[#allocation2 + $0x3f] sm:$0xff]
      %v914 = vld [vmem:[#allocation2 + $0x47] sm:$0xff]
      %v915 = vld [vmem:[#allocation2 + $0x4f] sm:$0xff]
      %v916 = vld [vmem:[#allocation2 + $0x57] sm:$0xff]
      %v917 = vld [vmem:[#allocation2 + $0x5f] sm:$0xff]
      %v918 = vld [vmem:[#allocation2 + $0x67] sm:$0xff]
      %v919 = vld [vmem:[#allocation2 + $0x6f] sm:$0xff]
      %v920 = vld [vmem:[#allocation2 + $0x77] sm:$0xff]
      %v921 = vld [vmem:[#allocation2 + $0x7f] sm:$0xff]
      %v922 = vld [vmem:[#allocation2 + $0x87] sm:$0xff]
      %v923 = vld [vmem:[#allocation2 + $0x8f] sm:$0xff]
      %v924 = vld [vmem:[#allocation2 + $0x97] sm:$0xff]
      %v925 = vld [vmem:[#allocation2 + $0x9f] sm:$0xff]
      %v926 = vld [vmem:[#allocation2 + $0xa7] sm:$0xff]
      %v927 = vld [vmem:[#allocation2 + $0xaf] sm:$0xff]
      %v928 = vld [vmem:[#allocation2 + $0xb7] sm:$0xff]
      %v929 = vld [vmem:[#allocation2 + $0xbf] sm:$0xff]
      %v930 = vld [vmem:[#allocation2 + $0xc7] sm:$0xff]
      %v931 = vld [vmem:[#allocation2 + $0xcf] sm:$0xff]
      %v932 = vld [vmem:[#allocation2 + $0xd7] sm:$0xff]
      %v933 = vld [vmem:[#allocation2 + $0xdf] sm:$0xff]
      %v934 = vld [vmem:[#allocation2 + $0xe7] sm:$0xff]
      %v935 = vld [vmem:[#allocation2 + $0xef] sm:$0xff]
      %v936 = vld [vmem:[#allocation2 + $0xf7] sm:$0xff]
      %v937 = vld [vmem:[#allocation2 + $0xff] sm:$0xff]
      %v938 = vsel %vm714, %v906, 0.0
      %v939 = vsel %vm715, %v907, 0.0
      %v940 = vsel %vm716, %v908, 0.0
      %v941 = vsel %vm717, %v909, 0.0
      %v942 = vsel %vm718, %v910, 0.0
      %v943 = vsel %vm719, %v911, 0.0
      %v944 = vsel %vm720, %v912, 0.0
      %v945 = vsel %vm721, %v913, 0.0
      %v946 = vsel %vm722, %v914, 0.0
      %v947 = vsel %vm723, %v915, 0.0
      %v948 = vsel %vm724, %v916, 0.0
      %v949 = vsel %vm725, %v917, 0.0
      %v950 = vsel %vm726, %v918, 0.0
      %v951 = vsel %vm727, %v919, 0.0
      %v952 = vsel %vm728, %v920, 0.0
      %v953 = vsel %vm729, %v921, 0.0
      %v954 = vsel %vm730, %v922, 0.0
      %v955 = vsel %vm731, %v923, 0.0
      %v956 = vsel %vm732, %v924, 0.0
      %v957 = vsel %vm733, %v925, 0.0
      %v958 = vsel %vm734, %v926, 0.0
      %v959 = vsel %vm735, %v927, 0.0
      %v960 = vsel %vm736, %v928, 0.0
      %v961 = vsel %vm737, %v929, 0.0
      %v962 = vsel %vm738, %v930, 0.0
      %v963 = vsel %vm739, %v931, 0.0
      %v964 = vsel %vm740, %v932, 0.0
      %v965 = vsel %vm741, %v933, 0.0
      %v966 = vsel %vm742, %v934, 0.0
      %v967 = vsel %vm743, %v935, 0.0
      %v968 = vsel %vm744, %v936, 0.0
      %v969 = vsel %vm745, %v937, 0.0
      %v970 = vpack.c.bf16 %v939, %v938
      %v971 = vpack.c.bf16 %v941, %v940
      %v972 = vpack.c.bf16 %v943, %v942
      %v973 = vpack.c.bf16 %v945, %v944
      %v974 = vpack.c.bf16 %v947, %v946
      %v975 = vpack.c.bf16 %v949, %v948
      %v976 = vpack.c.bf16 %v951, %v950
      %v977 = vpack.c.bf16 %v953, %v952
      %v978 = vpack.c.bf16 %v955, %v954
      %v979 = vpack.c.bf16 %v957, %v956
      %v980 = vpack.c.bf16 %v959, %v958
      %v981 = vpack.c.bf16 %v961, %v960
      %v982 = vpack.c.bf16 %v963, %v962
      %v983 = vpack.c.bf16 %v965, %v964
      %v984 = vpack.c.bf16 %v967, %v966
      %v985 = vpack.c.bf16 %v969, %v968
      %v1002 = vunpack.c.l.b16 %v970
      %v1003 = vunpack.c.h.b16 %v970
      %v1004 = vunpack.c.l.b16 %v971
      %v1005 = vunpack.c.h.b16 %v971
      %v1006 = vunpack.c.l.b16 %v972
      %v1007 = vunpack.c.h.b16 %v972
      %v1008 = vunpack.c.l.b16 %v973
      %v1009 = vunpack.c.h.b16 %v973
      %v1010 = vunpack.c.l.b16 %v974
      %v1011 = vunpack.c.h.b16 %v974
      %v1012 = vunpack.c.l.b16 %v975
      %v1013 = vunpack.c.h.b16 %v975
      %v1014 = vunpack.c.l.b16 %v976
      %v1015 = vunpack.c.h.b16 %v976
      %v1016 = vunpack.c.l.b16 %v977
      %v1017 = vunpack.c.h.b16 %v977
      %v1018 = vunpack.c.l.b16 %v978
      %v1019 = vunpack.c.h.b16 %v978
      %v1020 = vunpack.c.l.b16 %v979
      %v1021 = vunpack.c.h.b16 %v979
      %v1022 = vunpack.c.l.b16 %v980
      %v1023 = vunpack.c.h.b16 %v980
      %v1024 = vunpack.c.l.b16 %v981
      %v1025 = vunpack.c.h.b16 %v981
      %v1026 = vunpack.c.l.b16 %v982
      %v1027 = vunpack.c.h.b16 %v982
      %v1028 = vunpack.c.l.b16 %v983
      %v1029 = vunpack.c.h.b16 %v983
      %v1030 = vunpack.c.l.b16 %v984
      %v1031 = vunpack.c.h.b16 %v984
      %v1032 = vunpack.c.l.b16 %v985
      %v1033 = vunpack.c.h.b16 %v985
      %v1034 = vpack.c.b16 %v1002, %v1002
      %v1035 = vpack.c.b16 %v1003, %v1003
      %v1036 = vpack.c.b16 %v1004, %v1004
      %v1037 = vpack.c.b16 %v1005, %v1005
      %v1038 = vpack.c.b16 %v1006, %v1006
      %v1039 = vpack.c.b16 %v1007, %v1007
      %v1040 = vpack.c.b16 %v1008, %v1008
      %v1041 = vpack.c.b16 %v1009, %v1009
      %v1042 = vpack.c.b16 %v1010, %v1010
      %v1043 = vpack.c.b16 %v1011, %v1011
      %v1044 = vpack.c.b16 %v1012, %v1012
      %v1045 = vpack.c.b16 %v1013, %v1013
      %v1046 = vpack.c.b16 %v1014, %v1014
      %v1047 = vpack.c.b16 %v1015, %v1015
      %v1048 = vpack.c.b16 %v1016, %v1016
      %v1049 = vpack.c.b16 %v1017, %v1017
      %v1050 = vpack.c.b16 %v1018, %v1018
      %v1051 = vpack.c.b16 %v1019, %v1019
      %v1052 = vpack.c.b16 %v1020, %v1020
      %v1053 = vpack.c.b16 %v1021, %v1021
      %v1054 = vpack.c.b16 %v1022, %v1022
      %v1055 = vpack.c.b16 %v1023, %v1023
      %v1056 = vpack.c.b16 %v1024, %v1024
      %v1057 = vpack.c.b16 %v1025, %v1025
      %v1058 = vpack.c.b16 %v1026, %v1026
      %v1059 = vpack.c.b16 %v1027, %v1027
      %v1060 = vpack.c.b16 %v1028, %v1028
      %v1061 = vpack.c.b16 %v1029, %v1029
      %v1062 = vpack.c.b16 %v1030, %v1030
      %v1063 = vpack.c.b16 %v1031, %v1031
      %v1064 = vpack.c.b16 %v1032, %v1032
      %v1065 = vpack.c.b16 %v1033, %v1033
      %vm1098 = vcmask 27648
      %1099 = vst.msk [vmem:[#allocation3] sm:$0xf] %vm1098, %v1034
      %1100 = vst.msk [vmem:[#allocation3 + $0x4] sm:$0xf] %vm1098, %v1035
      %1101 = vst.msk [vmem:[#allocation3 + $0x8] sm:$0xf] %vm1098, %v1036
      %1102 = vst.msk [vmem:[#allocation3 + $0xc] sm:$0xf] %vm1098, %v1037
      %1103 = vst.msk [vmem:[#allocation3 + $0x10] sm:$0xf] %vm1098, %v1038
      %1104 = vst.msk [vmem:[#allocation3 + $0x14] sm:$0xf] %vm1098, %v1039
      %1105 = vst.msk [vmem:[#allocation3 + $0x18] sm:$0xf] %vm1098, %v1040
      %1106 = vst.msk [vmem:[#allocation3 + $0x1c] sm:$0xf] %vm1098, %v1041
      %1107 = vst.msk [vmem:[#allocation3 + $0x20] sm:$0xf] %vm1098, %v1042
      %1108 = vst.msk [vmem:[#allocation3 + $0x24] sm:$0xf] %vm1098, %v1043
      %1109 = vst.msk [vmem:[#allocation3 + $0x28] sm:$0xf] %vm1098, %v1044
      %1110 = vst.msk [vmem:[#allocation3 + $0x2c] sm:$0xf] %vm1098, %v1045
      %1111 = vst.msk [vmem:[#allocation3 + $0x30] sm:$0xf] %vm1098, %v1046
      %1112 = vst.msk [vmem:[#allocation3 + $0x34] sm:$0xf] %vm1098, %v1047
      %1113 = vst.msk [vmem:[#allocation3 + $0x38] sm:$0xf] %vm1098, %v1048
      %1114 = vst.msk [vmem:[#allocation3 + $0x3c] sm:$0xf] %vm1098, %v1049
      %1115 = vst.msk [vmem:[#allocation3 + $0x40] sm:$0xf] %vm1098, %v1050
      %1116 = vst.msk [vmem:[#allocation3 + $0x44] sm:$0xf] %vm1098, %v1051
      %1117 = vst.msk [vmem:[#allocation3 + $0x48] sm:$0xf] %vm1098, %v1052
      %1118 = vst.msk [vmem:[#allocation3 + $0x4c] sm:$0xf] %vm1098, %v1053
      %1119 = vst.msk [vmem:[#allocation3 + $0x50] sm:$0xf] %vm1098, %v1054
      %1120 = vst.msk [vmem:[#allocation3 + $0x54] sm:$0xf] %vm1098, %v1055
      %1121 = vst.msk [vmem:[#allocation3 + $0x58] sm:$0xf] %vm1098, %v1056
      %1122 = vst.msk [vmem:[#allocation3 + $0x5c] sm:$0xf] %vm1098, %v1057
      %1123 = vst.msk [vmem:[#allocation3 + $0x60] sm:$0xf] %vm1098, %v1058
      %1124 = vst.msk [vmem:[#allocation3 + $0x64] sm:$0xf] %vm1098, %v1059
      %1125 = vst.msk [vmem:[#allocation3 + $0x68] sm:$0xf] %vm1098, %v1060
      %1126 = vst.msk [vmem:[#allocation3 + $0x6c] sm:$0xf] %vm1098, %v1061
      %1127 = vst.msk [vmem:[#allocation3 + $0x70] sm:$0xf] %vm1098, %v1062
      %1128 = vst.msk [vmem:[#allocation3 + $0x74] sm:$0xf] %vm1098, %v1063
      %1129 = vst.msk [vmem:[#allocation3 + $0x78] sm:$0xf] %vm1098, %v1064
      %1130 = vst.msk [vmem:[#allocation3 + $0x7c] sm:$0xf] %vm1098, %v1065
      %v1131 = vld [vmem:[#allocation2 + $0x8] sm:$0xff]
      %v1132 = vld [vmem:[#allocation2 + $0x10] sm:$0xff]
      %v1133 = vld [vmem:[#allocation2 + $0x18] sm:$0xff]
      %v1134 = vld [vmem:[#allocation2 + $0x20] sm:$0xff]
      %v1135 = vld [vmem:[#allocation2 + $0x28] sm:$0xff]
      %v1136 = vld [vmem:[#allocation2 + $0x30] sm:$0xff]
      %v1137 = vld [vmem:[#allocation2 + $0x38] sm:$0xff]
      %v1138 = vld [vmem:[#allocation2 + $0x40] sm:$0xff]
      %v1139 = vld [vmem:[#allocation2 + $0x48] sm:$0xff]
      %v1140 = vld [vmem:[#allocation2 + $0x50] sm:$0xff]
      %v1141 = vld [vmem:[#allocation2 + $0x58] sm:$0xff]
      %v1142 = vld [vmem:[#allocation2 + $0x60] sm:$0xff]
      %v1143 = vld [vmem:[#allocation2 + $0x68] sm:$0xff]
      %v1144 = vld [vmem:[#allocation2 + $0x70] sm:$0xff]
      %v1145 = vld [vmem:[#allocation2 + $0x78] sm:$0xff]
      %v1146 = vld [vmem:[#allocation2 + $0x80] sm:$0xff]
      %v1147 = vld [vmem:[#allocation2 + $0x88] sm:$0xff]
      %v1148 = vld [vmem:[#allocation2 + $0x90] sm:$0xff]
      %v1149 = vld [vmem:[#allocation2 + $0x98] sm:$0xff]
      %v1150 = vld [vmem:[#allocation2 + $0xa0] sm:$0xff]
      %v1151 = vld [vmem:[#allocation2 + $0xa8] sm:$0xff]
      %v1152 = vld [vmem:[#allocation2 + $0xb0] sm:$0xff]
      %v1153 = vld [vmem:[#allocation2 + $0xb8] sm:$0xff]
      %v1154 = vld [vmem:[#allocation2 + $0xc0] sm:$0xff]
      %v1155 = vld [vmem:[#allocation2 + $0xc8] sm:$0xff]
      %v1156 = vld [vmem:[#allocation2 + $0xd0] sm:$0xff]
      %v1157 = vld [vmem:[#allocation2 + $0xd8] sm:$0xff]
      %v1158 = vld [vmem:[#allocation2 + $0xe0] sm:$0xff]
      %v1159 = vld [vmem:[#allocation2 + $0xe8] sm:$0xff]
      %v1160 = vld [vmem:[#allocation2 + $0xf0] sm:$0xff]
      %v1161 = vld [vmem:[#allocation2 + $0xf8] sm:$0xff]
      %v1162 = vld [vmem:[#allocation2 + $0x100] sm:$0xff]
      %v1163 = vpack.c.bf16 %v1132, %v1131
      %v1164 = vpack.c.bf16 %v1134, %v1133
      %v1165 = vpack.c.bf16 %v1136, %v1135
      %v1166 = vpack.c.bf16 %v1138, %v1137
      %v1167 = vpack.c.bf16 %v1140, %v1139
      %v1168 = vpack.c.bf16 %v1142, %v1141
      %v1169 = vpack.c.bf16 %v1144, %v1143
      %v1170 = vpack.c.bf16 %v1146, %v1145
      %v1171 = vpack.c.bf16 %v1148, %v1147
      %v1172 = vpack.c.bf16 %v1150, %v1149
      %v1173 = vpack.c.bf16 %v1152, %v1151
      %v1174 = vpack.c.bf16 %v1154, %v1153
      %v1175 = vpack.c.bf16 %v1156, %v1155
      %v1176 = vpack.c.bf16 %v1158, %v1157
      %v1177 = vpack.c.bf16 %v1160, %v1159
      %v1178 = vpack.c.bf16 %v1162, %v1161
      %v1195 = vunpack.c.l.b16 %v1163
      %v1196 = vunpack.c.h.b16 %v1163
      %v1197 = vunpack.c.l.b16 %v1164
      %v1198 = vunpack.c.h.b16 %v1164
      %v1199 = vunpack.c.l.b16 %v1165
      %v1200 = vunpack.c.h.b16 %v1165
      %v1201 = vunpack.c.l.b16 %v1166
      %v1202 = vunpack.c.h.b16 %v1166
      %v1203 = vunpack.c.l.b16 %v1167
      %v1204 = vunpack.c.h.b16 %v1167
      %v1205 = vunpack.c.l.b16 %v1168
      %v1206 = vunpack.c.h.b16 %v1168
      %v1207 = vunpack.c.l.b16 %v1169
      %v1208 = vunpack.c.h.b16 %v1169
      %v1209 = vunpack.c.l.b16 %v1170
      %v1210 = vunpack.c.h.b16 %v1170
      %v1211 = vunpack.c.l.b16 %v1171
      %v1212 = vunpack.c.h.b16 %v1171
      %v1213 = vunpack.c.l.b16 %v1172
      %v1214 = vunpack.c.h.b16 %v1172
      %v1215 = vunpack.c.l.b16 %v1173
      %v1216 = vunpack.c.h.b16 %v1173
      %v1217 = vunpack.c.l.b16 %v1174
      %v1218 = vunpack.c.h.b16 %v1174
      %v1219 = vunpack.c.l.b16 %v1175
      %v1220 = vunpack.c.h.b16 %v1175
      %v1221 = vunpack.c.l.b16 %v1176
      %v1222 = vunpack.c.h.b16 %v1176
      %v1223 = vunpack.c.l.b16 %v1177
      %v1224 = vunpack.c.h.b16 %v1177
      %v1225 = vunpack.c.l.b16 %v1178
      %v1226 = vunpack.c.h.b16 %v1178
      %v1227 = vpack.c.b16 %v1195, %v1195
      %v1228 = vpack.c.b16 %v1196, %v1196
      %v1229 = vpack.c.b16 %v1197, %v1197
      %v1230 = vpack.c.b16 %v1198, %v1198
      %v1231 = vpack.c.b16 %v1199, %v1199
      %v1232 = vpack.c.b16 %v1200, %v1200
      %v1233 = vpack.c.b16 %v1201, %v1201
      %v1234 = vpack.c.b16 %v1202, %v1202
      %v1235 = vpack.c.b16 %v1203, %v1203
      %v1236 = vpack.c.b16 %v1204, %v1204
      %v1237 = vpack.c.b16 %v1205, %v1205
      %v1238 = vpack.c.b16 %v1206, %v1206
      %v1239 = vpack.c.b16 %v1207, %v1207
      %v1240 = vpack.c.b16 %v1208, %v1208
      %v1241 = vpack.c.b16 %v1209, %v1209
      %v1242 = vpack.c.b16 %v1210, %v1210
      %v1243 = vpack.c.b16 %v1211, %v1211
      %v1244 = vpack.c.b16 %v1212, %v1212
      %v1245 = vpack.c.b16 %v1213, %v1213
      %v1246 = vpack.c.b16 %v1214, %v1214
      %v1247 = vpack.c.b16 %v1215, %v1215
      %v1248 = vpack.c.b16 %v1216, %v1216
      %v1249 = vpack.c.b16 %v1217, %v1217
      %v1250 = vpack.c.b16 %v1218, %v1218
      %v1251 = vpack.c.b16 %v1219, %v1219
      %v1252 = vpack.c.b16 %v1220, %v1220
      %v1253 = vpack.c.b16 %v1221, %v1221
      %v1254 = vpack.c.b16 %v1222, %v1222
      %v1255 = vpack.c.b16 %v1223, %v1223
      %v1256 = vpack.c.b16 %v1224, %v1224
      %v1257 = vpack.c.b16 %v1225, %v1225
      %v1258 = vpack.c.b16 %v1226, %v1226
      %1259 = vrot.lane.b32.xlu0 %v1227, 4
      %v1260 = vpop.permute.xlu0 %1259
      %1261 = vrot.lane.b32.xlu0 %v1228, 4
      %v1262 = vpop.permute.xlu0 %1261
      %1263 = vrot.lane.b32.xlu0 %v1229, 4
      %v1264 = vpop.permute.xlu0 %1263
      %1265 = vrot.lane.b32.xlu0 %v1230, 4
      %v1266 = vpop.permute.xlu0 %1265
      %1267 = vrot.lane.b32.xlu0 %v1231, 4
      %v1268 = vpop.permute.xlu0 %1267
      %1269 = vrot.lane.b32.xlu0 %v1232, 4
      %v1270 = vpop.permute.xlu0 %1269
      %1271 = vrot.lane.b32.xlu0 %v1233, 4
      %v1272 = vpop.permute.xlu0 %1271
      %1273 = vrot.lane.b32.xlu0 %v1234, 4
      %v1274 = vpop.permute.xlu0 %1273
      %1275 = vrot.lane.b32.xlu0 %v1235, 4
      %v1276 = vpop.permute.xlu0 %1275
      %1277 = vrot.lane.b32.xlu0 %v1236, 4
      %v1278 = vpop.permute.xlu0 %1277
      %1279 = vrot.lane.b32.xlu0 %v1237, 4
      %v1280 = vpop.permute.xlu0 %1279
      %1281 = vrot.lane.b32.xlu0 %v1238, 4
      %v1282 = vpop.permute.xlu0 %1281
      %1283 = vrot.lane.b32.xlu0 %v1239, 4
      %v1284 = vpop.permute.xlu0 %1283
      %1285 = vrot.lane.b32.xlu0 %v1240, 4
      %v1286 = vpop.permute.xlu0 %1285
      %1287 = vrot.lane.b32.xlu0 %v1241, 4
      %v1288 = vpop.permute.xlu0 %1287
      %1289 = vrot.lane.b32.xlu0 %v1242, 4
      %v1290 = vpop.permute.xlu0 %1289
      %1291 = vrot.lane.b32.xlu0 %v1243, 4
      %v1292 = vpop.permute.xlu0 %1291
      %1293 = vrot.lane.b32.xlu0 %v1244, 4
      %v1294 = vpop.permute.xlu0 %1293
      %1295 = vrot.lane.b32.xlu0 %v1245, 4
      %v1296 = vpop.permute.xlu0 %1295
      %1297 = vrot.lane.b32.xlu0 %v1246, 4
      %v1298 = vpop.permute.xlu0 %1297
      %1299 = vrot.lane.b32.xlu0 %v1247, 4
      %v1300 = vpop.permute.xlu0 %1299
      %1301 = vrot.lane.b32.xlu0 %v1248, 4
      %v1302 = vpop.permute.xlu0 %1301
      %1303 = vrot.lane.b32.xlu0 %v1249, 4
      %v1304 = vpop.permute.xlu0 %1303
      %1305 = vrot.lane.b32.xlu0 %v1250, 4
      %v1306 = vpop.permute.xlu0 %1305
      %1307 = vrot.lane.b32.xlu0 %v1251, 4
      %v1308 = vpop.permute.xlu0 %1307
      %1309 = vrot.lane.b32.xlu0 %v1252, 4
      %v1310 = vpop.permute.xlu0 %1309
      %1311 = vrot.lane.b32.xlu0 %v1253, 4
      %v1312 = vpop.permute.xlu0 %1311
      %1313 = vrot.lane.b32.xlu0 %v1254, 4
      %v1314 = vpop.permute.xlu0 %1313
      %1315 = vrot.lane.b32.xlu0 %v1255, 4
      %v1316 = vpop.permute.xlu0 %1315
      %1317 = vrot.lane.b32.xlu0 %v1256, 4
      %v1318 = vpop.permute.xlu0 %1317
      %1319 = vrot.lane.b32.xlu0 %v1257, 4
      %v1320 = vpop.permute.xlu0 %1319
      %1321 = vrot.lane.b32.xlu0 %v1258, 4
      %v1322 = vpop.permute.xlu0 %1321
      %vm1355 = vcmask 60448
      %1356 = vst.msk [vmem:[#allocation3] sm:$0xf] %vm1355, %v1260
      %1357 = vst.msk [vmem:[#allocation3 + $0x4] sm:$0xf] %vm1355, %v1262
      %1358 = vst.msk [vmem:[#allocation3 + $0x8] sm:$0xf] %vm1355, %v1264
      %1359 = vst.msk [vmem:[#allocation3 + $0xc] sm:$0xf] %vm1355, %v1266
      %1360 = vst.msk [vmem:[#allocation3 + $0x10] sm:$0xf] %vm1355, %v1268
      %1361 = vst.msk [vmem:[#allocation3 + $0x14] sm:$0xf] %vm1355, %v1270
      %1362 = vst.msk [vmem:[#allocation3 + $0x18] sm:$0xf] %vm1355, %v1272
      %1363 = vst.msk [vmem:[#allocation3 + $0x1c] sm:$0xf] %vm1355, %v1274
      %1364 = vst.msk [vmem:[#allocation3 + $0x20] sm:$0xf] %vm1355, %v1276
      %1365 = vst.msk [vmem:[#allocation3 + $0x24] sm:$0xf] %vm1355, %v1278
      %1366 = vst.msk [vmem:[#allocation3 + $0x28] sm:$0xf] %vm1355, %v1280
      %1367 = vst.msk [vmem:[#allocation3 + $0x2c] sm:$0xf] %vm1355, %v1282
      %1368 = vst.msk [vmem:[#allocation3 + $0x30] sm:$0xf] %vm1355, %v1284
      %1369 = vst.msk [vmem:[#allocation3 + $0x34] sm:$0xf] %vm1355, %v1286
      %1370 = vst.msk [vmem:[#allocation3 + $0x38] sm:$0xf] %vm1355, %v1288
      %1371 = vst.msk [vmem:[#allocation3 + $0x3c] sm:$0xf] %vm1355, %v1290
      %1372 = vst.msk [vmem:[#allocation3 + $0x40] sm:$0xf] %vm1355, %v1292
      %1373 = vst.msk [vmem:[#allocation3 + $0x44] sm:$0xf] %vm1355, %v1294
      %1374 = vst.msk [vmem:[#allocation3 + $0x48] sm:$0xf] %vm1355, %v1296
      %1375 = vst.msk [vmem:[#allocation3 + $0x4c] sm:$0xf] %vm1355, %v1298
      %1376 = vst.msk [vmem:[#allocation3 + $0x50] sm:$0xf] %vm1355, %v1300
      %1377 = vst.msk [vmem:[#allocation3 + $0x54] sm:$0xf] %vm1355, %v1302
      %1378 = vst.msk [vmem:[#allocation3 + $0x58] sm:$0xf] %vm1355, %v1304
      %1379 = vst.msk [vmem:[#allocation3 + $0x5c] sm:$0xf] %vm1355, %v1306
      %1380 = vst.msk [vmem:[#allocation3 + $0x60] sm:$0xf] %vm1355, %v1308
      %1381 = vst.msk [vmem:[#allocation3 + $0x64] sm:$0xf] %vm1355, %v1310
      %1382 = vst.msk [vmem:[#allocation3 + $0x68] sm:$0xf] %vm1355, %v1312
      %1383 = vst.msk [vmem:[#allocation3 + $0x6c] sm:$0xf] %vm1355, %v1314
      %1384 = vst.msk [vmem:[#allocation3 + $0x70] sm:$0xf] %vm1355, %v1316
      %1385 = vst.msk [vmem:[#allocation3 + $0x74] sm:$0xf] %vm1355, %v1318
      %1386 = vst.msk [vmem:[#allocation3 + $0x78] sm:$0xf] %vm1355, %v1320
      %1387 = vst.msk [vmem:[#allocation3 + $0x7c] sm:$0xf] %vm1355, %v1322
      %v1388 = vld [vmem:[#allocation2 + $0x9] sm:$0xff]
      %v1389 = vld [vmem:[#allocation2 + $0x11] sm:$0xff]
      %v1390 = vld [vmem:[#allocation2 + $0x19] sm:$0xff]
      %v1391 = vld [vmem:[#allocation2 + $0x21] sm:$0xff]
      %v1392 = vld [vmem:[#allocation2 + $0x29] sm:$0xff]
      %v1393 = vld [vmem:[#allocation2 + $0x31] sm:$0xff]
      %v1394 = vld [vmem:[#allocation2 + $0x39] sm:$0xff]
      %v1395 = vld [vmem:[#allocation2 + $0x41] sm:$0xff]
      %v1396 = vld [vmem:[#allocation2 + $0x49] sm:$0xff]
      %v1397 = vld [vmem:[#allocation2 + $0x51] sm:$0xff]
      %v1398 = vld [vmem:[#allocation2 + $0x59] sm:$0xff]
      %v1399 = vld [vmem:[#allocation2 + $0x61] sm:$0xff]
      %v1400 = vld [vmem:[#allocation2 + $0x69] sm:$0xff]
      %v1401 = vld [vmem:[#allocation2 + $0x71] sm:$0xff]
      %v1402 = vld [vmem:[#allocation2 + $0x79] sm:$0xff]
      %v1403 = vld [vmem:[#allocation2 + $0x81] sm:$0xff]
      %v1404 = vld [vmem:[#allocation2 + $0x89] sm:$0xff]
      %v1405 = vld [vmem:[#allocation2 + $0x91] sm:$0xff]
      %v1406 = vld [vmem:[#allocation2 + $0x99] sm:$0xff]
      %v1407 = vld [vmem:[#allocation2 + $0xa1] sm:$0xff]
      %v1408 = vld [vmem:[#allocation2 + $0xa9] sm:$0xff]
      %v1409 = vld [vmem:[#allocation2 + $0xb1] sm:$0xff]
      %v1410 = vld [vmem:[#allocation2 + $0xb9] sm:$0xff]
      %v1411 = vld [vmem:[#allocation2 + $0xc1] sm:$0xff]
      %v1412 = vld [vmem:[#allocation2 + $0xc9] sm:$0xff]
      %v1413 = vld [vmem:[#allocation2 + $0xd1] sm:$0xff]
      %v1414 = vld [vmem:[#allocation2 + $0xd9] sm:$0xff]
      %v1415 = vld [vmem:[#allocation2 + $0xe1] sm:$0xff]
      %v1416 = vld [vmem:[#allocation2 + $0xe9] sm:$0xff]
      %v1417 = vld [vmem:[#allocation2 + $0xf1] sm:$0xff]
      %v1418 = vld [vmem:[#allocation2 + $0xf9] sm:$0xff]
      %v1419 = vld [vmem:[#allocation2 + $0x101] sm:$0xff]
      %v1420 = vsel %vm810, %v1388, 0.0
      %v1421 = vsel %vm811, %v1389, 0.0
      %v1422 = vsel %vm812, %v1390, 0.0
      %v1423 = vsel %vm813, %v1391, 0.0
      %v1424 = vsel %vm814, %v1392, 0.0
      %v1425 = vsel %vm815, %v1393, 0.0
      %v1426 = vsel %vm816, %v1394, 0.0
      %v1427 = vsel %vm817, %v1395, 0.0
      %v1428 = vsel %vm818, %v1396, 0.0
      %v1429 = vsel %vm819, %v1397, 0.0
      %v1430 = vsel %vm820, %v1398, 0.0
      %v1431 = vsel %vm821, %v1399, 0.0
      %v1432 = vsel %vm822, %v1400, 0.0
      %v1433 = vsel %vm823, %v1401, 0.0
      %v1434 = vsel %vm824, %v1402, 0.0
      %v1435 = vsel %vm825, %v1403, 0.0
      %v1436 = vsel %vm826, %v1404, 0.0
      %v1437 = vsel %vm827, %v1405, 0.0
      %v1438 = vsel %vm828, %v1406, 0.0
      %v1439 = vsel %vm829, %v1407, 0.0
      %v1440 = vsel %vm830, %v1408, 0.0
      %v1441 = vsel %vm831, %v1409, 0.0
      %v1442 = vsel %vm832, %v1410, 0.0
      %v1443 = vsel %vm833, %v1411, 0.0
      %v1444 = vsel %vm834, %v1412, 0.0
      %v1445 = vsel %vm835, %v1413, 0.0
      %v1446 = vsel %vm836, %v1414, 0.0
      %v1447 = vsel %vm837, %v1415, 0.0
      %v1448 = vsel %vm838, %v1416, 0.0
      %v1449 = vsel %vm839, %v1417, 0.0
      %v1450 = vsel %vm840, %v1418, 0.0
      %v1451 = vsel %vm841, %v1419, 0.0
      %v1452 = vpack.c.bf16 %v1421, %v1420
      %v1453 = vpack.c.bf16 %v1423, %v1422
      %v1454 = vpack.c.bf16 %v1425, %v1424
      %v1455 = vpack.c.bf16 %v1427, %v1426
      %v1456 = vpack.c.bf16 %v1429, %v1428
      %v1457 = vpack.c.bf16 %v1431, %v1430
      %v1458 = vpack.c.bf16 %v1433, %v1432
      %v1459 = vpack.c.bf16 %v1435, %v1434
      %v1460 = vpack.c.bf16 %v1437, %v1436
      %v1461 = vpack.c.bf16 %v1439, %v1438
      %v1462 = vpack.c.bf16 %v1441, %v1440
      %v1463 = vpack.c.bf16 %v1443, %v1442
      %v1464 = vpack.c.bf16 %v1445, %v1444
      %v1465 = vpack.c.bf16 %v1447, %v1446
      %v1466 = vpack.c.bf16 %v1449, %v1448
      %v1467 = vpack.c.bf16 %v1451, %v1450
      %v1484 = vunpack.c.l.b16 %v1452
      %v1485 = vunpack.c.h.b16 %v1452
      %v1486 = vunpack.c.l.b16 %v1453
      %v1487 = vunpack.c.h.b16 %v1453
      %v1488 = vunpack.c.l.b16 %v1454
      %v1489 = vunpack.c.h.b16 %v1454
      %v1490 = vunpack.c.l.b16 %v1455
      %v1491 = vunpack.c.h.b16 %v1455
      %v1492 = vunpack.c.l.b16 %v1456
      %v1493 = vunpack.c.h.b16 %v1456
      %v1494 = vunpack.c.l.b16 %v1457
      %v1495 = vunpack.c.h.b16 %v1457
      %v1496 = vunpack.c.l.b16 %v1458
      %v1497 = vunpack.c.h.b16 %v1458
      %v1498 = vunpack.c.l.b16 %v1459
      %v1499 = vunpack.c.h.b16 %v1459
      %v1500 = vunpack.c.l.b16 %v1460
      %v1501 = vunpack.c.h.b16 %v1460
      %v1502 = vunpack.c.l.b16 %v1461
      %v1503 = vunpack.c.h.b16 %v1461
      %v1504 = vunpack.c.l.b16 %v1462
      %v1505 = vunpack.c.h.b16 %v1462
      %v1506 = vunpack.c.l.b16 %v1463
      %v1507 = vunpack.c.h.b16 %v1463
      %v1508 = vunpack.c.l.b16 %v1464
      %v1509 = vunpack.c.h.b16 %v1464
      %v1510 = vunpack.c.l.b16 %v1465
      %v1511 = vunpack.c.h.b16 %v1465
      %v1512 = vunpack.c.l.b16 %v1466
      %v1513 = vunpack.c.h.b16 %v1466
      %v1514 = vunpack.c.l.b16 %v1467
      %v1515 = vunpack.c.h.b16 %v1467
      %v1516 = vpack.c.b16 %v1484, %v1484
      %v1517 = vpack.c.b16 %v1485, %v1485
      %v1518 = vpack.c.b16 %v1486, %v1486
      %v1519 = vpack.c.b16 %v1487, %v1487
      %v1520 = vpack.c.b16 %v1488, %v1488
      %v1521 = vpack.c.b16 %v1489, %v1489
      %v1522 = vpack.c.b16 %v1490, %v1490
      %v1523 = vpack.c.b16 %v1491, %v1491
      %v1524 = vpack.c.b16 %v1492, %v1492
      %v1525 = vpack.c.b16 %v1493, %v1493
      %v1526 = vpack.c.b16 %v1494, %v1494
      %v1527 = vpack.c.b16 %v1495, %v1495
      %v1528 = vpack.c.b16 %v1496, %v1496
      %v1529 = vpack.c.b16 %v1497, %v1497
      %v1530 = vpack.c.b16 %v1498, %v1498
      %v1531 = vpack.c.b16 %v1499, %v1499
      %v1532 = vpack.c.b16 %v1500, %v1500
      %v1533 = vpack.c.b16 %v1501, %v1501
      %v1534 = vpack.c.b16 %v1502, %v1502
      %v1535 = vpack.c.b16 %v1503, %v1503
      %v1536 = vpack.c.b16 %v1504, %v1504
      %v1537 = vpack.c.b16 %v1505, %v1505
      %v1538 = vpack.c.b16 %v1506, %v1506
      %v1539 = vpack.c.b16 %v1507, %v1507
      %v1540 = vpack.c.b16 %v1508, %v1508
      %v1541 = vpack.c.b16 %v1509, %v1509
      %v1542 = vpack.c.b16 %v1510, %v1510
      %v1543 = vpack.c.b16 %v1511, %v1511
      %v1544 = vpack.c.b16 %v1512, %v1512
      %v1545 = vpack.c.b16 %v1513, %v1513
      %v1546 = vpack.c.b16 %v1514, %v1514
      %v1547 = vpack.c.b16 %v1515, %v1515
      %1548 = vrot.lane.b32.xlu0 %v1516, 8
      %v1549 = vpop.permute.xlu0 %1548
      %1550 = vrot.lane.b32.xlu0 %v1517, 8
      %v1551 = vpop.permute.xlu0 %1550
      %1552 = vrot.lane.b32.xlu0 %v1518, 8
      %v1553 = vpop.permute.xlu0 %1552
      %1554 = vrot.lane.b32.xlu0 %v1519, 8
      %v1555 = vpop.permute.xlu0 %1554
      %1556 = vrot.lane.b32.xlu0 %v1520, 8
      %v1557 = vpop.permute.xlu0 %1556
      %1558 = vrot.lane.b32.xlu0 %v1521, 8
      %v1559 = vpop.permute.xlu0 %1558
      %1560 = vrot.lane.b32.xlu0 %v1522, 8
      %v1561 = vpop.permute.xlu0 %1560
      %1562 = vrot.lane.b32.xlu0 %v1523, 8
      %v1563 = vpop.permute.xlu0 %1562
      %1564 = vrot.lane.b32.xlu0 %v1524, 8
      %v1565 = vpop.permute.xlu0 %1564
      %1566 = vrot.lane.b32.xlu0 %v1525, 8
      %v1567 = vpop.permute.xlu0 %1566
      %1568 = vrot.lane.b32.xlu0 %v1526, 8
      %v1569 = vpop.permute.xlu0 %1568
      %1570 = vrot.lane.b32.xlu0 %v1527, 8
      %v1571 = vpop.permute.xlu0 %1570
      %1572 = vrot.lane.b32.xlu0 %v1528, 8
      %v1573 = vpop.permute.xlu0 %1572
      %1574 = vrot.lane.b32.xlu0 %v1529, 8
      %v1575 = vpop.permute.xlu0 %1574
      %1576 = vrot.lane.b32.xlu0 %v1530, 8
      %v1577 = vpop.permute.xlu0 %1576
      %1578 = vrot.lane.b32.xlu0 %v1531, 8
      %v1579 = vpop.permute.xlu0 %1578
      %1580 = vrot.lane.b32.xlu0 %v1532, 8
      %v1581 = vpop.permute.xlu0 %1580
      %1582 = vrot.lane.b32.xlu0 %v1533, 8
      %v1583 = vpop.permute.xlu0 %1582
      %1584 = vrot.lane.b32.xlu0 %v1534, 8
      %v1585 = vpop.permute.xlu0 %1584
      %1586 = vrot.lane.b32.xlu0 %v1535, 8
      %v1587 = vpop.permute.xlu0 %1586
      %1588 = vrot.lane.b32.xlu0 %v1536, 8
      %v1589 = vpop.permute.xlu0 %1588
      %1590 = vrot.lane.b32.xlu0 %v1537, 8
      %v1591 = vpop.permute.xlu0 %1590
      %1592 = vrot.lane.b32.xlu0 %v1538, 8
      %v1593 = vpop.permute.xlu0 %1592
      %1594 = vrot.lane.b32.xlu0 %v1539, 8
      %v1595 = vpop.permute.xlu0 %1594
      %1596 = vrot.lane.b32.xlu0 %v1540, 8
      %v1597 = vpop.permute.xlu0 %1596
      %1598 = vrot.lane.b32.xlu0 %v1541, 8
      %v1599 = vpop.permute.xlu0 %1598
      %1600 = vrot.lane.b32.xlu0 %v1542, 8
      %v1601 = vpop.permute.xlu0 %1600
      %1602 = vrot.lane.b32.xlu0 %v1543, 8
      %v1603 = vpop.permute.xlu0 %1602
      %1604 = vrot.lane.b32.xlu0 %v1544, 8
      %v1605 = vpop.permute.xlu0 %1604
      %1606 = vrot.lane.b32.xlu0 %v1545, 8
      %v1607 = vpop.permute.xlu0 %1606
      %1608 = vrot.lane.b32.xlu0 %v1546, 8
      %v1609 = vpop.permute.xlu0 %1608
      %1610 = vrot.lane.b32.xlu0 %v1547, 8
      %v1611 = vpop.permute.xlu0 %1610
      %vm1644 = vcmask 93248
      %1645 = vst.msk [vmem:[#allocation3] sm:$0xf] %vm1644, %v1549
      %1646 = vst.msk [vmem:[#allocation3 + $0x4] sm:$0xf] %vm1644, %v1551
      %1647 = vst.msk [vmem:[#allocation3 + $0x8] sm:$0xf] %vm1644, %v1553
      %1648 = vst.msk [vmem:[#allocation3 + $0xc] sm:$0xf] %vm1644, %v1555
      %1649 = vst.msk [vmem:[#allocation3 + $0x10] sm:$0xf] %vm1644, %v1557
      %1650 = vst.msk [vmem:[#allocation3 + $0x14] sm:$0xf] %vm1644, %v1559
      %1651 = vst.msk [vmem:[#allocation3 + $0x18] sm:$0xf] %vm1644, %v1561
      %1652 = vst.msk [vmem:[#allocation3 + $0x1c] sm:$0xf] %vm1644, %v1563
      %1653 = vst.msk [vmem:[#allocation3 + $0x20] sm:$0xf] %vm1644, %v1565
      %1654 = vst.msk [vmem:[#allocation3 + $0x24] sm:$0xf] %vm1644, %v1567
      %1655 = vst.msk [vmem:[#allocation3 + $0x28] sm:$0xf] %vm1644, %v1569
      %1656 = vst.msk [vmem:[#allocation3 + $0x2c] sm:$0xf] %vm1644, %v1571
      %1657 = vst.msk [vmem:[#allocation3 + $0x30] sm:$0xf] %vm1644, %v1573
      %1658 = vst.msk [vmem:[#allocation3 + $0x34] sm:$0xf] %vm1644, %v1575
      %1659 = vst.msk [vmem:[#allocation3 + $0x38] sm:$0xf] %vm1644, %v1577
      %1660 = vst.msk [vmem:[#allocation3 + $0x3c] sm:$0xf] %vm1644, %v1579
      %1661 = vst.msk [vmem:[#allocation3 + $0x40] sm:$0xf] %vm1644, %v1581
      %1662 = vst.msk [vmem:[#allocation3 + $0x44] sm:$0xf] %vm1644, %v1583
      %1663 = vst.msk [vmem:[#allocation3 + $0x48] sm:$0xf] %vm1644, %v1585
      %1664 = vst.msk [vmem:[#allocation3 + $0x4c] sm:$0xf] %vm1644, %v1587
      %1665 = vst.msk [vmem:[#allocation3 + $0x50] sm:$0xf] %vm1644, %v1589
      %1666 = vst.msk [vmem:[#allocation3 + $0x54] sm:$0xf] %vm1644, %v1591
      %1667 = vst.msk [vmem:[#allocation3 + $0x58] sm:$0xf] %vm1644, %v1593
      %1668 = vst.msk [vmem:[#allocation3 + $0x5c] sm:$0xf] %vm1644, %v1595
      %1669 = vst.msk [vmem:[#allocation3 + $0x60] sm:$0xf] %vm1644, %v1597
      %1670 = vst.msk [vmem:[#allocation3 + $0x64] sm:$0xf] %vm1644, %v1599
      %1671 = vst.msk [vmem:[#allocation3 + $0x68] sm:$0xf] %vm1644, %v1601
      %1672 = vst.msk [vmem:[#allocation3 + $0x6c] sm:$0xf] %vm1644, %v1603
      %1673 = vst.msk [vmem:[#allocation3 + $0x70] sm:$0xf] %vm1644, %v1605
      %1674 = vst.msk [vmem:[#allocation3 + $0x74] sm:$0xf] %vm1644, %v1607
      %1675 = vst.msk [vmem:[#allocation3 + $0x78] sm:$0xf] %vm1644, %v1609
      %1676 = vst.msk [vmem:[#allocation3 + $0x7c] sm:$0xf] %vm1644, %v1611
      %v1677 = vld [vmem:[#allocation2 + $0x17] sm:$0xff]
      %v1678 = vld [vmem:[#allocation2 + $0x1f] sm:$0xff]
      %v1679 = vld [vmem:[#allocation2 + $0x27] sm:$0xff]
      %v1680 = vld [vmem:[#allocation2 + $0x2f] sm:$0xff]
      %v1681 = vld [vmem:[#allocation2 + $0x37] sm:$0xff]
      %v1682 = vld [vmem:[#allocation2 + $0x3f] sm:$0xff]
      %v1683 = vld [vmem:[#allocation2 + $0x47] sm:$0xff]
      %v1684 = vld [vmem:[#allocation2 + $0x4f] sm:$0xff]
      %v1685 = vld [vmem:[#allocation2 + $0x57] sm:$0xff]
      %v1686 = vld [vmem:[#allocation2 + $0x5f] sm:$0xff]
      %v1687 = vld [vmem:[#allocation2 + $0x67] sm:$0xff]
      %v1688 = vld [vmem:[#allocation2 + $0x6f] sm:$0xff]
      %v1689 = vld [vmem:[#allocation2 + $0x77] sm:$0xff]
      %v1690 = vld [vmem:[#allocation2 + $0x7f] sm:$0xff]
      %v1691 = vld [vmem:[#allocation2 + $0x87] sm:$0xff]
      %v1692 = vld [vmem:[#allocation2 + $0x8f] sm:$0xff]
      %v1693 = vld [vmem:[#allocation2 + $0x97] sm:$0xff]
      %v1694 = vld [vmem:[#allocation2 + $0x9f] sm:$0xff]
      %v1695 = vld [vmem:[#allocation2 + $0xa7] sm:$0xff]
      %v1696 = vld [vmem:[#allocation2 + $0xaf] sm:$0xff]
      %v1697 = vld [vmem:[#allocation2 + $0xb7] sm:$0xff]
      %v1698 = vld [vmem:[#allocation2 + $0xbf] sm:$0xff]
      %v1699 = vld [vmem:[#allocation2 + $0xc7] sm:$0xff]
      %v1700 = vld [vmem:[#allocation2 + $0xcf] sm:$0xff]
      %v1701 = vld [vmem:[#allocation2 + $0xd7] sm:$0xff]
      %v1702 = vld [vmem:[#allocation2 + $0xdf] sm:$0xff]
      %v1703 = vld [vmem:[#allocation2 + $0xe7] sm:$0xff]
      %v1704 = vld [vmem:[#allocation2 + $0xef] sm:$0xff]
      %v1705 = vld [vmem:[#allocation2 + $0xf7] sm:$0xff]
      %v1706 = vld [vmem:[#allocation2 + $0xff] sm:$0xff]
      %v1707 = vld [vmem:[#allocation2 + $0x107] sm:$0xff]
      %v1708 = vld [vmem:[#allocation2 + $0x10f] sm:$0xff]
      %v1709 = vsel %vm714, %v1677, 0.0
      %v1710 = vsel %vm715, %v1678, 0.0
      %v1711 = vsel %vm716, %v1679, 0.0
      %v1712 = vsel %vm717, %v1680, 0.0
      %v1713 = vsel %vm718, %v1681, 0.0
      %v1714 = vsel %vm719, %v1682, 0.0
      %v1715 = vsel %vm720, %v1683, 0.0
      %v1716 = vsel %vm721, %v1684, 0.0
      %v1717 = vsel %vm722, %v1685, 0.0
      %v1718 = vsel %vm723, %v1686, 0.0
      %v1719 = vsel %vm724, %v1687, 0.0
      %v1720 = vsel %vm725, %v1688, 0.0
      %v1721 = vsel %vm726, %v1689, 0.0
      %v1722 = vsel %vm727, %v1690, 0.0
      %v1723 = vsel %vm728, %v1691, 0.0
      %v1724 = vsel %vm729, %v1692, 0.0
      %v1725 = vsel %vm730, %v1693, 0.0
      %v1726 = vsel %vm731, %v1694, 0.0
      %v1727 = vsel %vm732, %v1695, 0.0
      %v1728 = vsel %vm733, %v1696, 0.0
      %v1729 = vsel %vm734, %v1697, 0.0
      %v1730 = vsel %vm735, %v1698, 0.0
      %v1731 = vsel %vm736, %v1699, 0.0
      %v1732 = vsel %vm737, %v1700, 0.0
      %v1733 = vsel %vm738, %v1701, 0.0
      %v1734 = vsel %vm739, %v1702, 0.0
      %v1735 = vsel %vm740, %v1703, 0.0
      %v1736 = vsel %vm741, %v1704, 0.0
      %v1737 = vsel %vm742, %v1705, 0.0
      %v1738 = vsel %vm743, %v1706, 0.0
      %v1739 = vsel %vm744, %v1707, 0.0
      %v1740 = vsel %vm745, %v1708, 0.0
      %v1741 = vpack.c.bf16 %v1710, %v1709
      %v1742 = vpack.c.bf16 %v1712, %v1711
      %v1743 = vpack.c.bf16 %v1714, %v1713
      %v1744 = vpack.c.bf16 %v1716, %v1715
      %v1745 = vpack.c.bf16 %v1718, %v1717
      %v1746 = vpack.c.bf16 %v1720, %v1719
      %v1747 = vpack.c.bf16 %v1722, %v1721
      %v1748 = vpack.c.bf16 %v1724, %v1723
      %v1749 = vpack.c.bf16 %v1726, %v1725
      %v1750 = vpack.c.bf16 %v1728, %v1727
      %v1751 = vpack.c.bf16 %v1730, %v1729
      %v1752 = vpack.c.bf16 %v1732, %v1731
      %v1753 = vpack.c.bf16 %v1734, %v1733
      %v1754 = vpack.c.bf16 %v1736, %v1735
      %v1755 = vpack.c.bf16 %v1738, %v1737
      %v1756 = vpack.c.bf16 %v1740, %v1739
      %v1773 = vunpack.c.l.b16 %v1741
      %v1774 = vunpack.c.h.b16 %v1741
      %v1775 = vunpack.c.l.b16 %v1742
      %v1776 = vunpack.c.h.b16 %v1742
      %v1777 = vunpack.c.l.b16 %v1743
      %v1778 = vunpack.c.h.b16 %v1743
      %v1779 = vunpack.c.l.b16 %v1744
      %v1780 = vunpack.c.h.b16 %v1744
      %v1781 = vunpack.c.l.b16 %v1745
      %v1782 = vunpack.c.h.b16 %v1745
      %v1783 = vunpack.c.l.b16 %v1746
      %v1784 = vunpack.c.h.b16 %v1746
      %v1785 = vunpack.c.l.b16 %v1747
      %v1786 = vunpack.c.h.b16 %v1747
      %v1787 = vunpack.c.l.b16 %v1748
      %v1788 = vunpack.c.h.b16 %v1748
      %v1789 = vunpack.c.l.b16 %v1749
      %v1790 = vunpack.c.h.b16 %v1749
      %v1791 = vunpack.c.l.b16 %v1750
      %v1792 = vunpack.c.h.b16 %v1750
      %v1793 = vunpack.c.l.b16 %v1751
      %v1794 = vunpack.c.h.b16 %v1751
      %v1795 = vunpack.c.l.b16 %v1752
      %v1796 = vunpack.c.h.b16 %v1752
      %v1797 = vunpack.c.l.b16 %v1753
      %v1798 = vunpack.c.h.b16 %v1753
      %v1799 = vunpack.c.l.b16 %v1754
      %v1800 = vunpack.c.h.b16 %v1754
      %v1801 = vunpack.c.l.b16 %v1755
      %v1802 = vunpack.c.h.b16 %v1755
      %v1803 = vunpack.c.l.b16 %v1756
      %v1804 = vunpack.c.h.b16 %v1756
      %v1805 = vpack.c.b16 %v1773, %v1773
      %v1806 = vpack.c.b16 %v1774, %v1774
      %v1807 = vpack.c.b16 %v1775, %v1775
      %v1808 = vpack.c.b16 %v1776, %v1776
      %v1809 = vpack.c.b16 %v1777, %v1777
      %v1810 = vpack.c.b16 %v1778, %v1778
      %v1811 = vpack.c.b16 %v1779, %v1779
      %v1812 = vpack.c.b16 %v1780, %v1780
      %v1813 = vpack.c.b16 %v1781, %v1781
      %v1814 = vpack.c.b16 %v1782, %v1782
      %v1815 = vpack.c.b16 %v1783, %v1783
      %v1816 = vpack.c.b16 %v1784, %v1784
      %v1817 = vpack.c.b16 %v1785, %v1785
      %v1818 = vpack.c.b16 %v1786, %v1786
      %v1819 = vpack.c.b16 %v1787, %v1787
      %v1820 = vpack.c.b16 %v1788, %v1788
      %v1821 = vpack.c.b16 %v1789, %v1789
      %v1822 = vpack.c.b16 %v1790, %v1790
      %v1823 = vpack.c.b16 %v1791, %v1791
      %v1824 = vpack.c.b16 %v1792, %v1792
      %v1825 = vpack.c.b16 %v1793, %v1793
      %v1826 = vpack.c.b16 %v1794, %v1794
      %v1827 = vpack.c.b16 %v1795, %v1795
      %v1828 = vpack.c.b16 %v1796, %v1796
      %v1829 = vpack.c.b16 %v1797, %v1797
      %v1830 = vpack.c.b16 %v1798, %v1798
      %v1831 = vpack.c.b16 %v1799, %v1799
      %v1832 = vpack.c.b16 %v1800, %v1800
      %v1833 = vpack.c.b16 %v1801, %v1801
      %v1834 = vpack.c.b16 %v1802, %v1802
      %v1835 = vpack.c.b16 %v1803, %v1803
      %v1836 = vpack.c.b16 %v1804, %v1804
      %1837 = vrot.lane.b32.xlu0 %v1805, 12
      %v1838 = vpop.permute.xlu0 %1837
      %1839 = vrot.lane.b32.xlu0 %v1806, 12
      %v1840 = vpop.permute.xlu0 %1839
      %1841 = vrot.lane.b32.xlu0 %v1807, 12
      %v1842 = vpop.permute.xlu0 %1841
      %1843 = vrot.lane.b32.xlu0 %v1808, 12
      %v1844 = vpop.permute.xlu0 %1843
      %1845 = vrot.lane.b32.xlu0 %v1809, 12
      %v1846 = vpop.permute.xlu0 %1845
      %1847 = vrot.lane.b32.xlu0 %v1810, 12
      %v1848 = vpop.permute.xlu0 %1847
      %1849 = vrot.lane.b32.xlu0 %v1811, 12
      %v1850 = vpop.permute.xlu0 %1849
      %1851 = vrot.lane.b32.xlu0 %v1812, 12
      %v1852 = vpop.permute.xlu0 %1851
      %1853 = vrot.lane.b32.xlu0 %v1813, 12
      %v1854 = vpop.permute.xlu0 %1853
      %1855 = vrot.lane.b32.xlu0 %v1814, 12
      %v1856 = vpop.permute.xlu0 %1855
      %1857 = vrot.lane.b32.xlu0 %v1815, 12
      %v1858 = vpop.permute.xlu0 %1857
      %1859 = vrot.lane.b32.xlu0 %v1816, 12
      %v1860 = vpop.permute.xlu0 %1859
      %1861 = vrot.lane.b32.xlu0 %v1817, 12
      %v1862 = vpop.permute.xlu0 %1861
      %1863 = vrot.lane.b32.xlu0 %v1818, 12
      %v1864 = vpop.permute.xlu0 %1863
      %1865 = vrot.lane.b32.xlu0 %v1819, 12
      %v1866 = vpop.permute.xlu0 %1865
      %1867 = vrot.lane.b32.xlu0 %v1820, 12
      %v1868 = vpop.permute.xlu0 %1867
      %1869 = vrot.lane.b32.xlu0 %v1821, 12
      %v1870 = vpop.permute.xlu0 %1869
      %1871 = vrot.lane.b32.xlu0 %v1822, 12
      %v1872 = vpop.permute.xlu0 %1871
      %1873 = vrot.lane.b32.xlu0 %v1823, 12
      %v1874 = vpop.permute.xlu0 %1873
      %1875 = vrot.lane.b32.xlu0 %v1824, 12
      %v1876 = vpop.permute.xlu0 %1875
      %1877 = vrot.lane.b32.xlu0 %v1825, 12
      %v1878 = vpop.permute.xlu0 %1877
      %1879 = vrot.lane.b32.xlu0 %v1826, 12
      %v1880 = vpop.permute.xlu0 %1879
      %1881 = vrot.lane.b32.xlu0 %v1827, 12
      %v1882 = vpop.permute.xlu0 %1881
      %1883 = vrot.lane.b32.xlu0 %v1828, 12
      %v1884 = vpop.permute.xlu0 %1883
      %1885 = vrot.lane.b32.xlu0 %v1829, 12
      %v1886 = vpop.permute.xlu0 %1885
      %1887 = vrot.lane.b32.xlu0 %v1830, 12
      %v1888 = vpop.permute.xlu0 %1887
      %1889 = vrot.lane.b32.xlu0 %v1831, 12
      %v1890 = vpop.permute.xlu0 %1889
      %1891 = vrot.lane.b32.xlu0 %v1832, 12
      %v1892 = vpop.permute.xlu0 %1891
      %1893 = vrot.lane.b32.xlu0 %v1833, 12
      %v1894 = vpop.permute.xlu0 %1893
      %1895 = vrot.lane.b32.xlu0 %v1834, 12
      %v1896 = vpop.permute.xlu0 %1895
      %1897 = vrot.lane.b32.xlu0 %v1835, 12
      %v1898 = vpop.permute.xlu0 %1897
      %1899 = vrot.lane.b32.xlu0 %v1836, 12
      %v1900 = vpop.permute.xlu0 %1899
      %vm1933 = vcmask 126048
      %1934 = vst.msk [vmem:[#allocation3] sm:$0xf] %vm1933, %v1838
      %1935 = vst.msk [vmem:[#allocation3 + $0x4] sm:$0xf] %vm1933, %v1840
      %1936 = vst.msk [vmem:[#allocation3 + $0x8] sm:$0xf] %vm1933, %v1842
      %1937 = vst.msk [vmem:[#allocation3 + $0xc] sm:$0xf] %vm1933, %v1844
      %1938 = vst.msk [vmem:[#allocation3 + $0x10] sm:$0xf] %vm1933, %v1846
      %1939 = vst.msk [vmem:[#allocation3 + $0x14] sm:$0xf] %vm1933, %v1848
      %1940 = vst.msk [vmem:[#allocation3 + $0x18] sm:$0xf] %vm1933, %v1850
      %1941 = vst.msk [vmem:[#allocation3 + $0x1c] sm:$0xf] %vm1933, %v1852
      %1942 = vst.msk [vmem:[#allocation3 + $0x20] sm:$0xf] %vm1933, %v1854
      %1943 = vst.msk [vmem:[#allocation3 + $0x24] sm:$0xf] %vm1933, %v1856
      %1944 = vst.msk [vmem:[#allocation3 + $0x28] sm:$0xf] %vm1933, %v1858
      %1945 = vst.msk [vmem:[#allocation3 + $0x2c] sm:$0xf] %vm1933, %v1860
      %1946 = vst.msk [vmem:[#allocation3 + $0x30] sm:$0xf] %vm1933, %v1862
      %1947 = vst.msk [vmem:[#allocation3 + $0x34] sm:$0xf] %vm1933, %v1864
      %1948 = vst.msk [vmem:[#allocation3 + $0x38] sm:$0xf] %vm1933, %v1866
      %1949 = vst.msk [vmem:[#allocation3 + $0x3c] sm:$0xf] %vm1933, %v1868
      %1950 = vst.msk [vmem:[#allocation3 + $0x40] sm:$0xf] %vm1933, %v1870
      %1951 = vst.msk [vmem:[#allocation3 + $0x44] sm:$0xf] %vm1933, %v1872
      %1952 = vst.msk [vmem:[#allocation3 + $0x48] sm:$0xf] %vm1933, %v1874
      %1953 = vst.msk [vmem:[#allocation3 + $0x4c] sm:$0xf] %vm1933, %v1876
      %1954 = vst.msk [vmem:[#allocation3 + $0x50] sm:$0xf] %vm1933, %v1878
      %1955 = vst.msk [vmem:[#allocation3 + $0x54] sm:$0xf] %vm1933, %v1880
      %1956 = vst.msk [vmem:[#allocation3 + $0x58] sm:$0xf] %vm1933, %v1882
      %1957 = vst.msk [vmem:[#allocation3 + $0x5c] sm:$0xf] %vm1933, %v1884
      %1958 = vst.msk [vmem:[#allocation3 + $0x60] sm:$0xf] %vm1933, %v1886
      %1959 = vst.msk [vmem:[#allocation3 + $0x64] sm:$0xf] %vm1933, %v1888
      %1960 = vst.msk [vmem:[#allocation3 + $0x68] sm:$0xf] %vm1933, %v1890
      %1961 = vst.msk [vmem:[#allocation3 + $0x6c] sm:$0xf] %vm1933, %v1892
      %1962 = vst.msk [vmem:[#allocation3 + $0x70] sm:$0xf] %vm1933, %v1894
      %1963 = vst.msk [vmem:[#allocation3 + $0x74] sm:$0xf] %vm1933, %v1896
      %1964 = vst.msk [vmem:[#allocation3 + $0x78] sm:$0xf] %vm1933, %v1898
      %1965 = vst.msk [vmem:[#allocation3 + $0x7c] sm:$0xf] %vm1933, %v1900
      %v1966 = vld [vmem:[#allocation2 + $0x18] sm:$0xff]
      %v1967 = vld [vmem:[#allocation2 + $0x20] sm:$0xff]
      %v1968 = vld [vmem:[#allocation2 + $0x28] sm:$0xff]
      %v1969 = vld [vmem:[#allocation2 + $0x30] sm:$0xff]
      %v1970 = vld [vmem:[#allocation2 + $0x38] sm:$0xff]
      %v1971 = vld [vmem:[#allocation2 + $0x40] sm:$0xff]
      %v1972 = vld [vmem:[#allocation2 + $0x48] sm:$0xff]
      %v1973 = vld [vmem:[#allocation2 + $0x50] sm:$0xff]
      %v1974 = vld [vmem:[#allocation2 + $0x58] sm:$0xff]
      %v1975 = vld [vmem:[#allocation2 + $0x60] sm:$0xff]
      %v1976 = vld [vmem:[#allocation2 + $0x68] sm:$0xff]
      %v1977 = vld [vmem:[#allocation2 + $0x70] sm:$0xff]
      %v1978 = vld [vmem:[#allocation2 + $0x78] sm:$0xff]
      %v1979 = vld [vmem:[#allocation2 + $0x80] sm:$0xff]
      %v1980 = vld [vmem:[#allocation2 + $0x88] sm:$0xff]
      %v1981 = vld [vmem:[#allocation2 + $0x90] sm:$0xff]
      %v1982 = vld [vmem:[#allocation2 + $0x98] sm:$0xff]
      %v1983 = vld [vmem:[#allocation2 + $0xa0] sm:$0xff]
      %v1984 = vld [vmem:[#allocation2 + $0xa8] sm:$0xff]
      %v1985 = vld [vmem:[#allocation2 + $0xb0] sm:$0xff]
      %v1986 = vld [vmem:[#allocation2 + $0xb8] sm:$0xff]
      %v1987 = vld [vmem:[#allocation2 + $0xc0] sm:$0xff]
      %v1988 = vld [vmem:[#allocation2 + $0xc8] sm:$0xff]
      %v1989 = vld [vmem:[#allocation2 + $0xd0] sm:$0xff]
      %v1990 = vld [vmem:[#allocation2 + $0xd8] sm:$0xff]
      %v1991 = vld [vmem:[#allocation2 + $0xe0] sm:$0xff]
      %v1992 = vld [vmem:[#allocation2 + $0xe8] sm:$0xff]
      %v1993 = vld [vmem:[#allocation2 + $0xf0] sm:$0xff]
      %v1994 = vld [vmem:[#allocation2 + $0xf8] sm:$0xff]
      %v1995 = vld [vmem:[#allocation2 + $0x100] sm:$0xff]
      %v1996 = vld [vmem:[#allocation2 + $0x108] sm:$0xff]
      %v1997 = vld [vmem:[#allocation2 + $0x110] sm:$0xff]
      %v1998 = vpack.c.bf16 %v1967, %v1966
      %v1999 = vpack.c.bf16 %v1969, %v1968
      %v2000 = vpack.c.bf16 %v1971, %v1970
      %v2001 = vpack.c.bf16 %v1973, %v1972
      %v2002 = vpack.c.bf16 %v1975, %v1974
      %v2003 = vpack.c.bf16 %v1977, %v1976
      %v2004 = vpack.c.bf16 %v1979, %v1978
      %v2005 = vpack.c.bf16 %v1981, %v1980
      %v2006 = vpack.c.bf16 %v1983, %v1982
      %v2007 = vpack.c.bf16 %v1985, %v1984
      %v2008 = vpack.c.bf16 %v1987, %v1986
      %v2009 = vpack.c.bf16 %v1989, %v1988
      %v2010 = vpack.c.bf16 %v1991, %v1990
      %v2011 = vpack.c.bf16 %v1993, %v1992
      %v2012 = vpack.c.bf16 %v1995, %v1994
      %v2013 = vpack.c.bf16 %v1997, %v1996
      %v2030 = vunpack.c.l.b16 %v1998
      %v2031 = vunpack.c.h.b16 %v1998
      %v2032 = vunpack.c.l.b16 %v1999
      %v2033 = vunpack.c.h.b16 %v1999
      %v2034 = vunpack.c.l.b16 %v2000
      %v2035 = vunpack.c.h.b16 %v2000
      %v2036 = vunpack.c.l.b16 %v2001
      %v2037 = vunpack.c.h.b16 %v2001
      %v2038 = vunpack.c.l.b16 %v2002
      %v2039 = vunpack.c.h.b16 %v2002
      %v2040 = vunpack.c.l.b16 %v2003
      %v2041 = vunpack.c.h.b16 %v2003
      %v2042 = vunpack.c.l.b16 %v2004
      %v2043 = vunpack.c.h.b16 %v2004
      %v2044 = vunpack.c.l.b16 %v2005
      %v2045 = vunpack.c.h.b16 %v2005
      %v2046 = vunpack.c.l.b16 %v2006
      %v2047 = vunpack.c.h.b16 %v2006
      %v2048 = vunpack.c.l.b16 %v2007
      %v2049 = vunpack.c.h.b16 %v2007
      %v2050 = vunpack.c.l.b16 %v2008
      %v2051 = vunpack.c.h.b16 %v2008
      %v2052 = vunpack.c.l.b16 %v2009
      %v2053 = vunpack.c.h.b16 %v2009
      %v2054 = vunpack.c.l.b16 %v2010
      %v2055 = vunpack.c.h.b16 %v2010
      %v2056 = vunpack.c.l.b16 %v2011
      %v2057 = vunpack.c.h.b16 %v2011
      %v2058 = vunpack.c.l.b16 %v2012
      %v2059 = vunpack.c.h.b16 %v2012
      %v2060 = vunpack.c.l.b16 %v2013
      %v2061 = vunpack.c.h.b16 %v2013
      %v2062 = vpack.c.b16 %v2030, %v2030
      %v2063 = vpack.c.b16 %v2031, %v2031
      %v2064 = vpack.c.b16 %v2032, %v2032
      %v2065 = vpack.c.b16 %v2033, %v2033
      %v2066 = vpack.c.b16 %v2034, %v2034
      %v2067 = vpack.c.b16 %v2035, %v2035
      %v2068 = vpack.c.b16 %v2036, %v2036
      %v2069 = vpack.c.b16 %v2037, %v2037
      %v2070 = vpack.c.b16 %v2038, %v2038
      %v2071 = vpack.c.b16 %v2039, %v2039
      %v2072 = vpack.c.b16 %v2040, %v2040
      %v2073 = vpack.c.b16 %v2041, %v2041
      %v2074 = vpack.c.b16 %v2042, %v2042
      %v2075 = vpack.c.b16 %v2043, %v2043
      %v2076 = vpack.c.b16 %v2044, %v2044
      %v2077 = vpack.c.b16 %v2045, %v2045
      %v2078 = vpack.c.b16 %v2046, %v2046
      %v2079 = vpack.c.b16 %v2047, %v2047
      %v2080 = vpack.c.b16 %v2048, %v2048
      %v2081 = vpack.c.b16 %v2049, %v2049
      %v2082 = vpack.c.b16 %v2050, %v2050
      %v2083 = vpack.c.b16 %v2051, %v2051
      %v2084 = vpack.c.b16 %v2052, %v2052
      %v2085 = vpack.c.b16 %v2053, %v2053
      %v2086 = vpack.c.b16 %v2054, %v2054
      %v2087 = vpack.c.b16 %v2055, %v2055
      %v2088 = vpack.c.b16 %v2056, %v2056
      %v2089 = vpack.c.b16 %v2057, %v2057
      %v2090 = vpack.c.b16 %v2058, %v2058
      %v2091 = vpack.c.b16 %v2059, %v2059
      %v2092 = vpack.c.b16 %v2060, %v2060
      %v2093 = vpack.c.b16 %v2061, %v2061
      %2094 = vrot.lane.b32.xlu0 %v2062, 16
      %v2095 = vpop.permute.xlu0 %2094
      %2096 = vrot.lane.b32.xlu0 %v2063, 16
      %v2097 = vpop.permute.xlu0 %2096
      %2098 = vrot.lane.b32.xlu0 %v2064, 16
      %v2099 = vpop.permute.xlu0 %2098
      %2100 = vrot.lane.b32.xlu0 %v2065, 16
      %v2101 = vpop.permute.xlu0 %2100
      %2102 = vrot.lane.b32.xlu0 %v2066, 16
      %v2103 = vpop.permute.xlu0 %2102
      %2104 = vrot.lane.b32.xlu0 %v2067, 16
      %v2105 = vpop.permute.xlu0 %2104
      %2106 = vrot.lane.b32.xlu0 %v2068, 16
      %v2107 = vpop.permute.xlu0 %2106
      %2108 = vrot.lane.b32.xlu0 %v2069, 16
      %v2109 = vpop.permute.xlu0 %2108
      %2110 = vrot.lane.b32.xlu0 %v2070, 16
      %v2111 = vpop.permute.xlu0 %2110
      %2112 = vrot.lane.b32.xlu0 %v2071, 16
      %v2113 = vpop.permute.xlu0 %2112
      %2114 = vrot.lane.b32.xlu0 %v2072, 16
      %v2115 = vpop.permute.xlu0 %2114
      %2116 = vrot.lane.b32.xlu0 %v2073, 16
      %v2117 = vpop.permute.xlu0 %2116
      %2118 = vrot.lane.b32.xlu0 %v2074, 16
      %v2119 = vpop.permute.xlu0 %2118
      %2120 = vrot.lane.b32.xlu0 %v2075, 16
      %v2121 = vpop.permute.xlu0 %2120
      %2122 = vrot.lane.b32.xlu0 %v2076, 16
      %v2123 = vpop.permute.xlu0 %2122
      %2124 = vrot.lane.b32.xlu0 %v2077, 16
      %v2125 = vpop.permute.xlu0 %2124
      %2126 = vrot.lane.b32.xlu0 %v2078, 16
      %v2127 = vpop.permute.xlu0 %2126
      %2128 = vrot.lane.b32.xlu0 %v2079, 16
      %v2129 = vpop.permute.xlu0 %2128
      %2130 = vrot.lane.b32.xlu0 %v2080, 16
      %v2131 = vpop.permute.xlu0 %2130
      %2132 = vrot.lane.b32.xlu0 %v2081, 16
      %v2133 = vpop.permute.xlu0 %2132
      %2134 = vrot.lane.b32.xlu0 %v2082, 16
      %v2135 = vpop.permute.xlu0 %2134
      %2136 = vrot.lane.b32.xlu0 %v2083, 16
      %v2137 = vpop.permute.xlu0 %2136
      %2138 = vrot.lane.b32.xlu0 %v2084, 16
      %v2139 = vpop.permute.xlu0 %2138
      %2140 = vrot.lane.b32.xlu0 %v2085, 16
      %v2141 = vpop.permute.xlu0 %2140
      %2142 = vrot.lane.b32.xlu0 %v2086, 16
      %v2143 = vpop.permute.xlu0 %2142
      %2144 = vrot.lane.b32.xlu0 %v2087, 16
      %v2145 = vpop.permute.xlu0 %2144
      %2146 = vrot.lane.b32.xlu0 %v2088, 16
      %v2147 = vpop.permute.xlu0 %2146
      %2148 = vrot.lane.b32.xlu0 %v2089, 16
      %v2149 = vpop.permute.xlu0 %2148
      %2150 = vrot.lane.b32.xlu0 %v2090, 16
      %v2151 = vpop.permute.xlu0 %2150
      %2152 = vrot.lane.b32.xlu0 %v2091, 16
      %v2153 = vpop.permute.xlu0 %2152
      %2154 = vrot.lane.b32.xlu0 %v2092, 16
      %v2155 = vpop.permute.xlu0 %2154
      %2156 = vrot.lane.b32.xlu0 %v2093, 16
      %v2157 = vpop.permute.xlu0 %2156
      %vm2190 = vcmask 158848
      %2191 = vst.msk [vmem:[#allocation3] sm:$0xf] %vm2190, %v2095
      %2192 = vst.msk [vmem:[#allocation3 + $0x4] sm:$0xf] %vm2190, %v2097
      %2193 = vst.msk [vmem:[#allocation3 + $0x8] sm:$0xf] %vm2190, %v2099
      %2194 = vst.msk [vmem:[#allocation3 + $0xc] sm:$0xf] %vm2190, %v2101
      %2195 = vst.msk [vmem:[#allocation3 + $0x10] sm:$0xf] %vm2190, %v2103
      %2196 = vst.msk [vmem:[#allocation3 + $0x14] sm:$0xf] %vm2190, %v2105
      %2197 = vst.msk [vmem:[#allocation3 + $0x18] sm:$0xf] %vm2190, %v2107
      %2198 = vst.msk [vmem:[#allocation3 + $0x1c] sm:$0xf] %vm2190, %v2109
      %2199 = vst.msk [vmem:[#allocation3 + $0x20] sm:$0xf] %vm2190, %v2111
      %2200 = vst.msk [vmem:[#allocation3 + $0x24] sm:$0xf] %vm2190, %v2113
      %2201 = vst.msk [vmem:[#allocation3 + $0x28] sm:$0xf] %vm2190, %v2115
      %2202 = vst.msk [vmem:[#allocation3 + $0x2c] sm:$0xf] %vm2190, %v2117
      %2203 = vst.msk [vmem:[#allocation3 + $0x30] sm:$0xf] %vm2190, %v2119
      %2204 = vst.msk [vmem:[#allocation3 + $0x34] sm:$0xf] %vm2190, %v2121
      %2205 = vst.msk [vmem:[#allocation3 + $0x38] sm:$0xf] %vm2190, %v2123
      %2206 = vst.msk [vmem:[#allocation3 + $0x3c] sm:$0xf] %vm2190, %v2125
      %2207 = vst.msk [vmem:[#allocation3 + $0x40] sm:$0xf] %vm2190, %v2127
      %2208 = vst.msk [vmem:[#allocation3 + $0x44] sm:$0xf] %vm2190, %v2129
      %2209 = vst.msk [vmem:[#allocation3 + $0x48] sm:$0xf] %vm2190, %v2131
      %2210 = vst.msk [vmem:[#allocation3 + $0x4c] sm:$0xf] %vm2190, %v2133
      %2211 = vst.msk [vmem:[#allocation3 + $0x50] sm:$0xf] %vm2190, %v2135
      %2212 = vst.msk [vmem:[#allocation3 + $0x54] sm:$0xf] %vm2190, %v2137
      %2213 = vst.msk [vmem:[#allocation3 + $0x58] sm:$0xf] %vm2190, %v2139
      %2214 = vst.msk [vmem:[#allocation3 + $0x5c] sm:$0xf] %vm2190, %v2141
      %2215 = vst.msk [vmem:[#allocation3 + $0x60] sm:$0xf] %vm2190, %v2143
      %2216 = vst.msk [vmem:[#allocation3 + $0x64] sm:$0xf] %vm2190, %v2145
      %2217 = vst.msk [vmem:[#allocation3 + $0x68] sm:$0xf] %vm2190, %v2147
      %2218 = vst.msk [vmem:[#allocation3 + $0x6c] sm:$0xf] %vm2190, %v2149
      %2219 = vst.msk [vmem:[#allocation3 + $0x70] sm:$0xf] %vm2190, %v2151
      %2220 = vst.msk [vmem:[#allocation3 + $0x74] sm:$0xf] %vm2190, %v2153
      %2221 = vst.msk [vmem:[#allocation3 + $0x78] sm:$0xf] %vm2190, %v2155
      %2222 = vst.msk [vmem:[#allocation3 + $0x7c] sm:$0xf] %vm2190, %v2157
      %v2223 = vld [vmem:[#allocation2 + $0x19] sm:$0xff]
      %v2224 = vld [vmem:[#allocation2 + $0x21] sm:$0xff]
      %v2225 = vld [vmem:[#allocation2 + $0x29] sm:$0xff]
      %v2226 = vld [vmem:[#allocation2 + $0x31] sm:$0xff]
      %v2227 = vld [vmem:[#allocation2 + $0x39] sm:$0xff]
      %v2228 = vld [vmem:[#allocation2 + $0x41] sm:$0xff]
      %v2229 = vld [vmem:[#allocation2 + $0x49] sm:$0xff]
      %v2230 = vld [vmem:[#allocation2 + $0x51] sm:$0xff]
      %v2231 = vld [vmem:[#allocation2 + $0x59] sm:$0xff]
      %v2232 = vld [vmem:[#allocation2 + $0x61] sm:$0xff]
      %v2233 = vld [vmem:[#allocation2 + $0x69] sm:$0xff]
      %v2234 = vld [vmem:[#allocation2 + $0x71] sm:$0xff]
      %v2235 = vld [vmem:[#allocation2 + $0x79] sm:$0xff]
      %v2236 = vld [vmem:[#allocation2 + $0x81] sm:$0xff]
      %v2237 = vld [vmem:[#allocation2 + $0x89] sm:$0xff]
      %v2238 = vld [vmem:[#allocation2 + $0x91] sm:$0xff]
      %v2239 = vld [vmem:[#allocation2 + $0x99] sm:$0xff]
      %v2240 = vld [vmem:[#allocation2 + $0xa1] sm:$0xff]
      %v2241 = vld [vmem:[#allocation2 + $0xa9] sm:$0xff]
      %v2242 = vld [vmem:[#allocation2 + $0xb1] sm:$0xff]
      %v2243 = vld [vmem:[#allocation2 + $0xb9] sm:$0xff]
      %v2244 = vld [vmem:[#allocation2 + $0xc1] sm:$0xff]
      %v2245 = vld [vmem:[#allocation2 + $0xc9] sm:$0xff]
      %v2246 = vld [vmem:[#allocation2 + $0xd1] sm:$0xff]
      %v2247 = vld [vmem:[#allocation2 + $0xd9] sm:$0xff]
      %v2248 = vld [vmem:[#allocation2 + $0xe1] sm:$0xff]
      %v2249 = vld [vmem:[#allocation2 + $0xe9] sm:$0xff]
      %v2250 = vld [vmem:[#allocation2 + $0xf1] sm:$0xff]
      %v2251 = vld [vmem:[#allocation2 + $0xf9] sm:$0xff]
      %v2252 = vld [vmem:[#allocation2 + $0x101] sm:$0xff]
      %v2253 = vld [vmem:[#allocation2 + $0x109] sm:$0xff]
      %v2254 = vld [vmem:[#allocation2 + $0x111] sm:$0xff]
      %v2255 = vsel %vm810, %v2223, 0.0
      %v2256 = vsel %vm811, %v2224, 0.0
      %v2257 = vsel %vm812, %v2225, 0.0
      %v2258 = vsel %vm813, %v2226, 0.0
      %v2259 = vsel %vm814, %v2227, 0.0
      %v2260 = vsel %vm815, %v2228, 0.0
      %v2261 = vsel %vm816, %v2229, 0.0
      %v2262 = vsel %vm817, %v2230, 0.0
      %v2263 = vsel %vm818, %v2231, 0.0
      %v2264 = vsel %vm819, %v2232, 0.0
      %v2265 = vsel %vm820, %v2233, 0.0
      %v2266 = vsel %vm821, %v2234, 0.0
      %v2267 = vsel %vm822, %v2235, 0.0
      %v2268 = vsel %vm823, %v2236, 0.0
      %v2269 = vsel %vm824, %v2237, 0.0
      %v2270 = vsel %vm825, %v2238, 0.0
      %v2271 = vsel %vm826, %v2239, 0.0
      %v2272 = vsel %vm827, %v2240, 0.0
      %v2273 = vsel %vm828, %v2241, 0.0
      %v2274 = vsel %vm829, %v2242, 0.0
      %v2275 = vsel %vm830, %v2243, 0.0
      %v2276 = vsel %vm831, %v2244, 0.0
      %v2277 = vsel %vm832, %v2245, 0.0
      %v2278 = vsel %vm833, %v2246, 0.0
      %v2279 = vsel %vm834, %v2247, 0.0
      %v2280 = vsel %vm835, %v2248, 0.0
      %v2281 = vsel %vm836, %v2249, 0.0
      %v2282 = vsel %vm837, %v2250, 0.0
      %v2283 = vsel %vm838, %v2251, 0.0
      %v2284 = vsel %vm839, %v2252, 0.0
      %v2285 = vsel %vm840, %v2253, 0.0
      %v2286 = vsel %vm841, %v2254, 0.0
      %v2287 = vpack.c.bf16 %v2256, %v2255
      %v2288 = vpack.c.bf16 %v2258, %v2257
      %v2289 = vpack.c.bf16 %v2260, %v2259
      %v2290 = vpack.c.bf16 %v2262, %v2261
      %v2291 = vpack.c.bf16 %v2264, %v2263
      %v2292 = vpack.c.bf16 %v2266, %v2265
      %v2293 = vpack.c.bf16 %v2268, %v2267
      %v2294 = vpack.c.bf16 %v2270, %v2269
      %v2295 = vpack.c.bf16 %v2272, %v2271
      %v2296 = vpack.c.bf16 %v2274, %v2273
      %v2297 = vpack.c.bf16 %v2276, %v2275
      %v2298 = vpack.c.bf16 %v2278, %v2277
      %v2299 = vpack.c.bf16 %v2280, %v2279
      %v2300 = vpack.c.bf16 %v2282, %v2281
      %v2301 = vpack.c.bf16 %v2284, %v2283
      %v2302 = vpack.c.bf16 %v2286, %v2285
      %v2319 = vunpack.c.l.b16 %v2287
      %v2320 = vunpack.c.h.b16 %v2287
      %v2321 = vunpack.c.l.b16 %v2288
      %v2322 = vunpack.c.h.b16 %v2288
      %v2323 = vunpack.c.l.b16 %v2289
      %v2324 = vunpack.c.h.b16 %v2289
      %v2325 = vunpack.c.l.b16 %v2290
      %v2326 = vunpack.c.h.b16 %v2290
      %v2327 = vunpack.c.l.b16 %v2291
      %v2328 = vunpack.c.h.b16 %v2291
      %v2329 = vunpack.c.l.b16 %v2292
      %v2330 = vunpack.c.h.b16 %v2292
      %v2331 = vunpack.c.l.b16 %v2293
      %v2332 = vunpack.c.h.b16 %v2293
      %v2333 = vunpack.c.l.b16 %v2294
      %v2334 = vunpack.c.h.b16 %v2294
      %v2335 = vunpack.c.l.b16 %v2295
      %v2336 = vunpack.c.h.b16 %v2295
      %v2337 = vunpack.c.l.b16 %v2296
      %v2338 = vunpack.c.h.b16 %v2296
      %v2339 = vunpack.c.l.b16 %v2297
      %v2340 = vunpack.c.h.b16 %v2297
      %v2341 = vunpack.c.l.b16 %v2298
      %v2342 = vunpack.c.h.b16 %v2298
      %v2343 = vunpack.c.l.b16 %v2299
      %v2344 = vunpack.c.h.b16 %v2299
      %v2345 = vunpack.c.l.b16 %v2300
      %v2346 = vunpack.c.h.b16 %v2300
      %v2347 = vunpack.c.l.b16 %v2301
      %v2348 = vunpack.c.h.b16 %v2301
      %v2349 = vunpack.c.l.b16 %v2302
      %v2350 = vunpack.c.h.b16 %v2302
      %v2351 = vpack.c.b16 %v2319, %v2319
      %v2352 = vpack.c.b16 %v2320, %v2320
      %v2353 = vpack.c.b16 %v2321, %v2321
      %v2354 = vpack.c.b16 %v2322, %v2322
      %v2355 = vpack.c.b16 %v2323, %v2323
      %v2356 = vpack.c.b16 %v2324, %v2324
      %v2357 = vpack.c.b16 %v2325, %v2325
      %v2358 = vpack.c.b16 %v2326, %v2326
      %v2359 = vpack.c.b16 %v2327, %v2327
      %v2360 = vpack.c.b16 %v2328, %v2328
      %v2361 = vpack.c.b16 %v2329, %v2329
      %v2362 = vpack.c.b16 %v2330, %v2330
      %v2363 = vpack.c.b16 %v2331, %v2331
      %v2364 = vpack.c.b16 %v2332, %v2332
      %v2365 = vpack.c.b16 %v2333, %v2333
      %v2366 = vpack.c.b16 %v2334, %v2334
      %v2367 = vpack.c.b16 %v2335, %v2335
      %v2368 = vpack.c.b16 %v2336, %v2336
      %v2369 = vpack.c.b16 %v2337, %v2337
      %v2370 = vpack.c.b16 %v2338, %v2338
      %v2371 = vpack.c.b16 %v2339, %v2339
      %v2372 = vpack.c.b16 %v2340, %v2340
      %v2373 = vpack.c.b16 %v2341, %v2341
      %v2374 = vpack.c.b16 %v2342, %v2342
      %v2375 = vpack.c.b16 %v2343, %v2343
      %v2376 = vpack.c.b16 %v2344, %v2344
      %v2377 = vpack.c.b16 %v2345, %v2345
      %v2378 = vpack.c.b16 %v2346, %v2346
      %v2379 = vpack.c.b16 %v2347, %v2347
      %v2380 = vpack.c.b16 %v2348, %v2348
      %v2381 = vpack.c.b16 %v2349, %v2349
      %v2382 = vpack.c.b16 %v2350, %v2350
      %2383 = vrot.lane.b32.xlu0 %v2351, 20
      %v2384 = vpop.permute.xlu0 %2383
      %2385 = vrot.lane.b32.xlu0 %v2352, 20
      %v2386 = vpop.permute.xlu0 %2385
      %2387 = vrot.lane.b32.xlu0 %v2353, 20
      %v2388 = vpop.permute.xlu0 %2387
      %2389 = vrot.lane.b32.xlu0 %v2354, 20
      %v2390 = vpop.permute.xlu0 %2389
      %2391 = vrot.lane.b32.xlu0 %v2355, 20
      %v2392 = vpop.permute.xlu0 %2391
      %2393 = vrot.lane.b32.xlu0 %v2356, 20
      %v2394 = vpop.permute.xlu0 %2393
      %2395 = vrot.lane.b32.xlu0 %v2357, 20
      %v2396 = vpop.permute.xlu0 %2395
      %2397 = vrot.lane.b32.xlu0 %v2358, 20
      %v2398 = vpop.permute.xlu0 %2397
      %2399 = vrot.lane.b32.xlu0 %v2359, 20
      %v2400 = vpop.permute.xlu0 %2399
      %2401 = vrot.lane.b32.xlu0 %v2360, 20
      %v2402 = vpop.permute.xlu0 %2401
      %2403 = vrot.lane.b32.xlu0 %v2361, 20
      %v2404 = vpop.permute.xlu0 %2403
      %2405 = vrot.lane.b32.xlu0 %v2362, 20
      %v2406 = vpop.permute.xlu0 %2405
      %2407 = vrot.lane.b32.xlu0 %v2363, 20
      %v2408 = vpop.permute.xlu0 %2407
      %2409 = vrot.lane.b32.xlu0 %v2364, 20
      %v2410 = vpop.permute.xlu0 %2409
      %2411 = vrot.lane.b32.xlu0 %v2365, 20
      %v2412 = vpop.permute.xlu0 %2411
      %2413 = vrot.lane.b32.xlu0 %v2366, 20
      %v2414 = vpop.permute.xlu0 %2413
      %2415 = vrot.lane.b32.xlu0 %v2367, 20
      %v2416 = vpop.permute.xlu0 %2415
      %2417 = vrot.lane.b32.xlu0 %v2368, 20
      %v2418 = vpop.permute.xlu0 %2417
      %2419 = vrot.lane.b32.xlu0 %v2369, 20
      %v2420 = vpop.permute.xlu0 %2419
      %2421 = vrot.lane.b32.xlu0 %v2370, 20
      %v2422 = vpop.permute.xlu0 %2421
      %2423 = vrot.lane.b32.xlu0 %v2371, 20
      %v2424 = vpop.permute.xlu0 %2423
      %2425 = vrot.lane.b32.xlu0 %v2372, 20
      %v2426 = vpop.permute.xlu0 %2425
      %2427 = vrot.lane.b32.xlu0 %v2373, 20
      %v2428 = vpop.permute.xlu0 %2427
      %2429 = vrot.lane.b32.xlu0 %v2374, 20
      %v2430 = vpop.permute.xlu0 %2429
      %2431 = vrot.lane.b32.xlu0 %v2375, 20
      %v2432 = vpop.permute.xlu0 %2431
      %2433 = vrot.lane.b32.xlu0 %v2376, 20
      %v2434 = vpop.permute.xlu0 %2433
      %2435 = vrot.lane.b32.xlu0 %v2377, 20
      %v2436 = vpop.permute.xlu0 %2435
      %2437 = vrot.lane.b32.xlu0 %v2378, 20
      %v2438 = vpop.permute.xlu0 %2437
      %2439 = vrot.lane.b32.xlu0 %v2379, 20
      %v2440 = vpop.permute.xlu0 %2439
      %2441 = vrot.lane.b32.xlu0 %v2380, 20
      %v2442 = vpop.permute.xlu0 %2441
      %2443 = vrot.lane.b32.xlu0 %v2381, 20
      %v2444 = vpop.permute.xlu0 %2443
      %2445 = vrot.lane.b32.xlu0 %v2382, 20
      %v2446 = vpop.permute.xlu0 %2445
      %vm2479 = vcmask 191648
      %2480 = vst.msk [vmem:[#allocation3] sm:$0xf] %vm2479, %v2384
      %2481 = vst.msk [vmem:[#allocation3 + $0x4] sm:$0xf] %vm2479, %v2386
      %2482 = vst.msk [vmem:[#allocation3 + $0x8] sm:$0xf] %vm2479, %v2388
      %2483 = vst.msk [vmem:[#allocation3 + $0xc] sm:$0xf] %vm2479, %v2390
      %2484 = vst.msk [vmem:[#allocation3 + $0x10] sm:$0xf] %vm2479, %v2392
      %2485 = vst.msk [vmem:[#allocation3 + $0x14] sm:$0xf] %vm2479, %v2394
      %2486 = vst.msk [vmem:[#allocation3 + $0x18] sm:$0xf] %vm2479, %v2396
      %2487 = vst.msk [vmem:[#allocation3 + $0x1c] sm:$0xf] %vm2479, %v2398
      %2488 = vst.msk [vmem:[#allocation3 + $0x20] sm:$0xf] %vm2479, %v2400
      %2489 = vst.msk [vmem:[#allocation3 + $0x24] sm:$0xf] %vm2479, %v2402
      %2490 = vst.msk [vmem:[#allocation3 + $0x28] sm:$0xf] %vm2479, %v2404
      %2491 = vst.msk [vmem:[#allocation3 + $0x2c] sm:$0xf] %vm2479, %v2406
      %2492 = vst.msk [vmem:[#allocation3 + $0x30] sm:$0xf] %vm2479, %v2408
      %2493 = vst.msk [vmem:[#allocation3 + $0x34] sm:$0xf] %vm2479, %v2410
      %2494 = vst.msk [vmem:[#allocation3 + $0x38] sm:$0xf] %vm2479, %v2412
      %2495 = vst.msk [vmem:[#allocation3 + $0x3c] sm:$0xf] %vm2479, %v2414
      %2496 = vst.msk [vmem:[#allocation3 + $0x40] sm:$0xf] %vm2479, %v2416
      %2497 = vst.msk [vmem:[#allocation3 + $0x44] sm:$0xf] %vm2479, %v2418
      %2498 = vst.msk [vmem:[#allocation3 + $0x48] sm:$0xf] %vm2479, %v2420
      %2499 = vst.msk [vmem:[#allocation3 + $0x4c] sm:$0xf] %vm2479, %v2422
      %2500 = vst.msk [vmem:[#allocation3 + $0x50] sm:$0xf] %vm2479, %v2424
      %2501 = vst.msk [vmem:[#allocation3 + $0x54] sm:$0xf] %vm2479, %v2426
      %2502 = vst.msk [vmem:[#allocation3 + $0x58] sm:$0xf] %vm2479, %v2428
      %2503 = vst.msk [vmem:[#allocation3 + $0x5c] sm:$0xf] %vm2479, %v2430
      %2504 = vst.msk [vmem:[#allocation3 + $0x60] sm:$0xf] %vm2479, %v2432
      %2505 = vst.msk [vmem:[#allocation3 + $0x64] sm:$0xf] %vm2479, %v2434
      %2506 = vst.msk [vmem:[#allocation3 + $0x68] sm:$0xf] %vm2479, %v2436
      %2507 = vst.msk [vmem:[#allocation3 + $0x6c] sm:$0xf] %vm2479, %v2438
      %2508 = vst.msk [vmem:[#allocation3 + $0x70] sm:$0xf] %vm2479, %v2440
      %2509 = vst.msk [vmem:[#allocation3 + $0x74] sm:$0xf] %vm2479, %v2442
      %2510 = vst.msk [vmem:[#allocation3 + $0x78] sm:$0xf] %vm2479, %v2444
      %2511 = vst.msk [vmem:[#allocation3 + $0x7c] sm:$0xf] %vm2479, %v2446
      %v2512 = vld [vmem:[#allocation2 + $0x27] sm:$0xff]
      %v2513 = vld [vmem:[#allocation2 + $0x2f] sm:$0xff]
      %v2514 = vld [vmem:[#allocation2 + $0x37] sm:$0xff]
      %v2515 = vld [vmem:[#allocation2 + $0x3f] sm:$0xff]
      %v2516 = vld [vmem:[#allocation2 + $0x47] sm:$0xff]
      %v2517 = vld [vmem:[#allocation2 + $0x4f] sm:$0xff]
      %v2518 = vld [vmem:[#allocation2 + $0x57] sm:$0xff]
      %v2519 = vld [vmem:[#allocation2 + $0x5f] sm:$0xff]
      %v2520 = vld [vmem:[#allocation2 + $0x67] sm:$0xff]
      %v2521 = vld [vmem:[#allocation2 + $0x6f] sm:$0xff]
      %v2522 = vld [vmem:[#allocation2 + $0x77] sm:$0xff]
      %v2523 = vld [vmem:[#allocation2 + $0x7f] sm:$0xff]
      %v2524 = vld [vmem:[#allocation2 + $0x87] sm:$0xff]
      %v2525 = vld [vmem:[#allocation2 + $0x8f] sm:$0xff]
      %v2526 = vld [vmem:[#allocation2 + $0x97] sm:$0xff]
      %v2527 = vld [vmem:[#allocation2 + $0x9f] sm:$0xff]
      %v2528 = vld [vmem:[#allocation2 + $0xa7] sm:$0xff]
      %v2529 = vld [vmem:[#allocation2 + $0xaf] sm:$0xff]
      %v2530 = vld [vmem:[#allocation2 + $0xb7] sm:$0xff]
      %v2531 = vld [vmem:[#allocation2 + $0xbf] sm:$0xff]
      %v2532 = vld [vmem:[#allocation2 + $0xc7] sm:$0xff]
      %v2533 = vld [vmem:[#allocation2 + $0xcf] sm:$0xff]
      %v2534 = vld [vmem:[#allocation2 + $0xd7] sm:$0xff]
      %v2535 = vld [vmem:[#allocation2 + $0xdf] sm:$0xff]
      %v2536 = vld [vmem:[#allocation2 + $0xe7] sm:$0xff]
      %v2537 = vld [vmem:[#allocation2 + $0xef] sm:$0xff]
      %v2538 = vld [vmem:[#allocation2 + $0xf7] sm:$0xff]
      %v2539 = vld [vmem:[#allocation2 + $0xff] sm:$0xff]
      %v2540 = vld [vmem:[#allocation2 + $0x107] sm:$0xff]
      %v2541 = vld [vmem:[#allocation2 + $0x10f] sm:$0xff]
      %v2542 = vld [vmem:[#allocation2 + $0x117] sm:$0xff]
      %v2543 = vld [vmem:[#allocation2 + $0x11f] sm:$0xff]
      %v2544 = vsel %vm714, %v2512, 0.0
      %v2545 = vsel %vm715, %v2513, 0.0
      %v2546 = vsel %vm716, %v2514, 0.0
      %v2547 = vsel %vm717, %v2515, 0.0
      %v2548 = vsel %vm718, %v2516, 0.0
      %v2549 = vsel %vm719, %v2517, 0.0
      %v2550 = vsel %vm720, %v2518, 0.0
      %v2551 = vsel %vm721, %v2519, 0.0
      %v2552 = vsel %vm722, %v2520, 0.0
      %v2553 = vsel %vm723, %v2521, 0.0
      %v2554 = vsel %vm724, %v2522, 0.0
      %v2555 = vsel %vm725, %v2523, 0.0
      %v2556 = vsel %vm726, %v2524, 0.0
      %v2557 = vsel %vm727, %v2525, 0.0
      %v2558 = vsel %vm728, %v2526, 0.0
      %v2559 = vsel %vm729, %v2527, 0.0
      %v2560 = vsel %vm730, %v2528, 0.0
      %v2561 = vsel %vm731, %v2529, 0.0
      %v2562 = vsel %vm732, %v2530, 0.0
      %v2563 = vsel %vm733, %v2531, 0.0
      %v2564 = vsel %vm734, %v2532, 0.0
      %v2565 = vsel %vm735, %v2533, 0.0
      %v2566 = vsel %vm736, %v2534, 0.0
      %v2567 = vsel %vm737, %v2535, 0.0
      %v2568 = vsel %vm738, %v2536, 0.0
      %v2569 = vsel %vm739, %v2537, 0.0
      %v2570 = vsel %vm740, %v2538, 0.0
      %v2571 = vsel %vm741, %v2539, 0.0
      %v2572 = vsel %vm742, %v2540, 0.0
      %v2573 = vsel %vm743, %v2541, 0.0
      %v2574 = vsel %vm744, %v2542, 0.0
      %v2575 = vsel %vm745, %v2543, 0.0
      %v2576 = vpack.c.bf16 %v2545, %v2544
      %v2577 = vpack.c.bf16 %v2547, %v2546
      %v2578 = vpack.c.bf16 %v2549, %v2548
      %v2579 = vpack.c.bf16 %v2551, %v2550
      %v2580 = vpack.c.bf16 %v2553, %v2552
      %v2581 = vpack.c.bf16 %v2555, %v2554
      %v2582 = vpack.c.bf16 %v2557, %v2556
      %v2583 = vpack.c.bf16 %v2559, %v2558
      %v2584 = vpack.c.bf16 %v2561, %v2560
      %v2585 = vpack.c.bf16 %v2563, %v2562
      %v2586 = vpack.c.bf16 %v2565, %v2564
      %v2587 = vpack.c.bf16 %v2567, %v2566
      %v2588 = vpack.c.bf16 %v2569, %v2568
      %v2589 = vpack.c.bf16 %v2571, %v2570
      %v2590 = vpack.c.bf16 %v2573, %v2572
      %v2591 = vpack.c.bf16 %v2575, %v2574
      %v2608 = vunpack.c.l.b16 %v2576
      %v2609 = vunpack.c.h.b16 %v2576
      %v2610 = vunpack.c.l.b16 %v2577
      %v2611 = vunpack.c.h.b16 %v2577
      %v2612 = vunpack.c.l.b16 %v2578
      %v2613 = vunpack.c.h.b16 %v2578
      %v2614 = vunpack.c.l.b16 %v2579
      %v2615 = vunpack.c.h.b16 %v2579
      %v2616 = vunpack.c.l.b16 %v2580
      %v2617 = vunpack.c.h.b16 %v2580
      %v2618 = vunpack.c.l.b16 %v2581
      %v2619 = vunpack.c.h.b16 %v2581
      %v2620 = vunpack.c.l.b16 %v2582
      %v2621 = vunpack.c.h.b16 %v2582
      %v2622 = vunpack.c.l.b16 %v2583
      %v2623 = vunpack.c.h.b16 %v2583
      %v2624 = vunpack.c.l.b16 %v2584
      %v2625 = vunpack.c.h.b16 %v2584
      %v2626 = vunpack.c.l.b16 %v2585
      %v2627 = vunpack.c.h.b16 %v2585
      %v2628 = vunpack.c.l.b16 %v2586
      %v2629 = vunpack.c.h.b16 %v2586
      %v2630 = vunpack.c.l.b16 %v2587
      %v2631 = vunpack.c.h.b16 %v2587
      %v2632 = vunpack.c.l.b16 %v2588
      %v2633 = vunpack.c.h.b16 %v2588
      %v2634 = vunpack.c.l.b16 %v2589
      %v2635 = vunpack.c.h.b16 %v2589
      %v2636 = vunpack.c.l.b16 %v2590
      %v2637 = vunpack.c.h.b16 %v2590
      %v2638 = vunpack.c.l.b16 %v2591
      %v2639 = vunpack.c.h.b16 %v2591
      %v2640 = vpack.c.b16 %v2608, %v2608
      %v2641 = vpack.c.b16 %v2609, %v2609
      %v2642 = vpack.c.b16 %v2610, %v2610
      %v2643 = vpack.c.b16 %v2611, %v2611
      %v2644 = vpack.c.b16 %v2612, %v2612
      %v2645 = vpack.c.b16 %v2613, %v2613
      %v2646 = vpack.c.b16 %v2614, %v2614
      %v2647 = vpack.c.b16 %v2615, %v2615
      %v2648 = vpack.c.b16 %v2616, %v2616
      %v2649 = vpack.c.b16 %v2617, %v2617
      %v2650 = vpack.c.b16 %v2618, %v2618
      %v2651 = vpack.c.b16 %v2619, %v2619
      %v2652 = vpack.c.b16 %v2620, %v2620
      %v2653 = vpack.c.b16 %v2621, %v2621
      %v2654 = vpack.c.b16 %v2622, %v2622
      %v2655 = vpack.c.b16 %v2623, %v2623
      %v2656 = vpack.c.b16 %v2624, %v2624
      %v2657 = vpack.c.b16 %v2625, %v2625
      %v2658 = vpack.c.b16 %v2626, %v2626
      %v2659 = vpack.c.b16 %v2627, %v2627
      %v2660 = vpack.c.b16 %v2628, %v2628
      %v2661 = vpack.c.b16 %v2629, %v2629
      %v2662 = vpack.c.b16 %v2630, %v2630
      %v2663 = vpack.c.b16 %v2631, %v2631
      %v2664 = vpack.c.b16 %v2632, %v2632
      %v2665 = vpack.c.b16 %v2633, %v2633
      %v2666 = vpack.c.b16 %v2634, %v2634
      %v2667 = vpack.c.b16 %v2635, %v2635
      %v2668 = vpack.c.b16 %v2636, %v2636
      %v2669 = vpack.c.b16 %v2637, %v2637
      %v2670 = vpack.c.b16 %v2638, %v2638
      %v2671 = vpack.c.b16 %v2639, %v2639
      %2672 = vrot.lane.b32.xlu0 %v2640, 24
      %v2673 = vpop.permute.xlu0 %2672
      %2674 = vrot.lane.b32.xlu0 %v2641, 24
      %v2675 = vpop.permute.xlu0 %2674
      %2676 = vrot.lane.b32.xlu0 %v2642, 24
      %v2677 = vpop.permute.xlu0 %2676
      %2678 = vrot.lane.b32.xlu0 %v2643, 24
      %v2679 = vpop.permute.xlu0 %2678
      %2680 = vrot.lane.b32.xlu0 %v2644, 24
      %v2681 = vpop.permute.xlu0 %2680
      %2682 = vrot.lane.b32.xlu0 %v2645, 24
      %v2683 = vpop.permute.xlu0 %2682
      %2684 = vrot.lane.b32.xlu0 %v2646, 24
      %v2685 = vpop.permute.xlu0 %2684
      %2686 = vrot.lane.b32.xlu0 %v2647, 24
      %v2687 = vpop.permute.xlu0 %2686
      %2688 = vrot.lane.b32.xlu0 %v2648, 24
      %v2689 = vpop.permute.xlu0 %2688
      %2690 = vrot.lane.b32.xlu0 %v2649, 24
      %v2691 = vpop.permute.xlu0 %2690
      %2692 = vrot.lane.b32.xlu0 %v2650, 24
      %v2693 = vpop.permute.xlu0 %2692
      %2694 = vrot.lane.b32.xlu0 %v2651, 24
      %v2695 = vpop.permute.xlu0 %2694
      %2696 = vrot.lane.b32.xlu0 %v2652, 24
      %v2697 = vpop.permute.xlu0 %2696
      %2698 = vrot.lane.b32.xlu0 %v2653, 24
      %v2699 = vpop.permute.xlu0 %2698
      %2700 = vrot.lane.b32.xlu0 %v2654, 24
      %v2701 = vpop.permute.xlu0 %2700
      %2702 = vrot.lane.b32.xlu0 %v2655, 24
      %v2703 = vpop.permute.xlu0 %2702
      %2704 = vrot.lane.b32.xlu0 %v2656, 24
      %v2705 = vpop.permute.xlu0 %2704
      %2706 = vrot.lane.b32.xlu0 %v2657, 24
      %v2707 = vpop.permute.xlu0 %2706
      %2708 = vrot.lane.b32.xlu0 %v2658, 24
      %v2709 = vpop.permute.xlu0 %2708
      %2710 = vrot.lane.b32.xlu0 %v2659, 24
      %v2711 = vpop.permute.xlu0 %2710
      %2712 = vrot.lane.b32.xlu0 %v2660, 24
      %v2713 = vpop.permute.xlu0 %2712
      %2714 = vrot.lane.b32.xlu0 %v2661, 24
      %v2715 = vpop.permute.xlu0 %2714
      %2716 = vrot.lane.b32.xlu0 %v2662, 24
      %v2717 = vpop.permute.xlu0 %2716
      %2718 = vrot.lane.b32.xlu0 %v2663, 24
      %v2719 = vpop.permute.xlu0 %2718
      %2720 = vrot.lane.b32.xlu0 %v2664, 24
      %v2721 = vpop.permute.xlu0 %2720
      %2722 = vrot.lane.b32.xlu0 %v2665, 24
      %v2723 = vpop.permute.xlu0 %2722
      %2724 = vrot.lane.b32.xlu0 %v2666, 24
      %v2725 = vpop.permute.xlu0 %2724
      %2726 = vrot.lane.b32.xlu0 %v2667, 24
      %v2727 = vpop.permute.xlu0 %2726
      %2728 = vrot.lane.b32.xlu0 %v2668, 24
      %v2729 = vpop.permute.xlu0 %2728
      %2730 = vrot.lane.b32.xlu0 %v2669, 24
      %v2731 = vpop.permute.xlu0 %2730
      %2732 = vrot.lane.b32.xlu0 %v2670, 24
      %v2733 = vpop.permute.xlu0 %2732
      %2734 = vrot.lane.b32.xlu0 %v2671, 24
      %v2735 = vpop.permute.xlu0 %2734
      %vm2768 = vcmask 224448
      %2769 = vst.msk [vmem:[#allocation3] sm:$0xf] %vm2768, %v2673
      %2770 = vst.msk [vmem:[#allocation3 + $0x4] sm:$0xf] %vm2768, %v2675
      %2771 = vst.msk [vmem:[#allocation3 + $0x8] sm:$0xf] %vm2768, %v2677
      %2772 = vst.msk [vmem:[#allocation3 + $0xc] sm:$0xf] %vm2768, %v2679
      %2773 = vst.msk [vmem:[#allocation3 + $0x10] sm:$0xf] %vm2768, %v2681
      %2774 = vst.msk [vmem:[#allocation3 + $0x14] sm:$0xf] %vm2768, %v2683
      %2775 = vst.msk [vmem:[#allocation3 + $0x18] sm:$0xf] %vm2768, %v2685
      %2776 = vst.msk [vmem:[#allocation3 + $0x1c] sm:$0xf] %vm2768, %v2687
      %2777 = vst.msk [vmem:[#allocation3 + $0x20] sm:$0xf] %vm2768, %v2689
      %2778 = vst.msk [vmem:[#allocation3 + $0x24] sm:$0xf] %vm2768, %v2691
      %2779 = vst.msk [vmem:[#allocation3 + $0x28] sm:$0xf] %vm2768, %v2693
      %2780 = vst.msk [vmem:[#allocation3 + $0x2c] sm:$0xf] %vm2768, %v2695
      %2781 = vst.msk [vmem:[#allocation3 + $0x30] sm:$0xf] %vm2768, %v2697
      %2782 = vst.msk [vmem:[#allocation3 + $0x34] sm:$0xf] %vm2768, %v2699
      %2783 = vst.msk [vmem:[#allocation3 + $0x38] sm:$0xf] %vm2768, %v2701
      %2784 = vst.msk [vmem:[#allocation3 + $0x3c] sm:$0xf] %vm2768, %v2703
      %2785 = vst.msk [vmem:[#allocation3 + $0x40] sm:$0xf] %vm2768, %v2705
      %2786 = vst.msk [vmem:[#allocation3 + $0x44] sm:$0xf] %vm2768, %v2707
      %2787 = vst.msk [vmem:[#allocation3 + $0x48] sm:$0xf] %vm2768, %v2709
      %2788 = vst.msk [vmem:[#allocation3 + $0x4c] sm:$0xf] %vm2768, %v2711
      %2789 = vst.msk [vmem:[#allocation3 + $0x50] sm:$0xf] %vm2768, %v2713
      %2790 = vst.msk [vmem:[#allocation3 + $0x54] sm:$0xf] %vm2768, %v2715
      %2791 = vst.msk [vmem:[#allocation3 + $0x58] sm:$0xf] %vm2768, %v2717
      %2792 = vst.msk [vmem:[#allocation3 + $0x5c] sm:$0xf] %vm2768, %v2719
      %2793 = vst.msk [vmem:[#allocation3 + $0x60] sm:$0xf] %vm2768, %v2721
      %2794 = vst.msk [vmem:[#allocation3 + $0x64] sm:$0xf] %vm2768, %v2723
      %2795 = vst.msk [vmem:[#allocation3 + $0x68] sm:$0xf] %vm2768, %v2725
      %2796 = vst.msk [vmem:[#allocation3 + $0x6c] sm:$0xf] %vm2768, %v2727
      %2797 = vst.msk [vmem:[#allocation3 + $0x70] sm:$0xf] %vm2768, %v2729
      %2798 = vst.msk [vmem:[#allocation3 + $0x74] sm:$0xf] %vm2768, %v2731
      %2799 = vst.msk [vmem:[#allocation3 + $0x78] sm:$0xf] %vm2768, %v2733
      %2800 = vst.msk [vmem:[#allocation3 + $0x7c] sm:$0xf] %vm2768, %v2735
      %v2801 = vld [vmem:[#allocation2 + $0x28] sm:$0xff]
      %v2802 = vld [vmem:[#allocation2 + $0x30] sm:$0xff]
      %v2803 = vld [vmem:[#allocation2 + $0x38] sm:$0xff]
      %v2804 = vld [vmem:[#allocation2 + $0x40] sm:$0xff]
      %v2805 = vld [vmem:[#allocation2 + $0x48] sm:$0xff]
      %v2806 = vld [vmem:[#allocation2 + $0x50] sm:$0xff]
      %v2807 = vld [vmem:[#allocation2 + $0x58] sm:$0xff]
      %v2808 = vld [vmem:[#allocation2 + $0x60] sm:$0xff]
      %v2809 = vld [vmem:[#allocation2 + $0x68] sm:$0xff]
      %v2810 = vld [vmem:[#allocation2 + $0x70] sm:$0xff]
      %v2811 = vld [vmem:[#allocation2 + $0x78] sm:$0xff]
      %v2812 = vld [vmem:[#allocation2 + $0x80] sm:$0xff]
      %v2813 = vld [vmem:[#allocation2 + $0x88] sm:$0xff]
      %v2814 = vld [vmem:[#allocation2 + $0x90] sm:$0xff]
      %v2815 = vld [vmem:[#allocation2 + $0x98] sm:$0xff]
      %v2816 = vld [vmem:[#allocation2 + $0xa0] sm:$0xff]
      %v2817 = vld [vmem:[#allocation2 + $0xa8] sm:$0xff]
      %v2818 = vld [vmem:[#allocation2 + $0xb0] sm:$0xff]
      %v2819 = vld [vmem:[#allocation2 + $0xb8] sm:$0xff]
      %v2820 = vld [vmem:[#allocation2 + $0xc0] sm:$0xff]
      %v2821 = vld [vmem:[#allocation2 + $0xc8] sm:$0xff]
      %v2822 = vld [vmem:[#allocation2 + $0xd0] sm:$0xff]
      %v2823 = vld [vmem:[#allocation2 + $0xd8] sm:$0xff]
      %v2824 = vld [vmem:[#allocation2 + $0xe0] sm:$0xff]
      %v2825 = vld [vmem:[#allocation2 + $0xe8] sm:$0xff]
      %v2826 = vld [vmem:[#allocation2 + $0xf0] sm:$0xff]
      %v2827 = vld [vmem:[#allocation2 + $0xf8] sm:$0xff]
      %v2828 = vld [vmem:[#allocation2 + $0x100] sm:$0xff]
      %v2829 = vld [vmem:[#allocation2 + $0x108] sm:$0xff]
      %v2830 = vld [vmem:[#allocation2 + $0x110] sm:$0xff]
      %v2831 = vld [vmem:[#allocation2 + $0x118] sm:$0xff]
      %v2832 = vld [vmem:[#allocation2 + $0x120] sm:$0xff]
      %v2833 = vpack.c.bf16 %v2802, %v2801
      %v2834 = vpack.c.bf16 %v2804, %v2803
      %v2835 = vpack.c.bf16 %v2806, %v2805
      %v2836 = vpack.c.bf16 %v2808, %v2807
      %v2837 = vpack.c.bf16 %v2810, %v2809
      %v2838 = vpack.c.bf16 %v2812, %v2811
      %v2839 = vpack.c.bf16 %v2814, %v2813
      %v2840 = vpack.c.bf16 %v2816, %v2815
      %v2841 = vpack.c.bf16 %v2818, %v2817
      %v2842 = vpack.c.bf16 %v2820, %v2819
      %v2843 = vpack.c.bf16 %v2822, %v2821
      %v2844 = vpack.c.bf16 %v2824, %v2823
      %v2845 = vpack.c.bf16 %v2826, %v2825
      %v2846 = vpack.c.bf16 %v2828, %v2827
      %v2847 = vpack.c.bf16 %v2830, %v2829
      %v2848 = vpack.c.bf16 %v2832, %v2831
      %v2865 = vunpack.c.l.b16 %v2833
      %v2866 = vunpack.c.h.b16 %v2833
      %v2867 = vunpack.c.l.b16 %v2834
      %v2868 = vunpack.c.h.b16 %v2834
      %v2869 = vunpack.c.l.b16 %v2835
      %v2870 = vunpack.c.h.b16 %v2835
      %v2871 = vunpack.c.l.b16 %v2836
      %v2872 = vunpack.c.h.b16 %v2836
      %v2873 = vunpack.c.l.b16 %v2837
      %v2874 = vunpack.c.h.b16 %v2837
      %v2875 = vunpack.c.l.b16 %v2838
      %v2876 = vunpack.c.h.b16 %v2838
      %v2877 = vunpack.c.l.b16 %v2839
      %v2878 = vunpack.c.h.b16 %v2839
      %v2879 = vunpack.c.l.b16 %v2840
      %v2880 = vunpack.c.h.b16 %v2840
      %v2881 = vunpack.c.l.b16 %v2841
      %v2882 = vunpack.c.h.b16 %v2841
      %v2883 = vunpack.c.l.b16 %v2842
      %v2884 = vunpack.c.h.b16 %v2842
      %v2885 = vunpack.c.l.b16 %v2843
      %v2886 = vunpack.c.h.b16 %v2843
      %v2887 = vunpack.c.l.b16 %v2844
      %v2888 = vunpack.c.h.b16 %v2844
      %v2889 = vunpack.c.l.b16 %v2845
      %v2890 = vunpack.c.h.b16 %v2845
      %v2891 = vunpack.c.l.b16 %v2846
      %v2892 = vunpack.c.h.b16 %v2846
      %v2893 = vunpack.c.l.b16 %v2847
      %v2894 = vunpack.c.h.b16 %v2847
      %v2895 = vunpack.c.l.b16 %v2848
      %v2896 = vunpack.c.h.b16 %v2848
      %v2897 = vpack.c.b16 %v2865, %v2865
      %v2898 = vpack.c.b16 %v2866, %v2866
      %v2899 = vpack.c.b16 %v2867, %v2867
      %v2900 = vpack.c.b16 %v2868, %v2868
      %v2901 = vpack.c.b16 %v2869, %v2869
      %v2902 = vpack.c.b16 %v2870, %v2870
      %v2903 = vpack.c.b16 %v2871, %v2871
      %v2904 = vpack.c.b16 %v2872, %v2872
      %v2905 = vpack.c.b16 %v2873, %v2873
      %v2906 = vpack.c.b16 %v2874, %v2874
      %v2907 = vpack.c.b16 %v2875, %v2875
      %v2908 = vpack.c.b16 %v2876, %v2876
      %v2909 = vpack.c.b16 %v2877, %v2877
      %v2910 = vpack.c.b16 %v2878, %v2878
      %v2911 = vpack.c.b16 %v2879, %v2879
      %v2912 = vpack.c.b16 %v2880, %v2880
      %v2913 = vpack.c.b16 %v2881, %v2881
      %v2914 = vpack.c.b16 %v2882, %v2882
      %v2915 = vpack.c.b16 %v2883, %v2883
      %v2916 = vpack.c.b16 %v2884, %v2884
      %v2917 = vpack.c.b16 %v2885, %v2885
      %v2918 = vpack.c.b16 %v2886, %v2886
      %v2919 = vpack.c.b16 %v2887, %v2887
      %v2920 = vpack.c.b16 %v2888, %v2888
      %v2921 = vpack.c.b16 %v2889, %v2889
      %v2922 = vpack.c.b16 %v2890, %v2890
      %v2923 = vpack.c.b16 %v2891, %v2891
      %v2924 = vpack.c.b16 %v2892, %v2892
      %v2925 = vpack.c.b16 %v2893, %v2893
      %v2926 = vpack.c.b16 %v2894, %v2894
      %v2927 = vpack.c.b16 %v2895, %v2895
      %v2928 = vpack.c.b16 %v2896, %v2896
      %2929 = vrot.lane.b32.xlu0 %v2897, 28
      %v2930 = vpop.permute.xlu0 %2929
      %2931 = vrot.lane.b32.xlu0 %v2898, 28
      %v2932 = vpop.permute.xlu0 %2931
      %2933 = vrot.lane.b32.xlu0 %v2899, 28
      %v2934 = vpop.permute.xlu0 %2933
      %2935 = vrot.lane.b32.xlu0 %v2900, 28
      %v2936 = vpop.permute.xlu0 %2935
      %2937 = vrot.lane.b32.xlu0 %v2901, 28
      %v2938 = vpop.permute.xlu0 %2937
      %2939 = vrot.lane.b32.xlu0 %v2902, 28
      %v2940 = vpop.permute.xlu0 %2939
      %2941 = vrot.lane.b32.xlu0 %v2903, 28
      %v2942 = vpop.permute.xlu0 %2941
      %2943 = vrot.lane.b32.xlu0 %v2904, 28
      %v2944 = vpop.permute.xlu0 %2943
      %2945 = vrot.lane.b32.xlu0 %v2905, 28
      %v2946 = vpop.permute.xlu0 %2945
      %2947 = vrot.lane.b32.xlu0 %v2906, 28
      %v2948 = vpop.permute.xlu0 %2947
      %2949 = vrot.lane.b32.xlu0 %v2907, 28
      %v2950 = vpop.permute.xlu0 %2949
      %2951 = vrot.lane.b32.xlu0 %v2908, 28
      %v2952 = vpop.permute.xlu0 %2951
      %2953 = vrot.lane.b32.xlu0 %v2909, 28
      %v2954 = vpop.permute.xlu0 %2953
      %2955 = vrot.lane.b32.xlu0 %v2910, 28
      %v2956 = vpop.permute.xlu0 %2955
      %2957 = vrot.lane.b32.xlu0 %v2911, 28
      %v2958 = vpop.permute.xlu0 %2957
      %2959 = vrot.lane.b32.xlu0 %v2912, 28
      %v2960 = vpop.permute.xlu0 %2959
      %2961 = vrot.lane.b32.xlu0 %v2913, 28
      %v2962 = vpop.permute.xlu0 %2961
      %2963 = vrot.lane.b32.xlu0 %v2914, 28
      %v2964 = vpop.permute.xlu0 %2963
      %2965 = vrot.lane.b32.xlu0 %v2915, 28
      %v2966 = vpop.permute.xlu0 %2965
      %2967 = vrot.lane.b32.xlu0 %v2916, 28
      %v2968 = vpop.permute.xlu0 %2967
      %2969 = vrot.lane.b32.xlu0 %v2917, 28
      %v2970 = vpop.permute.xlu0 %2969
      %2971 = vrot.lane.b32.xlu0 %v2918, 28
      %v2972 = vpop.permute.xlu0 %2971
      %2973 = vrot.lane.b32.xlu0 %v2919, 28
      %v2974 = vpop.permute.xlu0 %2973
      %2975 = vrot.lane.b32.xlu0 %v2920, 28
      %v2976 = vpop.permute.xlu0 %2975
      %2977 = vrot.lane.b32.xlu0 %v2921, 28
      %v2978 = vpop.permute.xlu0 %2977
      %2979 = vrot.lane.b32.xlu0 %v2922, 28
      %v2980 = vpop.permute.xlu0 %2979
      %2981 = vrot.lane.b32.xlu0 %v2923, 28
      %v2982 = vpop.permute.xlu0 %2981
      %2983 = vrot.lane.b32.xlu0 %v2924, 28
      %v2984 = vpop.permute.xlu0 %2983
      %2985 = vrot.lane.b32.xlu0 %v2925, 28
      %v2986 = vpop.permute.xlu0 %2985
      %2987 = vrot.lane.b32.xlu0 %v2926, 28
      %v2988 = vpop.permute.xlu0 %2987
      %2989 = vrot.lane.b32.xlu0 %v2927, 28
      %v2990 = vpop.permute.xlu0 %2989
      %2991 = vrot.lane.b32.xlu0 %v2928, 28
      %v2992 = vpop.permute.xlu0 %2991
      %vm3025 = vcmask 257248
      %3026 = vst.msk [vmem:[#allocation3] sm:$0xf] %vm3025, %v2930
      %3027 = vst.msk [vmem:[#allocation3 + $0x4] sm:$0xf] %vm3025, %v2932
      %3028 = vst.msk [vmem:[#allocation3 + $0x8] sm:$0xf] %vm3025, %v2934
      %3029 = vst.msk [vmem:[#allocation3 + $0xc] sm:$0xf] %vm3025, %v2936
      %3030 = vst.msk [vmem:[#allocation3 + $0x10] sm:$0xf] %vm3025, %v2938
      %3031 = vst.msk [vmem:[#allocation3 + $0x14] sm:$0xf] %vm3025, %v2940
      %3032 = vst.msk [vmem:[#allocation3 + $0x18] sm:$0xf] %vm3025, %v2942
      %3033 = vst.msk [vmem:[#allocation3 + $0x1c] sm:$0xf] %vm3025, %v2944
      %3034 = vst.msk [vmem:[#allocation3 + $0x20] sm:$0xf] %vm3025, %v2946
      %3035 = vst.msk [vmem:[#allocation3 + $0x24] sm:$0xf] %vm3025, %v2948
      %3036 = vst.msk [vmem:[#allocation3 + $0x28] sm:$0xf] %vm3025, %v2950
      %3037 = vst.msk [vmem:[#allocation3 + $0x2c] sm:$0xf] %vm3025, %v2952
      %3038 = vst.msk [vmem:[#allocation3 + $0x30] sm:$0xf] %vm3025, %v2954
      %3039 = vst.msk [vmem:[#allocation3 + $0x34] sm:$0xf] %vm3025, %v2956
      %3040 = vst.msk [vmem:[#allocation3 + $0x38] sm:$0xf] %vm3025, %v2958
      %3041 = vst.msk [vmem:[#allocation3 + $0x3c] sm:$0xf] %vm3025, %v2960
      %3042 = vst.msk [vmem:[#allocation3 + $0x40] sm:$0xf] %vm3025, %v2962
      %3043 = vst.msk [vmem:[#allocation3 + $0x44] sm:$0xf] %vm3025, %v2964
      %3044 = vst.msk [vmem:[#allocation3 + $0x48] sm:$0xf] %vm3025, %v2966
      %3045 = vst.msk [vmem:[#allocation3 + $0x4c] sm:$0xf] %vm3025, %v2968
      %3046 = vst.msk [vmem:[#allocation3 + $0x50] sm:$0xf] %vm3025, %v2970
      %3047 = vst.msk [vmem:[#allocation3 + $0x54] sm:$0xf] %vm3025, %v2972
      %3048 = vst.msk [vmem:[#allocation3 + $0x58] sm:$0xf] %vm3025, %v2974
      %3049 = vst.msk [vmem:[#allocation3 + $0x5c] sm:$0xf] %vm3025, %v2976
      %3050 = vst.msk [vmem:[#allocation3 + $0x60] sm:$0xf] %vm3025, %v2978
      %3051 = vst.msk [vmem:[#allocation3 + $0x64] sm:$0xf] %vm3025, %v2980
      %3052 = vst.msk [vmem:[#allocation3 + $0x68] sm:$0xf] %vm3025, %v2982
      %3053 = vst.msk [vmem:[#allocation3 + $0x6c] sm:$0xf] %vm3025, %v2984
      %3054 = vst.msk [vmem:[#allocation3 + $0x70] sm:$0xf] %vm3025, %v2986
      %3055 = vst.msk [vmem:[#allocation3 + $0x74] sm:$0xf] %vm3025, %v2988
      %3056 = vst.msk [vmem:[#allocation3 + $0x78] sm:$0xf] %vm3025, %v2990
      %3057 = vst.msk [vmem:[#allocation3 + $0x7c] sm:$0xf] %vm3025, %v2992
      %v3058 = vld [vmem:[#allocation2 + $0x29] sm:$0xff]
      %v3059 = vld [vmem:[#allocation2 + $0x31] sm:$0xff]
      %v3060 = vld [vmem:[#allocation2 + $0x39] sm:$0xff]
      %v3061 = vld [vmem:[#allocation2 + $0x41] sm:$0xff]
      %v3062 = vld [vmem:[#allocation2 + $0x49] sm:$0xff]
      %v3063 = vld [vmem:[#allocation2 + $0x51] sm:$0xff]
      %v3064 = vld [vmem:[#allocation2 + $0x59] sm:$0xff]
      %v3065 = vld [vmem:[#allocation2 + $0x61] sm:$0xff]
      %v3066 = vld [vmem:[#allocation2 + $0x69] sm:$0xff]
      %v3067 = vld [vmem:[#allocation2 + $0x71] sm:$0xff]
      %v3068 = vld [vmem:[#allocation2 + $0x79] sm:$0xff]
      %v3069 = vld [vmem:[#allocation2 + $0x81] sm:$0xff]
      %v3070 = vld [vmem:[#allocation2 + $0x89] sm:$0xff]
      %v3071 = vld [vmem:[#allocation2 + $0x91] sm:$0xff]
      %v3072 = vld [vmem:[#allocation2 + $0x99] sm:$0xff]
      %v3073 = vld [vmem:[#allocation2 + $0xa1] sm:$0xff]
      %v3074 = vld [vmem:[#allocation2 + $0xa9] sm:$0xff]
      %v3075 = vld [vmem:[#allocation2 + $0xb1] sm:$0xff]
      %v3076 = vld [vmem:[#allocation2 + $0xb9] sm:$0xff]
      %v3077 = vld [vmem:[#allocation2 + $0xc1] sm:$0xff]
      %v3078 = vld [vmem:[#allocation2 + $0xc9] sm:$0xff]
      %v3079 = vld [vmem:[#allocation2 + $0xd1] sm:$0xff]
      %v3080 = vld [vmem:[#allocation2 + $0xd9] sm:$0xff]
      %v3081 = vld [vmem:[#allocation2 + $0xe1] sm:$0xff]
      %v3082 = vld [vmem:[#allocation2 + $0xe9] sm:$0xff]
      %v3083 = vld [vmem:[#allocation2 + $0xf1] sm:$0xff]
      %v3084 = vld [vmem:[#allocation2 + $0xf9] sm:$0xff]
      %v3085 = vld [vmem:[#allocation2 + $0x101] sm:$0xff]
      %v3086 = vld [vmem:[#allocation2 + $0x109] sm:$0xff]
      %v3087 = vld [vmem:[#allocation2 + $0x111] sm:$0xff]
      %v3088 = vld [vmem:[#allocation2 + $0x119] sm:$0xff]
      %v3089 = vld [vmem:[#allocation2 + $0x121] sm:$0xff]
      %v3090 = vsel %vm810, %v3058, 0.0
      %v3091 = vsel %vm811, %v3059, 0.0
      %v3092 = vsel %vm812, %v3060, 0.0
      %v3093 = vsel %vm813, %v3061, 0.0
      %v3094 = vsel %vm814, %v3062, 0.0
      %v3095 = vsel %vm815, %v3063, 0.0
      %v3096 = vsel %vm816, %v3064, 0.0
      %v3097 = vsel %vm817, %v3065, 0.0
      %v3098 = vsel %vm818, %v3066, 0.0
      %v3099 = vsel %vm819, %v3067, 0.0
      %v3100 = vsel %vm820, %v3068, 0.0
      %v3101 = vsel %vm821, %v3069, 0.0
      %v3102 = vsel %vm822, %v3070, 0.0
      %v3103 = vsel %vm823, %v3071, 0.0
      %v3104 = vsel %vm824, %v3072, 0.0
      %v3105 = vsel %vm825, %v3073, 0.0
      %v3106 = vsel %vm826, %v3074, 0.0
      %v3107 = vsel %vm827, %v3075, 0.0
      %v3108 = vsel %vm828, %v3076, 0.0
      %v3109 = vsel %vm829, %v3077, 0.0
      %v3110 = vsel %vm830, %v3078, 0.0
      %v3111 = vsel %vm831, %v3079, 0.0
      %v3112 = vsel %vm832, %v3080, 0.0
      %v3113 = vsel %vm833, %v3081, 0.0
      %v3114 = vsel %vm834, %v3082, 0.0
      %v3115 = vsel %vm835, %v3083, 0.0
      %v3116 = vsel %vm836, %v3084, 0.0
      %v3117 = vsel %vm837, %v3085, 0.0
      %v3118 = vsel %vm838, %v3086, 0.0
      %v3119 = vsel %vm839, %v3087, 0.0
      %v3120 = vsel %vm840, %v3088, 0.0
      %v3121 = vsel %vm841, %v3089, 0.0
      %v3122 = vpack.c.bf16 %v3091, %v3090
      %v3123 = vpack.c.bf16 %v3093, %v3092
      %v3124 = vpack.c.bf16 %v3095, %v3094
      %v3125 = vpack.c.bf16 %v3097, %v3096
      %v3126 = vpack.c.bf16 %v3099, %v3098
      %v3127 = vpack.c.bf16 %v3101, %v3100
      %v3128 = vpack.c.bf16 %v3103, %v3102
      %v3129 = vpack.c.bf16 %v3105, %v3104
      %v3130 = vpack.c.bf16 %v3107, %v3106
      %v3131 = vpack.c.bf16 %v3109, %v3108
      %v3132 = vpack.c.bf16 %v3111, %v3110
      %v3133 = vpack.c.bf16 %v3113, %v3112
      %v3134 = vpack.c.bf16 %v3115, %v3114
      %v3135 = vpack.c.bf16 %v3117, %v3116
      %v3136 = vpack.c.bf16 %v3119, %v3118
      %v3137 = vpack.c.bf16 %v3121, %v3120
      %v3154 = vunpack.c.l.b16 %v3122
      %v3155 = vunpack.c.h.b16 %v3122
      %v3156 = vunpack.c.l.b16 %v3123
      %v3157 = vunpack.c.h.b16 %v3123
      %v3158 = vunpack.c.l.b16 %v3124
      %v3159 = vunpack.c.h.b16 %v3124
      %v3160 = vunpack.c.l.b16 %v3125
      %v3161 = vunpack.c.h.b16 %v3125
      %v3162 = vunpack.c.l.b16 %v3126
      %v3163 = vunpack.c.h.b16 %v3126
      %v3164 = vunpack.c.l.b16 %v3127
      %v3165 = vunpack.c.h.b16 %v3127
      %v3166 = vunpack.c.l.b16 %v3128
      %v3167 = vunpack.c.h.b16 %v3128
      %v3168 = vunpack.c.l.b16 %v3129
      %v3169 = vunpack.c.h.b16 %v3129
      %v3170 = vunpack.c.l.b16 %v3130
      %v3171 = vunpack.c.h.b16 %v3130
      %v3172 = vunpack.c.l.b16 %v3131
      %v3173 = vunpack.c.h.b16 %v3131
      %v3174 = vunpack.c.l.b16 %v3132
      %v3175 = vunpack.c.h.b16 %v3132
      %v3176 = vunpack.c.l.b16 %v3133
      %v3177 = vunpack.c.h.b16 %v3133
      %v3178 = vunpack.c.l.b16 %v3134
      %v3179 = vunpack.c.h.b16 %v3134
      %v3180 = vunpack.c.l.b16 %v3135
      %v3181 = vunpack.c.h.b16 %v3135
      %v3182 = vunpack.c.l.b16 %v3136
      %v3183 = vunpack.c.h.b16 %v3136
      %v3184 = vunpack.c.l.b16 %v3137
      %v3185 = vunpack.c.h.b16 %v3137
      %v3186 = vpack.c.b16 %v3154, %v3154
      %v3187 = vpack.c.b16 %v3155, %v3155
      %v3188 = vpack.c.b16 %v3156, %v3156
      %v3189 = vpack.c.b16 %v3157, %v3157
      %v3190 = vpack.c.b16 %v3158, %v3158
      %v3191 = vpack.c.b16 %v3159, %v3159
      %v3192 = vpack.c.b16 %v3160, %v3160
      %v3193 = vpack.c.b16 %v3161, %v3161
      %v3194 = vpack.c.b16 %v3162, %v3162
      %v3195 = vpack.c.b16 %v3163, %v3163
      %v3196 = vpack.c.b16 %v3164, %v3164
      %v3197 = vpack.c.b16 %v3165, %v3165
      %v3198 = vpack.c.b16 %v3166, %v3166
      %v3199 = vpack.c.b16 %v3167, %v3167
      %v3200 = vpack.c.b16 %v3168, %v3168
      %v3201 = vpack.c.b16 %v3169, %v3169
      %v3202 = vpack.c.b16 %v3170, %v3170
      %v3203 = vpack.c.b16 %v3171, %v3171
      %v3204 = vpack.c.b16 %v3172, %v3172
      %v3205 = vpack.c.b16 %v3173, %v3173
      %v3206 = vpack.c.b16 %v3174, %v3174
      %v3207 = vpack.c.b16 %v3175, %v3175
      %v3208 = vpack.c.b16 %v3176, %v3176
      %v3209 = vpack.c.b16 %v3177, %v3177
      %v3210 = vpack.c.b16 %v3178, %v3178
      %v3211 = vpack.c.b16 %v3179, %v3179
      %v3212 = vpack.c.b16 %v3180, %v3180
      %v3213 = vpack.c.b16 %v3181, %v3181
      %v3214 = vpack.c.b16 %v3182, %v3182
      %v3215 = vpack.c.b16 %v3183, %v3183
      %v3216 = vpack.c.b16 %v3184, %v3184
      %v3217 = vpack.c.b16 %v3185, %v3185
      %3218 = vrot.lane.b32.xlu0 %v3186, 32
      %v3219 = vpop.permute.xlu0 %3218
      %3220 = vrot.lane.b32.xlu0 %v3187, 32
      %v3221 = vpop.permute.xlu0 %3220
      %3222 = vrot.lane.b32.xlu0 %v3188, 32
      %v3223 = vpop.permute.xlu0 %3222
      %3224 = vrot.lane.b32.xlu0 %v3189, 32
      %v3225 = vpop.permute.xlu0 %3224
      %3226 = vrot.lane.b32.xlu0 %v3190, 32
      %v3227 = vpop.permute.xlu0 %3226
      %3228 = vrot.lane.b32.xlu0 %v3191, 32
      %v3229 = vpop.permute.xlu0 %3228
      %3230 = vrot.lane.b32.xlu0 %v3192, 32
      %v3231 = vpop.permute.xlu0 %3230
      %3232 = vrot.lane.b32.xlu0 %v3193, 32
      %v3233 = vpop.permute.xlu0 %3232
      %3234 = vrot.lane.b32.xlu0 %v3194, 32
      %v3235 = vpop.permute.xlu0 %3234
      %3236 = vrot.lane.b32.xlu0 %v3195, 32
      %v3237 = vpop.permute.xlu0 %3236
      %3238 = vrot.lane.b32.xlu0 %v3196, 32
      %v3239 = vpop.permute.xlu0 %3238
      %3240 = vrot.lane.b32.xlu0 %v3197, 32
      %v3241 = vpop.permute.xlu0 %3240
      %3242 = vrot.lane.b32.xlu0 %v3198, 32
      %v3243 = vpop.permute.xlu0 %3242
      %3244 = vrot.lane.b32.xlu0 %v3199, 32
      %v3245 = vpop.permute.xlu0 %3244
      %3246 = vrot.lane.b32.xlu0 %v3200, 32
      %v3247 = vpop.permute.xlu0 %3246
      %3248 = vrot.lane.b32.xlu0 %v3201, 32
      %v3249 = vpop.permute.xlu0 %3248
      %3250 = vrot.lane.b32.xlu0 %v3202, 32
      %v3251 = vpop.permute.xlu0 %3250
      %3252 = vrot.lane.b32.xlu0 %v3203, 32
      %v3253 = vpop.permute.xlu0 %3252
      %3254 = vrot.lane.b32.xlu0 %v3204, 32
      %v3255 = vpop.permute.xlu0 %3254
      %3256 = vrot.lane.b32.xlu0 %v3205, 32
      %v3257 = vpop.permute.xlu0 %3256
      %3258 = vrot.lane.b32.xlu0 %v3206, 32
      %v3259 = vpop.permute.xlu0 %3258
      %3260 = vrot.lane.b32.xlu0 %v3207, 32
      %v3261 = vpop.permute.xlu0 %3260
      %3262 = vrot.lane.b32.xlu0 %v3208, 32
      %v3263 = vpop.permute.xlu0 %3262
      %3264 = vrot.lane.b32.xlu0 %v3209, 32
      %v3265 = vpop.permute.xlu0 %3264
      %3266 = vrot.lane.b32.xlu0 %v3210, 32
      %v3267 = vpop.permute.xlu0 %3266
      %3268 = vrot.lane.b32.xlu0 %v3211, 32
      %v3269 = vpop.permute.xlu0 %3268
      %3270 = vrot.lane.b32.xlu0 %v3212, 32
      %v3271 = vpop.permute.xlu0 %3270
      %3272 = vrot.lane.b32.xlu0 %v3213, 32
      %v3273 = vpop.permute.xlu0 %3272
      %3274 = vrot.lane.b32.xlu0 %v3214, 32
      %v3275 = vpop.permute.xlu0 %3274
      %3276 = vrot.lane.b32.xlu0 %v3215, 32
      %v3277 = vpop.permute.xlu0 %3276
      %3278 = vrot.lane.b32.xlu0 %v3216, 32
      %v3279 = vpop.permute.xlu0 %3278
      %3280 = vrot.lane.b32.xlu0 %v3217, 32
      %v3281 = vpop.permute.xlu0 %3280
      %vm3314 = vcmask 290048
      %3315 = vst.msk [vmem:[#allocation3] sm:$0xf] %vm3314, %v3219
      %3316 = vst.msk [vmem:[#allocation3 + $0x4] sm:$0xf] %vm3314, %v3221
      %3317 = vst.msk [vmem:[#allocation3 + $0x8] sm:$0xf] %vm3314, %v3223
      %3318 = vst.msk [vmem:[#allocation3 + $0xc] sm:$0xf] %vm3314, %v3225
      %3319 = vst.msk [vmem:[#allocation3 + $0x10] sm:$0xf] %vm3314, %v3227
      %3320 = vst.msk [vmem:[#allocation3 + $0x14] sm:$0xf] %vm3314, %v3229
      %3321 = vst.msk [vmem:[#allocation3 + $0x18] sm:$0xf] %vm3314, %v3231
      %3322 = vst.msk [vmem:[#allocation3 + $0x1c] sm:$0xf] %vm3314, %v3233
      %3323 = vst.msk [vmem:[#allocation3 + $0x20] sm:$0xf] %vm3314, %v3235
      %3324 = vst.msk [vmem:[#allocation3 + $0x24] sm:$0xf] %vm3314, %v3237
      %3325 = vst.msk [vmem:[#allocation3 + $0x28] sm:$0xf] %vm3314, %v3239
      %3326 = vst.msk [vmem:[#allocation3 + $0x2c] sm:$0xf] %vm3314, %v3241
      %3327 = vst.msk [vmem:[#allocation3 + $0x30] sm:$0xf] %vm3314, %v3243
      %3328 = vst.msk [vmem:[#allocation3 + $0x34] sm:$0xf] %vm3314, %v3245
      %3329 = vst.msk [vmem:[#allocation3 + $0x38] sm:$0xf] %vm3314, %v3247
      %3330 = vst.msk [vmem:[#allocation3 + $0x3c] sm:$0xf] %vm3314, %v3249
      %3331 = vst.msk [vmem:[#allocation3 + $0x40] sm:$0xf] %vm3314, %v3251
      %3332 = vst.msk [vmem:[#allocation3 + $0x44] sm:$0xf] %vm3314, %v3253
      %3333 = vst.msk [vmem:[#allocation3 + $0x48] sm:$0xf] %vm3314, %v3255
      %3334 = vst.msk [vmem:[#allocation3 + $0x4c] sm:$0xf] %vm3314, %v3257
      %3335 = vst.msk [vmem:[#allocation3 + $0x50] sm:$0xf] %vm3314, %v3259
      %3336 = vst.msk [vmem:[#allocation3 + $0x54] sm:$0xf] %vm3314, %v3261
      %3337 = vst.msk [vmem:[#allocation3 + $0x58] sm:$0xf] %vm3314, %v3263
      %3338 = vst.msk [vmem:[#allocation3 + $0x5c] sm:$0xf] %vm3314, %v3265
      %3339 = vst.msk [vmem:[#allocation3 + $0x60] sm:$0xf] %vm3314, %v3267
      %3340 = vst.msk [vmem:[#allocation3 + $0x64] sm:$0xf] %vm3314, %v3269
      %3341 = vst.msk [vmem:[#allocation3 + $0x68] sm:$0xf] %vm3314, %v3271
      %3342 = vst.msk [vmem:[#allocation3 + $0x6c] sm:$0xf] %vm3314, %v3273
      %3343 = vst.msk [vmem:[#allocation3 + $0x70] sm:$0xf] %vm3314, %v3275
      %3344 = vst.msk [vmem:[#allocation3 + $0x74] sm:$0xf] %vm3314, %v3277
      %3345 = vst.msk [vmem:[#allocation3 + $0x78] sm:$0xf] %vm3314, %v3279
      %3346 = vst.msk [vmem:[#allocation3 + $0x7c] sm:$0xf] %vm3314, %v3281
      %v3347 = vld [vmem:[#allocation3] sm:$0xf]
      %v3348 = vld [vmem:[#allocation3 + $0x4] sm:$0xf]
      %v3349 = vld [vmem:[#allocation3 + $0x8] sm:$0xf]
      %v3350 = vld [vmem:[#allocation3 + $0xc] sm:$0xf]
      %v3351 = vld [vmem:[#allocation3 + $0x10] sm:$0xf]
      %v3352 = vld [vmem:[#allocation3 + $0x14] sm:$0xf]
      %v3353 = vld [vmem:[#allocation3 + $0x18] sm:$0xf]
      %v3354 = vld [vmem:[#allocation3 + $0x1c] sm:$0xf]
      %v3355 = vld [vmem:[#allocation3 + $0x20] sm:$0xf]
      %v3356 = vld [vmem:[#allocation3 + $0x24] sm:$0xf]
      %v3357 = vld [vmem:[#allocation3 + $0x28] sm:$0xf]
      %v3358 = vld [vmem:[#allocation3 + $0x2c] sm:$0xf]
      %v3359 = vld [vmem:[#allocation3 + $0x30] sm:$0xf]
      %v3360 = vld [vmem:[#allocation3 + $0x34] sm:$0xf]
      %v3361 = vld [vmem:[#allocation3 + $0x38] sm:$0xf]
      %v3362 = vld [vmem:[#allocation3 + $0x3c] sm:$0xf]
      %v3363 = vld [vmem:[#allocation3 + $0x40] sm:$0xf]
      %v3364 = vld [vmem:[#allocation3 + $0x44] sm:$0xf]
      %v3365 = vld [vmem:[#allocation3 + $0x48] sm:$0xf]
      %v3366 = vld [vmem:[#allocation3 + $0x4c] sm:$0xf]
      %v3367 = vld [vmem:[#allocation3 + $0x50] sm:$0xf]
      %v3368 = vld [vmem:[#allocation3 + $0x54] sm:$0xf]
      %v3369 = vld [vmem:[#allocation3 + $0x58] sm:$0xf]
      %v3370 = vld [vmem:[#allocation3 + $0x5c] sm:$0xf]
      %v3371 = vld [vmem:[#allocation3 + $0x60] sm:$0xf]
      %v3372 = vld [vmem:[#allocation3 + $0x64] sm:$0xf]
      %v3373 = vld [vmem:[#allocation3 + $0x68] sm:$0xf]
      %v3374 = vld [vmem:[#allocation3 + $0x6c] sm:$0xf]
      %v3375 = vld [vmem:[#allocation3 + $0x70] sm:$0xf]
      %v3376 = vld [vmem:[#allocation3 + $0x74] sm:$0xf]
      %v3377 = vld [vmem:[#allocation3 + $0x78] sm:$0xf]
      %v3378 = vld [vmem:[#allocation3 + $0x7c] sm:$0xf]
      %v3379 = vld [vmem:[%s1] sm:$0xf]
      %v3380 = vld [vmem:[%s1 + $0x4] sm:$0xf]
      %v3381 = vld [vmem:[%s1 + $0x8] sm:$0xf]
      %v3382 = vld [vmem:[%s1 + $0xc] sm:$0xf]
      %v3383 = vld [vmem:[%s1 + $0x10] sm:$0x3]
      %v3416 = vunpack.c.l.b16 %v3347
      %v3417 = vunpack.c.l.b16 %v3348
      %v3418 = vunpack.c.l.b16 %v3349
      %v3419 = vunpack.c.l.b16 %v3350
      %v3420 = vunpack.c.l.b16 %v3351
      %v3421 = vunpack.c.l.b16 %v3352
      %v3422 = vunpack.c.l.b16 %v3353
      %v3423 = vunpack.c.l.b16 %v3354
      %v3424 = vunpack.c.l.b16 %v3355
      %v3425 = vunpack.c.l.b16 %v3356
      %v3426 = vunpack.c.l.b16 %v3357
      %v3427 = vunpack.c.l.b16 %v3358
      %v3428 = vunpack.c.l.b16 %v3359
      %v3429 = vunpack.c.l.b16 %v3360
      %v3430 = vunpack.c.l.b16 %v3361
      %v3431 = vunpack.c.l.b16 %v3362
      %v3432 = vunpack.c.l.b16 %v3363
      %v3433 = vunpack.c.l.b16 %v3364
      %v3434 = vunpack.c.l.b16 %v3365
      %v3435 = vunpack.c.l.b16 %v3366
      %v3436 = vunpack.c.l.b16 %v3367
      %v3437 = vunpack.c.l.b16 %v3368
      %v3438 = vunpack.c.l.b16 %v3369
      %v3439 = vunpack.c.l.b16 %v3370
      %v3440 = vunpack.c.l.b16 %v3371
      %v3441 = vunpack.c.l.b16 %v3372
      %v3442 = vunpack.c.l.b16 %v3373
      %v3443 = vunpack.c.l.b16 %v3374
      %v3444 = vunpack.c.l.b16 %v3375
      %v3445 = vunpack.c.l.b16 %v3376
      %v3446 = vunpack.c.l.b16 %v3377
      %v3447 = vunpack.c.l.b16 %v3378
      %v3448 = vpack.c.b16 %v3417, %v3416
      %v3449 = vpack.c.b16 %v3419, %v3418
      %v3450 = vpack.c.b16 %v3421, %v3420
      %v3451 = vpack.c.b16 %v3423, %v3422
      %v3452 = vpack.c.b16 %v3425, %v3424
      %v3453 = vpack.c.b16 %v3427, %v3426
      %v3454 = vpack.c.b16 %v3429, %v3428
      %v3455 = vpack.c.b16 %v3431, %v3430
      %v3456 = vpack.c.b16 %v3433, %v3432
      %v3457 = vpack.c.b16 %v3435, %v3434
      %v3458 = vpack.c.b16 %v3437, %v3436
      %v3459 = vpack.c.b16 %v3439, %v3438
      %v3460 = vpack.c.b16 %v3441, %v3440
      %v3461 = vpack.c.b16 %v3443, %v3442
      %v3462 = vpack.c.b16 %v3445, %v3444
      %v3463 = vpack.c.b16 %v3447, %v3446
      %v3469 = vunpack.c.l.b16 %v3379
      %v3470 = vunpack.c.l.b16 %v3380
      %v3471 = vunpack.c.l.b16 %v3381
      %v3472 = vunpack.c.l.b16 %v3382
      %v3473 = vunpack.c.l.b16 %v3383
      %v3474 = vpack.c.b16 %v3470, %v3469
      %v3475 = vpack.c.b16 %v3472, %v3471
      %v3476 = vpack.c.b16 %v3473, %v3473
      %vm3479 = vcmask 293888
      %v3481 = vsel %vm3479, %v3448, 0
      %v3484 = vsel %vm3479, %v3449, 0
      %v3487 = vsel %vm3479, %v3450, 0
      %v3490 = vsel %vm3479, %v3451, 0
      %v3493 = vsel %vm3479, %v3452, 0
      %v3496 = vsel %vm3479, %v3453, 0
      %v3499 = vsel %vm3479, %v3454, 0
      %v3502 = vsel %vm3479, %v3455, 0
      %v3505 = vsel %vm3479, %v3456, 0
      %v3508 = vsel %vm3479, %v3457, 0
      %v3511 = vsel %vm3479, %v3458, 0
      %v3514 = vsel %vm3479, %v3459, 0
      %v3517 = vsel %vm3479, %v3460, 0
      %v3520 = vsel %vm3479, %v3461, 0
      %v3523 = vsel %vm3479, %v3462, 0
      %v3526 = vsel %vm3479, %v3463, 0
      %vm3528 = vcmask 1041408
      %v3530 = vsel %vm3528, %v3476, 0
      %3532 = vmatprep.subr.bf16.mxu0 0
      %3533 = vmatpush1.bf16.msra.mxu0 0
      %3534 = vmatprep.subr.bf16.mxu0 0
      %3535 = vmatpush1.bf16.msra.mxu0 0
      %3536 = vmatprep.subr.bf16.mxu0 0
      %3537 = vmatpush1.bf16.msra.mxu0 0
      %3538 = vmatprep.subr.bf16.mxu0 0
      %3539 = vmatpush1.bf16.msra.mxu0 0
      %3540 = vmatprep.subr.bf16.mxu0 0
      %3541 = vmatpush1.bf16.msra.mxu0 0
      %3542 = vmatprep.subr.bf16.mxu0 0
      %3543 = vmatpush1.bf16.msra.mxu0 %v3530
      %3544 = vmatprep.subr.bf16.mxu0 0
      %3545 = vmatpush1.bf16.msra.mxu0 %v3475
      %3546 = vmatprep.subr.bf16.mxu0 0
      %3547 = vmatpush1.bf16.msra.mxu0 %v3474
      %3548 = vmatprep.subr.bf16.mxu0 0
      %3549 = vmatpush2.bf16.msra.mxu0 0
      %3550 = vmatprep.subr.bf16.mxu0 0
      %3551 = vmatpush2.bf16.msra.mxu0 0
      %3552 = vmatprep.subr.bf16.mxu0 0
      %3553 = vmatpush2.bf16.msra.mxu0 0
      %3554 = vmatprep.subr.bf16.mxu0 0
      %3555 = vmatpush2.bf16.msra.mxu0 0
      %3556 = vmatprep.subr.bf16.mxu0 0
      %3557 = vmatpush2.bf16.msra.mxu0 0
      %3558 = vmatprep.subr.bf16.mxu0 0
      %3559 = vmatpush2.bf16.msra.mxu0 0
      %3560 = vmatprep.subr.bf16.mxu0 0
      %3561 = vmatpush2.bf16.msra.mxu0 0
      %3562 = vmatprep.subr.bf16.mxu0 0
      %3563 = vmatpush2.bf16.msra.mxu0 0
      %3564 = vmatprep.mubr.bf16.mxu0 0
      %3565 = vmatmul.mubr.bf16.gmra.mxu0 %v3481
      %v3566 = vpop.f32.mrf.mxu0
      %v3567 = vadd.f32 0.0, %v3566
      %v3568 = vpop.f32.mrf.mxu0
      %v3569 = vpop.f32.mrf.mxu0
      %v3570 = vadd.f32 0.0, %v3569
      %v3571 = vpop.f32.mrf.mxu0
      %3572 = vmatprep.mubr.bf16.mxu0 0
      %3573 = vmatmul.mubr.bf16.gmra.mxu0 %v3484
      %v3574 = vpop.f32.mrf.mxu0
      %v3575 = vadd.f32 0.0, %v3574
      %v3576 = vpop.f32.mrf.mxu0
      %v3577 = vpop.f32.mrf.mxu0
      %v3578 = vadd.f32 0.0, %v3577
      %v3579 = vpop.f32.mrf.mxu0
      %3580 = vmatprep.mubr.bf16.mxu0 0
      %3581 = vmatmul.mubr.bf16.gmra.mxu0 %v3487
      %v3582 = vpop.f32.mrf.mxu0
      %v3583 = vadd.f32 0.0, %v3582
      %v3584 = vpop.f32.mrf.mxu0
      %v3585 = vpop.f32.mrf.mxu0
      %v3586 = vadd.f32 0.0, %v3585
      %v3587 = vpop.f32.mrf.mxu0
      %3588 = vmatprep.mubr.bf16.mxu0 0
      %3589 = vmatmul.mubr.bf16.gmra.mxu0 %v3490
      %v3590 = vpop.f32.mrf.mxu0
      %v3591 = vadd.f32 0.0, %v3590
      %v3592 = vpop.f32.mrf.mxu0
      %v3593 = vpop.f32.mrf.mxu0
      %v3594 = vadd.f32 0.0, %v3593
      %v3595 = vpop.f32.mrf.mxu0
      %3596 = vmatprep.mubr.bf16.mxu0 0
      %3597 = vmatmul.mubr.bf16.gmra.mxu0 %v3493
      %v3598 = vpop.f32.mrf.mxu0
      %v3599 = vadd.f32 0.0, %v3598
      %v3600 = vpop.f32.mrf.mxu0
      %v3601 = vpop.f32.mrf.mxu0
      %v3602 = vadd.f32 0.0, %v3601
      %v3603 = vpop.f32.mrf.mxu0
      %3604 = vmatprep.mubr.bf16.mxu0 0
      %3605 = vmatmul.mubr.bf16.gmra.mxu0 %v3496
      %v3606 = vpop.f32.mrf.mxu0
      %v3607 = vadd.f32 0.0, %v3606
      %v3608 = vpop.f32.mrf.mxu0
      %v3609 = vpop.f32.mrf.mxu0
      %v3610 = vadd.f32 0.0, %v3609
      %v3611 = vpop.f32.mrf.mxu0
      %3612 = vmatprep.mubr.bf16.mxu0 0
      %3613 = vmatmul.mubr.bf16.gmra.mxu0 %v3499
      %v3614 = vpop.f32.mrf.mxu0
      %v3615 = vadd.f32 0.0, %v3614
      %v3616 = vpop.f32.mrf.mxu0
      %v3617 = vpop.f32.mrf.mxu0
      %v3618 = vadd.f32 0.0, %v3617
      %v3619 = vpop.f32.mrf.mxu0
      %3620 = vmatprep.mubr.bf16.mxu0 0
      %3621 = vmatmul.mubr.bf16.gmra.mxu0 %v3502
      %v3622 = vpop.f32.mrf.mxu0
      %v3623 = vadd.f32 0.0, %v3622
      %v3624 = vpop.f32.mrf.mxu0
      %v3625 = vpop.f32.mrf.mxu0
      %v3626 = vadd.f32 0.0, %v3625
      %v3627 = vpop.f32.mrf.mxu0
      %3628 = vmatprep.mubr.bf16.mxu0 0
      %3629 = vmatmul.mubr.bf16.gmra.mxu0 %v3505
      %v3630 = vpop.f32.mrf.mxu0
      %v3631 = vadd.f32 0.0, %v3630
      %v3632 = vpop.f32.mrf.mxu0
      %v3633 = vpop.f32.mrf.mxu0
      %v3634 = vadd.f32 0.0, %v3633
      %v3635 = vpop.f32.mrf.mxu0
      %3636 = vmatprep.mubr.bf16.mxu0 0
      %3637 = vmatmul.mubr.bf16.gmra.mxu0 %v3508
      %v3638 = vpop.f32.mrf.mxu0
      %v3639 = vadd.f32 0.0, %v3638
      %v3640 = vpop.f32.mrf.mxu0
      %v3641 = vpop.f32.mrf.mxu0
      %v3642 = vadd.f32 0.0, %v3641
      %v3643 = vpop.f32.mrf.mxu0
      %3644 = vmatprep.mubr.bf16.mxu0 0
      %3645 = vmatmul.mubr.bf16.gmra.mxu0 %v3511
      %v3646 = vpop.f32.mrf.mxu0
      %v3647 = vadd.f32 0.0, %v3646
      %v3648 = vpop.f32.mrf.mxu0
      %v3649 = vpop.f32.mrf.mxu0
      %v3650 = vadd.f32 0.0, %v3649
      %v3651 = vpop.f32.mrf.mxu0
      %3652 = vmatprep.mubr.bf16.mxu0 0
      %3653 = vmatmul.mubr.bf16.gmra.mxu0 %v3514
      %v3654 = vpop.f32.mrf.mxu0
      %v3655 = vadd.f32 0.0, %v3654
      %v3656 = vpop.f32.mrf.mxu0
      %v3657 = vpop.f32.mrf.mxu0
      %v3658 = vadd.f32 0.0, %v3657
      %v3659 = vpop.f32.mrf.mxu0
      %3660 = vmatprep.mubr.bf16.mxu0 0
      %3661 = vmatmul.mubr.bf16.gmra.mxu0 %v3517
      %v3662 = vpop.f32.mrf.mxu0
      %v3663 = vadd.f32 0.0, %v3662
      %v3664 = vpop.f32.mrf.mxu0
      %v3665 = vpop.f32.mrf.mxu0
      %v3666 = vadd.f32 0.0, %v3665
      %v3667 = vpop.f32.mrf.mxu0
      %3668 = vmatprep.mubr.bf16.mxu0 0
      %3669 = vmatmul.mubr.bf16.gmra.mxu0 %v3520
      %v3670 = vpop.f32.mrf.mxu0
      %v3671 = vadd.f32 0.0, %v3670
      %v3672 = vpop.f32.mrf.mxu0
      %v3673 = vpop.f32.mrf.mxu0
      %v3674 = vadd.f32 0.0, %v3673
      %v3675 = vpop.f32.mrf.mxu0
      %3676 = vmatprep.mubr.bf16.mxu0 0
      %3677 = vmatmul.mubr.bf16.gmra.mxu0 %v3523
      %v3678 = vpop.f32.mrf.mxu0
      %v3679 = vadd.f32 0.0, %v3678
      %v3680 = vpop.f32.mrf.mxu0
      %v3681 = vpop.f32.mrf.mxu0
      %v3682 = vadd.f32 0.0, %v3681
      %v3683 = vpop.f32.mrf.mxu0
      %3684 = vmatprep.mubr.bf16.mxu0 0
      %3685 = vmatmul.mubr.bf16.gmra.mxu0 %v3526
      %v3686 = vpop.f32.mrf.mxu0
      %v3687 = vadd.f32 0.0, %v3686
      %v3688 = vpop.f32.mrf.mxu0
      %v3689 = vpop.f32.mrf.mxu0
      %v3690 = vadd.f32 0.0, %v3689
      %v3691 = vpop.f32.mrf.mxu0
      %3692 = vdwg.mxu0
      %v3693 = vld [vmem:[%s2] sm:$0x1]
      %v3694 = vlaneseq
      %v3695 = vshrl.u32 %v3694, 7
      %v3696 = vsub.s32 0, %v3695
      %v3697 = vrot.slane %v3693, %v3696
      %v3698 = vmul.f32 %v3567, %v3697
      %v3699 = vmul.f32 %v3570, %v3697
      %v3700 = vmul.f32 %v3575, %v3697
      %v3701 = vmul.f32 %v3578, %v3697
      %v3702 = vmul.f32 %v3583, %v3697
      %v3703 = vmul.f32 %v3586, %v3697
      %v3704 = vmul.f32 %v3591, %v3697
      %v3705 = vmul.f32 %v3594, %v3697
      %v3706 = vmul.f32 %v3599, %v3697
      %v3707 = vmul.f32 %v3602, %v3697
      %v3708 = vmul.f32 %v3607, %v3697
      %v3709 = vmul.f32 %v3610, %v3697
      %v3710 = vmul.f32 %v3615, %v3697
      %v3711 = vmul.f32 %v3618, %v3697
      %v3712 = vmul.f32 %v3623, %v3697
      %v3713 = vmul.f32 %v3626, %v3697
      %v3714 = vmul.f32 %v3631, %v3697
      %v3715 = vmul.f32 %v3634, %v3697
      %v3716 = vmul.f32 %v3639, %v3697
      %v3717 = vmul.f32 %v3642, %v3697
      %v3718 = vmul.f32 %v3647, %v3697
      %v3719 = vmul.f32 %v3650, %v3697
      %v3720 = vmul.f32 %v3655, %v3697
      %v3721 = vmul.f32 %v3658, %v3697
      %v3722 = vmul.f32 %v3663, %v3697
      %v3723 = vmul.f32 %v3666, %v3697
      %v3724 = vmul.f32 %v3671, %v3697
      %v3725 = vmul.f32 %v3674, %v3697
      %v3726 = vmul.f32 %v3679, %v3697
      %v3727 = vmul.f32 %v3682, %v3697
      %v3728 = vmul.f32 %v3687, %v3697
      %v3729 = vmul.f32 %v3690, %v3697
      %v3730 = vld [vmem:[%s2 + $0x1] sm:$0x1]
      %v3731 = vlaneseq
      %v3732 = vshrl.u32 %v3731, 7
      %v3733 = vsub.s32 0, %v3732
      %v3734 = vrot.slane %v3730, %v3733
      %v3735 = vadd.f32 %v3698, %v3734
      %v3736 = vadd.f32 %v3699, %v3734
      %v3737 = vadd.f32 %v3700, %v3734
      %v3738 = vadd.f32 %v3701, %v3734
      %v3739 = vadd.f32 %v3702, %v3734
      %v3740 = vadd.f32 %v3703, %v3734
      %v3741 = vadd.f32 %v3704, %v3734
      %v3742 = vadd.f32 %v3705, %v3734
      %v3743 = vadd.f32 %v3706, %v3734
      %v3744 = vadd.f32 %v3707, %v3734
      %v3745 = vadd.f32 %v3708, %v3734
      %v3746 = vadd.f32 %v3709, %v3734
      %v3747 = vadd.f32 %v3710, %v3734
      %v3748 = vadd.f32 %v3711, %v3734
      %v3749 = vadd.f32 %v3712, %v3734
      %v3750 = vadd.f32 %v3713, %v3734
      %v3751 = vadd.f32 %v3714, %v3734
      %v3752 = vadd.f32 %v3715, %v3734
      %v3753 = vadd.f32 %v3716, %v3734
      %v3754 = vadd.f32 %v3717, %v3734
      %v3755 = vadd.f32 %v3718, %v3734
      %v3756 = vadd.f32 %v3719, %v3734
      %v3757 = vadd.f32 %v3720, %v3734
      %v3758 = vadd.f32 %v3721, %v3734
      %v3759 = vadd.f32 %v3722, %v3734
      %v3760 = vadd.f32 %v3723, %v3734
      %v3761 = vadd.f32 %v3724, %v3734
      %v3762 = vadd.f32 %v3725, %v3734
      %v3763 = vadd.f32 %v3726, %v3734
      %v3764 = vadd.f32 %v3727, %v3734
      %v3765 = vadd.f32 %v3728, %v3734
      %v3766 = vadd.f32 %v3729, %v3734
      %v3767 = vmax.f32 %v3735, 0.0
      %v3768 = vmax.f32 %v3736, 0.0
      %v3769 = vmax.f32 %v3737, 0.0
      %v3770 = vmax.f32 %v3738, 0.0
      %v3771 = vmax.f32 %v3739, 0.0
      %v3772 = vmax.f32 %v3740, 0.0
      %v3773 = vmax.f32 %v3741, 0.0
      %v3774 = vmax.f32 %v3742, 0.0
      %v3775 = vmax.f32 %v3743, 0.0
      %v3776 = vmax.f32 %v3744, 0.0
      %v3777 = vmax.f32 %v3745, 0.0
      %v3778 = vmax.f32 %v3746, 0.0
      %v3779 = vmax.f32 %v3747, 0.0
      %v3780 = vmax.f32 %v3748, 0.0
      %v3781 = vmax.f32 %v3749, 0.0
      %v3782 = vmax.f32 %v3750, 0.0
      %v3783 = vmax.f32 %v3751, 0.0
      %v3784 = vmax.f32 %v3752, 0.0
      %v3785 = vmax.f32 %v3753, 0.0
      %v3786 = vmax.f32 %v3754, 0.0
      %v3787 = vmax.f32 %v3755, 0.0
      %v3788 = vmax.f32 %v3756, 0.0
      %v3789 = vmax.f32 %v3757, 0.0
      %v3790 = vmax.f32 %v3758, 0.0
      %v3791 = vmax.f32 %v3759, 0.0
      %v3792 = vmax.f32 %v3760, 0.0
      %v3793 = vmax.f32 %v3761, 0.0
      %v3794 = vmax.f32 %v3762, 0.0
      %v3795 = vmax.f32 %v3763, 0.0
      %v3796 = vmax.f32 %v3764, 0.0
      %v3797 = vmax.f32 %v3765, 0.0
      %v3798 = vmax.f32 %v3766, 0.0
      %3799 = vst.msk [vmem:[#allocation2 + $0x18] sm:$0xff] %vm226, %v3767
      %3800 = vst.msk [vmem:[#allocation2 + $0x20] sm:$0xff] %vm226, %v3768
      %3801 = vst.msk [vmem:[#allocation2 + $0x28] sm:$0xff] %vm226, %v3769
      %3802 = vst.msk [vmem:[#allocation2 + $0x30] sm:$0xff] %vm226, %v3770
      %3803 = vst.msk [vmem:[#allocation2 + $0x38] sm:$0xff] %vm226, %v3771
      %3804 = vst.msk [vmem:[#allocation2 + $0x40] sm:$0xff] %vm226, %v3772
      %3805 = vst.msk [vmem:[#allocation2 + $0x48] sm:$0xff] %vm226, %v3773
      %3806 = vst.msk [vmem:[#allocation2 + $0x50] sm:$0xff] %vm226, %v3774
      %3807 = vst.msk [vmem:[#allocation2 + $0x58] sm:$0xff] %vm226, %v3775
      %3808 = vst.msk [vmem:[#allocation2 + $0x60] sm:$0xff] %vm226, %v3776
      %3809 = vst.msk [vmem:[#allocation2 + $0x68] sm:$0xff] %vm226, %v3777
      %3810 = vst.msk [vmem:[#allocation2 + $0x70] sm:$0xff] %vm226, %v3778
      %3811 = vst.msk [vmem:[#allocation2 + $0x78] sm:$0xff] %vm226, %v3779
      %3812 = vst.msk [vmem:[#allocation2 + $0x80] sm:$0xff] %vm226, %v3780
      %3813 = vst.msk [vmem:[#allocation2 + $0x88] sm:$0xff] %vm226, %v3781
      %3814 = vst.msk [vmem:[#allocation2 + $0x90] sm:$0xff] %vm226, %v3782
      %3815 = vst.msk [vmem:[#allocation2 + $0x98] sm:$0xff] %vm226, %v3783
      %3816 = vst.msk [vmem:[#allocation2 + $0xa0] sm:$0xff] %vm226, %v3784
      %3817 = vst.msk [vmem:[#allocation2 + $0xa8] sm:$0xff] %vm226, %v3785
      %3818 = vst.msk [vmem:[#allocation2 + $0xb0] sm:$0xff] %vm226, %v3786
      %3819 = vst.msk [vmem:[#allocation2 + $0xb8] sm:$0xff] %vm226, %v3787
      %3820 = vst.msk [vmem:[#allocation2 + $0xc0] sm:$0xff] %vm226, %v3788
      %3821 = vst.msk [vmem:[#allocation2 + $0xc8] sm:$0xff] %vm226, %v3789
      %3822 = vst.msk [vmem:[#allocation2 + $0xd0] sm:$0xff] %vm226, %v3790
      %3823 = vst.msk [vmem:[#allocation2 + $0xd8] sm:$0xff] %vm226, %v3791
      %3824 = vst.msk [vmem:[#allocation2 + $0xe0] sm:$0xff] %vm226, %v3792
      %3825 = vst.msk [vmem:[#allocation2 + $0xe8] sm:$0xff] %vm226, %v3793
      %3826 = vst.msk [vmem:[#allocation2 + $0xf0] sm:$0xff] %vm226, %v3794
      %3827 = vst.msk [vmem:[#allocation2 + $0xf8] sm:$0xff] %vm226, %v3795
      %3828 = vst.msk [vmem:[#allocation2 + $0x100] sm:$0xff] %vm226, %v3796
      %3829 = vst.msk [vmem:[#allocation2 + $0x108] sm:$0xff] %vm226, %v3797
      %3830 = vst.msk [vmem:[#allocation2 + $0x110] sm:$0xff] %vm226, %v3798
      %v3831 = vld [vmem:[#allocation2 + $0x7] sm:$0xff]
      %v3832 = vld [vmem:[#allocation2 + $0xf] sm:$0xff]
      %v3833 = vld [vmem:[#allocation2 + $0x17] sm:$0xff]
      %v3834 = vld [vmem:[#allocation2 + $0x1f] sm:$0xff]
      %v3835 = vld [vmem:[#allocation2 + $0x27] sm:$0xff]
      %v3836 = vld [vmem:[#allocation2 + $0x2f] sm:$0xff]
      %v3837 = vld [vmem:[#allocation2 + $0x37] sm:$0xff]
      %v3838 = vld [vmem:[#allocation2 + $0x3f] sm:$0xff]
      %v3839 = vld [vmem:[#allocation2 + $0x47] sm:$0xff]
      %v3840 = vld [vmem:[#allocation2 + $0x4f] sm:$0xff]
      %v3841 = vld [vmem:[#allocation2 + $0x57] sm:$0xff]
      %v3842 = vld [vmem:[#allocation2 + $0x5f] sm:$0xff]
      %v3843 = vld [vmem:[#allocation2 + $0x67] sm:$0xff]
      %v3844 = vld [vmem:[#allocation2 + $0x6f] sm:$0xff]
      %v3845 = vld [vmem:[#allocation2 + $0x77] sm:$0xff]
      %v3846 = vld [vmem:[#allocation2 + $0x7f] sm:$0xff]
      %v3847 = vld [vmem:[#allocation2 + $0x87] sm:$0xff]
      %v3848 = vld [vmem:[#allocation2 + $0x8f] sm:$0xff]
      %v3849 = vld [vmem:[#allocation2 + $0x97] sm:$0xff]
      %v3850 = vld [vmem:[#allocation2 + $0x9f] sm:$0xff]
      %v3851 = vld [vmem:[#allocation2 + $0xa7] sm:$0xff]
      %v3852 = vld [vmem:[#allocation2 + $0xaf] sm:$0xff]
      %v3853 = vld [vmem:[#allocation2 + $0xb7] sm:$0xff]
      %v3854 = vld [vmem:[#allocation2 + $0xbf] sm:$0xff]
      %v3855 = vld [vmem:[#allocation2 + $0xc7] sm:$0xff]
      %v3856 = vld [vmem:[#allocation2 + $0xcf] sm:$0xff]
      %v3857 = vld [vmem:[#allocation2 + $0xd7] sm:$0xff]
      %v3858 = vld [vmem:[#allocation2 + $0xdf] sm:$0xff]
      %v3859 = vld [vmem:[#allocation2 + $0xe7] sm:$0xff]
      %v3860 = vld [vmem:[#allocation2 + $0xef] sm:$0xff]
      %v3861 = vld [vmem:[#allocation2 + $0xf7] sm:$0xff]
      %v3862 = vld [vmem:[#allocation2 + $0xff] sm:$0xff]
      %v3863 = vsel %vm714, %v3831, 0.0
      %v3864 = vsel %vm715, %v3832, 0.0
      %v3865 = vsel %vm716, %v3833, 0.0
      %v3866 = vsel %vm717, %v3834, 0.0
      %v3867 = vsel %vm718, %v3835, 0.0
      %v3868 = vsel %vm719, %v3836, 0.0
      %v3869 = vsel %vm720, %v3837, 0.0
      %v3870 = vsel %vm721, %v3838, 0.0
      %v3871 = vsel %vm722, %v3839, 0.0
      %v3872 = vsel %vm723, %v3840, 0.0
      %v3873 = vsel %vm724, %v3841, 0.0
      %v3874 = vsel %vm725, %v3842, 0.0
      %v3875 = vsel %vm726, %v3843, 0.0
      %v3876 = vsel %vm727, %v3844, 0.0
      %v3877 = vsel %vm728, %v3845, 0.0
      %v3878 = vsel %vm729, %v3846, 0.0
      %v3879 = vsel %vm730, %v3847, 0.0
      %v3880 = vsel %vm731, %v3848, 0.0
      %v3881 = vsel %vm732, %v3849, 0.0
      %v3882 = vsel %vm733, %v3850, 0.0
      %v3883 = vsel %vm734, %v3851, 0.0
      %v3884 = vsel %vm735, %v3852, 0.0
      %v3885 = vsel %vm736, %v3853, 0.0
      %v3886 = vsel %vm737, %v3854, 0.0
      %v3887 = vsel %vm738, %v3855, 0.0
      %v3888 = vsel %vm739, %v3856, 0.0
      %v3889 = vsel %vm740, %v3857, 0.0
      %v3890 = vsel %vm741, %v3858, 0.0
      %v3891 = vsel %vm742, %v3859, 0.0
      %v3892 = vsel %vm743, %v3860, 0.0
      %v3893 = vsel %vm744, %v3861, 0.0
      %v3894 = vsel %vm745, %v3862, 0.0
      %v3895 = vpack.c.bf16 %v3864, %v3863
      %v3896 = vpack.c.bf16 %v3866, %v3865
      %v3897 = vpack.c.bf16 %v3868, %v3867
      %v3898 = vpack.c.bf16 %v3870, %v3869
      %v3899 = vpack.c.bf16 %v3872, %v3871
      %v3900 = vpack.c.bf16 %v3874, %v3873
      %v3901 = vpack.c.bf16 %v3876, %v3875
      %v3902 = vpack.c.bf16 %v3878, %v3877
      %v3903 = vpack.c.bf16 %v3880, %v3879
      %v3904 = vpack.c.bf16 %v3882, %v3881
      %v3905 = vpack.c.bf16 %v3884, %v3883
      %v3906 = vpack.c.bf16 %v3886, %v3885
      %v3907 = vpack.c.bf16 %v3888, %v3887
      %v3908 = vpack.c.bf16 %v3890, %v3889
      %v3909 = vpack.c.bf16 %v3892, %v3891
      %v3910 = vpack.c.bf16 %v3894, %v3893
      %v3927 = vunpack.c.l.b16 %v3895
      %v3928 = vunpack.c.h.b16 %v3895
      %v3929 = vunpack.c.l.b16 %v3896
      %v3930 = vunpack.c.h.b16 %v3896
      %v3931 = vunpack.c.l.b16 %v3897
      %v3932 = vunpack.c.h.b16 %v3897
      %v3933 = vunpack.c.l.b16 %v3898
      %v3934 = vunpack.c.h.b16 %v3898
      %v3935 = vunpack.c.l.b16 %v3899
      %v3936 = vunpack.c.h.b16 %v3899
      %v3937 = vunpack.c.l.b16 %v3900
      %v3938 = vunpack.c.h.b16 %v3900
      %v3939 = vunpack.c.l.b16 %v3901
      %v3940 = vunpack.c.h.b16 %v3901
      %v3941 = vunpack.c.l.b16 %v3902
      %v3942 = vunpack.c.h.b16 %v3902
      %v3943 = vunpack.c.l.b16 %v3903
      %v3944 = vunpack.c.h.b16 %v3903
      %v3945 = vunpack.c.l.b16 %v3904
      %v3946 = vunpack.c.h.b16 %v3904
      %v3947 = vunpack.c.l.b16 %v3905
      %v3948 = vunpack.c.h.b16 %v3905
      %v3949 = vunpack.c.l.b16 %v3906
      %v3950 = vunpack.c.h.b16 %v3906
      %v3951 = vunpack.c.l.b16 %v3907
      %v3952 = vunpack.c.h.b16 %v3907
      %v3953 = vunpack.c.l.b16 %v3908
      %v3954 = vunpack.c.h.b16 %v3908
      %v3955 = vunpack.c.l.b16 %v3909
      %v3956 = vunpack.c.h.b16 %v3909
      %v3957 = vunpack.c.l.b16 %v3910
      %v3958 = vunpack.c.h.b16 %v3910
      %v3959 = vpack.c.b16 %v3927, %v3927
      %v3960 = vpack.c.b16 %v3928, %v3928
      %v3961 = vpack.c.b16 %v3929, %v3929
      %v3962 = vpack.c.b16 %v3930, %v3930
      %v3963 = vpack.c.b16 %v3931, %v3931
      %v3964 = vpack.c.b16 %v3932, %v3932
      %v3965 = vpack.c.b16 %v3933, %v3933
      %v3966 = vpack.c.b16 %v3934, %v3934
      %v3967 = vpack.c.b16 %v3935, %v3935
      %v3968 = vpack.c.b16 %v3936, %v3936
      %v3969 = vpack.c.b16 %v3937, %v3937
      %v3970 = vpack.c.b16 %v3938, %v3938
      %v3971 = vpack.c.b16 %v3939, %v3939
      %v3972 = vpack.c.b16 %v3940, %v3940
      %v3973 = vpack.c.b16 %v3941, %v3941
      %v3974 = vpack.c.b16 %v3942, %v3942
      %v3975 = vpack.c.b16 %v3943, %v3943
      %v3976 = vpack.c.b16 %v3944, %v3944
      %v3977 = vpack.c.b16 %v3945, %v3945
      %v3978 = vpack.c.b16 %v3946, %v3946
      %v3979 = vpack.c.b16 %v3947, %v3947
      %v3980 = vpack.c.b16 %v3948, %v3948
      %v3981 = vpack.c.b16 %v3949, %v3949
      %v3982 = vpack.c.b16 %v3950, %v3950
      %v3983 = vpack.c.b16 %v3951, %v3951
      %v3984 = vpack.c.b16 %v3952, %v3952
      %v3985 = vpack.c.b16 %v3953, %v3953
      %v3986 = vpack.c.b16 %v3954, %v3954
      %v3987 = vpack.c.b16 %v3955, %v3955
      %v3988 = vpack.c.b16 %v3956, %v3956
      %v3989 = vpack.c.b16 %v3957, %v3957
      %v3990 = vpack.c.b16 %v3958, %v3958
      %4023 = vst.msk [vmem:[#allocation3] sm:$0xf] %vm1098, %v3959
      %4024 = vst.msk [vmem:[#allocation3 + $0x4] sm:$0xf] %vm1098, %v3960
      %4025 = vst.msk [vmem:[#allocation3 + $0x8] sm:$0xf] %vm1098, %v3961
      %4026 = vst.msk [vmem:[#allocation3 + $0xc] sm:$0xf] %vm1098, %v3962
      %4027 = vst.msk [vmem:[#allocation3 + $0x10] sm:$0xf] %vm1098, %v3963
      %4028 = vst.msk [vmem:[#allocation3 + $0x14] sm:$0xf] %vm1098, %v3964
      %4029 = vst.msk [vmem:[#allocation3 + $0x18] sm:$0xf] %vm1098, %v3965
      %4030 = vst.msk [vmem:[#allocation3 + $0x1c] sm:$0xf] %vm1098, %v3966
      %4031 = vst.msk [vmem:[#allocation3 + $0x20] sm:$0xf] %vm1098, %v3967
      %4032 = vst.msk [vmem:[#allocation3 + $0x24] sm:$0xf] %vm1098, %v3968
      %4033 = vst.msk [vmem:[#allocation3 + $0x28] sm:$0xf] %vm1098, %v3969
      %4034 = vst.msk [vmem:[#allocation3 + $0x2c] sm:$0xf] %vm1098, %v3970
      %4035 = vst.msk [vmem:[#allocation3 + $0x30] sm:$0xf] %vm1098, %v3971
      %4036 = vst.msk [vmem:[#allocation3 + $0x34] sm:$0xf] %vm1098, %v3972
      %4037 = vst.msk [vmem:[#allocation3 + $0x38] sm:$0xf] %vm1098, %v3973
      %4038 = vst.msk [vmem:[#allocation3 + $0x3c] sm:$0xf] %vm1098, %v3974
      %4039 = vst.msk [vmem:[#allocation3 + $0x40] sm:$0xf] %vm1098, %v3975
      %4040 = vst.msk [vmem:[#allocation3 + $0x44] sm:$0xf] %vm1098, %v3976
      %4041 = vst.msk [vmem:[#allocation3 + $0x48] sm:$0xf] %vm1098, %v3977
      %4042 = vst.msk [vmem:[#allocation3 + $0x4c] sm:$0xf] %vm1098, %v3978
      %4043 = vst.msk [vmem:[#allocation3 + $0x50] sm:$0xf] %vm1098, %v3979
      %4044 = vst.msk [vmem:[#allocation3 + $0x54] sm:$0xf] %vm1098, %v3980
      %4045 = vst.msk [vmem:[#allocation3 + $0x58] sm:$0xf] %vm1098, %v3981
      %4046 = vst.msk [vmem:[#allocation3 + $0x5c] sm:$0xf] %vm1098, %v3982
      %4047 = vst.msk [vmem:[#allocation3 + $0x60] sm:$0xf] %vm1098, %v3983
      %4048 = vst.msk [vmem:[#allocation3 + $0x64] sm:$0xf] %vm1098, %v3984
      %4049 = vst.msk [vmem:[#allocation3 + $0x68] sm:$0xf] %vm1098, %v3985
      %4050 = vst.msk [vmem:[#allocation3 + $0x6c] sm:$0xf] %vm1098, %v3986
      %4051 = vst.msk [vmem:[#allocation3 + $0x70] sm:$0xf] %vm1098, %v3987
      %4052 = vst.msk [vmem:[#allocation3 + $0x74] sm:$0xf] %vm1098, %v3988
      %4053 = vst.msk [vmem:[#allocation3 + $0x78] sm:$0xf] %vm1098, %v3989
      %4054 = vst.msk [vmem:[#allocation3 + $0x7c] sm:$0xf] %vm1098, %v3990
      %v4055 = vld [vmem:[#allocation2 + $0x8] sm:$0xff]
      %v4056 = vld [vmem:[#allocation2 + $0x10] sm:$0xff]
      %v4057 = vld [vmem:[#allocation2 + $0x18] sm:$0xff]
      %v4058 = vld [vmem:[#allocation2 + $0x20] sm:$0xff]
      %v4059 = vld [vmem:[#allocation2 + $0x28] sm:$0xff]
      %v4060 = vld [vmem:[#allocation2 + $0x30] sm:$0xff]
      %v4061 = vld [vmem:[#allocation2 + $0x38] sm:$0xff]
      %v4062 = vld [vmem:[#allocation2 + $0x40] sm:$0xff]
      %v4063 = vld [vmem:[#allocation2 + $0x48] sm:$0xff]
      %v4064 = vld [vmem:[#allocation2 + $0x50] sm:$0xff]
      %v4065 = vld [vmem:[#allocation2 + $0x58] sm:$0xff]
      %v4066 = vld [vmem:[#allocation2 + $0x60] sm:$0xff]
      %v4067 = vld [vmem:[#allocation2 + $0x68] sm:$0xff]
      %v4068 = vld [vmem:[#allocation2 + $0x70] sm:$0xff]
      %v4069 = vld [vmem:[#allocation2 + $0x78] sm:$0xff]
      %v4070 = vld [vmem:[#allocation2 + $0x80] sm:$0xff]
      %v4071 = vld [vmem:[#allocation2 + $0x88] sm:$0xff]
      %v4072 = vld [vmem:[#allocation2 + $0x90] sm:$0xff]
      %v4073 = vld [vmem:[#allocation2 + $0x98] sm:$0xff]
      %v4074 = vld [vmem:[#allocation2 + $0xa0] sm:$0xff]
      %v4075 = vld [vmem:[#allocation2 + $0xa8] sm:$0xff]
      %v4076 = vld [vmem:[#allocation2 + $0xb0] sm:$0xff]
      %v4077 = vld [vmem:[#allocation2 + $0xb8] sm:$0xff]
      %v4078 = vld [vmem:[#allocation2 + $0xc0] sm:$0xff]
      %v4079 = vld [vmem:[#allocation2 + $0xc8] sm:$0xff]
      %v4080 = vld [vmem:[#allocation2 + $0xd0] sm:$0xff]
      %v4081 = vld [vmem:[#allocation2 + $0xd8] sm:$0xff]
      %v4082 = vld [vmem:[#allocation2 + $0xe0] sm:$0xff]
      %v4083 = vld [vmem:[#allocation2 + $0xe8] sm:$0xff]
      %v4084 = vld [vmem:[#allocation2 + $0xf0] sm:$0xff]
      %v4085 = vld [vmem:[#allocation2 + $0xf8] sm:$0xff]
      %v4086 = vld [vmem:[#allocation2 + $0x100] sm:$0xff]
      %v4087 = vpack.c.bf16 %v4056, %v4055
      %v4088 = vpack.c.bf16 %v4058, %v4057
      %v4089 = vpack.c.bf16 %v4060, %v4059
      %v4090 = vpack.c.bf16 %v4062, %v4061
      %v4091 = vpack.c.bf16 %v4064, %v4063
      %v4092 = vpack.c.bf16 %v4066, %v4065
      %v4093 = vpack.c.bf16 %v4068, %v4067
      %v4094 = vpack.c.bf16 %v4070, %v4069
      %v4095 = vpack.c.bf16 %v4072, %v4071
      %v4096 = vpack.c.bf16 %v4074, %v4073
      %v4097 = vpack.c.bf16 %v4076, %v4075
      %v4098 = vpack.c.bf16 %v4078, %v4077
      %v4099 = vpack.c.bf16 %v4080, %v4079
      %v4100 = vpack.c.bf16 %v4082, %v4081
      %v4101 = vpack.c.bf16 %v4084, %v4083
      %v4102 = vpack.c.bf16 %v4086, %v4085
      %v4119 = vunpack.c.l.b16 %v4087
      %v4120 = vunpack.c.h.b16 %v4087
      %v4121 = vunpack.c.l.b16 %v4088
      %v4122 = vunpack.c.h.b16 %v4088
      %v4123 = vunpack.c.l.b16 %v4089
      %v4124 = vunpack.c.h.b16 %v4089
      %v4125 = vunpack.c.l.b16 %v4090
      %v4126 = vunpack.c.h.b16 %v4090
      %v4127 = vunpack.c.l.b16 %v4091
      %v4128 = vunpack.c.h.b16 %v4091
      %v4129 = vunpack.c.l.b16 %v4092
      %v4130 = vunpack.c.h.b16 %v4092
      %v4131 = vunpack.c.l.b16 %v4093
      %v4132 = vunpack.c.h.b16 %v4093
      %v4133 = vunpack.c.l.b16 %v4094
      %v4134 = vunpack.c.h.b16 %v4094
      %v4135 = vunpack.c.l.b16 %v4095
      %v4136 = vunpack.c.h.b16 %v4095
      %v4137 = vunpack.c.l.b16 %v4096
      %v4138 = vunpack.c.h.b16 %v4096
      %v4139 = vunpack.c.l.b16 %v4097
      %v4140 = vunpack.c.h.b16 %v4097
      %v4141 = vunpack.c.l.b16 %v4098
      %v4142 = vunpack.c.h.b16 %v4098
      %v4143 = vunpack.c.l.b16 %v4099
      %v4144 = vunpack.c.h.b16 %v4099
      %v4145 = vunpack.c.l.b16 %v4100
      %v4146 = vunpack.c.h.b16 %v4100
      %v4147 = vunpack.c.l.b16 %v4101
      %v4148 = vunpack.c.h.b16 %v4101
      %v4149 = vunpack.c.l.b16 %v4102
      %v4150 = vunpack.c.h.b16 %v4102
      %v4151 = vpack.c.b16 %v4119, %v4119
      %v4152 = vpack.c.b16 %v4120, %v4120
      %v4153 = vpack.c.b16 %v4121, %v4121
      %v4154 = vpack.c.b16 %v4122, %v4122
      %v4155 = vpack.c.b16 %v4123, %v4123
      %v4156 = vpack.c.b16 %v4124, %v4124
      %v4157 = vpack.c.b16 %v4125, %v4125
      %v4158 = vpack.c.b16 %v4126, %v4126
      %v4159 = vpack.c.b16 %v4127, %v4127
      %v4160 = vpack.c.b16 %v4128, %v4128
      %v4161 = vpack.c.b16 %v4129, %v4129
      %v4162 = vpack.c.b16 %v4130, %v4130
      %v4163 = vpack.c.b16 %v4131, %v4131
      %v4164 = vpack.c.b16 %v4132, %v4132
      %v4165 = vpack.c.b16 %v4133, %v4133
      %v4166 = vpack.c.b16 %v4134, %v4134
      %v4167 = vpack.c.b16 %v4135, %v4135
      %v4168 = vpack.c.b16 %v4136, %v4136
      %v4169 = vpack.c.b16 %v4137, %v4137
      %v4170 = vpack.c.b16 %v4138, %v4138
      %v4171 = vpack.c.b16 %v4139, %v4139
      %v4172 = vpack.c.b16 %v4140, %v4140
      %v4173 = vpack.c.b16 %v4141, %v4141
      %v4174 = vpack.c.b16 %v4142, %v4142
      %v4175 = vpack.c.b16 %v4143, %v4143
      %v4176 = vpack.c.b16 %v4144, %v4144
      %v4177 = vpack.c.b16 %v4145, %v4145
      %v4178 = vpack.c.b16 %v4146, %v4146
      %v4179 = vpack.c.b16 %v4147, %v4147
      %v4180 = vpack.c.b16 %v4148, %v4148
      %v4181 = vpack.c.b16 %v4149, %v4149
      %v4182 = vpack.c.b16 %v4150, %v4150
      %4183 = vrot.lane.b32.xlu0 %v4151, 4
      %v4184 = vpop.permute.xlu0 %4183
      %4185 = vrot.lane.b32.xlu0 %v4152, 4
      %v4186 = vpop.permute.xlu0 %4185
      %4187 = vrot.lane.b32.xlu0 %v4153, 4
      %v4188 = vpop.permute.xlu0 %4187
      %4189 = vrot.lane.b32.xlu0 %v4154, 4
      %v4190 = vpop.permute.xlu0 %4189
      %4191 = vrot.lane.b32.xlu0 %v4155, 4
      %v4192 = vpop.permute.xlu0 %4191
      %4193 = vrot.lane.b32.xlu0 %v4156, 4
      %v4194 = vpop.permute.xlu0 %4193
      %4195 = vrot.lane.b32.xlu0 %v4157, 4
      %v4196 = vpop.permute.xlu0 %4195
      %4197 = vrot.lane.b32.xlu0 %v4158, 4
      %v4198 = vpop.permute.xlu0 %4197
      %4199 = vrot.lane.b32.xlu0 %v4159, 4
      %v4200 = vpop.permute.xlu0 %4199
      %4201 = vrot.lane.b32.xlu0 %v4160, 4
      %v4202 = vpop.permute.xlu0 %4201
      %4203 = vrot.lane.b32.xlu0 %v4161, 4
      %v4204 = vpop.permute.xlu0 %4203
      %4205 = vrot.lane.b32.xlu0 %v4162, 4
      %v4206 = vpop.permute.xlu0 %4205
      %4207 = vrot.lane.b32.xlu0 %v4163, 4
      %v4208 = vpop.permute.xlu0 %4207
      %4209 = vrot.lane.b32.xlu0 %v4164, 4
      %v4210 = vpop.permute.xlu0 %4209
      %4211 = vrot.lane.b32.xlu0 %v4165, 4
      %v4212 = vpop.permute.xlu0 %4211
      %4213 = vrot.lane.b32.xlu0 %v4166, 4
      %v4214 = vpop.permute.xlu0 %4213
      %4215 = vrot.lane.b32.xlu0 %v4167, 4
      %v4216 = vpop.permute.xlu0 %4215
      %4217 = vrot.lane.b32.xlu0 %v4168, 4
      %v4218 = vpop.permute.xlu0 %4217
      %4219 = vrot.lane.b32.xlu0 %v4169, 4
      %v4220 = vpop.permute.xlu0 %4219
      %4221 = vrot.lane.b32.xlu0 %v4170, 4
      %v4222 = vpop.permute.xlu0 %4221
      %4223 = vrot.lane.b32.xlu0 %v4171, 4
      %v4224 = vpop.permute.xlu0 %4223
      %4225 = vrot.lane.b32.xlu0 %v4172, 4
      %v4226 = vpop.permute.xlu0 %4225
      %4227 = vrot.lane.b32.xlu0 %v4173, 4
      %v4228 = vpop.permute.xlu0 %4227
      %4229 = vrot.lane.b32.xlu0 %v4174, 4
      %v4230 = vpop.permute.xlu0 %4229
      %4231 = vrot.lane.b32.xlu0 %v4175, 4
      %v4232 = vpop.permute.xlu0 %4231
      %4233 = vrot.lane.b32.xlu0 %v4176, 4
      %v4234 = vpop.permute.xlu0 %4233
      %4235 = vrot.lane.b32.xlu0 %v4177, 4
      %v4236 = vpop.permute.xlu0 %4235
      %4237 = vrot.lane.b32.xlu0 %v4178, 4
      %v4238 = vpop.permute.xlu0 %4237
      %4239 = vrot.lane.b32.xlu0 %v4179, 4
      %v4240 = vpop.permute.xlu0 %4239
      %4241 = vrot.lane.b32.xlu0 %v4180, 4
      %v4242 = vpop.permute.xlu0 %4241
      %4243 = vrot.lane.b32.xlu0 %v4181, 4
      %v4244 = vpop.permute.xlu0 %4243
      %4245 = vrot.lane.b32.xlu0 %v4182, 4
      %v4246 = vpop.permute.xlu0 %4245
      %4279 = vst.msk [vmem:[#allocation3] sm:$0xf] %vm1355, %v4184
      %4280 = vst.msk [vmem:[#allocation3 + $0x4] sm:$0xf] %vm1355, %v4186
      %4281 = vst.msk [vmem:[#allocation3 + $0x8] sm:$0xf] %vm1355, %v4188
      %4282 = vst.msk [vmem:[#allocation3 + $0xc] sm:$0xf] %vm1355, %v4190
      %4283 = vst.msk [vmem:[#allocation3 + $0x10] sm:$0xf] %vm1355, %v4192
      %4284 = vst.msk [vmem:[#allocation3 + $0x14] sm:$0xf] %vm1355, %v4194
      %4285 = vst.msk [vmem:[#allocation3 + $0x18] sm:$0xf] %vm1355, %v4196
      %4286 = vst.msk [vmem:[#allocation3 + $0x1c] sm:$0xf] %vm1355, %v4198
      %4287 = vst.msk [vmem:[#allocation3 + $0x20] sm:$0xf] %vm1355, %v4200
      %4288 = vst.msk [vmem:[#allocation3 + $0x24] sm:$0xf] %vm1355, %v4202
      %4289 = vst.msk [vmem:[#allocation3 + $0x28] sm:$0xf] %vm1355, %v4204
      %4290 = vst.msk [vmem:[#allocation3 + $0x2c] sm:$0xf] %vm1355, %v4206
      %4291 = vst.msk [vmem:[#allocation3 + $0x30] sm:$0xf] %vm1355, %v4208
      %4292 = vst.msk [vmem:[#allocation3 + $0x34] sm:$0xf] %vm1355, %v4210
      %4293 = vst.msk [vmem:[#allocation3 + $0x38] sm:$0xf] %vm1355, %v4212
      %4294 = vst.msk [vmem:[#allocation3 + $0x3c] sm:$0xf] %vm1355, %v4214
      %4295 = vst.msk [vmem:[#allocation3 + $0x40] sm:$0xf] %vm1355, %v4216
      %4296 = vst.msk [vmem:[#allocation3 + $0x44] sm:$0xf] %vm1355, %v4218
      %4297 = vst.msk [vmem:[#allocation3 + $0x48] sm:$0xf] %vm1355, %v4220
      %4298 = vst.msk [vmem:[#allocation3 + $0x4c] sm:$0xf] %vm1355, %v4222
      %4299 = vst.msk [vmem:[#allocation3 + $0x50] sm:$0xf] %vm1355, %v4224
      %4300 = vst.msk [vmem:[#allocation3 + $0x54] sm:$0xf] %vm1355, %v4226
      %4301 = vst.msk [vmem:[#allocation3 + $0x58] sm:$0xf] %vm1355, %v4228
      %4302 = vst.msk [vmem:[#allocation3 + $0x5c] sm:$0xf] %vm1355, %v4230
      %4303 = vst.msk [vmem:[#allocation3 + $0x60] sm:$0xf] %vm1355, %v4232
      %4304 = vst.msk [vmem:[#allocation3 + $0x64] sm:$0xf] %vm1355, %v4234
      %4305 = vst.msk [vmem:[#allocation3 + $0x68] sm:$0xf] %vm1355, %v4236
      %4306 = vst.msk [vmem:[#allocation3 + $0x6c] sm:$0xf] %vm1355, %v4238
      %4307 = vst.msk [vmem:[#allocation3 + $0x70] sm:$0xf] %vm1355, %v4240
      %4308 = vst.msk [vmem:[#allocation3 + $0x74] sm:$0xf] %vm1355, %v4242
      %4309 = vst.msk [vmem:[#allocation3 + $0x78] sm:$0xf] %vm1355, %v4244
      %4310 = vst.msk [vmem:[#allocation3 + $0x7c] sm:$0xf] %vm1355, %v4246
      %v4311 = vld [vmem:[#allocation2 + $0x9] sm:$0xff]
      %v4312 = vld [vmem:[#allocation2 + $0x11] sm:$0xff]
      %v4313 = vld [vmem:[#allocation2 + $0x19] sm:$0xff]
      %v4314 = vld [vmem:[#allocation2 + $0x21] sm:$0xff]
      %v4315 = vld [vmem:[#allocation2 + $0x29] sm:$0xff]
      %v4316 = vld [vmem:[#allocation2 + $0x31] sm:$0xff]
      %v4317 = vld [vmem:[#allocation2 + $0x39] sm:$0xff]
      %v4318 = vld [vmem:[#allocation2 + $0x41] sm:$0xff]
      %v4319 = vld [vmem:[#allocation2 + $0x49] sm:$0xff]
      %v4320 = vld [vmem:[#allocation2 + $0x51] sm:$0xff]
      %v4321 = vld [vmem:[#allocation2 + $0x59] sm:$0xff]
      %v4322 = vld [vmem:[#allocation2 + $0x61] sm:$0xff]
      %v4323 = vld [vmem:[#allocation2 + $0x69] sm:$0xff]
      %v4324 = vld [vmem:[#allocation2 + $0x71] sm:$0xff]
      %v4325 = vld [vmem:[#allocation2 + $0x79] sm:$0xff]
      %v4326 = vld [vmem:[#allocation2 + $0x81] sm:$0xff]
      %v4327 = vld [vmem:[#allocation2 + $0x89] sm:$0xff]
      %v4328 = vld [vmem:[#allocation2 + $0x91] sm:$0xff]
      %v4329 = vld [vmem:[#allocation2 + $0x99] sm:$0xff]
      %v4330 = vld [vmem:[#allocation2 + $0xa1] sm:$0xff]
      %v4331 = vld [vmem:[#allocation2 + $0xa9] sm:$0xff]
      %v4332 = vld [vmem:[#allocation2 + $0xb1] sm:$0xff]
      %v4333 = vld [vmem:[#allocation2 + $0xb9] sm:$0xff]
      %v4334 = vld [vmem:[#allocation2 + $0xc1] sm:$0xff]
      %v4335 = vld [vmem:[#allocation2 + $0xc9] sm:$0xff]
      %v4336 = vld [vmem:[#allocation2 + $0xd1] sm:$0xff]
      %v4337 = vld [vmem:[#allocation2 + $0xd9] sm:$0xff]
      %v4338 = vld [vmem:[#allocation2 + $0xe1] sm:$0xff]
      %v4339 = vld [vmem:[#allocation2 + $0xe9] sm:$0xff]
      %v4340 = vld [vmem:[#allocation2 + $0xf1] sm:$0xff]
      %v4341 = vld [vmem:[#allocation2 + $0xf9] sm:$0xff]
      %v4342 = vld [vmem:[#allocation2 + $0x101] sm:$0xff]
      %v4343 = vsel %vm810, %v4311, 0.0
      %v4344 = vsel %vm811, %v4312, 0.0
      %v4345 = vsel %vm812, %v4313, 0.0
      %v4346 = vsel %vm813, %v4314, 0.0
      %v4347 = vsel %vm814, %v4315, 0.0
      %v4348 = vsel %vm815, %v4316, 0.0
      %v4349 = vsel %vm816, %v4317, 0.0
      %v4350 = vsel %vm817, %v4318, 0.0
      %v4351 = vsel %vm818, %v4319, 0.0
      %v4352 = vsel %vm819, %v4320, 0.0
      %v4353 = vsel %vm820, %v4321, 0.0
      %v4354 = vsel %vm821, %v4322, 0.0
      %v4355 = vsel %vm822, %v4323, 0.0
      %v4356 = vsel %vm823, %v4324, 0.0
      %v4357 = vsel %vm824, %v4325, 0.0
      %v4358 = vsel %vm825, %v4326, 0.0
      %v4359 = vsel %vm826, %v4327, 0.0
      %v4360 = vsel %vm827, %v4328, 0.0
      %v4361 = vsel %vm828, %v4329, 0.0
      %v4362 = vsel %vm829, %v4330, 0.0
      %v4363 = vsel %vm830, %v4331, 0.0
      %v4364 = vsel %vm831, %v4332, 0.0
      %v4365 = vsel %vm832, %v4333, 0.0
      %v4366 = vsel %vm833, %v4334, 0.0
      %v4367 = vsel %vm834, %v4335, 0.0
      %v4368 = vsel %vm835, %v4336, 0.0
      %v4369 = vsel %vm836, %v4337, 0.0
      %v4370 = vsel %vm837, %v4338, 0.0
      %v4371 = vsel %vm838, %v4339, 0.0
      %v4372 = vsel %vm839, %v4340, 0.0
      %v4373 = vsel %vm840, %v4341, 0.0
      %v4374 = vsel %vm841, %v4342, 0.0
      %v4375 = vpack.c.bf16 %v4344, %v4343
      %v4376 = vpack.c.bf16 %v4346, %v4345
      %v4377 = vpack.c.bf16 %v4348, %v4347
      %v4378 = vpack.c.bf16 %v4350, %v4349
      %v4379 = vpack.c.bf16 %v4352, %v4351
      %v4380 = vpack.c.bf16 %v4354, %v4353
      %v4381 = vpack.c.bf16 %v4356, %v4355
      %v4382 = vpack.c.bf16 %v4358, %v4357
      %v4383 = vpack.c.bf16 %v4360, %v4359
      %v4384 = vpack.c.bf16 %v4362, %v4361
      %v4385 = vpack.c.bf16 %v4364, %v4363
      %v4386 = vpack.c.bf16 %v4366, %v4365
      %v4387 = vpack.c.bf16 %v4368, %v4367
      %v4388 = vpack.c.bf16 %v4370, %v4369
      %v4389 = vpack.c.bf16 %v4372, %v4371
      %v4390 = vpack.c.bf16 %v4374, %v4373
      %v4407 = vunpack.c.l.b16 %v4375
      %v4408 = vunpack.c.h.b16 %v4375
      %v4409 = vunpack.c.l.b16 %v4376
      %v4410 = vunpack.c.h.b16 %v4376
      %v4411 = vunpack.c.l.b16 %v4377
      %v4412 = vunpack.c.h.b16 %v4377
      %v4413 = vunpack.c.l.b16 %v4378
      %v4414 = vunpack.c.h.b16 %v4378
      %v4415 = vunpack.c.l.b16 %v4379
      %v4416 = vunpack.c.h.b16 %v4379
      %v4417 = vunpack.c.l.b16 %v4380
      %v4418 = vunpack.c.h.b16 %v4380
      %v4419 = vunpack.c.l.b16 %v4381
      %v4420 = vunpack.c.h.b16 %v4381
      %v4421 = vunpack.c.l.b16 %v4382
      %v4422 = vunpack.c.h.b16 %v4382
      %v4423 = vunpack.c.l.b16 %v4383
      %v4424 = vunpack.c.h.b16 %v4383
      %v4425 = vunpack.c.l.b16 %v4384
      %v4426 = vunpack.c.h.b16 %v4384
      %v4427 = vunpack.c.l.b16 %v4385
      %v4428 = vunpack.c.h.b16 %v4385
      %v4429 = vunpack.c.l.b16 %v4386
      %v4430 = vunpack.c.h.b16 %v4386
      %v4431 = vunpack.c.l.b16 %v4387
      %v4432 = vunpack.c.h.b16 %v4387
      %v4433 = vunpack.c.l.b16 %v4388
      %v4434 = vunpack.c.h.b16 %v4388
      %v4435 = vunpack.c.l.b16 %v4389
      %v4436 = vunpack.c.h.b16 %v4389
      %v4437 = vunpack.c.l.b16 %v4390
      %v4438 = vunpack.c.h.b16 %v4390
      %v4439 = vpack.c.b16 %v4407, %v4407
      %v4440 = vpack.c.b16 %v4408, %v4408
      %v4441 = vpack.c.b16 %v4409, %v4409
      %v4442 = vpack.c.b16 %v4410, %v4410
      %v4443 = vpack.c.b16 %v4411, %v4411
      %v4444 = vpack.c.b16 %v4412, %v4412
      %v4445 = vpack.c.b16 %v4413, %v4413
      %v4446 = vpack.c.b16 %v4414, %v4414
      %v4447 = vpack.c.b16 %v4415, %v4415
      %v4448 = vpack.c.b16 %v4416, %v4416
      %v4449 = vpack.c.b16 %v4417, %v4417
      %v4450 = vpack.c.b16 %v4418, %v4418
      %v4451 = vpack.c.b16 %v4419, %v4419
      %v4452 = vpack.c.b16 %v4420, %v4420
      %v4453 = vpack.c.b16 %v4421, %v4421
      %v4454 = vpack.c.b16 %v4422, %v4422
      %v4455 = vpack.c.b16 %v4423, %v4423
      %v4456 = vpack.c.b16 %v4424, %v4424
      %v4457 = vpack.c.b16 %v4425, %v4425
      %v4458 = vpack.c.b16 %v4426, %v4426
      %v4459 = vpack.c.b16 %v4427, %v4427
      %v4460 = vpack.c.b16 %v4428, %v4428
      %v4461 = vpack.c.b16 %v4429, %v4429
      %v4462 = vpack.c.b16 %v4430, %v4430
      %v4463 = vpack.c.b16 %v4431, %v4431
      %v4464 = vpack.c.b16 %v4432, %v4432
      %v4465 = vpack.c.b16 %v4433, %v4433
      %v4466 = vpack.c.b16 %v4434, %v4434
      %v4467 = vpack.c.b16 %v4435, %v4435
      %v4468 = vpack.c.b16 %v4436, %v4436
      %v4469 = vpack.c.b16 %v4437, %v4437
      %v4470 = vpack.c.b16 %v4438, %v4438
      %4471 = vrot.lane.b32.xlu0 %v4439, 8
      %v4472 = vpop.permute.xlu0 %4471
      %4473 = vrot.lane.b32.xlu0 %v4440, 8
      %v4474 = vpop.permute.xlu0 %4473
      %4475 = vrot.lane.b32.xlu0 %v4441, 8
      %v4476 = vpop.permute.xlu0 %4475
      %4477 = vrot.lane.b32.xlu0 %v4442, 8
      %v4478 = vpop.permute.xlu0 %4477
      %4479 = vrot.lane.b32.xlu0 %v4443, 8
      %v4480 = vpop.permute.xlu0 %4479
      %4481 = vrot.lane.b32.xlu0 %v4444, 8
      %v4482 = vpop.permute.xlu0 %4481
      %4483 = vrot.lane.b32.xlu0 %v4445, 8
      %v4484 = vpop.permute.xlu0 %4483
      %4485 = vrot.lane.b32.xlu0 %v4446, 8
      %v4486 = vpop.permute.xlu0 %4485
      %4487 = vrot.lane.b32.xlu0 %v4447, 8
      %v4488 = vpop.permute.xlu0 %4487
      %4489 = vrot.lane.b32.xlu0 %v4448, 8
      %v4490 = vpop.permute.xlu0 %4489
      %4491 = vrot.lane.b32.xlu0 %v4449, 8
      %v4492 = vpop.permute.xlu0 %4491
      %4493 = vrot.lane.b32.xlu0 %v4450, 8
      %v4494 = vpop.permute.xlu0 %4493
      %4495 = vrot.lane.b32.xlu0 %v4451, 8
      %v4496 = vpop.permute.xlu0 %4495
      %4497 = vrot.lane.b32.xlu0 %v4452, 8
      %v4498 = vpop.permute.xlu0 %4497
      %4499 = vrot.lane.b32.xlu0 %v4453, 8
      %v4500 = vpop.permute.xlu0 %4499
      %4501 = vrot.lane.b32.xlu0 %v4454, 8
      %v4502 = vpop.permute.xlu0 %4501
      %4503 = vrot.lane.b32.xlu0 %v4455, 8
      %v4504 = vpop.permute.xlu0 %4503
      %4505 = vrot.lane.b32.xlu0 %v4456, 8
      %v4506 = vpop.permute.xlu0 %4505
      %4507 = vrot.lane.b32.xlu0 %v4457, 8
      %v4508 = vpop.permute.xlu0 %4507
      %4509 = vrot.lane.b32.xlu0 %v4458, 8
      %v4510 = vpop.permute.xlu0 %4509
      %4511 = vrot.lane.b32.xlu0 %v4459, 8
      %v4512 = vpop.permute.xlu0 %4511
      %4513 = vrot.lane.b32.xlu0 %v4460, 8
      %v4514 = vpop.permute.xlu0 %4513
      %4515 = vrot.lane.b32.xlu0 %v4461, 8
      %v4516 = vpop.permute.xlu0 %4515
      %4517 = vrot.lane.b32.xlu0 %v4462, 8
      %v4518 = vpop.permute.xlu0 %4517
      %4519 = vrot.lane.b32.xlu0 %v4463, 8
      %v4520 = vpop.permute.xlu0 %4519
      %4521 = vrot.lane.b32.xlu0 %v4464, 8
      %v4522 = vpop.permute.xlu0 %4521
      %4523 = vrot.lane.b32.xlu0 %v4465, 8
      %v4524 = vpop.permute.xlu0 %4523
      %4525 = vrot.lane.b32.xlu0 %v4466, 8
      %v4526 = vpop.permute.xlu0 %4525
      %4527 = vrot.lane.b32.xlu0 %v4467, 8
      %v4528 = vpop.permute.xlu0 %4527
      %4529 = vrot.lane.b32.xlu0 %v4468, 8
      %v4530 = vpop.permute.xlu0 %4529
      %4531 = vrot.lane.b32.xlu0 %v4469, 8
      %v4532 = vpop.permute.xlu0 %4531
      %4533 = vrot.lane.b32.xlu0 %v4470, 8
      %v4534 = vpop.permute.xlu0 %4533
      %4567 = vst.msk [vmem:[#allocation3] sm:$0xf] %vm1644, %v4472
      %4568 = vst.msk [vmem:[#allocation3 + $0x4] sm:$0xf] %vm1644, %v4474
      %4569 = vst.msk [vmem:[#allocation3 + $0x8] sm:$0xf] %vm1644, %v4476
      %4570 = vst.msk [vmem:[#allocation3 + $0xc] sm:$0xf] %vm1644, %v4478
      %4571 = vst.msk [vmem:[#allocation3 + $0x10] sm:$0xf] %vm1644, %v4480
      %4572 = vst.msk [vmem:[#allocation3 + $0x14] sm:$0xf] %vm1644, %v4482
      %4573 = vst.msk [vmem:[#allocation3 + $0x18] sm:$0xf] %vm1644, %v4484
      %4574 = vst.msk [vmem:[#allocation3 + $0x1c] sm:$0xf] %vm1644, %v4486
      %4575 = vst.msk [vmem:[#allocation3 + $0x20] sm:$0xf] %vm1644, %v4488
      %4576 = vst.msk [vmem:[#allocation3 + $0x24] sm:$0xf] %vm1644, %v4490
      %4577 = vst.msk [vmem:[#allocation3 + $0x28] sm:$0xf] %vm1644, %v4492
      %4578 = vst.msk [vmem:[#allocation3 + $0x2c] sm:$0xf] %vm1644, %v4494
      %4579 = vst.msk [vmem:[#allocation3 + $0x30] sm:$0xf] %vm1644, %v4496
      %4580 = vst.msk [vmem:[#allocation3 + $0x34] sm:$0xf] %vm1644, %v4498
      %4581 = vst.msk [vmem:[#allocation3 + $0x38] sm:$0xf] %vm1644, %v4500
      %4582 = vst.msk [vmem:[#allocation3 + $0x3c] sm:$0xf] %vm1644, %v4502
      %4583 = vst.msk [vmem:[#allocation3 + $0x40] sm:$0xf] %vm1644, %v4504
      %4584 = vst.msk [vmem:[#allocation3 + $0x44] sm:$0xf] %vm1644, %v4506
      %4585 = vst.msk [vmem:[#allocation3 + $0x48] sm:$0xf] %vm1644, %v4508
      %4586 = vst.msk [vmem:[#allocation3 + $0x4c] sm:$0xf] %vm1644, %v4510
      %4587 = vst.msk [vmem:[#allocation3 + $0x50] sm:$0xf] %vm1644, %v4512
      %4588 = vst.msk [vmem:[#allocation3 + $0x54] sm:$0xf] %vm1644, %v4514
      %4589 = vst.msk [vmem:[#allocation3 + $0x58] sm:$0xf] %vm1644, %v4516
      %4590 = vst.msk [vmem:[#allocation3 + $0x5c] sm:$0xf] %vm1644, %v4518
      %4591 = vst.msk [vmem:[#allocation3 + $0x60] sm:$0xf] %vm1644, %v4520
      %4592 = vst.msk [vmem:[#allocation3 + $0x64] sm:$0xf] %vm1644, %v4522
      %4593 = vst.msk [vmem:[#allocation3 + $0x68] sm:$0xf] %vm1644, %v4524
      %4594 = vst.msk [vmem:[#allocation3 + $0x6c] sm:$0xf] %vm1644, %v4526
      %4595 = vst.msk [vmem:[#allocation3 + $0x70] sm:$0xf] %vm1644, %v4528
      %4596 = vst.msk [vmem:[#allocation3 + $0x74] sm:$0xf] %vm1644, %v4530
      %4597 = vst.msk [vmem:[#allocation3 + $0x78] sm:$0xf] %vm1644, %v4532
      %4598 = vst.msk [vmem:[#allocation3 + $0x7c] sm:$0xf] %vm1644, %v4534
      %v4599 = vld [vmem:[#allocation2 + $0x17] sm:$0xff]
      %v4600 = vld [vmem:[#allocation2 + $0x1f] sm:$0xff]
      %v4601 = vld [vmem:[#allocation2 + $0x27] sm:$0xff]
      %v4602 = vld [vmem:[#allocation2 + $0x2f] sm:$0xff]
      %v4603 = vld [vmem:[#allocation2 + $0x37] sm:$0xff]
      %v4604 = vld [vmem:[#allocation2 + $0x3f] sm:$0xff]
      %v4605 = vld [vmem:[#allocation2 + $0x47] sm:$0xff]
      %v4606 = vld [vmem:[#allocation2 + $0x4f] sm:$0xff]
      %v4607 = vld [vmem:[#allocation2 + $0x57] sm:$0xff]
      %v4608 = vld [vmem:[#allocation2 + $0x5f] sm:$0xff]
      %v4609 = vld [vmem:[#allocation2 + $0x67] sm:$0xff]
      %v4610 = vld [vmem:[#allocation2 + $0x6f] sm:$0xff]
      %v4611 = vld [vmem:[#allocation2 + $0x77] sm:$0xff]
      %v4612 = vld [vmem:[#allocation2 + $0x7f] sm:$0xff]
      %v4613 = vld [vmem:[#allocation2 + $0x87] sm:$0xff]
      %v4614 = vld [vmem:[#allocation2 + $0x8f] sm:$0xff]
      %v4615 = vld [vmem:[#allocation2 + $0x97] sm:$0xff]
      %v4616 = vld [vmem:[#allocation2 + $0x9f] sm:$0xff]
      %v4617 = vld [vmem:[#allocation2 + $0xa7] sm:$0xff]
      %v4618 = vld [vmem:[#allocation2 + $0xaf] sm:$0xff]
      %v4619 = vld [vmem:[#allocation2 + $0xb7] sm:$0xff]
      %v4620 = vld [vmem:[#allocation2 + $0xbf] sm:$0xff]
      %v4621 = vld [vmem:[#allocation2 + $0xc7] sm:$0xff]
      %v4622 = vld [vmem:[#allocation2 + $0xcf] sm:$0xff]
      %v4623 = vld [vmem:[#allocation2 + $0xd7] sm:$0xff]
      %v4624 = vld [vmem:[#allocation2 + $0xdf] sm:$0xff]
      %v4625 = vld [vmem:[#allocation2 + $0xe7] sm:$0xff]
      %v4626 = vld [vmem:[#allocation2 + $0xef] sm:$0xff]
      %v4627 = vld [vmem:[#allocation2 + $0xf7] sm:$0xff]
      %v4628 = vld [vmem:[#allocation2 + $0xff] sm:$0xff]
      %v4629 = vld [vmem:[#allocation2 + $0x107] sm:$0xff]
      %v4630 = vld [vmem:[#allocation2 + $0x10f] sm:$0xff]
      %v4631 = vsel %vm714, %v4599, 0.0
      %v4632 = vsel %vm715, %v4600, 0.0
      %v4633 = vsel %vm716, %v4601, 0.0
      %v4634 = vsel %vm717, %v4602, 0.0
      %v4635 = vsel %vm718, %v4603, 0.0
      %v4636 = vsel %vm719, %v4604, 0.0
      %v4637 = vsel %vm720, %v4605, 0.0
      %v4638 = vsel %vm721, %v4606, 0.0
      %v4639 = vsel %vm722, %v4607, 0.0
      %v4640 = vsel %vm723, %v4608, 0.0
      %v4641 = vsel %vm724, %v4609, 0.0
      %v4642 = vsel %vm725, %v4610, 0.0
      %v4643 = vsel %vm726, %v4611, 0.0
      %v4644 = vsel %vm727, %v4612, 0.0
      %v4645 = vsel %vm728, %v4613, 0.0
      %v4646 = vsel %vm729, %v4614, 0.0
      %v4647 = vsel %vm730, %v4615, 0.0
      %v4648 = vsel %vm731, %v4616, 0.0
      %v4649 = vsel %vm732, %v4617, 0.0
      %v4650 = vsel %vm733, %v4618, 0.0
      %v4651 = vsel %vm734, %v4619, 0.0
      %v4652 = vsel %vm735, %v4620, 0.0
      %v4653 = vsel %vm736, %v4621, 0.0
      %v4654 = vsel %vm737, %v4622, 0.0
      %v4655 = vsel %vm738, %v4623, 0.0
      %v4656 = vsel %vm739, %v4624, 0.0
      %v4657 = vsel %vm740, %v4625, 0.0
      %v4658 = vsel %vm741, %v4626, 0.0
      %v4659 = vsel %vm742, %v4627, 0.0
      %v4660 = vsel %vm743, %v4628, 0.0
      %v4661 = vsel %vm744, %v4629, 0.0
      %v4662 = vsel %vm745, %v4630, 0.0
      %v4663 = vpack.c.bf16 %v4632, %v4631
      %v4664 = vpack.c.bf16 %v4634, %v4633
      %v4665 = vpack.c.bf16 %v4636, %v4635
      %v4666 = vpack.c.bf16 %v4638, %v4637
      %v4667 = vpack.c.bf16 %v4640, %v4639
      %v4668 = vpack.c.bf16 %v4642, %v4641
      %v4669 = vpack.c.bf16 %v4644, %v4643
      %v4670 = vpack.c.bf16 %v4646, %v4645
      %v4671 = vpack.c.bf16 %v4648, %v4647
      %v4672 = vpack.c.bf16 %v4650, %v4649
      %v4673 = vpack.c.bf16 %v4652, %v4651
      %v4674 = vpack.c.bf16 %v4654, %v4653
      %v4675 = vpack.c.bf16 %v4656, %v4655
      %v4676 = vpack.c.bf16 %v4658, %v4657
      %v4677 = vpack.c.bf16 %v4660, %v4659
      %v4678 = vpack.c.bf16 %v4662, %v4661
      %v4695 = vunpack.c.l.b16 %v4663
      %v4696 = vunpack.c.h.b16 %v4663
      %v4697 = vunpack.c.l.b16 %v4664
      %v4698 = vunpack.c.h.b16 %v4664
      %v4699 = vunpack.c.l.b16 %v4665
      %v4700 = vunpack.c.h.b16 %v4665
      %v4701 = vunpack.c.l.b16 %v4666
      %v4702 = vunpack.c.h.b16 %v4666
      %v4703 = vunpack.c.l.b16 %v4667
      %v4704 = vunpack.c.h.b16 %v4667
      %v4705 = vunpack.c.l.b16 %v4668
      %v4706 = vunpack.c.h.b16 %v4668
      %v4707 = vunpack.c.l.b16 %v4669
      %v4708 = vunpack.c.h.b16 %v4669
      %v4709 = vunpack.c.l.b16 %v4670
      %v4710 = vunpack.c.h.b16 %v4670
      %v4711 = vunpack.c.l.b16 %v4671
      %v4712 = vunpack.c.h.b16 %v4671
      %v4713 = vunpack.c.l.b16 %v4672
      %v4714 = vunpack.c.h.b16 %v4672
      %v4715 = vunpack.c.l.b16 %v4673
      %v4716 = vunpack.c.h.b16 %v4673
      %v4717 = vunpack.c.l.b16 %v4674
      %v4718 = vunpack.c.h.b16 %v4674
      %v4719 = vunpack.c.l.b16 %v4675
      %v4720 = vunpack.c.h.b16 %v4675
      %v4721 = vunpack.c.l.b16 %v4676
      %v4722 = vunpack.c.h.b16 %v4676
      %v4723 = vunpack.c.l.b16 %v4677
      %v4724 = vunpack.c.h.b16 %v4677
      %v4725 = vunpack.c.l.b16 %v4678
      %v4726 = vunpack.c.h.b16 %v4678
      %v4727 = vpack.c.b16 %v4695, %v4695
      %v4728 = vpack.c.b16 %v4696, %v4696
      %v4729 = vpack.c.b16 %v4697, %v4697
      %v4730 = vpack.c.b16 %v4698, %v4698
      %v4731 = vpack.c.b16 %v4699, %v4699
      %v4732 = vpack.c.b16 %v4700, %v4700
      %v4733 = vpack.c.b16 %v4701, %v4701
      %v4734 = vpack.c.b16 %v4702, %v4702
      %v4735 = vpack.c.b16 %v4703, %v4703
      %v4736 = vpack.c.b16 %v4704, %v4704
      %v4737 = vpack.c.b16 %v4705, %v4705
      %v4738 = vpack.c.b16 %v4706, %v4706
      %v4739 = vpack.c.b16 %v4707, %v4707
      %v4740 = vpack.c.b16 %v4708, %v4708
      %v4741 = vpack.c.b16 %v4709, %v4709
      %v4742 = vpack.c.b16 %v4710, %v4710
      %v4743 = vpack.c.b16 %v4711, %v4711
      %v4744 = vpack.c.b16 %v4712, %v4712
      %v4745 = vpack.c.b16 %v4713, %v4713
      %v4746 = vpack.c.b16 %v4714, %v4714
      %v4747 = vpack.c.b16 %v4715, %v4715
      %v4748 = vpack.c.b16 %v4716, %v4716
      %v4749 = vpack.c.b16 %v4717, %v4717
      %v4750 = vpack.c.b16 %v4718, %v4718
      %v4751 = vpack.c.b16 %v4719, %v4719
      %v4752 = vpack.c.b16 %v4720, %v4720
      %v4753 = vpack.c.b16 %v4721, %v4721
      %v4754 = vpack.c.b16 %v4722, %v4722
      %v4755 = vpack.c.b16 %v4723, %v4723
      %v4756 = vpack.c.b16 %v4724, %v4724
      %v4757 = vpack.c.b16 %v4725, %v4725
      %v4758 = vpack.c.b16 %v4726, %v4726
      %4759 = vrot.lane.b32.xlu0 %v4727, 12
      %v4760 = vpop.permute.xlu0 %4759
      %4761 = vrot.lane.b32.xlu0 %v4728, 12
      %v4762 = vpop.permute.xlu0 %4761
      %4763 = vrot.lane.b32.xlu0 %v4729, 12
      %v4764 = vpop.permute.xlu0 %4763
      %4765 = vrot.lane.b32.xlu0 %v4730, 12
      %v4766 = vpop.permute.xlu0 %4765
      %4767 = vrot.lane.b32.xlu0 %v4731, 12
      %v4768 = vpop.permute.xlu0 %4767
      %4769 = vrot.lane.b32.xlu0 %v4732, 12
      %v4770 = vpop.permute.xlu0 %4769
      %4771 = vrot.lane.b32.xlu0 %v4733, 12
      %v4772 = vpop.permute.xlu0 %4771
      %4773 = vrot.lane.b32.xlu0 %v4734, 12
      %v4774 = vpop.permute.xlu0 %4773
      %4775 = vrot.lane.b32.xlu0 %v4735, 12
      %v4776 = vpop.permute.xlu0 %4775
      %4777 = vrot.lane.b32.xlu0 %v4736, 12
      %v4778 = vpop.permute.xlu0 %4777
      %4779 = vrot.lane.b32.xlu0 %v4737, 12
      %v4780 = vpop.permute.xlu0 %4779
      %4781 = vrot.lane.b32.xlu0 %v4738, 12
      %v4782 = vpop.permute.xlu0 %4781
      %4783 = vrot.lane.b32.xlu0 %v4739, 12
      %v4784 = vpop.permute.xlu0 %4783
      %4785 = vrot.lane.b32.xlu0 %v4740, 12
      %v4786 = vpop.permute.xlu0 %4785
      %4787 = vrot.lane.b32.xlu0 %v4741, 12
      %v4788 = vpop.permute.xlu0 %4787
      %4789 = vrot.lane.b32.xlu0 %v4742, 12
      %v4790 = vpop.permute.xlu0 %4789
      %4791 = vrot.lane.b32.xlu0 %v4743, 12
      %v4792 = vpop.permute.xlu0 %4791
      %4793 = vrot.lane.b32.xlu0 %v4744, 12
      %v4794 = vpop.permute.xlu0 %4793
      %4795 = vrot.lane.b32.xlu0 %v4745, 12
      %v4796 = vpop.permute.xlu0 %4795
      %4797 = vrot.lane.b32.xlu0 %v4746, 12
      %v4798 = vpop.permute.xlu0 %4797
      %4799 = vrot.lane.b32.xlu0 %v4747, 12
      %v4800 = vpop.permute.xlu0 %4799
      %4801 = vrot.lane.b32.xlu0 %v4748, 12
      %v4802 = vpop.permute.xlu0 %4801
      %4803 = vrot.lane.b32.xlu0 %v4749, 12
      %v4804 = vpop.permute.xlu0 %4803
      %4805 = vrot.lane.b32.xlu0 %v4750, 12
      %v4806 = vpop.permute.xlu0 %4805
      %4807 = vrot.lane.b32.xlu0 %v4751, 12
      %v4808 = vpop.permute.xlu0 %4807
      %4809 = vrot.lane.b32.xlu0 %v4752, 12
      %v4810 = vpop.permute.xlu0 %4809
      %4811 = vrot.lane.b32.xlu0 %v4753, 12
      %v4812 = vpop.permute.xlu0 %4811
      %4813 = vrot.lane.b32.xlu0 %v4754, 12
      %v4814 = vpop.permute.xlu0 %4813
      %4815 = vrot.lane.b32.xlu0 %v4755, 12
      %v4816 = vpop.permute.xlu0 %4815
      %4817 = vrot.lane.b32.xlu0 %v4756, 12
      %v4818 = vpop.permute.xlu0 %4817
      %4819 = vrot.lane.b32.xlu0 %v4757, 12
      %v4820 = vpop.permute.xlu0 %4819
      %4821 = vrot.lane.b32.xlu0 %v4758, 12
      %v4822 = vpop.permute.xlu0 %4821
      %4855 = vst.msk [vmem:[#allocation3] sm:$0xf] %vm1933, %v4760
      %4856 = vst.msk [vmem:[#allocation3 + $0x4] sm:$0xf] %vm1933, %v4762
      %4857 = vst.msk [vmem:[#allocation3 + $0x8] sm:$0xf] %vm1933, %v4764
      %4858 = vst.msk [vmem:[#allocation3 + $0xc] sm:$0xf] %vm1933, %v4766
      %4859 = vst.msk [vmem:[#allocation3 + $0x10] sm:$0xf] %vm1933, %v4768
      %4860 = vst.msk [vmem:[#allocation3 + $0x14] sm:$0xf] %vm1933, %v4770
      %4861 = vst.msk [vmem:[#allocation3 + $0x18] sm:$0xf] %vm1933, %v4772
      %4862 = vst.msk [vmem:[#allocation3 + $0x1c] sm:$0xf] %vm1933, %v4774
      %4863 = vst.msk [vmem:[#allocation3 + $0x20] sm:$0xf] %vm1933, %v4776
      %4864 = vst.msk [vmem:[#allocation3 + $0x24] sm:$0xf] %vm1933, %v4778
      %4865 = vst.msk [vmem:[#allocation3 + $0x28] sm:$0xf] %vm1933, %v4780
      %4866 = vst.msk [vmem:[#allocation3 + $0x2c] sm:$0xf] %vm1933, %v4782
      %4867 = vst.msk [vmem:[#allocation3 + $0x30] sm:$0xf] %vm1933, %v4784
      %4868 = vst.msk [vmem:[#allocation3 + $0x34] sm:$0xf] %vm1933, %v4786
      %4869 = vst.msk [vmem:[#allocation3 + $0x38] sm:$0xf] %vm1933, %v4788
      %4870 = vst.msk [vmem:[#allocation3 + $0x3c] sm:$0xf] %vm1933, %v4790
      %4871 = vst.msk [vmem:[#allocation3 + $0x40] sm:$0xf] %vm1933, %v4792
      %4872 = vst.msk [vmem:[#allocation3 + $0x44] sm:$0xf] %vm1933, %v4794
      %4873 = vst.msk [vmem:[#allocation3 + $0x48] sm:$0xf] %vm1933, %v4796
      %4874 = vst.msk [vmem:[#allocation3 + $0x4c] sm:$0xf] %vm1933, %v4798
      %4875 = vst.msk [vmem:[#allocation3 + $0x50] sm:$0xf] %vm1933, %v4800
      %4876 = vst.msk [vmem:[#allocation3 + $0x54] sm:$0xf] %vm1933, %v4802
      %4877 = vst.msk [vmem:[#allocation3 + $0x58] sm:$0xf] %vm1933, %v4804
      %4878 = vst.msk [vmem:[#allocation3 + $0x5c] sm:$0xf] %vm1933, %v4806
      %4879 = vst.msk [vmem:[#allocation3 + $0x60] sm:$0xf] %vm1933, %v4808
      %4880 = vst.msk [vmem:[#allocation3 + $0x64] sm:$0xf] %vm1933, %v4810
      %4881 = vst.msk [vmem:[#allocation3 + $0x68] sm:$0xf] %vm1933, %v4812
      %4882 = vst.msk [vmem:[#allocation3 + $0x6c] sm:$0xf] %vm1933, %v4814
      %4883 = vst.msk [vmem:[#allocation3 + $0x70] sm:$0xf] %vm1933, %v4816
      %4884 = vst.msk [vmem:[#allocation3 + $0x74] sm:$0xf] %vm1933, %v4818
      %4885 = vst.msk [vmem:[#allocation3 + $0x78] sm:$0xf] %vm1933, %v4820
      %4886 = vst.msk [vmem:[#allocation3 + $0x7c] sm:$0xf] %vm1933, %v4822
      %v4887 = vld [vmem:[#allocation2 + $0x18] sm:$0xff]
      %v4888 = vld [vmem:[#allocation2 + $0x20] sm:$0xff]
      %v4889 = vld [vmem:[#allocation2 + $0x28] sm:$0xff]
      %v4890 = vld [vmem:[#allocation2 + $0x30] sm:$0xff]
      %v4891 = vld [vmem:[#allocation2 + $0x38] sm:$0xff]
      %v4892 = vld [vmem:[#allocation2 + $0x40] sm:$0xff]
      %v4893 = vld [vmem:[#allocation2 + $0x48] sm:$0xff]
      %v4894 = vld [vmem:[#allocation2 + $0x50] sm:$0xff]
      %v4895 = vld [vmem:[#allocation2 + $0x58] sm:$0xff]
      %v4896 = vld [vmem:[#allocation2 + $0x60] sm:$0xff]
      %v4897 = vld [vmem:[#allocation2 + $0x68] sm:$0xff]
      %v4898 = vld [vmem:[#allocation2 + $0x70] sm:$0xff]
      %v4899 = vld [vmem:[#allocation2 + $0x78] sm:$0xff]
      %v4900 = vld [vmem:[#allocation2 + $0x80] sm:$0xff]
      %v4901 = vld [vmem:[#allocation2 + $0x88] sm:$0xff]
      %v4902 = vld [vmem:[#allocation2 + $0x90] sm:$0xff]
      %v4903 = vld [vmem:[#allocation2 + $0x98] sm:$0xff]
      %v4904 = vld [vmem:[#allocation2 + $0xa0] sm:$0xff]
      %v4905 = vld [vmem:[#allocation2 + $0xa8] sm:$0xff]
      %v4906 = vld [vmem:[#allocation2 + $0xb0] sm:$0xff]
      %v4907 = vld [vmem:[#allocation2 + $0xb8] sm:$0xff]
      %v4908 = vld [vmem:[#allocation2 + $0xc0] sm:$0xff]
      %v4909 = vld [vmem:[#allocation2 + $0xc8] sm:$0xff]
      %v4910 = vld [vmem:[#allocation2 + $0xd0] sm:$0xff]
      %v4911 = vld [vmem:[#allocation2 + $0xd8] sm:$0xff]
      %v4912 = vld [vmem:[#allocation2 + $0xe0] sm:$0xff]
      %v4913 = vld [vmem:[#allocation2 + $0xe8] sm:$0xff]
      %v4914 = vld [vmem:[#allocation2 + $0xf0] sm:$0xff]
      %v4915 = vld [vmem:[#allocation2 + $0xf8] sm:$0xff]
      %v4916 = vld [vmem:[#allocation2 + $0x100] sm:$0xff]
      %v4917 = vld [vmem:[#allocation2 + $0x108] sm:$0xff]
      %v4918 = vld [vmem:[#allocation2 + $0x110] sm:$0xff]
      %v4919 = vpack.c.bf16 %v4888, %v4887
      %v4920 = vpack.c.bf16 %v4890, %v4889
      %v4921 = vpack.c.bf16 %v4892, %v4891
      %v4922 = vpack.c.bf16 %v4894, %v4893
      %v4923 = vpack.c.bf16 %v4896, %v4895
      %v4924 = vpack.c.bf16 %v4898, %v4897
      %v4925 = vpack.c.bf16 %v4900, %v4899
      %v4926 = vpack.c.bf16 %v4902, %v4901
      %v4927 = vpack.c.bf16 %v4904, %v4903
      %v4928 = vpack.c.bf16 %v4906, %v4905
      %v4929 = vpack.c.bf16 %v4908, %v4907
      %v4930 = vpack.c.bf16 %v4910, %v4909
      %v4931 = vpack.c.bf16 %v4912, %v4911
      %v4932 = vpack.c.bf16 %v4914, %v4913
      %v4933 = vpack.c.bf16 %v4916, %v4915
      %v4934 = vpack.c.bf16 %v4918, %v4917
      %v4951 = vunpack.c.l.b16 %v4919
      %v4952 = vunpack.c.h.b16 %v4919
      %v4953 = vunpack.c.l.b16 %v4920
      %v4954 = vunpack.c.h.b16 %v4920
      %v4955 = vunpack.c.l.b16 %v4921
      %v4956 = vunpack.c.h.b16 %v4921
      %v4957 = vunpack.c.l.b16 %v4922
      %v4958 = vunpack.c.h.b16 %v4922
      %v4959 = vunpack.c.l.b16 %v4923
      %v4960 = vunpack.c.h.b16 %v4923
      %v4961 = vunpack.c.l.b16 %v4924
      %v4962 = vunpack.c.h.b16 %v4924
      %v4963 = vunpack.c.l.b16 %v4925
      %v4964 = vunpack.c.h.b16 %v4925
      %v4965 = vunpack.c.l.b16 %v4926
      %v4966 = vunpack.c.h.b16 %v4926
      %v4967 = vunpack.c.l.b16 %v4927
      %v4968 = vunpack.c.h.b16 %v4927
      %v4969 = vunpack.c.l.b16 %v4928
      %v4970 = vunpack.c.h.b16 %v4928
      %v4971 = vunpack.c.l.b16 %v4929
      %v4972 = vunpack.c.h.b16 %v4929
      %v4973 = vunpack.c.l.b16 %v4930
      %v4974 = vunpack.c.h.b16 %v4930
      %v4975 = vunpack.c.l.b16 %v4931
      %v4976 = vunpack.c.h.b16 %v4931
      %v4977 = vunpack.c.l.b16 %v4932
      %v4978 = vunpack.c.h.b16 %v4932
      %v4979 = vunpack.c.l.b16 %v4933
      %v4980 = vunpack.c.h.b16 %v4933
      %v4981 = vunpack.c.l.b16 %v4934
      %v4982 = vunpack.c.h.b16 %v4934
      %v4983 = vpack.c.b16 %v4951, %v4951
      %v4984 = vpack.c.b16 %v4952, %v4952
      %v4985 = vpack.c.b16 %v4953, %v4953
      %v4986 = vpack.c.b16 %v4954, %v4954
      %v4987 = vpack.c.b16 %v4955, %v4955
      %v4988 = vpack.c.b16 %v4956, %v4956
      %v4989 = vpack.c.b16 %v4957, %v4957
      %v4990 = vpack.c.b16 %v4958, %v4958
      %v4991 = vpack.c.b16 %v4959, %v4959
      %v4992 = vpack.c.b16 %v4960, %v4960
      %v4993 = vpack.c.b16 %v4961, %v4961
      %v4994 = vpack.c.b16 %v4962, %v4962
      %v4995 = vpack.c.b16 %v4963, %v4963
      %v4996 = vpack.c.b16 %v4964, %v4964
      %v4997 = vpack.c.b16 %v4965, %v4965
      %v4998 = vpack.c.b16 %v4966, %v4966
      %v4999 = vpack.c.b16 %v4967, %v4967
      %v5000 = vpack.c.b16 %v4968, %v4968
      %v5001 = vpack.c.b16 %v4969, %v4969
      %v5002 = vpack.c.b16 %v4970, %v4970
      %v5003 = vpack.c.b16 %v4971, %v4971
      %v5004 = vpack.c.b16 %v4972, %v4972
      %v5005 = vpack.c.b16 %v4973, %v4973
      %v5006 = vpack.c.b16 %v4974, %v4974
      %v5007 = vpack.c.b16 %v4975, %v4975
      %v5008 = vpack.c.b16 %v4976, %v4976
      %v5009 = vpack.c.b16 %v4977, %v4977
      %v5010 = vpack.c.b16 %v4978, %v4978
      %v5011 = vpack.c.b16 %v4979, %v4979
      %v5012 = vpack.c.b16 %v4980, %v4980
      %v5013 = vpack.c.b16 %v4981, %v4981
      %v5014 = vpack.c.b16 %v4982, %v4982
      %5015 = vrot.lane.b32.xlu0 %v4983, 16
      %v5016 = vpop.permute.xlu0 %5015
      %5017 = vrot.lane.b32.xlu0 %v4984, 16
      %v5018 = vpop.permute.xlu0 %5017
      %5019 = vrot.lane.b32.xlu0 %v4985, 16
      %v5020 = vpop.permute.xlu0 %5019
      %5021 = vrot.lane.b32.xlu0 %v4986, 16
      %v5022 = vpop.permute.xlu0 %5021
      %5023 = vrot.lane.b32.xlu0 %v4987, 16
      %v5024 = vpop.permute.xlu0 %5023
      %5025 = vrot.lane.b32.xlu0 %v4988, 16
      %v5026 = vpop.permute.xlu0 %5025
      %5027 = vrot.lane.b32.xlu0 %v4989, 16
      %v5028 = vpop.permute.xlu0 %5027
      %5029 = vrot.lane.b32.xlu0 %v4990, 16
      %v5030 = vpop.permute.xlu0 %5029
      %5031 = vrot.lane.b32.xlu0 %v4991, 16
      %v5032 = vpop.permute.xlu0 %5031
      %5033 = vrot.lane.b32.xlu0 %v4992, 16
      %v5034 = vpop.permute.xlu0 %5033
      %5035 = vrot.lane.b32.xlu0 %v4993, 16
      %v5036 = vpop.permute.xlu0 %5035
      %5037 = vrot.lane.b32.xlu0 %v4994, 16
      %v5038 = vpop.permute.xlu0 %5037
      %5039 = vrot.lane.b32.xlu0 %v4995, 16
      %v5040 = vpop.permute.xlu0 %5039
      %5041 = vrot.lane.b32.xlu0 %v4996, 16
      %v5042 = vpop.permute.xlu0 %5041
      %5043 = vrot.lane.b32.xlu0 %v4997, 16
      %v5044 = vpop.permute.xlu0 %5043
      %5045 = vrot.lane.b32.xlu0 %v4998, 16
      %v5046 = vpop.permute.xlu0 %5045
      %5047 = vrot.lane.b32.xlu0 %v4999, 16
      %v5048 = vpop.permute.xlu0 %5047
      %5049 = vrot.lane.b32.xlu0 %v5000, 16
      %v5050 = vpop.permute.xlu0 %5049
      %5051 = vrot.lane.b32.xlu0 %v5001, 16
      %v5052 = vpop.permute.xlu0 %5051
      %5053 = vrot.lane.b32.xlu0 %v5002, 16
      %v5054 = vpop.permute.xlu0 %5053
      %5055 = vrot.lane.b32.xlu0 %v5003, 16
      %v5056 = vpop.permute.xlu0 %5055
      %5057 = vrot.lane.b32.xlu0 %v5004, 16
      %v5058 = vpop.permute.xlu0 %5057
      %5059 = vrot.lane.b32.xlu0 %v5005, 16
      %v5060 = vpop.permute.xlu0 %5059
      %5061 = vrot.lane.b32.xlu0 %v5006, 16
      %v5062 = vpop.permute.xlu0 %5061
      %5063 = vrot.lane.b32.xlu0 %v5007, 16
      %v5064 = vpop.permute.xlu0 %5063
      %5065 = vrot.lane.b32.xlu0 %v5008, 16
      %v5066 = vpop.permute.xlu0 %5065
      %5067 = vrot.lane.b32.xlu0 %v5009, 16
      %v5068 = vpop.permute.xlu0 %5067
      %5069 = vrot.lane.b32.xlu0 %v5010, 16
      %v5070 = vpop.permute.xlu0 %5069
      %5071 = vrot.lane.b32.xlu0 %v5011, 16
      %v5072 = vpop.permute.xlu0 %5071
      %5073 = vrot.lane.b32.xlu0 %v5012, 16
      %v5074 = vpop.permute.xlu0 %5073
      %5075 = vrot.lane.b32.xlu0 %v5013, 16
      %v5076 = vpop.permute.xlu0 %5075
      %5077 = vrot.lane.b32.xlu0 %v5014, 16
      %v5078 = vpop.permute.xlu0 %5077
      %5111 = vst.msk [vmem:[#allocation3] sm:$0xf] %vm2190, %v5016
      %5112 = vst.msk [vmem:[#allocation3 + $0x4] sm:$0xf] %vm2190, %v5018
      %5113 = vst.msk [vmem:[#allocation3 + $0x8] sm:$0xf] %vm2190, %v5020
      %5114 = vst.msk [vmem:[#allocation3 + $0xc] sm:$0xf] %vm2190, %v5022
      %5115 = vst.msk [vmem:[#allocation3 + $0x10] sm:$0xf] %vm2190, %v5024
      %5116 = vst.msk [vmem:[#allocation3 + $0x14] sm:$0xf] %vm2190, %v5026
      %5117 = vst.msk [vmem:[#allocation3 + $0x18] sm:$0xf] %vm2190, %v5028
      %5118 = vst.msk [vmem:[#allocation3 + $0x1c] sm:$0xf] %vm2190, %v5030
      %5119 = vst.msk [vmem:[#allocation3 + $0x20] sm:$0xf] %vm2190, %v5032
      %5120 = vst.msk [vmem:[#allocation3 + $0x24] sm:$0xf] %vm2190, %v5034
      %5121 = vst.msk [vmem:[#allocation3 + $0x28] sm:$0xf] %vm2190, %v5036
      %5122 = vst.msk [vmem:[#allocation3 + $0x2c] sm:$0xf] %vm2190, %v5038
      %5123 = vst.msk [vmem:[#allocation3 + $0x30] sm:$0xf] %vm2190, %v5040
      %5124 = vst.msk [vmem:[#allocation3 + $0x34] sm:$0xf] %vm2190, %v5042
      %5125 = vst.msk [vmem:[#allocation3 + $0x38] sm:$0xf] %vm2190, %v5044
      %5126 = vst.msk [vmem:[#allocation3 + $0x3c] sm:$0xf] %vm2190, %v5046
      %5127 = vst.msk [vmem:[#allocation3 + $0x40] sm:$0xf] %vm2190, %v5048
      %5128 = vst.msk [vmem:[#allocation3 + $0x44] sm:$0xf] %vm2190, %v5050
      %5129 = vst.msk [vmem:[#allocation3 + $0x48] sm:$0xf] %vm2190, %v5052
      %5130 = vst.msk [vmem:[#allocation3 + $0x4c] sm:$0xf] %vm2190, %v5054
      %5131 = vst.msk [vmem:[#allocation3 + $0x50] sm:$0xf] %vm2190, %v5056
      %5132 = vst.msk [vmem:[#allocation3 + $0x54] sm:$0xf] %vm2190, %v5058
      %5133 = vst.msk [vmem:[#allocation3 + $0x58] sm:$0xf] %vm2190, %v5060
      %5134 = vst.msk [vmem:[#allocation3 + $0x5c] sm:$0xf] %vm2190, %v5062
      %5135 = vst.msk [vmem:[#allocation3 + $0x60] sm:$0xf] %vm2190, %v5064
      %5136 = vst.msk [vmem:[#allocation3 + $0x64] sm:$0xf] %vm2190, %v5066
      %5137 = vst.msk [vmem:[#allocation3 + $0x68] sm:$0xf] %vm2190, %v5068
      %5138 = vst.msk [vmem:[#allocation3 + $0x6c] sm:$0xf] %vm2190, %v5070
      %5139 = vst.msk [vmem:[#allocation3 + $0x70] sm:$0xf] %vm2190, %v5072
      %5140 = vst.msk [vmem:[#allocation3 + $0x74] sm:$0xf] %vm2190, %v5074
      %5141 = vst.msk [vmem:[#allocation3 + $0x78] sm:$0xf] %vm2190, %v5076
      %5142 = vst.msk [vmem:[#allocation3 + $0x7c] sm:$0xf] %vm2190, %v5078
      %v5143 = vld [vmem:[#allocation2 + $0x19] sm:$0xff]
      %v5144 = vld [vmem:[#allocation2 + $0x21] sm:$0xff]
      %v5145 = vld [vmem:[#allocation2 + $0x29] sm:$0xff]
      %v5146 = vld [vmem:[#allocation2 + $0x31] sm:$0xff]
      %v5147 = vld [vmem:[#allocation2 + $0x39] sm:$0xff]
      %v5148 = vld [vmem:[#allocation2 + $0x41] sm:$0xff]
      %v5149 = vld [vmem:[#allocation2 + $0x49] sm:$0xff]
      %v5150 = vld [vmem:[#allocation2 + $0x51] sm:$0xff]
      %v5151 = vld [vmem:[#allocation2 + $0x59] sm:$0xff]
      %v5152 = vld [vmem:[#allocation2 + $0x61] sm:$0xff]
      %v5153 = vld [vmem:[#allocation2 + $0x69] sm:$0xff]
      %v5154 = vld [vmem:[#allocation2 + $0x71] sm:$0xff]
      %v5155 = vld [vmem:[#allocation2 + $0x79] sm:$0xff]
      %v5156 = vld [vmem:[#allocation2 + $0x81] sm:$0xff]
      %v5157 = vld [vmem:[#allocation2 + $0x89] sm:$0xff]
      %v5158 = vld [vmem:[#allocation2 + $0x91] sm:$0xff]
      %v5159 = vld [vmem:[#allocation2 + $0x99] sm:$0xff]
      %v5160 = vld [vmem:[#allocation2 + $0xa1] sm:$0xff]
      %v5161 = vld [vmem:[#allocation2 + $0xa9] sm:$0xff]
      %v5162 = vld [vmem:[#allocation2 + $0xb1] sm:$0xff]
      %v5163 = vld [vmem:[#allocation2 + $0xb9] sm:$0xff]
      %v5164 = vld [vmem:[#allocation2 + $0xc1] sm:$0xff]
      %v5165 = vld [vmem:[#allocation2 + $0xc9] sm:$0xff]
      %v5166 = vld [vmem:[#allocation2 + $0xd1] sm:$0xff]
      %v5167 = vld [vmem:[#allocation2 + $0xd9] sm:$0xff]
      %v5168 = vld [vmem:[#allocation2 + $0xe1] sm:$0xff]
      %v5169 = vld [vmem:[#allocation2 + $0xe9] sm:$0xff]
      %v5170 = vld [vmem:[#allocation2 + $0xf1] sm:$0xff]
      %v5171 = vld [vmem:[#allocation2 + $0xf9] sm:$0xff]
      %v5172 = vld [vmem:[#allocation2 + $0x101] sm:$0xff]
      %v5173 = vld [vmem:[#allocation2 + $0x109] sm:$0xff]
      %v5174 = vld [vmem:[#allocation2 + $0x111] sm:$0xff]
      %v5175 = vsel %vm810, %v5143, 0.0
      %v5176 = vsel %vm811, %v5144, 0.0
      %v5177 = vsel %vm812, %v5145, 0.0
      %v5178 = vsel %vm813, %v5146, 0.0
      %v5179 = vsel %vm814, %v5147, 0.0
      %v5180 = vsel %vm815, %v5148, 0.0
      %v5181 = vsel %vm816, %v5149, 0.0
      %v5182 = vsel %vm817, %v5150, 0.0
      %v5183 = vsel %vm818, %v5151, 0.0
      %v5184 = vsel %vm819, %v5152, 0.0
      %v5185 = vsel %vm820, %v5153, 0.0
      %v5186 = vsel %vm821, %v5154, 0.0
      %v5187 = vsel %vm822, %v5155, 0.0
      %v5188 = vsel %vm823, %v5156, 0.0
      %v5189 = vsel %vm824, %v5157, 0.0
      %v5190 = vsel %vm825, %v5158, 0.0
      %v5191 = vsel %vm826, %v5159, 0.0
      %v5192 = vsel %vm827, %v5160, 0.0
      %v5193 = vsel %vm828, %v5161, 0.0
      %v5194 = vsel %vm829, %v5162, 0.0
      %v5195 = vsel %vm830, %v5163, 0.0
      %v5196 = vsel %vm831, %v5164, 0.0
      %v5197 = vsel %vm832, %v5165, 0.0
      %v5198 = vsel %vm833, %v5166, 0.0
      %v5199 = vsel %vm834, %v5167, 0.0
      %v5200 = vsel %vm835, %v5168, 0.0
      %v5201 = vsel %vm836, %v5169, 0.0
      %v5202 = vsel %vm837, %v5170, 0.0
      %v5203 = vsel %vm838, %v5171, 0.0
      %v5204 = vsel %vm839, %v5172, 0.0
      %v5205 = vsel %vm840, %v5173, 0.0
      %v5206 = vsel %vm841, %v5174, 0.0
      %v5207 = vpack.c.bf16 %v5176, %v5175
      %v5208 = vpack.c.bf16 %v5178, %v5177
      %v5209 = vpack.c.bf16 %v5180, %v5179
      %v5210 = vpack.c.bf16 %v5182, %v5181
      %v5211 = vpack.c.bf16 %v5184, %v5183
      %v5212 = vpack.c.bf16 %v5186, %v5185
      %v5213 = vpack.c.bf16 %v5188, %v5187
      %v5214 = vpack.c.bf16 %v5190, %v5189
      %v5215 = vpack.c.bf16 %v5192, %v5191
      %v5216 = vpack.c.bf16 %v5194, %v5193
      %v5217 = vpack.c.bf16 %v5196, %v5195
      %v5218 = vpack.c.bf16 %v5198, %v5197
      %v5219 = vpack.c.bf16 %v5200, %v5199
      %v5220 = vpack.c.bf16 %v5202, %v5201
      %v5221 = vpack.c.bf16 %v5204, %v5203
      %v5222 = vpack.c.bf16 %v5206, %v5205
      %v5239 = vunpack.c.l.b16 %v5207
      %v5240 = vunpack.c.h.b16 %v5207
      %v5241 = vunpack.c.l.b16 %v5208
      %v5242 = vunpack.c.h.b16 %v5208
      %v5243 = vunpack.c.l.b16 %v5209
      %v5244 = vunpack.c.h.b16 %v5209
      %v5245 = vunpack.c.l.b16 %v5210
      %v5246 = vunpack.c.h.b16 %v5210
      %v5247 = vunpack.c.l.b16 %v5211
      %v5248 = vunpack.c.h.b16 %v5211
      %v5249 = vunpack.c.l.b16 %v5212
      %v5250 = vunpack.c.h.b16 %v5212
      %v5251 = vunpack.c.l.b16 %v5213
      %v5252 = vunpack.c.h.b16 %v5213
      %v5253 = vunpack.c.l.b16 %v5214
      %v5254 = vunpack.c.h.b16 %v5214
      %v5255 = vunpack.c.l.b16 %v5215
      %v5256 = vunpack.c.h.b16 %v5215
      %v5257 = vunpack.c.l.b16 %v5216
      %v5258 = vunpack.c.h.b16 %v5216
      %v5259 = vunpack.c.l.b16 %v5217
      %v5260 = vunpack.c.h.b16 %v5217
      %v5261 = vunpack.c.l.b16 %v5218
      %v5262 = vunpack.c.h.b16 %v5218
      %v5263 = vunpack.c.l.b16 %v5219
      %v5264 = vunpack.c.h.b16 %v5219
      %v5265 = vunpack.c.l.b16 %v5220
      %v5266 = vunpack.c.h.b16 %v5220
      %v5267 = vunpack.c.l.b16 %v5221
      %v5268 = vunpack.c.h.b16 %v5221
      %v5269 = vunpack.c.l.b16 %v5222
      %v5270 = vunpack.c.h.b16 %v5222
      %v5271 = vpack.c.b16 %v5239, %v5239
      %v5272 = vpack.c.b16 %v5240, %v5240
      %v5273 = vpack.c.b16 %v5241, %v5241
      %v5274 = vpack.c.b16 %v5242, %v5242
      %v5275 = vpack.c.b16 %v5243, %v5243
      %v5276 = vpack.c.b16 %v5244, %v5244
      %v5277 = vpack.c.b16 %v5245, %v5245
      %v5278 = vpack.c.b16 %v5246, %v5246
      %v5279 = vpack.c.b16 %v5247, %v5247
      %v5280 = vpack.c.b16 %v5248, %v5248
      %v5281 = vpack.c.b16 %v5249, %v5249
      %v5282 = vpack.c.b16 %v5250, %v5250
      %v5283 = vpack.c.b16 %v5251, %v5251
      %v5284 = vpack.c.b16 %v5252, %v5252
      %v5285 = vpack.c.b16 %v5253, %v5253
      %v5286 = vpack.c.b16 %v5254, %v5254
      %v5287 = vpack.c.b16 %v5255, %v5255
      %v5288 = vpack.c.b16 %v5256, %v5256
      %v5289 = vpack.c.b16 %v5257, %v5257
      %v5290 = vpack.c.b16 %v5258, %v5258
      %v5291 = vpack.c.b16 %v5259, %v5259
      %v5292 = vpack.c.b16 %v5260, %v5260
      %v5293 = vpack.c.b16 %v5261, %v5261
      %v5294 = vpack.c.b16 %v5262, %v5262
      %v5295 = vpack.c.b16 %v5263, %v5263
      %v5296 = vpack.c.b16 %v5264, %v5264
      %v5297 = vpack.c.b16 %v5265, %v5265
      %v5298 = vpack.c.b16 %v5266, %v5266
      %v5299 = vpack.c.b16 %v5267, %v5267
      %v5300 = vpack.c.b16 %v5268, %v5268
      %v5301 = vpack.c.b16 %v5269, %v5269
      %v5302 = vpack.c.b16 %v5270, %v5270
      %5303 = vrot.lane.b32.xlu0 %v5271, 20
      %v5304 = vpop.permute.xlu0 %5303
      %5305 = vrot.lane.b32.xlu0 %v5272, 20
      %v5306 = vpop.permute.xlu0 %5305
      %5307 = vrot.lane.b32.xlu0 %v5273, 20
      %v5308 = vpop.permute.xlu0 %5307
      %5309 = vrot.lane.b32.xlu0 %v5274, 20
      %v5310 = vpop.permute.xlu0 %5309
      %5311 = vrot.lane.b32.xlu0 %v5275, 20
      %v5312 = vpop.permute.xlu0 %5311
      %5313 = vrot.lane.b32.xlu0 %v5276, 20
      %v5314 = vpop.permute.xlu0 %5313
      %5315 = vrot.lane.b32.xlu0 %v5277, 20
      %v5316 = vpop.permute.xlu0 %5315
      %5317 = vrot.lane.b32.xlu0 %v5278, 20
      %v5318 = vpop.permute.xlu0 %5317
      %5319 = vrot.lane.b32.xlu0 %v5279, 20
      %v5320 = vpop.permute.xlu0 %5319
      %5321 = vrot.lane.b32.xlu0 %v5280, 20
      %v5322 = vpop.permute.xlu0 %5321
      %5323 = vrot.lane.b32.xlu0 %v5281, 20
      %v5324 = vpop.permute.xlu0 %5323
      %5325 = vrot.lane.b32.xlu0 %v5282, 20
      %v5326 = vpop.permute.xlu0 %5325
      %5327 = vrot.lane.b32.xlu0 %v5283, 20
      %v5328 = vpop.permute.xlu0 %5327
      %5329 = vrot.lane.b32.xlu0 %v5284, 20
      %v5330 = vpop.permute.xlu0 %5329
      %5331 = vrot.lane.b32.xlu0 %v5285, 20
      %v5332 = vpop.permute.xlu0 %5331
      %5333 = vrot.lane.b32.xlu0 %v5286, 20
      %v5334 = vpop.permute.xlu0 %5333
      %5335 = vrot.lane.b32.xlu0 %v5287, 20
      %v5336 = vpop.permute.xlu0 %5335
      %5337 = vrot.lane.b32.xlu0 %v5288, 20
      %v5338 = vpop.permute.xlu0 %5337
      %5339 = vrot.lane.b32.xlu0 %v5289, 20
      %v5340 = vpop.permute.xlu0 %5339
      %5341 = vrot.lane.b32.xlu0 %v5290, 20
      %v5342 = vpop.permute.xlu0 %5341
      %5343 = vrot.lane.b32.xlu0 %v5291, 20
      %v5344 = vpop.permute.xlu0 %5343
      %5345 = vrot.lane.b32.xlu0 %v5292, 20
      %v5346 = vpop.permute.xlu0 %5345
      %5347 = vrot.lane.b32.xlu0 %v5293, 20
      %v5348 = vpop.permute.xlu0 %5347
      %5349 = vrot.lane.b32.xlu0 %v5294, 20
      %v5350 = vpop.permute.xlu0 %5349
      %5351 = vrot.lane.b32.xlu0 %v5295, 20
      %v5352 = vpop.permute.xlu0 %5351
      %5353 = vrot.lane.b32.xlu0 %v5296, 20
      %v5354 = vpop.permute.xlu0 %5353
      %5355 = vrot.lane.b32.xlu0 %v5297, 20
      %v5356 = vpop.permute.xlu0 %5355
      %5357 = vrot.lane.b32.xlu0 %v5298, 20
      %v5358 = vpop.permute.xlu0 %5357
      %5359 = vrot.lane.b32.xlu0 %v5299, 20
      %v5360 = vpop.permute.xlu0 %5359
      %5361 = vrot.lane.b32.xlu0 %v5300, 20
      %v5362 = vpop.permute.xlu0 %5361
      %5363 = vrot.lane.b32.xlu0 %v5301, 20
      %v5364 = vpop.permute.xlu0 %5363
      %5365 = vrot.lane.b32.xlu0 %v5302, 20
      %v5366 = vpop.permute.xlu0 %5365
      %5399 = vst.msk [vmem:[#allocation3] sm:$0xf] %vm2479, %v5304
      %5400 = vst.msk [vmem:[#allocation3 + $0x4] sm:$0xf] %vm2479, %v5306
      %5401 = vst.msk [vmem:[#allocation3 + $0x8] sm:$0xf] %vm2479, %v5308
      %5402 = vst.msk [vmem:[#allocation3 + $0xc] sm:$0xf] %vm2479, %v5310
      %5403 = vst.msk [vmem:[#allocation3 + $0x10] sm:$0xf] %vm2479, %v5312
      %5404 = vst.msk [vmem:[#allocation3 + $0x14] sm:$0xf] %vm2479, %v5314
      %5405 = vst.msk [vmem:[#allocation3 + $0x18] sm:$0xf] %vm2479, %v5316
      %5406 = vst.msk [vmem:[#allocation3 + $0x1c] sm:$0xf] %vm2479, %v5318
      %5407 = vst.msk [vmem:[#allocation3 + $0x20] sm:$0xf] %vm2479, %v5320
      %5408 = vst.msk [vmem:[#allocation3 + $0x24] sm:$0xf] %vm2479, %v5322
      %5409 = vst.msk [vmem:[#allocation3 + $0x28] sm:$0xf] %vm2479, %v5324
      %5410 = vst.msk [vmem:[#allocation3 + $0x2c] sm:$0xf] %vm2479, %v5326
      %5411 = vst.msk [vmem:[#allocation3 + $0x30] sm:$0xf] %vm2479, %v5328
      %5412 = vst.msk [vmem:[#allocation3 + $0x34] sm:$0xf] %vm2479, %v5330
      %5413 = vst.msk [vmem:[#allocation3 + $0x38] sm:$0xf] %vm2479, %v5332
      %5414 = vst.msk [vmem:[#allocation3 + $0x3c] sm:$0xf] %vm2479, %v5334
      %5415 = vst.msk [vmem:[#allocation3 + $0x40] sm:$0xf] %vm2479, %v5336
      %5416 = vst.msk [vmem:[#allocation3 + $0x44] sm:$0xf] %vm2479, %v5338
      %5417 = vst.msk [vmem:[#allocation3 + $0x48] sm:$0xf] %vm2479, %v5340
      %5418 = vst.msk [vmem:[#allocation3 + $0x4c] sm:$0xf] %vm2479, %v5342
      %5419 = vst.msk [vmem:[#allocation3 + $0x50] sm:$0xf] %vm2479, %v5344
      %5420 = vst.msk [vmem:[#allocation3 + $0x54] sm:$0xf] %vm2479, %v5346
      %5421 = vst.msk [vmem:[#allocation3 + $0x58] sm:$0xf] %vm2479, %v5348
      %5422 = vst.msk [vmem:[#allocation3 + $0x5c] sm:$0xf] %vm2479, %v5350
      %5423 = vst.msk [vmem:[#allocation3 + $0x60] sm:$0xf] %vm2479, %v5352
      %5424 = vst.msk [vmem:[#allocation3 + $0x64] sm:$0xf] %vm2479, %v5354
      %5425 = vst.msk [vmem:[#allocation3 + $0x68] sm:$0xf] %vm2479, %v5356
      %5426 = vst.msk [vmem:[#allocation3 + $0x6c] sm:$0xf] %vm2479, %v5358
      %5427 = vst.msk [vmem:[#allocation3 + $0x70] sm:$0xf] %vm2479, %v5360
      %5428 = vst.msk [vmem:[#allocation3 + $0x74] sm:$0xf] %vm2479, %v5362
      %5429 = vst.msk [vmem:[#allocation3 + $0x78] sm:$0xf] %vm2479, %v5364
      %5430 = vst.msk [vmem:[#allocation3 + $0x7c] sm:$0xf] %vm2479, %v5366
      %v5431 = vld [vmem:[#allocation2 + $0x27] sm:$0xff]
      %v5432 = vld [vmem:[#allocation2 + $0x2f] sm:$0xff]
      %v5433 = vld [vmem:[#allocation2 + $0x37] sm:$0xff]
      %v5434 = vld [vmem:[#allocation2 + $0x3f] sm:$0xff]
      %v5435 = vld [vmem:[#allocation2 + $0x47] sm:$0xff]
      %v5436 = vld [vmem:[#allocation2 + $0x4f] sm:$0xff]
      %v5437 = vld [vmem:[#allocation2 + $0x57] sm:$0xff]
      %v5438 = vld [vmem:[#allocation2 + $0x5f] sm:$0xff]
      %v5439 = vld [vmem:[#allocation2 + $0x67] sm:$0xff]
      %v5440 = vld [vmem:[#allocation2 + $0x6f] sm:$0xff]
      %v5441 = vld [vmem:[#allocation2 + $0x77] sm:$0xff]
      %v5442 = vld [vmem:[#allocation2 + $0x7f] sm:$0xff]
      %v5443 = vld [vmem:[#allocation2 + $0x87] sm:$0xff]
      %v5444 = vld [vmem:[#allocation2 + $0x8f] sm:$0xff]
      %v5445 = vld [vmem:[#allocation2 + $0x97] sm:$0xff]
      %v5446 = vld [vmem:[#allocation2 + $0x9f] sm:$0xff]
      %v5447 = vld [vmem:[#allocation2 + $0xa7] sm:$0xff]
      %v5448 = vld [vmem:[#allocation2 + $0xaf] sm:$0xff]
      %v5449 = vld [vmem:[#allocation2 + $0xb7] sm:$0xff]
      %v5450 = vld [vmem:[#allocation2 + $0xbf] sm:$0xff]
      %v5451 = vld [vmem:[#allocation2 + $0xc7] sm:$0xff]
      %v5452 = vld [vmem:[#allocation2 + $0xcf] sm:$0xff]
      %v5453 = vld [vmem:[#allocation2 + $0xd7] sm:$0xff]
      %v5454 = vld [vmem:[#allocation2 + $0xdf] sm:$0xff]
      %v5455 = vld [vmem:[#allocation2 + $0xe7] sm:$0xff]
      %v5456 = vld [vmem:[#allocation2 + $0xef] sm:$0xff]
      %v5457 = vld [vmem:[#allocation2 + $0xf7] sm:$0xff]
      %v5458 = vld [vmem:[#allocation2 + $0xff] sm:$0xff]
      %v5459 = vld [vmem:[#allocation2 + $0x107] sm:$0xff]
      %v5460 = vld [vmem:[#allocation2 + $0x10f] sm:$0xff]
      %v5461 = vld [vmem:[#allocation2 + $0x117] sm:$0xff]
      %v5462 = vld [vmem:[#allocation2 + $0x11f] sm:$0xff]
      %v5463 = vsel %vm714, %v5431, 0.0
      %v5464 = vsel %vm715, %v5432, 0.0
      %v5465 = vsel %vm716, %v5433, 0.0
      %v5466 = vsel %vm717, %v5434, 0.0
      %v5467 = vsel %vm718, %v5435, 0.0
      %v5468 = vsel %vm719, %v5436, 0.0
      %v5469 = vsel %vm720, %v5437, 0.0
      %v5470 = vsel %vm721, %v5438, 0.0
      %v5471 = vsel %vm722, %v5439, 0.0
      %v5472 = vsel %vm723, %v5440, 0.0
      %v5473 = vsel %vm724, %v5441, 0.0
      %v5474 = vsel %vm725, %v5442, 0.0
      %v5475 = vsel %vm726, %v5443, 0.0
      %v5476 = vsel %vm727, %v5444, 0.0
      %v5477 = vsel %vm728, %v5445, 0.0
      %v5478 = vsel %vm729, %v5446, 0.0
      %v5479 = vsel %vm730, %v5447, 0.0
      %v5480 = vsel %vm731, %v5448, 0.0
      %v5481 = vsel %vm732, %v5449, 0.0
      %v5482 = vsel %vm733, %v5450, 0.0
      %v5483 = vsel %vm734, %v5451, 0.0
      %v5484 = vsel %vm735, %v5452, 0.0
      %v5485 = vsel %vm736, %v5453, 0.0
      %v5486 = vsel %vm737, %v5454, 0.0
      %v5487 = vsel %vm738, %v5455, 0.0
      %v5488 = vsel %vm739, %v5456, 0.0
      %v5489 = vsel %vm740, %v5457, 0.0
      %v5490 = vsel %vm741, %v5458, 0.0
      %v5491 = vsel %vm742, %v5459, 0.0
      %v5492 = vsel %vm743, %v5460, 0.0
      %v5493 = vsel %vm744, %v5461, 0.0
      %v5494 = vsel %vm745, %v5462, 0.0
      %v5495 = vpack.c.bf16 %v5464, %v5463
      %v5496 = vpack.c.bf16 %v5466, %v5465
      %v5497 = vpack.c.bf16 %v5468, %v5467
      %v5498 = vpack.c.bf16 %v5470, %v5469
      %v5499 = vpack.c.bf16 %v5472, %v5471
      %v5500 = vpack.c.bf16 %v5474, %v5473
      %v5501 = vpack.c.bf16 %v5476, %v5475
      %v5502 = vpack.c.bf16 %v5478, %v5477
      %v5503 = vpack.c.bf16 %v5480, %v5479
      %v5504 = vpack.c.bf16 %v5482, %v5481
      %v5505 = vpack.c.bf16 %v5484, %v5483
      %v5506 = vpack.c.bf16 %v5486, %v5485
      %v5507 = vpack.c.bf16 %v5488, %v5487
      %v5508 = vpack.c.bf16 %v5490, %v5489
      %v5509 = vpack.c.bf16 %v5492, %v5491
      %v5510 = vpack.c.bf16 %v5494, %v5493
      %v5527 = vunpack.c.l.b16 %v5495
      %v5528 = vunpack.c.h.b16 %v5495
      %v5529 = vunpack.c.l.b16 %v5496
      %v5530 = vunpack.c.h.b16 %v5496
      %v5531 = vunpack.c.l.b16 %v5497
      %v5532 = vunpack.c.h.b16 %v5497
      %v5533 = vunpack.c.l.b16 %v5498
      %v5534 = vunpack.c.h.b16 %v5498
      %v5535 = vunpack.c.l.b16 %v5499
      %v5536 = vunpack.c.h.b16 %v5499
      %v5537 = vunpack.c.l.b16 %v5500
      %v5538 = vunpack.c.h.b16 %v5500
      %v5539 = vunpack.c.l.b16 %v5501
      %v5540 = vunpack.c.h.b16 %v5501
      %v5541 = vunpack.c.l.b16 %v5502
      %v5542 = vunpack.c.h.b16 %v5502
      %v5543 = vunpack.c.l.b16 %v5503
      %v5544 = vunpack.c.h.b16 %v5503
      %v5545 = vunpack.c.l.b16 %v5504
      %v5546 = vunpack.c.h.b16 %v5504
      %v5547 = vunpack.c.l.b16 %v5505
      %v5548 = vunpack.c.h.b16 %v5505
      %v5549 = vunpack.c.l.b16 %v5506
      %v5550 = vunpack.c.h.b16 %v5506
      %v5551 = vunpack.c.l.b16 %v5507
      %v5552 = vunpack.c.h.b16 %v5507
      %v5553 = vunpack.c.l.b16 %v5508
      %v5554 = vunpack.c.h.b16 %v5508
      %v5555 = vunpack.c.l.b16 %v5509
      %v5556 = vunpack.c.h.b16 %v5509
      %v5557 = vunpack.c.l.b16 %v5510
      %v5558 = vunpack.c.h.b16 %v5510
      %v5559 = vpack.c.b16 %v5527, %v5527
      %v5560 = vpack.c.b16 %v5528, %v5528
      %v5561 = vpack.c.b16 %v5529, %v5529
      %v5562 = vpack.c.b16 %v5530, %v5530
      %v5563 = vpack.c.b16 %v5531, %v5531
      %v5564 = vpack.c.b16 %v5532, %v5532
      %v5565 = vpack.c.b16 %v5533, %v5533
      %v5566 = vpack.c.b16 %v5534, %v5534
      %v5567 = vpack.c.b16 %v5535, %v5535
      %v5568 = vpack.c.b16 %v5536, %v5536
      %v5569 = vpack.c.b16 %v5537, %v5537
      %v5570 = vpack.c.b16 %v5538, %v5538
      %v5571 = vpack.c.b16 %v5539, %v5539
      %v5572 = vpack.c.b16 %v5540, %v5540
      %v5573 = vpack.c.b16 %v5541, %v5541
      %v5574 = vpack.c.b16 %v5542, %v5542
      %v5575 = vpack.c.b16 %v5543, %v5543
      %v5576 = vpack.c.b16 %v5544, %v5544
      %v5577 = vpack.c.b16 %v5545, %v5545
      %v5578 = vpack.c.b16 %v5546, %v5546
      %v5579 = vpack.c.b16 %v5547, %v5547
      %v5580 = vpack.c.b16 %v5548, %v5548
      %v5581 = vpack.c.b16 %v5549, %v5549
      %v5582 = vpack.c.b16 %v5550, %v5550
      %v5583 = vpack.c.b16 %v5551, %v5551
      %v5584 = vpack.c.b16 %v5552, %v5552
      %v5585 = vpack.c.b16 %v5553, %v5553
      %v5586 = vpack.c.b16 %v5554, %v5554
      %v5587 = vpack.c.b16 %v5555, %v5555
      %v5588 = vpack.c.b16 %v5556, %v5556
      %v5589 = vpack.c.b16 %v5557, %v5557
      %v5590 = vpack.c.b16 %v5558, %v5558
      %5591 = vrot.lane.b32.xlu0 %v5559, 24
      %v5592 = vpop.permute.xlu0 %5591
      %5593 = vrot.lane.b32.xlu0 %v5560, 24
      %v5594 = vpop.permute.xlu0 %5593
      %5595 = vrot.lane.b32.xlu0 %v5561, 24
      %v5596 = vpop.permute.xlu0 %5595
      %5597 = vrot.lane.b32.xlu0 %v5562, 24
      %v5598 = vpop.permute.xlu0 %5597
      %5599 = vrot.lane.b32.xlu0 %v5563, 24
      %v5600 = vpop.permute.xlu0 %5599
      %5601 = vrot.lane.b32.xlu0 %v5564, 24
      %v5602 = vpop.permute.xlu0 %5601
      %5603 = vrot.lane.b32.xlu0 %v5565, 24
      %v5604 = vpop.permute.xlu0 %5603
      %5605 = vrot.lane.b32.xlu0 %v5566, 24
      %v5606 = vpop.permute.xlu0 %5605
      %5607 = vrot.lane.b32.xlu0 %v5567, 24
      %v5608 = vpop.permute.xlu0 %5607
      %5609 = vrot.lane.b32.xlu0 %v5568, 24
      %v5610 = vpop.permute.xlu0 %5609
      %5611 = vrot.lane.b32.xlu0 %v5569, 24
      %v5612 = vpop.permute.xlu0 %5611
      %5613 = vrot.lane.b32.xlu0 %v5570, 24
      %v5614 = vpop.permute.xlu0 %5613
      %5615 = vrot.lane.b32.xlu0 %v5571, 24
      %v5616 = vpop.permute.xlu0 %5615
      %5617 = vrot.lane.b32.xlu0 %v5572, 24
      %v5618 = vpop.permute.xlu0 %5617
      %5619 = vrot.lane.b32.xlu0 %v5573, 24
      %v5620 = vpop.permute.xlu0 %5619
      %5621 = vrot.lane.b32.xlu0 %v5574, 24
      %v5622 = vpop.permute.xlu0 %5621
      %5623 = vrot.lane.b32.xlu0 %v5575, 24
      %v5624 = vpop.permute.xlu0 %5623
      %5625 = vrot.lane.b32.xlu0 %v5576, 24
      %v5626 = vpop.permute.xlu0 %5625
      %5627 = vrot.lane.b32.xlu0 %v5577, 24
      %v5628 = vpop.permute.xlu0 %5627
      %5629 = vrot.lane.b32.xlu0 %v5578, 24
      %v5630 = vpop.permute.xlu0 %5629
      %5631 = vrot.lane.b32.xlu0 %v5579, 24
      %v5632 = vpop.permute.xlu0 %5631
      %5633 = vrot.lane.b32.xlu0 %v5580, 24
      %v5634 = vpop.permute.xlu0 %5633
      %5635 = vrot.lane.b32.xlu0 %v5581, 24
      %v5636 = vpop.permute.xlu0 %5635
      %5637 = vrot.lane.b32.xlu0 %v5582, 24
      %v5638 = vpop.permute.xlu0 %5637
      %5639 = vrot.lane.b32.xlu0 %v5583, 24
      %v5640 = vpop.permute.xlu0 %5639
      %5641 = vrot.lane.b32.xlu0 %v5584, 24
      %v5642 = vpop.permute.xlu0 %5641
      %5643 = vrot.lane.b32.xlu0 %v5585, 24
      %v5644 = vpop.permute.xlu0 %5643
      %5645 = vrot.lane.b32.xlu0 %v5586, 24
      %v5646 = vpop.permute.xlu0 %5645
      %5647 = vrot.lane.b32.xlu0 %v5587, 24
      %v5648 = vpop.permute.xlu0 %5647
      %5649 = vrot.lane.b32.xlu0 %v5588, 24
      %v5650 = vpop.permute.xlu0 %5649
      %5651 = vrot.lane.b32.xlu0 %v5589, 24
      %v5652 = vpop.permute.xlu0 %5651
      %5653 = vrot.lane.b32.xlu0 %v5590, 24
      %v5654 = vpop.permute.xlu0 %5653
      %5687 = vst.msk [vmem:[#allocation3] sm:$0xf] %vm2768, %v5592
      %5688 = vst.msk [vmem:[#allocation3 + $0x4] sm:$0xf] %vm2768, %v5594
      %5689 = vst.msk [vmem:[#allocation3 + $0x8] sm:$0xf] %vm2768, %v5596
      %5690 = vst.msk [vmem:[#allocation3 + $0xc] sm:$0xf] %vm2768, %v5598
      %5691 = vst.msk [vmem:[#allocation3 + $0x10] sm:$0xf] %vm2768, %v5600
      %5692 = vst.msk [vmem:[#allocation3 + $0x14] sm:$0xf] %vm2768, %v5602
      %5693 = vst.msk [vmem:[#allocation3 + $0x18] sm:$0xf] %vm2768, %v5604
      %5694 = vst.msk [vmem:[#allocation3 + $0x1c] sm:$0xf] %vm2768, %v5606
      %5695 = vst.msk [vmem:[#allocation3 + $0x20] sm:$0xf] %vm2768, %v5608
      %5696 = vst.msk [vmem:[#allocation3 + $0x24] sm:$0xf] %vm2768, %v5610
      %5697 = vst.msk [vmem:[#allocation3 + $0x28] sm:$0xf] %vm2768, %v5612
      %5698 = vst.msk [vmem:[#allocation3 + $0x2c] sm:$0xf] %vm2768, %v5614
      %5699 = vst.msk [vmem:[#allocation3 + $0x30] sm:$0xf] %vm2768, %v5616
      %5700 = vst.msk [vmem:[#allocation3 + $0x34] sm:$0xf] %vm2768, %v5618
      %5701 = vst.msk [vmem:[#allocation3 + $0x38] sm:$0xf] %vm2768, %v5620
      %5702 = vst.msk [vmem:[#allocation3 + $0x3c] sm:$0xf] %vm2768, %v5622
      %5703 = vst.msk [vmem:[#allocation3 + $0x40] sm:$0xf] %vm2768, %v5624
      %5704 = vst.msk [vmem:[#allocation3 + $0x44] sm:$0xf] %vm2768, %v5626
      %5705 = vst.msk [vmem:[#allocation3 + $0x48] sm:$0xf] %vm2768, %v5628
      %5706 = vst.msk [vmem:[#allocation3 + $0x4c] sm:$0xf] %vm2768, %v5630
      %5707 = vst.msk [vmem:[#allocation3 + $0x50] sm:$0xf] %vm2768, %v5632
      %5708 = vst.msk [vmem:[#allocation3 + $0x54] sm:$0xf] %vm2768, %v5634
      %5709 = vst.msk [vmem:[#allocation3 + $0x58] sm:$0xf] %vm2768, %v5636
      %5710 = vst.msk [vmem:[#allocation3 + $0x5c] sm:$0xf] %vm2768, %v5638
      %5711 = vst.msk [vmem:[#allocation3 + $0x60] sm:$0xf] %vm2768, %v5640
      %5712 = vst.msk [vmem:[#allocation3 + $0x64] sm:$0xf] %vm2768, %v5642
      %5713 = vst.msk [vmem:[#allocation3 + $0x68] sm:$0xf] %vm2768, %v5644
      %5714 = vst.msk [vmem:[#allocation3 + $0x6c] sm:$0xf] %vm2768, %v5646
      %5715 = vst.msk [vmem:[#allocation3 + $0x70] sm:$0xf] %vm2768, %v5648
      %5716 = vst.msk [vmem:[#allocation3 + $0x74] sm:$0xf] %vm2768, %v5650
      %5717 = vst.msk [vmem:[#allocation3 + $0x78] sm:$0xf] %vm2768, %v5652
      %5718 = vst.msk [vmem:[#allocation3 + $0x7c] sm:$0xf] %vm2768, %v5654
      %v5719 = vld [vmem:[#allocation2 + $0x28] sm:$0xff]
      %v5720 = vld [vmem:[#allocation2 + $0x30] sm:$0xff]
      %v5721 = vld [vmem:[#allocation2 + $0x38] sm:$0xff]
      %v5722 = vld [vmem:[#allocation2 + $0x40] sm:$0xff]
      %v5723 = vld [vmem:[#allocation2 + $0x48] sm:$0xff]
      %v5724 = vld [vmem:[#allocation2 + $0x50] sm:$0xff]
      %v5725 = vld [vmem:[#allocation2 + $0x58] sm:$0xff]
      %v5726 = vld [vmem:[#allocation2 + $0x60] sm:$0xff]
      %v5727 = vld [vmem:[#allocation2 + $0x68] sm:$0xff]
      %v5728 = vld [vmem:[#allocation2 + $0x70] sm:$0xff]
      %v5729 = vld [vmem:[#allocation2 + $0x78] sm:$0xff]
      %v5730 = vld [vmem:[#allocation2 + $0x80] sm:$0xff]
      %v5731 = vld [vmem:[#allocation2 + $0x88] sm:$0xff]
      %v5732 = vld [vmem:[#allocation2 + $0x90] sm:$0xff]
      %v5733 = vld [vmem:[#allocation2 + $0x98] sm:$0xff]
      %v5734 = vld [vmem:[#allocation2 + $0xa0] sm:$0xff]
      %v5735 = vld [vmem:[#allocation2 + $0xa8] sm:$0xff]
      %v5736 = vld [vmem:[#allocation2 + $0xb0] sm:$0xff]
      %v5737 = vld [vmem:[#allocation2 + $0xb8] sm:$0xff]
      %v5738 = vld [vmem:[#allocation2 + $0xc0] sm:$0xff]
      %v5739 = vld [vmem:[#allocation2 + $0xc8] sm:$0xff]
      %v5740 = vld [vmem:[#allocation2 + $0xd0] sm:$0xff]
      %v5741 = vld [vmem:[#allocation2 + $0xd8] sm:$0xff]
      %v5742 = vld [vmem:[#allocation2 + $0xe0] sm:$0xff]
      %v5743 = vld [vmem:[#allocation2 + $0xe8] sm:$0xff]
      %v5744 = vld [vmem:[#allocation2 + $0xf0] sm:$0xff]
      %v5745 = vld [vmem:[#allocation2 + $0xf8] sm:$0xff]
      %v5746 = vld [vmem:[#allocation2 + $0x100] sm:$0xff]
      %v5747 = vld [vmem:[#allocation2 + $0x108] sm:$0xff]
      %v5748 = vld [vmem:[#allocation2 + $0x110] sm:$0xff]
      %v5749 = vld [vmem:[#allocation2 + $0x118] sm:$0xff]
      %v5750 = vld [vmem:[#allocation2 + $0x120] sm:$0xff]
      %v5751 = vpack.c.bf16 %v5720, %v5719
      %v5752 = vpack.c.bf16 %v5722, %v5721
      %v5753 = vpack.c.bf16 %v5724, %v5723
      %v5754 = vpack.c.bf16 %v5726, %v5725
      %v5755 = vpack.c.bf16 %v5728, %v5727
      %v5756 = vpack.c.bf16 %v5730, %v5729
      %v5757 = vpack.c.bf16 %v5732, %v5731
      %v5758 = vpack.c.bf16 %v5734, %v5733
      %v5759 = vpack.c.bf16 %v5736, %v5735
      %v5760 = vpack.c.bf16 %v5738, %v5737
      %v5761 = vpack.c.bf16 %v5740, %v5739
      %v5762 = vpack.c.bf16 %v5742, %v5741
      %v5763 = vpack.c.bf16 %v5744, %v5743
      %v5764 = vpack.c.bf16 %v5746, %v5745
      %v5765 = vpack.c.bf16 %v5748, %v5747
      %v5766 = vpack.c.bf16 %v5750, %v5749
      %v5783 = vunpack.c.l.b16 %v5751
      %v5784 = vunpack.c.h.b16 %v5751
      %v5785 = vunpack.c.l.b16 %v5752
      %v5786 = vunpack.c.h.b16 %v5752
      %v5787 = vunpack.c.l.b16 %v5753
      %v5788 = vunpack.c.h.b16 %v5753
      %v5789 = vunpack.c.l.b16 %v5754
      %v5790 = vunpack.c.h.b16 %v5754
      %v5791 = vunpack.c.l.b16 %v5755
      %v5792 = vunpack.c.h.b16 %v5755
      %v5793 = vunpack.c.l.b16 %v5756
      %v5794 = vunpack.c.h.b16 %v5756
      %v5795 = vunpack.c.l.b16 %v5757
      %v5796 = vunpack.c.h.b16 %v5757
      %v5797 = vunpack.c.l.b16 %v5758
      %v5798 = vunpack.c.h.b16 %v5758
      %v5799 = vunpack.c.l.b16 %v5759
      %v5800 = vunpack.c.h.b16 %v5759
      %v5801 = vunpack.c.l.b16 %v5760
      %v5802 = vunpack.c.h.b16 %v5760
      %v5803 = vunpack.c.l.b16 %v5761
      %v5804 = vunpack.c.h.b16 %v5761
      %v5805 = vunpack.c.l.b16 %v5762
      %v5806 = vunpack.c.h.b16 %v5762
      %v5807 = vunpack.c.l.b16 %v5763
      %v5808 = vunpack.c.h.b16 %v5763
      %v5809 = vunpack.c.l.b16 %v5764
      %v5810 = vunpack.c.h.b16 %v5764
      %v5811 = vunpack.c.l.b16 %v5765
      %v5812 = vunpack.c.h.b16 %v5765
      %v5813 = vunpack.c.l.b16 %v5766
      %v5814 = vunpack.c.h.b16 %v5766
      %v5815 = vpack.c.b16 %v5783, %v5783
      %v5816 = vpack.c.b16 %v5784, %v5784
      %v5817 = vpack.c.b16 %v5785, %v5785
      %v5818 = vpack.c.b16 %v5786, %v5786
      %v5819 = vpack.c.b16 %v5787, %v5787
      %v5820 = vpack.c.b16 %v5788, %v5788
      %v5821 = vpack.c.b16 %v5789, %v5789
      %v5822 = vpack.c.b16 %v5790, %v5790
      %v5823 = vpack.c.b16 %v5791, %v5791
      %v5824 = vpack.c.b16 %v5792, %v5792
      %v5825 = vpack.c.b16 %v5793, %v5793
      %v5826 = vpack.c.b16 %v5794, %v5794
      %v5827 = vpack.c.b16 %v5795, %v5795
      %v5828 = vpack.c.b16 %v5796, %v5796
      %v5829 = vpack.c.b16 %v5797, %v5797
      %v5830 = vpack.c.b16 %v5798, %v5798
      %v5831 = vpack.c.b16 %v5799, %v5799
      %v5832 = vpack.c.b16 %v5800, %v5800
      %v5833 = vpack.c.b16 %v5801, %v5801
      %v5834 = vpack.c.b16 %v5802, %v5802
      %v5835 = vpack.c.b16 %v5803, %v5803
      %v5836 = vpack.c.b16 %v5804, %v5804
      %v5837 = vpack.c.b16 %v5805, %v5805
      %v5838 = vpack.c.b16 %v5806, %v5806
      %v5839 = vpack.c.b16 %v5807, %v5807
      %v5840 = vpack.c.b16 %v5808, %v5808
      %v5841 = vpack.c.b16 %v5809, %v5809
      %v5842 = vpack.c.b16 %v5810, %v5810
      %v5843 = vpack.c.b16 %v5811, %v5811
      %v5844 = vpack.c.b16 %v5812, %v5812
      %v5845 = vpack.c.b16 %v5813, %v5813
      %v5846 = vpack.c.b16 %v5814, %v5814
      %5847 = vrot.lane.b32.xlu0 %v5815, 28
      %v5848 = vpop.permute.xlu0 %5847
      %5849 = vrot.lane.b32.xlu0 %v5816, 28
      %v5850 = vpop.permute.xlu0 %5849
      %5851 = vrot.lane.b32.xlu0 %v5817, 28
      %v5852 = vpop.permute.xlu0 %5851
      %5853 = vrot.lane.b32.xlu0 %v5818, 28
      %v5854 = vpop.permute.xlu0 %5853
      %5855 = vrot.lane.b32.xlu0 %v5819, 28
      %v5856 = vpop.permute.xlu0 %5855
      %5857 = vrot.lane.b32.xlu0 %v5820, 28
      %v5858 = vpop.permute.xlu0 %5857
      %5859 = vrot.lane.b32.xlu0 %v5821, 28
      %v5860 = vpop.permute.xlu0 %5859
      %5861 = vrot.lane.b32.xlu0 %v5822, 28
      %v5862 = vpop.permute.xlu0 %5861
      %5863 = vrot.lane.b32.xlu0 %v5823, 28
      %v5864 = vpop.permute.xlu0 %5863
      %5865 = vrot.lane.b32.xlu0 %v5824, 28
      %v5866 = vpop.permute.xlu0 %5865
      %5867 = vrot.lane.b32.xlu0 %v5825, 28
      %v5868 = vpop.permute.xlu0 %5867
      %5869 = vrot.lane.b32.xlu0 %v5826, 28
      %v5870 = vpop.permute.xlu0 %5869
      %5871 = vrot.lane.b32.xlu0 %v5827, 28
      %v5872 = vpop.permute.xlu0 %5871
      %5873 = vrot.lane.b32.xlu0 %v5828, 28
      %v5874 = vpop.permute.xlu0 %5873
      %5875 = vrot.lane.b32.xlu0 %v5829, 28
      %v5876 = vpop.permute.xlu0 %5875
      %5877 = vrot.lane.b32.xlu0 %v5830, 28
      %v5878 = vpop.permute.xlu0 %5877
      %5879 = vrot.lane.b32.xlu0 %v5831, 28
      %v5880 = vpop.permute.xlu0 %5879
      %5881 = vrot.lane.b32.xlu0 %v5832, 28
      %v5882 = vpop.permute.xlu0 %5881
      %5883 = vrot.lane.b32.xlu0 %v5833, 28
      %v5884 = vpop.permute.xlu0 %5883
      %5885 = vrot.lane.b32.xlu0 %v5834, 28
      %v5886 = vpop.permute.xlu0 %5885
      %5887 = vrot.lane.b32.xlu0 %v5835, 28
      %v5888 = vpop.permute.xlu0 %5887
      %5889 = vrot.lane.b32.xlu0 %v5836, 28
      %v5890 = vpop.permute.xlu0 %5889
      %5891 = vrot.lane.b32.xlu0 %v5837, 28
      %v5892 = vpop.permute.xlu0 %5891
      %5893 = vrot.lane.b32.xlu0 %v5838, 28
      %v5894 = vpop.permute.xlu0 %5893
      %5895 = vrot.lane.b32.xlu0 %v5839, 28
      %v5896 = vpop.permute.xlu0 %5895
      %5897 = vrot.lane.b32.xlu0 %v5840, 28
      %v5898 = vpop.permute.xlu0 %5897
      %5899 = vrot.lane.b32.xlu0 %v5841, 28
      %v5900 = vpop.permute.xlu0 %5899
      %5901 = vrot.lane.b32.xlu0 %v5842, 28
      %v5902 = vpop.permute.xlu0 %5901
      %5903 = vrot.lane.b32.xlu0 %v5843, 28
      %v5904 = vpop.permute.xlu0 %5903
      %5905 = vrot.lane.b32.xlu0 %v5844, 28
      %v5906 = vpop.permute.xlu0 %5905
      %5907 = vrot.lane.b32.xlu0 %v5845, 28
      %v5908 = vpop.permute.xlu0 %5907
      %5909 = vrot.lane.b32.xlu0 %v5846, 28
      %v5910 = vpop.permute.xlu0 %5909
      %5943 = vst.msk [vmem:[#allocation3] sm:$0xf] %vm3025, %v5848
      %5944 = vst.msk [vmem:[#allocation3 + $0x4] sm:$0xf] %vm3025, %v5850
      %5945 = vst.msk [vmem:[#allocation3 + $0x8] sm:$0xf] %vm3025, %v5852
      %5946 = vst.msk [vmem:[#allocation3 + $0xc] sm:$0xf] %vm3025, %v5854
      %5947 = vst.msk [vmem:[#allocation3 + $0x10] sm:$0xf] %vm3025, %v5856
      %5948 = vst.msk [vmem:[#allocation3 + $0x14] sm:$0xf] %vm3025, %v5858
      %5949 = vst.msk [vmem:[#allocation3 + $0x18] sm:$0xf] %vm3025, %v5860
      %5950 = vst.msk [vmem:[#allocation3 + $0x1c] sm:$0xf] %vm3025, %v5862
      %5951 = vst.msk [vmem:[#allocation3 + $0x20] sm:$0xf] %vm3025, %v5864
      %5952 = vst.msk [vmem:[#allocation3 + $0x24] sm:$0xf] %vm3025, %v5866
      %5953 = vst.msk [vmem:[#allocation3 + $0x28] sm:$0xf] %vm3025, %v5868
      %5954 = vst.msk [vmem:[#allocation3 + $0x2c] sm:$0xf] %vm3025, %v5870
      %5955 = vst.msk [vmem:[#allocation3 + $0x30] sm:$0xf] %vm3025, %v5872
      %5956 = vst.msk [vmem:[#allocation3 + $0x34] sm:$0xf] %vm3025, %v5874
      %5957 = vst.msk [vmem:[#allocation3 + $0x38] sm:$0xf] %vm3025, %v5876
      %5958 = vst.msk [vmem:[#allocation3 + $0x3c] sm:$0xf] %vm3025, %v5878
      %5959 = vst.msk [vmem:[#allocation3 + $0x40] sm:$0xf] %vm3025, %v5880
      %5960 = vst.msk [vmem:[#allocation3 + $0x44] sm:$0xf] %vm3025, %v5882
      %5961 = vst.msk [vmem:[#allocation3 + $0x48] sm:$0xf] %vm3025, %v5884
      %5962 = vst.msk [vmem:[#allocation3 + $0x4c] sm:$0xf] %vm3025, %v5886
      %5963 = vst.msk [vmem:[#allocation3 + $0x50] sm:$0xf] %vm3025, %v5888
      %5964 = vst.msk [vmem:[#allocation3 + $0x54] sm:$0xf] %vm3025, %v5890
      %5965 = vst.msk [vmem:[#allocation3 + $0x58] sm:$0xf] %vm3025, %v5892
      %5966 = vst.msk [vmem:[#allocation3 + $0x5c] sm:$0xf] %vm3025, %v5894
      %5967 = vst.msk [vmem:[#allocation3 + $0x60] sm:$0xf] %vm3025, %v5896
      %5968 = vst.msk [vmem:[#allocation3 + $0x64] sm:$0xf] %vm3025, %v5898
      %5969 = vst.msk [vmem:[#allocation3 + $0x68] sm:$0xf] %vm3025, %v5900
      %5970 = vst.msk [vmem:[#allocation3 + $0x6c] sm:$0xf] %vm3025, %v5902
      %5971 = vst.msk [vmem:[#allocation3 + $0x70] sm:$0xf] %vm3025, %v5904
      %5972 = vst.msk [vmem:[#allocation3 + $0x74] sm:$0xf] %vm3025, %v5906
      %5973 = vst.msk [vmem:[#allocation3 + $0x78] sm:$0xf] %vm3025, %v5908
      %5974 = vst.msk [vmem:[#allocation3 + $0x7c] sm:$0xf] %vm3025, %v5910
      %v5975 = vld [vmem:[#allocation2 + $0x29] sm:$0xff]
      %v5976 = vld [vmem:[#allocation2 + $0x31] sm:$0xff]
      %v5977 = vld [vmem:[#allocation2 + $0x39] sm:$0xff]
      %v5978 = vld [vmem:[#allocation2 + $0x41] sm:$0xff]
      %v5979 = vld [vmem:[#allocation2 + $0x49] sm:$0xff]
      %v5980 = vld [vmem:[#allocation2 + $0x51] sm:$0xff]
      %v5981 = vld [vmem:[#allocation2 + $0x59] sm:$0xff]
      %v5982 = vld [vmem:[#allocation2 + $0x61] sm:$0xff]
      %v5983 = vld [vmem:[#allocation2 + $0x69] sm:$0xff]
      %v5984 = vld [vmem:[#allocation2 + $0x71] sm:$0xff]
      %v5985 = vld [vmem:[#allocation2 + $0x79] sm:$0xff]
      %v5986 = vld [vmem:[#allocation2 + $0x81] sm:$0xff]
      %v5987 = vld [vmem:[#allocation2 + $0x89] sm:$0xff]
      %v5988 = vld [vmem:[#allocation2 + $0x91] sm:$0xff]
      %v5989 = vld [vmem:[#allocation2 + $0x99] sm:$0xff]
      %v5990 = vld [vmem:[#allocation2 + $0xa1] sm:$0xff]
      %v5991 = vld [vmem:[#allocation2 + $0xa9] sm:$0xff]
      %v5992 = vld [vmem:[#allocation2 + $0xb1] sm:$0xff]
      %v5993 = vld [vmem:[#allocation2 + $0xb9] sm:$0xff]
      %v5994 = vld [vmem:[#allocation2 + $0xc1] sm:$0xff]
      %v5995 = vld [vmem:[#allocation2 + $0xc9] sm:$0xff]
      %v5996 = vld [vmem:[#allocation2 + $0xd1] sm:$0xff]
      %v5997 = vld [vmem:[#allocation2 + $0xd9] sm:$0xff]
      %v5998 = vld [vmem:[#allocation2 + $0xe1] sm:$0xff]
      %v5999 = vld [vmem:[#allocation2 + $0xe9] sm:$0xff]
      %v6000 = vld [vmem:[#allocation2 + $0xf1] sm:$0xff]
      %v6001 = vld [vmem:[#allocation2 + $0xf9] sm:$0xff]
      %v6002 = vld [vmem:[#allocation2 + $0x101] sm:$0xff]
      %v6003 = vld [vmem:[#allocation2 + $0x109] sm:$0xff]
      %v6004 = vld [vmem:[#allocation2 + $0x111] sm:$0xff]
      %v6005 = vld [vmem:[#allocation2 + $0x119] sm:$0xff]
      %v6006 = vld [vmem:[#allocation2 + $0x121] sm:$0xff]
      %v6007 = vsel %vm810, %v5975, 0.0
      %v6008 = vsel %vm811, %v5976, 0.0
      %v6009 = vsel %vm812, %v5977, 0.0
      %v6010 = vsel %vm813, %v5978, 0.0
      %v6011 = vsel %vm814, %v5979, 0.0
      %v6012 = vsel %vm815, %v5980, 0.0
      %v6013 = vsel %vm816, %v5981, 0.0
      %v6014 = vsel %vm817, %v5982, 0.0
      %v6015 = vsel %vm818, %v5983, 0.0
      %v6016 = vsel %vm819, %v5984, 0.0
      %v6017 = vsel %vm820, %v5985, 0.0
      %v6018 = vsel %vm821, %v5986, 0.0
      %v6019 = vsel %vm822, %v5987, 0.0
      %v6020 = vsel %vm823, %v5988, 0.0
      %v6021 = vsel %vm824, %v5989, 0.0
      %v6022 = vsel %vm825, %v5990, 0.0
      %v6023 = vsel %vm826, %v5991, 0.0
      %v6024 = vsel %vm827, %v5992, 0.0
      %v6025 = vsel %vm828, %v5993, 0.0
      %v6026 = vsel %vm829, %v5994, 0.0
      %v6027 = vsel %vm830, %v5995, 0.0
      %v6028 = vsel %vm831, %v5996, 0.0
      %v6029 = vsel %vm832, %v5997, 0.0
      %v6030 = vsel %vm833, %v5998, 0.0
      %v6031 = vsel %vm834, %v5999, 0.0
      %v6032 = vsel %vm835, %v6000, 0.0
      %v6033 = vsel %vm836, %v6001, 0.0
      %v6034 = vsel %vm837, %v6002, 0.0
      %v6035 = vsel %vm838, %v6003, 0.0
      %v6036 = vsel %vm839, %v6004, 0.0
      %v6037 = vsel %vm840, %v6005, 0.0
      %v6038 = vsel %vm841, %v6006, 0.0
      %v6039 = vpack.c.bf16 %v6008, %v6007
      %v6040 = vpack.c.bf16 %v6010, %v6009
      %v6041 = vpack.c.bf16 %v6012, %v6011
      %v6042 = vpack.c.bf16 %v6014, %v6013
      %v6043 = vpack.c.bf16 %v6016, %v6015
      %v6044 = vpack.c.bf16 %v6018, %v6017
      %v6045 = vpack.c.bf16 %v6020, %v6019
      %v6046 = vpack.c.bf16 %v6022, %v6021
      %v6047 = vpack.c.bf16 %v6024, %v6023
      %v6048 = vpack.c.bf16 %v6026, %v6025
      %v6049 = vpack.c.bf16 %v6028, %v6027
      %v6050 = vpack.c.bf16 %v6030, %v6029
      %v6051 = vpack.c.bf16 %v6032, %v6031
      %v6052 = vpack.c.bf16 %v6034, %v6033
      %v6053 = vpack.c.bf16 %v6036, %v6035
      %v6054 = vpack.c.bf16 %v6038, %v6037
      %v6071 = vunpack.c.l.b16 %v6039
      %v6072 = vunpack.c.h.b16 %v6039
      %v6073 = vunpack.c.l.b16 %v6040
      %v6074 = vunpack.c.h.b16 %v6040
      %v6075 = vunpack.c.l.b16 %v6041
      %v6076 = vunpack.c.h.b16 %v6041
      %v6077 = vunpack.c.l.b16 %v6042
      %v6078 = vunpack.c.h.b16 %v6042
      %v6079 = vunpack.c.l.b16 %v6043
      %v6080 = vunpack.c.h.b16 %v6043
      %v6081 = vunpack.c.l.b16 %v6044
      %v6082 = vunpack.c.h.b16 %v6044
      %v6083 = vunpack.c.l.b16 %v6045
      %v6084 = vunpack.c.h.b16 %v6045
      %v6085 = vunpack.c.l.b16 %v6046
      %v6086 = vunpack.c.h.b16 %v6046
      %v6087 = vunpack.c.l.b16 %v6047
      %v6088 = vunpack.c.h.b16 %v6047
      %v6089 = vunpack.c.l.b16 %v6048
      %v6090 = vunpack.c.h.b16 %v6048
      %v6091 = vunpack.c.l.b16 %v6049
      %v6092 = vunpack.c.h.b16 %v6049
      %v6093 = vunpack.c.l.b16 %v6050
      %v6094 = vunpack.c.h.b16 %v6050
      %v6095 = vunpack.c.l.b16 %v6051
      %v6096 = vunpack.c.h.b16 %v6051
      %v6097 = vunpack.c.l.b16 %v6052
      %v6098 = vunpack.c.h.b16 %v6052
      %v6099 = vunpack.c.l.b16 %v6053
      %v6100 = vunpack.c.h.b16 %v6053
      %v6101 = vunpack.c.l.b16 %v6054
      %v6102 = vunpack.c.h.b16 %v6054
      %v6103 = vpack.c.b16 %v6071, %v6071
      %v6104 = vpack.c.b16 %v6072, %v6072
      %v6105 = vpack.c.b16 %v6073, %v6073
      %v6106 = vpack.c.b16 %v6074, %v6074
      %v6107 = vpack.c.b16 %v6075, %v6075
      %v6108 = vpack.c.b16 %v6076, %v6076
      %v6109 = vpack.c.b16 %v6077, %v6077
      %v6110 = vpack.c.b16 %v6078, %v6078
      %v6111 = vpack.c.b16 %v6079, %v6079
      %v6112 = vpack.c.b16 %v6080, %v6080
      %v6113 = vpack.c.b16 %v6081, %v6081
      %v6114 = vpack.c.b16 %v6082, %v6082
      %v6115 = vpack.c.b16 %v6083, %v6083
      %v6116 = vpack.c.b16 %v6084, %v6084
      %v6117 = vpack.c.b16 %v6085, %v6085
      %v6118 = vpack.c.b16 %v6086, %v6086
      %v6119 = vpack.c.b16 %v6087, %v6087
      %v6120 = vpack.c.b16 %v6088, %v6088
      %v6121 = vpack.c.b16 %v6089, %v6089
      %v6122 = vpack.c.b16 %v6090, %v6090
      %v6123 = vpack.c.b16 %v6091, %v6091
      %v6124 = vpack.c.b16 %v6092, %v6092
      %v6125 = vpack.c.b16 %v6093, %v6093
      %v6126 = vpack.c.b16 %v6094, %v6094
      %v6127 = vpack.c.b16 %v6095, %v6095
      %v6128 = vpack.c.b16 %v6096, %v6096
      %v6129 = vpack.c.b16 %v6097, %v6097
      %v6130 = vpack.c.b16 %v6098, %v6098
      %v6131 = vpack.c.b16 %v6099, %v6099
      %v6132 = vpack.c.b16 %v6100, %v6100
      %v6133 = vpack.c.b16 %v6101, %v6101
      %v6134 = vpack.c.b16 %v6102, %v6102
      %6135 = vrot.lane.b32.xlu0 %v6103, 32
      %v6136 = vpop.permute.xlu0 %6135
      %6137 = vrot.lane.b32.xlu0 %v6104, 32
      %v6138 = vpop.permute.xlu0 %6137
      %6139 = vrot.lane.b32.xlu0 %v6105, 32
      %v6140 = vpop.permute.xlu0 %6139
      %6141 = vrot.lane.b32.xlu0 %v6106, 32
      %v6142 = vpop.permute.xlu0 %6141
      %6143 = vrot.lane.b32.xlu0 %v6107, 32
      %v6144 = vpop.permute.xlu0 %6143
      %6145 = vrot.lane.b32.xlu0 %v6108, 32
      %v6146 = vpop.permute.xlu0 %6145
      %6147 = vrot.lane.b32.xlu0 %v6109, 32
      %v6148 = vpop.permute.xlu0 %6147
      %6149 = vrot.lane.b32.xlu0 %v6110, 32
      %v6150 = vpop.permute.xlu0 %6149
      %6151 = vrot.lane.b32.xlu0 %v6111, 32
      %v6152 = vpop.permute.xlu0 %6151
      %6153 = vrot.lane.b32.xlu0 %v6112, 32
      %v6154 = vpop.permute.xlu0 %6153
      %6155 = vrot.lane.b32.xlu0 %v6113, 32
      %v6156 = vpop.permute.xlu0 %6155
      %6157 = vrot.lane.b32.xlu0 %v6114, 32
      %v6158 = vpop.permute.xlu0 %6157
      %6159 = vrot.lane.b32.xlu0 %v6115, 32
      %v6160 = vpop.permute.xlu0 %6159
      %6161 = vrot.lane.b32.xlu0 %v6116, 32
      %v6162 = vpop.permute.xlu0 %6161
      %6163 = vrot.lane.b32.xlu0 %v6117, 32
      %v6164 = vpop.permute.xlu0 %6163
      %6165 = vrot.lane.b32.xlu0 %v6118, 32
      %v6166 = vpop.permute.xlu0 %6165
      %6167 = vrot.lane.b32.xlu0 %v6119, 32
      %v6168 = vpop.permute.xlu0 %6167
      %6169 = vrot.lane.b32.xlu0 %v6120, 32
      %v6170 = vpop.permute.xlu0 %6169
      %6171 = vrot.lane.b32.xlu0 %v6121, 32
      %v6172 = vpop.permute.xlu0 %6171
      %6173 = vrot.lane.b32.xlu0 %v6122, 32
      %v6174 = vpop.permute.xlu0 %6173
      %6175 = vrot.lane.b32.xlu0 %v6123, 32
      %v6176 = vpop.permute.xlu0 %6175
      %6177 = vrot.lane.b32.xlu0 %v6124, 32
      %v6178 = vpop.permute.xlu0 %6177
      %6179 = vrot.lane.b32.xlu0 %v6125, 32
      %v6180 = vpop.permute.xlu0 %6179
      %6181 = vrot.lane.b32.xlu0 %v6126, 32
      %v6182 = vpop.permute.xlu0 %6181
      %6183 = vrot.lane.b32.xlu0 %v6127, 32
      %v6184 = vpop.permute.xlu0 %6183
      %6185 = vrot.lane.b32.xlu0 %v6128, 32
      %v6186 = vpop.permute.xlu0 %6185
      %6187 = vrot.lane.b32.xlu0 %v6129, 32
      %v6188 = vpop.permute.xlu0 %6187
      %6189 = vrot.lane.b32.xlu0 %v6130, 32
      %v6190 = vpop.permute.xlu0 %6189
      %6191 = vrot.lane.b32.xlu0 %v6131, 32
      %v6192 = vpop.permute.xlu0 %6191
      %6193 = vrot.lane.b32.xlu0 %v6132, 32
      %v6194 = vpop.permute.xlu0 %6193
      %6195 = vrot.lane.b32.xlu0 %v6133, 32
      %v6196 = vpop.permute.xlu0 %6195
      %6197 = vrot.lane.b32.xlu0 %v6134, 32
      %v6198 = vpop.permute.xlu0 %6197
      %6231 = vst.msk [vmem:[#allocation3] sm:$0xf] %vm3314, %v6136
      %6232 = vst.msk [vmem:[#allocation3 + $0x4] sm:$0xf] %vm3314, %v6138
      %6233 = vst.msk [vmem:[#allocation3 + $0x8] sm:$0xf] %vm3314, %v6140
      %6234 = vst.msk [vmem:[#allocation3 + $0xc] sm:$0xf] %vm3314, %v6142
      %6235 = vst.msk [vmem:[#allocation3 + $0x10] sm:$0xf] %vm3314, %v6144
      %6236 = vst.msk [vmem:[#allocation3 + $0x14] sm:$0xf] %vm3314, %v6146
      %6237 = vst.msk [vmem:[#allocation3 + $0x18] sm:$0xf] %vm3314, %v6148
      %6238 = vst.msk [vmem:[#allocation3 + $0x1c] sm:$0xf] %vm3314, %v6150
      %6239 = vst.msk [vmem:[#allocation3 + $0x20] sm:$0xf] %vm3314, %v6152
      %6240 = vst.msk [vmem:[#allocation3 + $0x24] sm:$0xf] %vm3314, %v6154
      %6241 = vst.msk [vmem:[#allocation3 + $0x28] sm:$0xf] %vm3314, %v6156
      %6242 = vst.msk [vmem:[#allocation3 + $0x2c] sm:$0xf] %vm3314, %v6158
      %6243 = vst.msk [vmem:[#allocation3 + $0x30] sm:$0xf] %vm3314, %v6160
      %6244 = vst.msk [vmem:[#allocation3 + $0x34] sm:$0xf] %vm3314, %v6162
      %6245 = vst.msk [vmem:[#allocation3 + $0x38] sm:$0xf] %vm3314, %v6164
      %6246 = vst.msk [vmem:[#allocation3 + $0x3c] sm:$0xf] %vm3314, %v6166
      %6247 = vst.msk [vmem:[#allocation3 + $0x40] sm:$0xf] %vm3314, %v6168
      %6248 = vst.msk [vmem:[#allocation3 + $0x44] sm:$0xf] %vm3314, %v6170
      %6249 = vst.msk [vmem:[#allocation3 + $0x48] sm:$0xf] %vm3314, %v6172
      %6250 = vst.msk [vmem:[#allocation3 + $0x4c] sm:$0xf] %vm3314, %v6174
      %6251 = vst.msk [vmem:[#allocation3 + $0x50] sm:$0xf] %vm3314, %v6176
      %6252 = vst.msk [vmem:[#allocation3 + $0x54] sm:$0xf] %vm3314, %v6178
      %6253 = vst.msk [vmem:[#allocation3 + $0x58] sm:$0xf] %vm3314, %v6180
      %6254 = vst.msk [vmem:[#allocation3 + $0x5c] sm:$0xf] %vm3314, %v6182
      %6255 = vst.msk [vmem:[#allocation3 + $0x60] sm:$0xf] %vm3314, %v6184
      %6256 = vst.msk [vmem:[#allocation3 + $0x64] sm:$0xf] %vm3314, %v6186
      %6257 = vst.msk [vmem:[#allocation3 + $0x68] sm:$0xf] %vm3314, %v6188
      %6258 = vst.msk [vmem:[#allocation3 + $0x6c] sm:$0xf] %vm3314, %v6190
      %6259 = vst.msk [vmem:[#allocation3 + $0x70] sm:$0xf] %vm3314, %v6192
      %6260 = vst.msk [vmem:[#allocation3 + $0x74] sm:$0xf] %vm3314, %v6194
      %6261 = vst.msk [vmem:[#allocation3 + $0x78] sm:$0xf] %vm3314, %v6196
      %6262 = vst.msk [vmem:[#allocation3 + $0x7c] sm:$0xf] %vm3314, %v6198
      %v6263 = vld [vmem:[#allocation3] sm:$0xf]
      %v6264 = vld [vmem:[#allocation3 + $0x4] sm:$0xf]
      %v6265 = vld [vmem:[#allocation3 + $0x8] sm:$0xf]
      %v6266 = vld [vmem:[#allocation3 + $0xc] sm:$0xf]
      %v6267 = vld [vmem:[#allocation3 + $0x10] sm:$0xf]
      %v6268 = vld [vmem:[#allocation3 + $0x14] sm:$0xf]
      %v6269 = vld [vmem:[#allocation3 + $0x18] sm:$0xf]
      %v6270 = vld [vmem:[#allocation3 + $0x1c] sm:$0xf]
      %v6271 = vld [vmem:[#allocation3 + $0x20] sm:$0xf]
      %v6272 = vld [vmem:[#allocation3 + $0x24] sm:$0xf]
      %v6273 = vld [vmem:[#allocation3 + $0x28] sm:$0xf]
      %v6274 = vld [vmem:[#allocation3 + $0x2c] sm:$0xf]
      %v6275 = vld [vmem:[#allocation3 + $0x30] sm:$0xf]
      %v6276 = vld [vmem:[#allocation3 + $0x34] sm:$0xf]
      %v6277 = vld [vmem:[#allocation3 + $0x38] sm:$0xf]
      %v6278 = vld [vmem:[#allocation3 + $0x3c] sm:$0xf]
      %v6279 = vld [vmem:[#allocation3 + $0x40] sm:$0xf]
      %v6280 = vld [vmem:[#allocation3 + $0x44] sm:$0xf]
      %v6281 = vld [vmem:[#allocation3 + $0x48] sm:$0xf]
      %v6282 = vld [vmem:[#allocation3 + $0x4c] sm:$0xf]
      %v6283 = vld [vmem:[#allocation3 + $0x50] sm:$0xf]
      %v6284 = vld [vmem:[#allocation3 + $0x54] sm:$0xf]
      %v6285 = vld [vmem:[#allocation3 + $0x58] sm:$0xf]
      %v6286 = vld [vmem:[#allocation3 + $0x5c] sm:$0xf]
      %v6287 = vld [vmem:[#allocation3 + $0x60] sm:$0xf]
      %v6288 = vld [vmem:[#allocation3 + $0x64] sm:$0xf]
      %v6289 = vld [vmem:[#allocation3 + $0x68] sm:$0xf]
      %v6290 = vld [vmem:[#allocation3 + $0x6c] sm:$0xf]
      %v6291 = vld [vmem:[#allocation3 + $0x70] sm:$0xf]
      %v6292 = vld [vmem:[#allocation3 + $0x74] sm:$0xf]
      %v6293 = vld [vmem:[#allocation3 + $0x78] sm:$0xf]
      %v6294 = vld [vmem:[#allocation3 + $0x7c] sm:$0xf]
      %v6295 = vld [vmem:[%s3] sm:$0xf]
      %v6296 = vld [vmem:[%s3 + $0x4] sm:$0xf]
      %v6297 = vld [vmem:[%s3 + $0x8] sm:$0xf]
      %v6298 = vld [vmem:[%s3 + $0xc] sm:$0xf]
      %v6299 = vld [vmem:[%s3 + $0x10] sm:$0x3]
      %v6332 = vunpack.c.l.b16 %v6263
      %v6333 = vunpack.c.l.b16 %v6264
      %v6334 = vunpack.c.l.b16 %v6265
      %v6335 = vunpack.c.l.b16 %v6266
      %v6336 = vunpack.c.l.b16 %v6267
      %v6337 = vunpack.c.l.b16 %v6268
      %v6338 = vunpack.c.l.b16 %v6269
      %v6339 = vunpack.c.l.b16 %v6270
      %v6340 = vunpack.c.l.b16 %v6271
      %v6341 = vunpack.c.l.b16 %v6272
      %v6342 = vunpack.c.l.b16 %v6273
      %v6343 = vunpack.c.l.b16 %v6274
      %v6344 = vunpack.c.l.b16 %v6275
      %v6345 = vunpack.c.l.b16 %v6276
      %v6346 = vunpack.c.l.b16 %v6277
      %v6347 = vunpack.c.l.b16 %v6278
      %v6348 = vunpack.c.l.b16 %v6279
      %v6349 = vunpack.c.l.b16 %v6280
      %v6350 = vunpack.c.l.b16 %v6281
      %v6351 = vunpack.c.l.b16 %v6282
      %v6352 = vunpack.c.l.b16 %v6283
      %v6353 = vunpack.c.l.b16 %v6284
      %v6354 = vunpack.c.l.b16 %v6285
      %v6355 = vunpack.c.l.b16 %v6286
      %v6356 = vunpack.c.l.b16 %v6287
      %v6357 = vunpack.c.l.b16 %v6288
      %v6358 = vunpack.c.l.b16 %v6289
      %v6359 = vunpack.c.l.b16 %v6290
      %v6360 = vunpack.c.l.b16 %v6291
      %v6361 = vunpack.c.l.b16 %v6292
      %v6362 = vunpack.c.l.b16 %v6293
      %v6363 = vunpack.c.l.b16 %v6294
      %v6364 = vpack.c.b16 %v6333, %v6332
      %v6365 = vpack.c.b16 %v6335, %v6334
      %v6366 = vpack.c.b16 %v6337, %v6336
      %v6367 = vpack.c.b16 %v6339, %v6338
      %v6368 = vpack.c.b16 %v6341, %v6340
      %v6369 = vpack.c.b16 %v6343, %v6342
      %v6370 = vpack.c.b16 %v6345, %v6344
      %v6371 = vpack.c.b16 %v6347, %v6346
      %v6372 = vpack.c.b16 %v6349, %v6348
      %v6373 = vpack.c.b16 %v6351, %v6350
      %v6374 = vpack.c.b16 %v6353, %v6352
      %v6375 = vpack.c.b16 %v6355, %v6354
      %v6376 = vpack.c.b16 %v6357, %v6356
      %v6377 = vpack.c.b16 %v6359, %v6358
      %v6378 = vpack.c.b16 %v6361, %v6360
      %v6379 = vpack.c.b16 %v6363, %v6362
      %v6385 = vunpack.c.l.b16 %v6295
      %v6386 = vunpack.c.l.b16 %v6296
      %v6387 = vunpack.c.l.b16 %v6297
      %v6388 = vunpack.c.l.b16 %v6298
      %v6389 = vunpack.c.l.b16 %v6299
      %v6390 = vpack.c.b16 %v6386, %v6385
      %v6391 = vpack.c.b16 %v6388, %v6387
      %v6392 = vpack.c.b16 %v6389, %v6389
      %v6396 = vsel %vm3479, %v6364, 0
      %v6399 = vsel %vm3479, %v6365, 0
      %v6402 = vsel %vm3479, %v6366, 0
      %v6405 = vsel %vm3479, %v6367, 0
      %v6408 = vsel %vm3479, %v6368, 0
      %v6411 = vsel %vm3479, %v6369, 0
      %v6414 = vsel %vm3479, %v6370, 0
      %v6417 = vsel %vm3479, %v6371, 0
      %v6420 = vsel %vm3479, %v6372, 0
      %v6423 = vsel %vm3479, %v6373, 0
      %v6426 = vsel %vm3479, %v6374, 0
      %v6429 = vsel %vm3479, %v6375, 0
      %v6432 = vsel %vm3479, %v6376, 0
      %v6435 = vsel %vm3479, %v6377, 0
      %v6438 = vsel %vm3479, %v6378, 0
      %v6441 = vsel %vm3479, %v6379, 0
      %v6444 = vsel %vm3528, %v6392, 0
      %6446 = vmatprep.subr.bf16.mxu0 0
      %6447 = vmatpush1.bf16.msra.mxu0 0
      %6448 = vmatprep.subr.bf16.mxu0 0
      %6449 = vmatpush1.bf16.msra.mxu0 0
      %6450 = vmatprep.subr.bf16.mxu0 0
      %6451 = vmatpush1.bf16.msra.mxu0 0
      %6452 = vmatprep.subr.bf16.mxu0 0
      %6453 = vmatpush1.bf16.msra.mxu0 0
      %6454 = vmatprep.subr.bf16.mxu0 0
      %6455 = vmatpush1.bf16.msra.mxu0 0
      %6456 = vmatprep.subr.bf16.mxu0 0
      %6457 = vmatpush1.bf16.msra.mxu0 %v6444
      %6458 = vmatprep.subr.bf16.mxu0 0
      %6459 = vmatpush1.bf16.msra.mxu0 %v6391
      %6460 = vmatprep.subr.bf16.mxu0 0
      %6461 = vmatpush1.bf16.msra.mxu0 %v6390
      %6462 = vmatprep.subr.bf16.mxu0 0
      %6463 = vmatpush2.bf16.msra.mxu0 0
      %6464 = vmatprep.subr.bf16.mxu0 0
      %6465 = vmatpush2.bf16.msra.mxu0 0
      %6466 = vmatprep.subr.bf16.mxu0 0
      %6467 = vmatpush2.bf16.msra.mxu0 0
      %6468 = vmatprep.subr.bf16.mxu0 0
      %6469 = vmatpush2.bf16.msra.mxu0 0
      %6470 = vmatprep.subr.bf16.mxu0 0
      %6471 = vmatpush2.bf16.msra.mxu0 0
      %6472 = vmatprep.subr.bf16.mxu0 0
      %6473 = vmatpush2.bf16.msra.mxu0 0
      %6474 = vmatprep.subr.bf16.mxu0 0
      %6475 = vmatpush2.bf16.msra.mxu0 0
      %6476 = vmatprep.subr.bf16.mxu0 0
      %6477 = vmatpush2.bf16.msra.mxu0 0
      %6478 = vmatprep.mubr.bf16.mxu0 0
      %6479 = vmatmul.mubr.bf16.gmra.mxu0 %v6396
      %v6480 = vpop.f32.mrf.mxu0
      %v6481 = vadd.f32 0.0, %v6480
      %v6482 = vpop.f32.mrf.mxu0
      %v6483 = vpop.f32.mrf.mxu0
      %v6484 = vadd.f32 0.0, %v6483
      %v6485 = vpop.f32.mrf.mxu0
      %6486 = vmatprep.mubr.bf16.mxu0 0
      %6487 = vmatmul.mubr.bf16.gmra.mxu0 %v6399
      %v6488 = vpop.f32.mrf.mxu0
      %v6489 = vadd.f32 0.0, %v6488
      %v6490 = vpop.f32.mrf.mxu0
      %v6491 = vpop.f32.mrf.mxu0
      %v6492 = vadd.f32 0.0, %v6491
      %v6493 = vpop.f32.mrf.mxu0
      %6494 = vmatprep.mubr.bf16.mxu0 0
      %6495 = vmatmul.mubr.bf16.gmra.mxu0 %v6402
      %v6496 = vpop.f32.mrf.mxu0
      %v6497 = vadd.f32 0.0, %v6496
      %v6498 = vpop.f32.mrf.mxu0
      %v6499 = vpop.f32.mrf.mxu0
      %v6500 = vadd.f32 0.0, %v6499
      %v6501 = vpop.f32.mrf.mxu0
      %6502 = vmatprep.mubr.bf16.mxu0 0
      %6503 = vmatmul.mubr.bf16.gmra.mxu0 %v6405
      %v6504 = vpop.f32.mrf.mxu0
      %v6505 = vadd.f32 0.0, %v6504
      %v6506 = vpop.f32.mrf.mxu0
      %v6507 = vpop.f32.mrf.mxu0
      %v6508 = vadd.f32 0.0, %v6507
      %v6509 = vpop.f32.mrf.mxu0
      %6510 = vmatprep.mubr.bf16.mxu0 0
      %6511 = vmatmul.mubr.bf16.gmra.mxu0 %v6408
      %v6512 = vpop.f32.mrf.mxu0
      %v6513 = vadd.f32 0.0, %v6512
      %v6514 = vpop.f32.mrf.mxu0
      %v6515 = vpop.f32.mrf.mxu0
      %v6516 = vadd.f32 0.0, %v6515
      %v6517 = vpop.f32.mrf.mxu0
      %6518 = vmatprep.mubr.bf16.mxu0 0
      %6519 = vmatmul.mubr.bf16.gmra.mxu0 %v6411
      %v6520 = vpop.f32.mrf.mxu0
      %v6521 = vadd.f32 0.0, %v6520
      %v6522 = vpop.f32.mrf.mxu0
      %v6523 = vpop.f32.mrf.mxu0
      %v6524 = vadd.f32 0.0, %v6523
      %v6525 = vpop.f32.mrf.mxu0
      %6526 = vmatprep.mubr.bf16.mxu0 0
      %6527 = vmatmul.mubr.bf16.gmra.mxu0 %v6414
      %v6528 = vpop.f32.mrf.mxu0
      %v6529 = vadd.f32 0.0, %v6528
      %v6530 = vpop.f32.mrf.mxu0
      %v6531 = vpop.f32.mrf.mxu0
      %v6532 = vadd.f32 0.0, %v6531
      %v6533 = vpop.f32.mrf.mxu0
      %6534 = vmatprep.mubr.bf16.mxu0 0
      %6535 = vmatmul.mubr.bf16.gmra.mxu0 %v6417
      %v6536 = vpop.f32.mrf.mxu0
      %v6537 = vadd.f32 0.0, %v6536
      %v6538 = vpop.f32.mrf.mxu0
      %v6539 = vpop.f32.mrf.mxu0
      %v6540 = vadd.f32 0.0, %v6539
      %v6541 = vpop.f32.mrf.mxu0
      %6542 = vmatprep.mubr.bf16.mxu0 0
      %6543 = vmatmul.mubr.bf16.gmra.mxu0 %v6420
      %v6544 = vpop.f32.mrf.mxu0
      %v6545 = vadd.f32 0.0, %v6544
      %v6546 = vpop.f32.mrf.mxu0
      %v6547 = vpop.f32.mrf.mxu0
      %v6548 = vadd.f32 0.0, %v6547
      %v6549 = vpop.f32.mrf.mxu0
      %6550 = vmatprep.mubr.bf16.mxu0 0
      %6551 = vmatmul.mubr.bf16.gmra.mxu0 %v6423
      %v6552 = vpop.f32.mrf.mxu0
      %v6553 = vadd.f32 0.0, %v6552
      %v6554 = vpop.f32.mrf.mxu0
      %v6555 = vpop.f32.mrf.mxu0
      %v6556 = vadd.f32 0.0, %v6555
      %v6557 = vpop.f32.mrf.mxu0
      %6558 = vmatprep.mubr.bf16.mxu0 0
      %6559 = vmatmul.mubr.bf16.gmra.mxu0 %v6426
      %v6560 = vpop.f32.mrf.mxu0
      %v6561 = vadd.f32 0.0, %v6560
      %v6562 = vpop.f32.mrf.mxu0
      %v6563 = vpop.f32.mrf.mxu0
      %v6564 = vadd.f32 0.0, %v6563
      %v6565 = vpop.f32.mrf.mxu0
      %6566 = vmatprep.mubr.bf16.mxu0 0
      %6567 = vmatmul.mubr.bf16.gmra.mxu0 %v6429
      %v6568 = vpop.f32.mrf.mxu0
      %v6569 = vadd.f32 0.0, %v6568
      %v6570 = vpop.f32.mrf.mxu0
      %v6571 = vpop.f32.mrf.mxu0
      %v6572 = vadd.f32 0.0, %v6571
      %v6573 = vpop.f32.mrf.mxu0
      %6574 = vmatprep.mubr.bf16.mxu0 0
      %6575 = vmatmul.mubr.bf16.gmra.mxu0 %v6432
      %v6576 = vpop.f32.mrf.mxu0
      %v6577 = vadd.f32 0.0, %v6576
      %v6578 = vpop.f32.mrf.mxu0
      %v6579 = vpop.f32.mrf.mxu0
      %v6580 = vadd.f32 0.0, %v6579
      %v6581 = vpop.f32.mrf.mxu0
      %6582 = vmatprep.mubr.bf16.mxu0 0
      %6583 = vmatmul.mubr.bf16.gmra.mxu0 %v6435
      %v6584 = vpop.f32.mrf.mxu0
      %v6585 = vadd.f32 0.0, %v6584
      %v6586 = vpop.f32.mrf.mxu0
      %v6587 = vpop.f32.mrf.mxu0
      %v6588 = vadd.f32 0.0, %v6587
      %v6589 = vpop.f32.mrf.mxu0
      %6590 = vmatprep.mubr.bf16.mxu0 0
      %6591 = vmatmul.mubr.bf16.gmra.mxu0 %v6438
      %v6592 = vpop.f32.mrf.mxu0
      %v6593 = vadd.f32 0.0, %v6592
      %v6594 = vpop.f32.mrf.mxu0
      %v6595 = vpop.f32.mrf.mxu0
      %v6596 = vadd.f32 0.0, %v6595
      %v6597 = vpop.f32.mrf.mxu0
      %6598 = vmatprep.mubr.bf16.mxu0 0
      %6599 = vmatmul.mubr.bf16.gmra.mxu0 %v6441
      %v6600 = vpop.f32.mrf.mxu0
      %v6601 = vadd.f32 0.0, %v6600
      %v6602 = vpop.f32.mrf.mxu0
      %v6603 = vpop.f32.mrf.mxu0
      %v6604 = vadd.f32 0.0, %v6603
      %v6605 = vpop.f32.mrf.mxu0
      %6606 = vdwg.mxu0
      %v6607 = vld [vmem:[%s4] sm:$0x1]
      %v6608 = vlaneseq
      %v6609 = vshrl.u32 %v6608, 7
      %v6610 = vsub.s32 0, %v6609
      %v6611 = vrot.slane %v6607, %v6610
      %v6612 = vmul.f32 %v6481, %v6611
      %v6613 = vmul.f32 %v6484, %v6611
      %v6614 = vmul.f32 %v6489, %v6611
      %v6615 = vmul.f32 %v6492, %v6611
      %v6616 = vmul.f32 %v6497, %v6611
      %v6617 = vmul.f32 %v6500, %v6611
      %v6618 = vmul.f32 %v6505, %v6611
      %v6619 = vmul.f32 %v6508, %v6611
      %v6620 = vmul.f32 %v6513, %v6611
      %v6621 = vmul.f32 %v6516, %v6611
      %v6622 = vmul.f32 %v6521, %v6611
      %v6623 = vmul.f32 %v6524, %v6611
      %v6624 = vmul.f32 %v6529, %v6611
      %v6625 = vmul.f32 %v6532, %v6611
      %v6626 = vmul.f32 %v6537, %v6611
      %v6627 = vmul.f32 %v6540, %v6611
      %v6628 = vmul.f32 %v6545, %v6611
      %v6629 = vmul.f32 %v6548, %v6611
      %v6630 = vmul.f32 %v6553, %v6611
      %v6631 = vmul.f32 %v6556, %v6611
      %v6632 = vmul.f32 %v6561, %v6611
      %v6633 = vmul.f32 %v6564, %v6611
      %v6634 = vmul.f32 %v6569, %v6611
      %v6635 = vmul.f32 %v6572, %v6611
      %v6636 = vmul.f32 %v6577, %v6611
      %v6637 = vmul.f32 %v6580, %v6611
      %v6638 = vmul.f32 %v6585, %v6611
      %v6639 = vmul.f32 %v6588, %v6611
      %v6640 = vmul.f32 %v6593, %v6611
      %v6641 = vmul.f32 %v6596, %v6611
      %v6642 = vmul.f32 %v6601, %v6611
      %v6643 = vmul.f32 %v6604, %v6611
      %v6644 = vld [vmem:[%s4 + $0x1] sm:$0x1]
      %v6645 = vlaneseq
      %v6646 = vshrl.u32 %v6645, 7
      %v6647 = vsub.s32 0, %v6646
      %v6648 = vrot.slane %v6644, %v6647
      %v6649 = vadd.f32 %v6612, %v6648
      %v6650 = vadd.f32 %v6613, %v6648
      %v6651 = vadd.f32 %v6614, %v6648
      %v6652 = vadd.f32 %v6615, %v6648
      %v6653 = vadd.f32 %v6616, %v6648
      %v6654 = vadd.f32 %v6617, %v6648
      %v6655 = vadd.f32 %v6618, %v6648
      %v6656 = vadd.f32 %v6619, %v6648
      %v6657 = vadd.f32 %v6620, %v6648
      %v6658 = vadd.f32 %v6621, %v6648
      %v6659 = vadd.f32 %v6622, %v6648
      %v6660 = vadd.f32 %v6623, %v6648
      %v6661 = vadd.f32 %v6624, %v6648
      %v6662 = vadd.f32 %v6625, %v6648
      %v6663 = vadd.f32 %v6626, %v6648
      %v6664 = vadd.f32 %v6627, %v6648
      %v6665 = vadd.f32 %v6628, %v6648
      %v6666 = vadd.f32 %v6629, %v6648
      %v6667 = vadd.f32 %v6630, %v6648
      %v6668 = vadd.f32 %v6631, %v6648
      %v6669 = vadd.f32 %v6632, %v6648
      %v6670 = vadd.f32 %v6633, %v6648
      %v6671 = vadd.f32 %v6634, %v6648
      %v6672 = vadd.f32 %v6635, %v6648
      %v6673 = vadd.f32 %v6636, %v6648
      %v6674 = vadd.f32 %v6637, %v6648
      %v6675 = vadd.f32 %v6638, %v6648
      %v6676 = vadd.f32 %v6639, %v6648
      %v6677 = vadd.f32 %v6640, %v6648
      %v6678 = vadd.f32 %v6641, %v6648
      %v6679 = vadd.f32 %v6642, %v6648
      %v6680 = vadd.f32 %v6643, %v6648
      %v6681 = vld [vmem:[%s219] sm:$0xff]
      %v6682 = vld [vmem:[%s219 + $0x8] sm:$0xff]
      %v6683 = vld [vmem:[%s219 + $0x10] sm:$0xff]
      %v6684 = vld [vmem:[%s219 + $0x18] sm:$0xff]
      %v6685 = vld [vmem:[%s219 + $0x20] sm:$0xff]
      %v6686 = vld [vmem:[%s219 + $0x28] sm:$0xff]
      %v6687 = vld [vmem:[%s219 + $0x30] sm:$0xff]
      %v6688 = vld [vmem:[%s219 + $0x38] sm:$0xff]
      %v6689 = vld [vmem:[%s219 + $0x40] sm:$0xff]
      %v6690 = vld [vmem:[%s219 + $0x48] sm:$0xff]
      %v6691 = vld [vmem:[%s219 + $0x50] sm:$0xff]
      %v6692 = vld [vmem:[%s219 + $0x58] sm:$0xff]
      %v6693 = vld [vmem:[%s219 + $0x60] sm:$0xff]
      %v6694 = vld [vmem:[%s219 + $0x68] sm:$0xff]
      %v6695 = vld [vmem:[%s219 + $0x70] sm:$0xff]
      %v6696 = vld [vmem:[%s219 + $0x78] sm:$0xff]
      %v6697 = vld [vmem:[%s219 + $0x80] sm:$0xff]
      %v6698 = vld [vmem:[%s219 + $0x88] sm:$0xff]
      %v6699 = vld [vmem:[%s219 + $0x90] sm:$0xff]
      %v6700 = vld [vmem:[%s219 + $0x98] sm:$0xff]
      %v6701 = vld [vmem:[%s219 + $0xa0] sm:$0xff]
      %v6702 = vld [vmem:[%s219 + $0xa8] sm:$0xff]
      %v6703 = vld [vmem:[%s219 + $0xb0] sm:$0xff]
      %v6704 = vld [vmem:[%s219 + $0xb8] sm:$0xff]
      %v6705 = vld [vmem:[%s219 + $0xc0] sm:$0xff]
      %v6706 = vld [vmem:[%s219 + $0xc8] sm:$0xff]
      %v6707 = vld [vmem:[%s219 + $0xd0] sm:$0xff]
      %v6708 = vld [vmem:[%s219 + $0xd8] sm:$0xff]
      %v6709 = vld [vmem:[%s219 + $0xe0] sm:$0xff]
      %v6710 = vld [vmem:[%s219 + $0xe8] sm:$0xff]
      %v6711 = vld [vmem:[%s219 + $0xf0] sm:$0xff]
      %v6712 = vld [vmem:[%s219 + $0xf8] sm:$0xff]
      %v6713 = vadd.f32 %v6649, %v6681
      %v6714 = vadd.f32 %v6650, %v6682
      %v6715 = vadd.f32 %v6651, %v6683
      %v6716 = vadd.f32 %v6652, %v6684
      %v6717 = vadd.f32 %v6653, %v6685
      %v6718 = vadd.f32 %v6654, %v6686
      %v6719 = vadd.f32 %v6655, %v6687
      %v6720 = vadd.f32 %v6656, %v6688
      %v6721 = vadd.f32 %v6657, %v6689
      %v6722 = vadd.f32 %v6658, %v6690
      %v6723 = vadd.f32 %v6659, %v6691
      %v6724 = vadd.f32 %v6660, %v6692
      %v6725 = vadd.f32 %v6661, %v6693
      %v6726 = vadd.f32 %v6662, %v6694
      %v6727 = vadd.f32 %v6663, %v6695
      %v6728 = vadd.f32 %v6664, %v6696
      %v6729 = vadd.f32 %v6665, %v6697
      %v6730 = vadd.f32 %v6666, %v6698
      %v6731 = vadd.f32 %v6667, %v6699
      %v6732 = vadd.f32 %v6668, %v6700
      %v6733 = vadd.f32 %v6669, %v6701
      %v6734 = vadd.f32 %v6670, %v6702
      %v6735 = vadd.f32 %v6671, %v6703
      %v6736 = vadd.f32 %v6672, %v6704
      %v6737 = vadd.f32 %v6673, %v6705
      %v6738 = vadd.f32 %v6674, %v6706
      %v6739 = vadd.f32 %v6675, %v6707
      %v6740 = vadd.f32 %v6676, %v6708
      %v6741 = vadd.f32 %v6677, %v6709
      %v6742 = vadd.f32 %v6678, %v6710
      %v6743 = vadd.f32 %v6679, %v6711
      %v6744 = vadd.f32 %v6680, %v6712
      %v6745 = vmax.f32 %v6713, 0.0
      %v6746 = vmax.f32 %v6714, 0.0
      %v6747 = vmax.f32 %v6715, 0.0
      %v6748 = vmax.f32 %v6716, 0.0
      %v6749 = vmax.f32 %v6717, 0.0
      %v6750 = vmax.f32 %v6718, 0.0
      %v6751 = vmax.f32 %v6719, 0.0
      %v6752 = vmax.f32 %v6720, 0.0
      %v6753 = vmax.f32 %v6721, 0.0
      %v6754 = vmax.f32 %v6722, 0.0
      %v6755 = vmax.f32 %v6723, 0.0
      %v6756 = vmax.f32 %v6724, 0.0
      %v6757 = vmax.f32 %v6725, 0.0
      %v6758 = vmax.f32 %v6726, 0.0
      %v6759 = vmax.f32 %v6727, 0.0
      %v6760 = vmax.f32 %v6728, 0.0
      %v6761 = vmax.f32 %v6729, 0.0
      %v6762 = vmax.f32 %v6730, 0.0
      %v6763 = vmax.f32 %v6731, 0.0
      %v6764 = vmax.f32 %v6732, 0.0
      %v6765 = vmax.f32 %v6733, 0.0
      %v6766 = vmax.f32 %v6734, 0.0
      %v6767 = vmax.f32 %v6735, 0.0
      %v6768 = vmax.f32 %v6736, 0.0
      %v6769 = vmax.f32 %v6737, 0.0
      %v6770 = vmax.f32 %v6738, 0.0
      %v6771 = vmax.f32 %v6739, 0.0
      %v6772 = vmax.f32 %v6740, 0.0
      %v6773 = vmax.f32 %v6741, 0.0
      %v6774 = vmax.f32 %v6742, 0.0
      %v6775 = vmax.f32 %v6743, 0.0
      %v6776 = vmax.f32 %v6744, 0.0
      %6777 = vst.msk [vmem:[%s224] sm:$0xff] %vm226, %v6745
      %6778 = vst.msk [vmem:[%s224 + $0x8] sm:$0xff] %vm226, %v6746
      %6779 = vst.msk [vmem:[%s224 + $0x10] sm:$0xff] %vm226, %v6747
      %6780 = vst.msk [vmem:[%s224 + $0x18] sm:$0xff] %vm226, %v6748
      %6781 = vst.msk [vmem:[%s224 + $0x20] sm:$0xff] %vm226, %v6749
      %6782 = vst.msk [vmem:[%s224 + $0x28] sm:$0xff] %vm226, %v6750
      %6783 = vst.msk [vmem:[%s224 + $0x30] sm:$0xff] %vm226, %v6751
      %6784 = vst.msk [vmem:[%s224 + $0x38] sm:$0xff] %vm226, %v6752
      %6785 = vst.msk [vmem:[%s224 + $0x40] sm:$0xff] %vm226, %v6753
      %6786 = vst.msk [vmem:[%s224 + $0x48] sm:$0xff] %vm226, %v6754
      %6787 = vst.msk [vmem:[%s224 + $0x50] sm:$0xff] %vm226, %v6755
      %6788 = vst.msk [vmem:[%s224 + $0x58] sm:$0xff] %vm226, %v6756
      %6789 = vst.msk [vmem:[%s224 + $0x60] sm:$0xff] %vm226, %v6757
      %6790 = vst.msk [vmem:[%s224 + $0x68] sm:$0xff] %vm226, %v6758
      %6791 = vst.msk [vmem:[%s224 + $0x70] sm:$0xff] %vm226, %v6759
      %6792 = vst.msk [vmem:[%s224 + $0x78] sm:$0xff] %vm226, %v6760
      %6793 = vst.msk [vmem:[%s224 + $0x80] sm:$0xff] %vm226, %v6761
      %6794 = vst.msk [vmem:[%s224 + $0x88] sm:$0xff] %vm226, %v6762
      %6795 = vst.msk [vmem:[%s224 + $0x90] sm:$0xff] %vm226, %v6763
      %6796 = vst.msk [vmem:[%s224 + $0x98] sm:$0xff] %vm226, %v6764
      %6797 = vst.msk [vmem:[%s224 + $0xa0] sm:$0xff] %vm226, %v6765
      %6798 = vst.msk [vmem:[%s224 + $0xa8] sm:$0xff] %vm226, %v6766
      %6799 = vst.msk [vmem:[%s224 + $0xb0] sm:$0xff] %vm226, %v6767
      %6800 = vst.msk [vmem:[%s224 + $0xb8] sm:$0xff] %vm226, %v6768
      %6801 = vst.msk [vmem:[%s224 + $0xc0] sm:$0xff] %vm226, %v6769
      %6802 = vst.msk [vmem:[%s224 + $0xc8] sm:$0xff] %vm226, %v6770
      %6803 = vst.msk [vmem:[%s224 + $0xd0] sm:$0xff] %vm226, %v6771
      %6804 = vst.msk [vmem:[%s224 + $0xd8] sm:$0xff] %vm226, %v6772
      %6805 = vst.msk [vmem:[%s224 + $0xe0] sm:$0xff] %vm226, %v6773
      %6806 = vst.msk [vmem:[%s224 + $0xe8] sm:$0xff] %vm226, %v6774
      %6807 = vst.msk [vmem:[%s224 + $0xf0] sm:$0xff] %vm226, %v6775
      %6808 = vst.msk [vmem:[%s224 + $0xf8] sm:$0xff] %vm226, %v6776
      %p6809 = scmp.lt.s32.totalorder %s16, 1
      %s6810 = scalar_select %p6809, %s16, 1
      %s6811 = smul.addr %s6810, 32
      %s6812 = smul.addr %s6811, 8
      %s6813 = scalar_lea.vmem %s5, %s6812
      // Predicated region
      $region41: #{tpu_custom_call.1} parent=39 // pred_check
        %p6814 = pneg %p144
      $region42: #{tpu_custom_call.1} parent=39 // pred_check_branch
        %6816 = sbr.rel (%p6814) target = $region44
      $region43: #{tpu_custom_call.1} parent=39 // pred_region
        _
      $region44: #{tpu_custom_call.1} parent=39 // pred_fallthru
        _
    $region40: #{tpu_custom_call.1} parent=5 // pred_fallthru
      _
    %p6817 = scmp.le.s32.totalorder 2, %s11
    // Predicated region
    $region45: #{tpu_custom_call.1} parent=5 // pred_check
      %p6818 = pneg %p6817
    $region46: #{tpu_custom_call.1} parent=5 // pred_check_branch
      %6820 = sbr.rel (%p6818) target = $region48
    $region47: #{tpu_custom_call.1} parent=5 // pred_region
      %s6821 = ssub.s32 %s11, 2
      // Predicated region
      $region49: #{tpu_custom_call.1} parent=47 // pred_check
        %p6822 = pneg %p150
      $region50: #{tpu_custom_call.1} parent=47 // pred_check_branch
        %6824 = sbr.rel (%p6822) target = $region52
      $region51: #{tpu_custom_call.1} parent=47 // pred_region
        %p6825 = scmp.lt.s32.totalorder %s17, 1
        %s6826 = scalar_select %p6825, %s17, 1
        %s6827 = smul.addr %s6826, 32
        %s6828 = smul.addr %s6827, 8
        %s6829 = scalar_lea.vmem %s5, %s6828
      $region52: #{tpu_custom_call.1} parent=47 // pred_fallthru
        _
    $region48: #{tpu_custom_call.1} parent=5 // pred_fallthru
      _
  $region6: #{tpu_custom_call.1} parent=0 // loop_footer
    %s15 = sadd.s32 1, %s11
  $region7: #{tpu_custom_call.1} parent=0 // loop_footer_branch
    %10 = sbr.rel target = $region3
  $region8: #{tpu_custom_call.1} parent=0 // loop_exit
    _

</llo_original>
